<compile_context>
chip_gen: v6e
topology: v6e:2x2x1
jax: 0.10.0
libtpu: 0.0.40
codegen_flags: <defaults>
</compile_context>

<pallas_src>
import math
from functools import partial

import jax
import jax.numpy as jnp
from jax.experimental import pallas as pl
from jax.experimental.pallas import tpu as pltpu


_DILATIONS = {
    1: (1, 16, 32, 48),
    2: (1, 12, 24, 36),
    4: (1, 6, 12, 18),
    8: (1, 4, 6, 10),
    16: (1, 2, 3, 4),
}

_EPS = 1e-5


def _round_up(x, m):
    return ((x + m - 1) // m) * m


def _silu(y, approx):
    # y is f32.  exp -> EUP; reciprocal -> EUP when approx=True (frees the VALU divide).
    return y * pl.reciprocal(1.0 + jnp.exp(-y), approx=approx)


def _vmem_limit_bytes():
    """Generation-aware scoped-VMEM limit (v7x: 64 MiB physical, v5e/v6e: 128 MiB)."""
    try:
        cap = int(pltpu.get_tpu_info().vmem_capacity_bytes)
    except Exception:
        cap = 64 * 1024 * 1024
    return max(32 * 1024 * 1024, (cap * 3) // 4)


def _mosaic_params(dim_sems, vmem_limit):
    return pltpu.CompilerParams(dimension_semantics=dim_sems,
                                vmem_limit_bytes=int(vmem_limit))


def _nbytes(*arrays):
    return int(sum(a.size * a.dtype.itemsize for a in arrays))


# --------------------------------------------------------------------------- #
# Kernel 1: fused conv1..conv4 (1x1 + BN + SiLU)
# --------------------------------------------------------------------------- #
def _pw1_kernel(x_ref, w_ref, b_ref, o_ref, *, approx):
    y = jnp.dot(x_ref[...], w_ref[...], preferred_element_type=jnp.float32)
    y = _silu(y + b_ref[...], approx)
    o_ref[...] = y.astype(o_ref.dtype)


def _pointwise1(x2d, w, b, out_dtype, vmem_limit, approx):
    M, K = x2d.shape
    N = w.shape[1]
    # Row tile: as large as the VMEM budget allows; pl.cdiv grid handles ragged M.
    bytes_per_row = (K + N) * x2d.dtype.itemsize * 2        # double-buffered in + out
    tm = 2048 if vmem_limit >= 80 * 1024 * 1024 else 1024
    tm = min(tm, max(256, ((vmem_limit // 3) // max(bytes_per_row, 1)) // 8 * 8))
    if tm >= M:
        tm = M                                              # block == full dim is legal
    else:
        tm = max(8, (tm // 8) * 8)
    grid = (pl.cdiv(M, tm),)
    cost = pl.CostEstimate(
        flops=2 * M * K * N,
        transcendentals=M * N,
        bytes_accessed=_nbytes(x2d, w, b) + M * N * jnp.dtype(out_dtype).itemsize)
    return pl.pallas_call(
        partial(_pw1_kernel, approx=approx),
        out_shape=jax.ShapeDtypeStruct((M, N), out_dtype),
        grid=grid,
        in_specs=[
            pl.BlockSpec((tm, K), lambda i: (i, 0)),
            pl.BlockSpec((K, N), lambda i: (0, 0)),
            pl.BlockSpec((1, N), lambda i: (0, 0)),
        ],
        out_specs=pl.BlockSpec((tm, N), lambda i: (i, 0)),
        compiler_params=_mosaic_params(("parallel",), vmem_limit),
        cost_estimate=cost,
    )(x2d, w, b)


# --------------------------------------------------------------------------- #
# Kernel 2: dilated convs + residuals + conv5 (x2) + convout, fused, H-tiled
# --------------------------------------------------------------------------- #
def _fused_kernel(y_ref, wa_ref, ba_ref, w5_ref, b5_ref, wo_ref, bo_ref,
                  o_ref, xp_ref, *, H, W, TH, Cq, dils, dmax, approx):
    """One (batch, H-tile) grid step.

    y_ref  : (1, H, W, Cin)  whole NHWC image for this batch element (resident)
    wa_ref : (4, 9*Cq, Cq)   tap-major dilated-conv weights
    ba_ref : (4, 1, Cq)      dilated-conv biases (f32)
    w5/b5  : (C2, C2), (1, C2)   folded conv5 (shared by both halves)
    wo/bo  : (Cin, Cin), (1, Cin) folded convout
    o_ref  : (1, TH*W, Cin)
    xp_ref : (H+2*dmax, padl+W+dmax, Cin) zero-padded image scratch (persists over j)
    """
    j = pl.program_id(1)
    Cin, C2 = 4 * Cq, 2 * Cq
    padl = _round_up(dmax, 8)                 # sublane-aligned left column padding
    Hp, Wp = H + 2 * dmax, padl + W + dmax
    THW = TH * W

    # --- once per batch element: build the padded image in VMEM (no HBM pad pass) ---
    @pl.when(j == 0)
    def _fill():
        dt = xp_ref.dtype
        xp_ref[0:dmax, :, :] = jnp.zeros((dmax, Wp, Cin), dt)
        xp_ref[dmax + H:Hp, :, :] = jnp.zeros((dmax, Wp, Cin), dt)
        xp_ref[dmax:dmax + H, 0:padl, :] = jnp.zeros((H, padl, Cin), dt)
        xp_ref[dmax:dmax + H, padl + W:Wp, :] = jnp.zeros((H, dmax, Cin), dt)
        for h0 in range(0, H, TH):            # chunked interior copy (bounds temporaries)
            xp_ref[dmax + h0:dmax + h0 + TH, padl:padl + W, :] = y_ref[0, h0:h0 + TH, :, :]

    row0 = j * TH + dmax                      # top row of this tile in padded coords

    def window(ch0, nch, di, dj):
        win = xp_ref[pl.ds(row0 + di, TH), pl.ds(padl + dj, W), pl.ds(ch0, nch)]
        return win.reshape(THW, nch)

    def atrous(idx, ch0, d):
        # im2col in VMEM: one (THW, 9*Cq) slab -> single MXU matmul with K = 9*Cq.
        cols = [window(ch0, Cq, (t // 3 - 1) * d, (t % 3 - 1) * d) for t in range(9)]
        slab = jnp.concatenate(cols, axis=1)
        return jnp.dot(slab, wa_ref[idx], preferred_element_type=jnp.float32)

    center = window(0, Cin, 0, 0).astype(jnp.float32)          # [x1 | x2 | x3 | x4]
    res12 = center[:, 0 * Cq:1 * Cq] + center[:, 1 * Cq:2 * Cq]
    res34 = center[:, 2 * Cq:3 * Cq] + center[:, 3 * Cq:4 * Cq]

    a1 = atrous(0, 0 * Cq, dils[0]) + ba_ref[0] + res12
    a2 = atrous(1, 1 * Cq, dils[1]) + ba_ref[1] + res12
    a3 = atrous(2, 2 * Cq, dils[2]) + ba_ref[2] + res34
    a4 = atrous(3, 3 * Cq, dils[3]) + ba_ref[3] + res34

    wd = w5_ref.dtype
    # NOTE: a* are cast to the weight dtype before conv5 (bf16 path loses a little
    # precision on the residual sum; covered by the scale-aware tolerance below).
    z12 = jnp.dot(a1.astype(wd), w5_ref[0:Cq, :], preferred_element_type=jnp.float32) \
        + jnp.dot(a2.astype(wd), w5_ref[Cq:C2, :], preferred_element_type=jnp.float32)
    z12 = _silu(z12 + b5_ref[...], approx)
    z34 = jnp.dot(a3.astype(wd), w5_ref[0:Cq, :], preferred_element_type=jnp.float32) \
        + jnp.dot(a4.astype(wd), w5_ref[Cq:C2, :], preferred_element_type=jnp.float32)
    z34 = _silu(z34 + b5_ref[...], approx)

    od = wo_ref.dtype
    out = jnp.dot(z12.astype(od), wo_ref[0:C2, :], preferred_element_type=jnp.float32) \
        + jnp.dot(z34.astype(od), wo_ref[C2:Cin, :], preferred_element_type=jnp.float32)
    out = _silu(out + bo_ref[...], approx)
    o_ref[0] = out.astype(o_ref.dtype)


def _choose_th(H, W, Cq, Cin, dmax, itemsize, vmem_limit):
    """Largest divisor of H whose tile fits the (generation-aware) VMEM budget."""
    padl = _round_up(dmax, 8)
    Hp, Wp = H + 2 * dmax, padl + W + dmax
    fixed = Hp * Wp * Cin * itemsize                      # padded VMEM scratch
    fixed += 2 * H * W * Cin * itemsize                   # double-buffered resident image
    fixed += (4 * 9 * Cq * Cq + 4 * Cq * Cq + Cin * Cin + 8 * Cin) * 4  # weights (bound)
    budget = int(vmem_limit * 0.8) - fixed
    per_row = 4 * (26 * Cq + 2 * Cin)                     # f32 temporaries (slab, a*, z*, out)
    per_row += (9 * Cq + 2 * Cin) * itemsize              # dtype windows + dbl-buffered out tile
    max_rows = max(W, budget // max(per_row, 1))
    for th in range(H, 0, -1):
        if H % th:
            continue
        if th * W <= max_rows and ((th * W) % 8 == 0 or th == H):
            return th
    return 1


def _fused_branches(y, wa, ba, w5, b5, wo, bo, *, H, W, Cq, dils, dmax,
                    out_dtype, vmem_limit, approx):
    B = y.shape[0]
    Cin, C2 = 4 * Cq, 2 * Cq
    itemsize = jnp.dtype(out_dtype).itemsize
    TH = _choose_th(H, W, Cq, Cin, dmax, itemsize, vmem_limit)
    assert H % TH == 0
    nH = H // TH
    padl = _round_up(dmax, 8)
    Hp, Wp = H + 2 * dmax, padl + W + dmax
    kernel = partial(_fused_kernel, H=H, W=W, TH=TH, Cq=Cq,
                     dils=tuple(int(d) for d in dils), dmax=dmax, approx=approx)
    macs_per_px = 4 * 9 * Cq * Cq + 2 * C2 * C2 + Cin * Cin
    cost = pl.CostEstimate(
        flops=2 * B * H * W * macs_per_px,
        transcendentals=B * H * W * (2 * C2 + Cin),
        bytes_accessed=_nbytes(y, wa, ba, w5, b5, wo, bo)
        + B * H * W * Cin * itemsize)
    return pl.pallas_call(
        kernel,
        out_shape=jax.ShapeDtypeStruct((B, H * W, Cin), out_dtype),
        grid=(B, nH),
        in_specs=[
            pl.BlockSpec((1, H, W, Cin), lambda b, j: (b, 0, 0, 0)),
            pl.BlockSpec((4, 9 * Cq, Cq), lambda b, j: (0, 0, 0)),
            pl.BlockSpec((4, 1, Cq), lambda b, j: (0, 0, 0)),
            pl.BlockSpec((C2, C2), lambda b, j: (0, 0)),
            pl.BlockSpec((1, C2), lambda b, j: (0, 0)),
            pl.BlockSpec((Cin, Cin), lambda b, j: (0, 0)),
            pl.BlockSpec((1, Cin), lambda b, j: (0, 0)),
        ],
        out_specs=pl.BlockSpec((1, TH * W, Cin), lambda b, j: (b, j, 0)),
        scratch_shapes=[pltpu.VMEM((Hp, Wp, Cin), out_dtype)],
        compiler_params=_mosaic_params(("parallel", "arbitrary"), vmem_limit),
        cost_estimate=cost,
    )(y, wa, ba, w5, b5, wo, bo)


# --------------------------------------------------------------------------- #
# Forward pass (PASPP semantics)
# --------------------------------------------------------------------------- #
def paspp_forward(x, params, *, output_stride=4, compute_dtype=jnp.bfloat16):
    """x: (B, Cin, H, W) NCHW (like the PyTorch module).  Returns (B, Cin, H, W).

    compute_dtype=bfloat16 is the recommended fast path (bf16 MXU operands, f32
    accumulation, half the HBM traffic); float32 is kept for strict verification.
    """
    dils = _DILATIONS[output_stride]
    dmax = max(dils)
    B, Cin, H, W = x.shape
    assert Cin % 4 == 0
    Cq, C2 = Cin // 4, Cin // 2
    M = B * H * W
    approx = jnp.dtype(compute_dtype) == jnp.dtype(jnp.bfloat16)
    vmem_limit = _vmem_limit_bytes()

    # ---- fold inference-mode BatchNorm into the 1x1 convs (glue) ----
    def fold_1x1(p):
        w, b, g, beta, mu, var = p
        s = g / jnp.sqrt(var + _EPS)
        wmat = (w[:, :, 0, 0].T * s[None, :]).astype(compute_dtype)   # (Cin_, Cout_)
        bvec = ((b - mu) * s + beta).astype(jnp.float32).reshape(1, -1)
        return wmat, bvec

    wq_parts, bq_parts = zip(*(fold_1x1(params[n])
                               for n in ("conv1", "conv2", "conv3", "conv4")))
    wq = jnp.concatenate(wq_parts, axis=1)             # (Cin, Cin) -> [x1|x2|x3|x4]
    bq = jnp.concatenate(bq_parts, axis=1)             # (1, Cin)

    def atrous_taps(w):                                 # (Cq, Cq, 3, 3) -> (9*Cq, Cq)
        taps = [w[:, :, t // 3, t % 3].T for t in range(9)]
        return jnp.concatenate(taps, axis=0)

    wa = jnp.stack([atrous_taps(params[f"at{i}"][0]) for i in (1, 2, 3, 4)],
                   axis=0).astype(compute_dtype)        # (4, 9*Cq, Cq)
    ba = jnp.stack([params[f"at{i}"][1].reshape(1, Cq) for i in (1, 2, 3, 4)],
                   axis=0).astype(jnp.float32)          # (4, 1, Cq)

    # NOTE: the PyTorch forward applies conv5 to BOTH halves (conv6 is unused).
    w5, b5 = fold_1x1(params["conv5"])
    wo, bo = fold_1x1(params["convout"])

    # ---- kernel 1: fused conv1..conv4 (1x1 + BN + SiLU), row-tiled ----
    # TODO(synk): fold this NCHW->NHWC transpose into kernel 1 (transposed-LHS dot).
    x2d = jnp.transpose(x, (0, 2, 3, 1)).reshape(M, Cin).astype(compute_dtype)
    y2d = _pointwise1(x2d, wq, bq, compute_dtype, vmem_limit, approx)
    y = y2d.reshape(B, H, W, Cin)                       # [x1 | x2 | x3 | x4]

    # ---- kernel 2: all dilated convs + residuals + conv5 (x2) + convout, fused ----
    out = _fused_branches(y, wa, ba, w5, b5, wo, bo, H=H, W=W, Cq=Cq, dils=dils,
                          dmax=dmax, out_dtype=compute_dtype,
                          vmem_limit=vmem_limit, approx=approx)   # (B, H*W, Cin)
    out = out.reshape(B, H, W, Cin)
    return jnp.transpose(out, (0, 3, 1, 2))


# --------------------------------------------------------------------------- #
# Pure-JAX reference + parameter init
# --------------------------------------------------------------------------- #
def _paspp_reference(x, params, dilations):
    hi = jax.lax.Precision.HIGHEST

    def cbs(z, p):                                      # conv1x1 + BN(eval) + SiLU
        w, b, g, beta, mu, var = p
        y = jax.lax.conv_general_dilated(
            z, w, (1, 1), ((0, 0), (0, 0)),
            dimension_numbers=("NCHW", "OIHW", "NCHW"), precision=hi)
        y = y + b[None, :, None, None]
        s = g / jnp.sqrt(var + _EPS)
        y = (y - mu[None, :, None, None]) * s[None, :, None, None] \
            + beta[None, :, None, None]
        return y * jax.nn.sigmoid(y)

    def atr(z, p, d):                                   # dilated 3x3 conv (+bias)
        w, b = p
        y = jax.lax.conv_general_dilated(
            z, w, (1, 1), ((d, d), (d, d)), rhs_dilation=(d, d),
            dimension_numbers=("NCHW", "OIHW", "NCHW"), precision=hi)
        return y + b[None, :, None, None]

    x1 = cbs(x, params["conv1"]); x2 = cbs(x, params["conv2"])
    x3 = cbs(x, params["conv3"]); x4 = cbs(x, params["conv4"])
    x12 = x1 + x2; x34 = x3 + x4
    x1 = atr(x1, params["at1"], dilations[0]) + x12
    x2 = atr(x2, params["at2"], dilations[1]) + x12
    x3 = atr(x3, params["at3"], dilations[2]) + x34
    x4 = atr(x4, params["at4"], dilations[3]) + x34
    z12 = cbs(jnp.concatenate([x1, x2], axis=1), params["conv5"])
    z34 = cbs(jnp.concatenate([x3, x4], axis=1), params["conv5"])   # conv5 reused
    return cbs(jnp.concatenate([z12, z34], axis=1), params["convout"])


def _init_params(key, inplanes):
    Cq, Ch = inplanes // 4, inplanes // 2
    keys = iter(jax.random.split(key, 64))

    def conv_bn(cin, cout):
        w = jax.random.normal(next(keys), (cout, cin, 1, 1), jnp.float32) \
            * math.sqrt(2.0 / cin)
        b = 0.1 * jax.random.normal(next(keys), (cout,), jnp.float32)
        g = 1.0 + 0.1 * jax.random.normal(next(keys), (cout,), jnp.float32)
        beta = 0.1 * jax.random.normal(next(keys), (cout,), jnp.float32)
        mu = 0.1 * jax.random.normal(next(keys), (cout,), jnp.float32)
        var = jax.random.uniform(next(keys), (cout,), jnp.float32, 0.5, 1.5)
        return (w, b, g, beta, mu, var)

    def atrous(c):
        w = jax.random.normal(next(keys), (c, c, 3, 3), jnp.float32) \
            * math.sqrt(2.0 / (9 * c))
        b = 0.1 * jax.random.normal(next(keys), (c,), jnp.float32)
        return (w, b)

    p = {}
    for n in ("conv1", "conv2", "conv3", "conv4"):
        p[n] = conv_bn(inplanes, Cq)
    for i in (1, 2, 3, 4):
        p[f"at{i}"] = atrous(Cq)
    p["conv5"] = conv_bn(Ch, Ch)
    p["convout"] = conv_bn(inplanes, inplanes)
    return p


# --------------------------------------------------------------------------- #
if __name__ == "__main__":
    B, INPLANES, SIZE = 2, 32, 16
    OUTPUT_STRIDE = 4

    key = jax.random.PRNGKey(0)
    kx, kp = jax.random.split(key)
    x = jax.random.normal(kx, (B, INPLANES, SIZE, SIZE), dtype=jnp.float32)
    params = _init_params(kp, INPLANES)

    ref = _paspp_reference(x, params, _DILATIONS[OUTPUT_STRIDE])
    jax.block_until_ready(ref)

    # f32 path: strict correctness check against the conv reference.
    fwd_f32 = jax.jit(lambda xx, pp: paspp_forward(
        xx, pp, output_stride=OUTPUT_STRIDE, compute_dtype=jnp.float32))
    out_f32 = fwd_f32(x, params)
    jax.block_until_ready(out_f32)
    assert out_f32.shape == ref.shape == (B, INPLANES, SIZE, SIZE)
    err_f32 = float(jnp.max(jnp.abs(out_f32 - ref)))
    assert err_f32 < 2e-3, f"f32 path max abs err {err_f32}"

    # bf16 fast path (recommended): bf16 storage + bf16 MXU operands, f32 accumulation.
    fwd_bf16 = jax.jit(lambda xx, pp: paspp_forward(
        xx, pp, output_stride=OUTPUT_STRIDE, compute_dtype=jnp.bfloat16))
    out_bf16 = fwd_bf16(x, params).astype(jnp.float32)
    jax.block_until_ready(out_bf16)
    err_bf16 = float(jnp.max(jnp.abs(out_bf16 - ref)))
    tol_bf16 = 5e-2 * (1.0 + float(jnp.max(jnp.abs(ref))))
    assert err_bf16 < tol_bf16, f"bf16 path max abs err {err_bf16} (tol {tol_bf16})"

    print("KERNEL_OK")
</pallas_src>

<mosaic_0001>
module attributes {stable_mosaic.version = 11 : i64} {
  func.func @_pw1_kernel(%arg0: i32, %arg1: memref<512x32xf32, #tpu.memory_space<vmem>>, %arg2: memref<32x32xf32, #tpu.memory_space<vmem>>, %arg3: memref<1x32xf32, #tpu.memory_space<vmem>>, %arg4: memref<512x32xf32, #tpu.memory_space<vmem>>) attributes {dimension_semantics = [#tpu.dimension_semantics<parallel>], iteration_bounds = array<i64: 1>, scalar_prefetch = 0 : i64, scratch_operands = 0 : i64, tpu.core_type = #tpu.core_type<tc>, window_params = [{transform_indices = @transform_0, window_bounds = array<i64: 512, 32>}, {pipeline_mode = #tpu.pipeline_mode<synchronous>, transform_indices = @transform_1, window_bounds = array<i64: 32, 32>}, {pipeline_mode = #tpu.pipeline_mode<synchronous>, transform_indices = @transform_2, window_bounds = array<i64: 1, 32>}, {transform_indices = @transform_3, window_bounds = array<i64: 512, 32>}]} {
    %c0 = arith.constant 0 : index
    %c0_0 = arith.constant 0 : index
    %0 = vector.load %arg1[%c0, %c0_0] : memref<512x32xf32, #tpu.memory_space<vmem>>, vector<512x32xf32>
    %c0_1 = arith.constant 0 : index
    %c0_2 = arith.constant 0 : index
    %1 = vector.load %arg2[%c0_1, %c0_2] : memref<32x32xf32, #tpu.memory_space<vmem>>, vector<32x32xf32>
    %cst = arith.constant dense<0.000000e+00> : vector<512x32xf32>
    %2 = tpu.matmul %0, %1, %cst {dimension_numbers = #tpu.dot_dimension_numbers<[1], [0], [0], [1], [0, 0, 1, 1], [], []>} : vector<512x32xf32>, vector<32x32xf32>, vector<512x32xf32> -> vector<512x32xf32>
    %c0_3 = arith.constant 0 : index
    %c0_4 = arith.constant 0 : index
    %3 = vector.load %arg3[%c0_3, %c0_4] : memref<1x32xf32, #tpu.memory_space<vmem>>, vector<1x32xf32>
    %4 = vector.broadcast %3 : vector<1x32xf32> to vector<512x32xf32>
    %5 = arith.addf %2, %4 : vector<512x32xf32>
    %cst_5 = arith.constant 0.000000e+00 : f32
    %6 = vector.broadcast %cst_5 : f32 to vector<512x32xf32>
    %7 = arith.subf %6, %5 : vector<512x32xf32>
    %8 = math.exp %7 : vector<512x32xf32>
    %cst_6 = arith.constant 1.000000e+00 : f32
    %9 = vector.broadcast %cst_6 : f32 to vector<512x32xf32>
    %10 = arith.addf %9, %8 : vector<512x32xf32>
    %11 = tpu.reciprocal %10 : vector<512x32xf32> -> vector<512x32xf32>
    %12 = arith.mulf %5, %11 : vector<512x32xf32>
    %c0_7 = arith.constant 0 : index
    %c0_8 = arith.constant 0 : index
    %13 = vector.load %arg4[%c0_7, %c0_8] : memref<512x32xf32, #tpu.memory_space<vmem>>, vector<512x32xf32>
    tpu.vector_store %arg4[%c0_7, %c0_8], %12 {strides = array<i32>} : memref<512x32xf32, #tpu.memory_space<vmem>>, vector<512x32xf32>,
    return
  }
  func.func @transform_0(%arg0: i32) -> (i32, i32) {
    %c0_i32 = arith.constant 0 : i32
    %c0_i32_0 = arith.constant 0 : i32
    return %arg0, %c0_i32 : i32, i32
  }
  func.func @transform_1(%arg0: i32) -> (i32, i32) {
    %c0_i32 = arith.constant 0 : i32
    %c0_i32_0 = arith.constant 0 : i32
    %c0_i32_1 = arith.constant 0 : i32
    return %c0_i32, %c0_i32_0 : i32, i32
  }
  func.func @transform_2(%arg0: i32) -> (i32, i32) {
    %c0_i32 = arith.constant 0 : i32
    %c0_i32_0 = arith.constant 0 : i32
    %c0_i32_1 = arith.constant 0 : i32
    return %c0_i32, %c0_i32_0 : i32, i32
  }
  func.func @transform_3(%arg0: i32) -> (i32, i32) {
    %c0_i32 = arith.constant 0 : i32
    %c0_i32_0 = arith.constant 0 : i32
    return %arg0, %c0_i32 : i32, i32
  }
}

module attributes {stable_mosaic.version = 11 : i64} {
  func.func @_fused_kernel(%arg0: i32, %arg1: i32, %arg2: memref<1x16x16x32xf32, #tpu.memory_space<vmem>>, %arg3: memref<4x72x8xf32, #tpu.memory_space<vmem>>, %arg4: memref<4x1x8xf32, #tpu.memory_space<vmem>>, %arg5: memref<16x16xf32, #tpu.memory_space<vmem>>, %arg6: memref<1x16xf32, #tpu.memory_space<vmem>>, %arg7: memref<32x32xf32, #tpu.memory_space<vmem>>, %arg8: memref<1x32xf32, #tpu.memory_space<vmem>>, %arg9: memref<1x256x32xf32, #tpu.memory_space<vmem>>, %arg10: memref<52x58x32xf32, #tpu.memory_space<vmem>>) attributes {dimension_semantics = [#tpu.dimension_semantics<parallel>, #tpu.dimension_semantics<arbitrary>], iteration_bounds = array<i64: 2, 1>, scalar_prefetch = 0 : i64, scratch_operands = 1 : i64, tpu.core_type = #tpu.core_type<tc>, window_params = [{transform_indices = @transform_0, window_bounds = array<i64: 1, 16, 16, 32>}, {pipeline_mode = #tpu.pipeline_mode<synchronous>, transform_indices = @transform_1, window_bounds = array<i64: 4, 72, 8>}, {pipeline_mode = #tpu.pipeline_mode<synchronous>, transform_indices = @transform_2, window_bounds = array<i64: 4, 1, 8>}, {pipeline_mode = #tpu.pipeline_mode<synchronous>, transform_indices = @transform_3, window_bounds = array<i64: 16, 16>}, {pipeline_mode = #tpu.pipeline_mode<synchronous>, transform_indices = @transform_4, window_bounds = array<i64: 1, 16>}, {pipeline_mode = #tpu.pipeline_mode<synchronous>, transform_indices = @transform_5, window_bounds = array<i64: 32, 32>}, {pipeline_mode = #tpu.pipeline_mode<synchronous>, transform_indices = @transform_6, window_bounds = array<i64: 1, 32>}, {transform_indices = @transform_7, window_bounds = array<i64: 1, 256, 32>}]} {
    %c0_i32 = arith.constant 0 : i32
    %0 = arith.cmpi eq, %arg1, %c0_i32 : i32
    %1 = arith.extui %0 : i1 to i32
    %c0_i32_0 = arith.constant 0 : i32
    %2 = arith.cmpi ne, %1, %c0_i32_0 : i32
    scf.if %2 {
      %cst_150 = arith.constant 0.000000e+00 : f32
      %243 = vector.broadcast %cst_150 : f32 to vector<18x58x32xf32>
      %c0_151 = arith.constant 0 : index
      %c0_152 = arith.constant 0 : index
      %c0_153 = arith.constant 0 : index
      %244 = vector.load %arg10[%c0_151, %c0_152, %c0_153] : memref<52x58x32xf32, #tpu.memory_space<vmem>>, vector<18x58x32xf32>
      tpu.vector_store %arg10[%c0_151, %c0_152, %c0_153], %243 {strides = array<i32>} : memref<52x58x32xf32, #tpu.memory_space<vmem>>, vector<18x58x32xf32>,
      %cst_154 = arith.constant 0.000000e+00 : f32
      %245 = vector.broadcast %cst_154 : f32 to vector<18x58x32xf32>
      %c34 = arith.constant 34 : index
      %c0_155 = arith.constant 0 : index
      %c0_156 = arith.constant 0 : index
      %246 = vector.load %arg10[%c34, %c0_155, %c0_156] : memref<52x58x32xf32, #tpu.memory_space<vmem>>, vector<18x58x32xf32>
      tpu.vector_store %arg10[%c34, %c0_155, %c0_156], %245 {strides = array<i32>} : memref<52x58x32xf32, #tpu.memory_space<vmem>>, vector<18x58x32xf32>,
      %cst_157 = arith.constant 0.000000e+00 : f32
      %247 = vector.broadcast %cst_157 : f32 to vector<16x24x32xf32>
      %c18_158 = arith.constant 18 : index
      %c0_159 = arith.constant 0 : index
      %c0_160 = arith.constant 0 : index
      %248 = vector.load %arg10[%c18_158, %c0_159, %c0_160] : memref<52x58x32xf32, #tpu.memory_space<vmem>>, vector<16x24x32xf32>
      tpu.vector_store %arg10[%c18_158, %c0_159, %c0_160], %247 {strides = array<i32>} : memref<52x58x32xf32, #tpu.memory_space<vmem>>, vector<16x24x32xf32>,
      %cst_161 = arith.constant 0.000000e+00 : f32
      %249 = vector.broadcast %cst_161 : f32 to vector<16x18x32xf32>
      %c18_162 = arith.constant 18 : index
      %c40 = arith.constant 40 : index
      %c0_163 = arith.constant 0 : index
      %250 = vector.load %arg10[%c18_162, %c40, %c0_163] : memref<52x58x32xf32, #tpu.memory_space<vmem>>, vector<16x18x32xf32>
      tpu.vector_store %arg10[%c18_162, %c40, %c0_163], %249 {strides = array<i32>} : memref<52x58x32xf32, #tpu.memory_space<vmem>>, vector<16x18x32xf32>,
      %c0_164 = arith.constant 0 : index
      %c0_165 = arith.constant 0 : index
      %c0_166 = arith.constant 0 : index
      %c0_167 = arith.constant 0 : index
      %251 = vector.load %arg2[%c0_164, %c0_165, %c0_166, %c0_167] : memref<1x16x16x32xf32, #tpu.memory_space<vmem>>, vector<1x16x16x32xf32>
      %252 = vector.shape_cast %251 : vector<1x16x16x32xf32> to vector<16x16x32xf32>
      %c18_168 = arith.constant 18 : index
      %c24_169 = arith.constant 24 : index
      %c0_170 = arith.constant 0 : index
      %253 = vector.load %arg10[%c18_168, %c24_169, %c0_170] : memref<52x58x32xf32, #tpu.memory_space<vmem>>, vector<16x16x32xf32>
      tpu.vector_store %arg10[%c18_168, %c24_169, %c0_170], %252 {strides = array<i32>} : memref<52x58x32xf32, #tpu.memory_space<vmem>>, vector<16x16x32xf32>,
    } else {
    }
    %c16_i32 = arith.constant 16 : i32
    %3 = arith.muli %arg1, %c16_i32 : i32
    %c18_i32 = arith.constant 18 : i32
    %4 = arith.addi %3, %c18_i32 : i32
    %c0_i32_1 = arith.constant 0 : i32
    %5 = arith.addi %4, %c0_i32_1 : i32
    %6 = arith.index_cast %5 : i32 to index
    %c24 = arith.constant 24 : index
    %c0 = arith.constant 0 : index
    %7 = vector.load %arg10[%6, %c24, %c0] : memref<52x58x32xf32, #tpu.memory_space<vmem>>, vector<16x16x32xf32>
    %8 = vector.shape_cast %7 : vector<16x16x32xf32> to vector<256x32xf32>
    %9 = vector.extract_strided_slice %8 {offsets = [0, 0], sizes = [256, 8], strides = [1, 1]} : vector<256x32xf32> to vector<256x8xf32>
    %10 = vector.extract_strided_slice %8 {offsets = [0, 8], sizes = [256, 8], strides = [1, 1]} : vector<256x32xf32> to vector<256x8xf32>
    %11 = arith.addf %9, %10 : vector<256x8xf32>
    %12 = vector.extract_strided_slice %8 {offsets = [0, 16], sizes = [256, 8], strides = [1, 1]} : vector<256x32xf32> to vector<256x8xf32>
    %13 = vector.extract_strided_slice %8 {offsets = [0, 24], sizes = [256, 8], strides = [1, 1]} : vector<256x32xf32> to vector<256x8xf32>
    %14 = arith.addf %12, %13 : vector<256x8xf32>
    %c-1_i32 = arith.constant -1 : i32
    %15 = arith.addi %4, %c-1_i32 : i32
    %16 = arith.index_cast %15 : i32 to index
    %c23 = arith.constant 23 : index
    %c0_2 = arith.constant 0 : index
    %17 = vector.load %arg10[%16, %c23, %c0_2] : memref<52x58x32xf32, #tpu.memory_space<vmem>>, vector<16x16x8xf32>
    %18 = vector.shape_cast %17 : vector<16x16x8xf32> to vector<256x8xf32>
    %c-1_i32_3 = arith.constant -1 : i32
    %19 = arith.addi %4, %c-1_i32_3 : i32
    %20 = arith.index_cast %19 : i32 to index
    %c24_4 = arith.constant 24 : index
    %c0_5 = arith.constant 0 : index
    %21 = vector.load %arg10[%20, %c24_4, %c0_5] : memref<52x58x32xf32, #tpu.memory_space<vmem>>, vector<16x16x8xf32>
    %22 = vector.shape_cast %21 : vector<16x16x8xf32> to vector<256x8xf32>
    %c-1_i32_6 = arith.constant -1 : i32
    %23 = arith.addi %4, %c-1_i32_6 : i32
    %24 = arith.index_cast %23 : i32 to index
    %c25 = arith.constant 25 : index
    %c0_7 = arith.constant 0 : index
    %25 = vector.load %arg10[%24, %c25, %c0_7] : memref<52x58x32xf32, #tpu.memory_space<vmem>>, vector<16x16x8xf32>
    %26 = vector.shape_cast %25 : vector<16x16x8xf32> to vector<256x8xf32>
    %c0_i32_8 = arith.constant 0 : i32
    %27 = arith.addi %4, %c0_i32_8 : i32
    %28 = arith.index_cast %27 : i32 to index
    %c23_9 = arith.constant 23 : index
    %c0_10 = arith.constant 0 : index
    %29 = vector.load %arg10[%28, %c23_9, %c0_10] : memref<52x58x32xf32, #tpu.memory_space<vmem>>, vector<16x16x8xf32>
    %30 = vector.shape_cast %29 : vector<16x16x8xf32> to vector<256x8xf32>
    %c0_i32_11 = arith.constant 0 : i32
    %31 = arith.addi %4, %c0_i32_11 : i32
    %32 = arith.index_cast %31 : i32 to index
    %c24_12 = arith.constant 24 : index
    %c0_13 = arith.constant 0 : index
    %33 = vector.load %arg10[%32, %c24_12, %c0_13] : memref<52x58x32xf32, #tpu.memory_space<vmem>>, vector<16x16x8xf32>
    %34 = vector.shape_cast %33 : vector<16x16x8xf32> to vector<256x8xf32>
    %c0_i32_14 = arith.constant 0 : i32
    %35 = arith.addi %4, %c0_i32_14 : i32
    %36 = arith.index_cast %35 : i32 to index
    %c25_15 = arith.constant 25 : index
    %c0_16 = arith.constant 0 : index
    %37 = vector.load %arg10[%36, %c25_15, %c0_16] : memref<52x58x32xf32, #tpu.memory_space<vmem>>, vector<16x16x8xf32>
    %38 = vector.shape_cast %37 : vector<16x16x8xf32> to vector<256x8xf32>
    %c1_i32 = arith.constant 1 : i32
    %39 = arith.addi %4, %c1_i32 : i32
    %40 = arith.index_cast %39 : i32 to index
    %c23_17 = arith.constant 23 : index
    %c0_18 = arith.constant 0 : index
    %41 = vector.load %arg10[%40, %c23_17, %c0_18] : memref<52x58x32xf32, #tpu.memory_space<vmem>>, vector<16x16x8xf32>
    %42 = vector.shape_cast %41 : vector<16x16x8xf32> to vector<256x8xf32>
    %c1_i32_19 = arith.constant 1 : i32
    %43 = arith.addi %4, %c1_i32_19 : i32
    %44 = arith.index_cast %43 : i32 to index
    %c24_20 = arith.constant 24 : index
    %c0_21 = arith.constant 0 : index
    %45 = vector.load %arg10[%44, %c24_20, %c0_21] : memref<52x58x32xf32, #tpu.memory_space<vmem>>, vector<16x16x8xf32>
    %46 = vector.shape_cast %45 : vector<16x16x8xf32> to vector<256x8xf32>
    %c1_i32_22 = arith.constant 1 : i32
    %47 = arith.addi %4, %c1_i32_22 : i32
    %48 = arith.index_cast %47 : i32 to index
    %c25_23 = arith.constant 25 : index
    %c0_24 = arith.constant 0 : index
    %49 = vector.load %arg10[%48, %c25_23, %c0_24] : memref<52x58x32xf32, #tpu.memory_space<vmem>>, vector<16x16x8xf32>
    %50 = vector.shape_cast %49 : vector<16x16x8xf32> to vector<256x8xf32>
    %51 = tpu.concatenate %18, %22, %26, %30, %34, %38, %42, %46, %50 in 1 : vector<256x8xf32>, vector<256x8xf32>, vector<256x8xf32>, vector<256x8xf32>, vector<256x8xf32>, vector<256x8xf32>, vector<256x8xf32>, vector<256x8xf32>, vector<256x8xf32> -> vector<256x72xf32>
    %c0_25 = arith.constant 0 : index
    %c0_26 = arith.constant 0 : index
    %c0_27 = arith.constant 0 : index
    %52 = vector.load %arg3[%c0_25, %c0_26, %c0_27] : memref<4x72x8xf32, #tpu.memory_space<vmem>>, vector<1x72x8xf32>
    %53 = vector.shape_cast %52 : vector<1x72x8xf32> to vector<72x8xf32>
    %cst = arith.constant dense<0.000000e+00> : vector<256x8xf32>
    %54 = tpu.matmul %51, %53, %cst {dimension_numbers = #tpu.dot_dimension_numbers<[1], [0], [0], [1], [0, 0, 1, 1], [], []>} : vector<256x72xf32>, vector<72x8xf32>, vector<256x8xf32> -> vector<256x8xf32>
    %c0_28 = arith.constant 0 : index
    %c0_29 = arith.constant 0 : index
    %c0_30 = arith.constant 0 : index
    %55 = vector.load %arg4[%c0_28, %c0_29, %c0_30] : memref<4x1x8xf32, #tpu.memory_space<vmem>>, vector<1x1x8xf32>
    %56 = vector.shape_cast %55 : vector<1x1x8xf32> to vector<1x8xf32>
    %57 = vector.broadcast %56 : vector<1x8xf32> to vector<256x8xf32>
    %58 = arith.addf %54, %57 : vector<256x8xf32>
    %59 = arith.addf %58, %11 : vector<256x8xf32>
    %c-6_i32 = arith.constant -6 : i32
    %60 = arith.addi %4, %c-6_i32 : i32
    %61 = arith.index_cast %60 : i32 to index
    %c18 = arith.constant 18 : index
    %c8 = arith.constant 8 : index
    %62 = vector.load %arg10[%61, %c18, %c8] : memref<52x58x32xf32, #tpu.memory_space<vmem>>, vector<16x16x8xf32>
    %63 = vector.shape_cast %62 : vector<16x16x8xf32> to vector<256x8xf32>
    %c-6_i32_31 = arith.constant -6 : i32
    %64 = arith.addi %4, %c-6_i32_31 : i32
    %65 = arith.index_cast %64 : i32 to index
    %c24_32 = arith.constant 24 : index
    %c8_33 = arith.constant 8 : index
    %66 = vector.load %arg10[%65, %c24_32, %c8_33] : memref<52x58x32xf32, #tpu.memory_space<vmem>>, vector<16x16x8xf32>
    %67 = vector.shape_cast %66 : vector<16x16x8xf32> to vector<256x8xf32>
    %c-6_i32_34 = arith.constant -6 : i32
    %68 = arith.addi %4, %c-6_i32_34 : i32
    %69 = arith.index_cast %68 : i32 to index
    %c30 = arith.constant 30 : index
    %c8_35 = arith.constant 8 : index
    %70 = vector.load %arg10[%69, %c30, %c8_35] : memref<52x58x32xf32, #tpu.memory_space<vmem>>, vector<16x16x8xf32>
    %71 = vector.shape_cast %70 : vector<16x16x8xf32> to vector<256x8xf32>
    %c0_i32_36 = arith.constant 0 : i32
    %72 = arith.addi %4, %c0_i32_36 : i32
    %73 = arith.index_cast %72 : i32 to index
    %c18_37 = arith.constant 18 : index
    %c8_38 = arith.constant 8 : index
    %74 = vector.load %arg10[%73, %c18_37, %c8_38] : memref<52x58x32xf32, #tpu.memory_space<vmem>>, vector<16x16x8xf32>
    %75 = vector.shape_cast %74 : vector<16x16x8xf32> to vector<256x8xf32>
    %c0_i32_39 = arith.constant 0 : i32
    %76 = arith.addi %4, %c0_i32_39 : i32
    %77 = arith.index_cast %76 : i32 to index
    %c24_40 = arith.constant 24 : index
    %c8_41 = arith.constant 8 : index
    %78 = vector.load %arg10[%77, %c24_40, %c8_41] : memref<52x58x32xf32, #tpu.memory_space<vmem>>, vector<16x16x8xf32>
    %79 = vector.shape_cast %78 : vector<16x16x8xf32> to vector<256x8xf32>
    %c0_i32_42 = arith.constant 0 : i32
    %80 = arith.addi %4, %c0_i32_42 : i32
    %81 = arith.index_cast %80 : i32 to index
    %c30_43 = arith.constant 30 : index
    %c8_44 = arith.constant 8 : index
    %82 = vector.load %arg10[%81, %c30_43, %c8_44] : memref<52x58x32xf32, #tpu.memory_space<vmem>>, vector<16x16x8xf32>
    %83 = vector.shape_cast %82 : vector<16x16x8xf32> to vector<256x8xf32>
    %c6_i32 = arith.constant 6 : i32
    %84 = arith.addi %4, %c6_i32 : i32
    %85 = arith.index_cast %84 : i32 to index
    %c18_45 = arith.constant 18 : index
    %c8_46 = arith.constant 8 : index
    %86 = vector.load %arg10[%85, %c18_45, %c8_46] : memref<52x58x32xf32, #tpu.memory_space<vmem>>, vector<16x16x8xf32>
    %87 = vector.shape_cast %86 : vector<16x16x8xf32> to vector<256x8xf32>
    %c6_i32_47 = arith.constant 6 : i32
    %88 = arith.addi %4, %c6_i32_47 : i32
    %89 = arith.index_cast %88 : i32 to index
    %c24_48 = arith.constant 24 : index
    %c8_49 = arith.constant 8 : index
    %90 = vector.load %arg10[%89, %c24_48, %c8_49] : memref<52x58x32xf32, #tpu.memory_space<vmem>>, vector<16x16x8xf32>
    %91 = vector.shape_cast %90 : vector<16x16x8xf32> to vector<256x8xf32>
    %c6_i32_50 = arith.constant 6 : i32
    %92 = arith.addi %4, %c6_i32_50 : i32
    %93 = arith.index_cast %92 : i32 to index
    %c30_51 = arith.constant 30 : index
    %c8_52 = arith.constant 8 : index
    %94 = vector.load %arg10[%93, %c30_51, %c8_52] : memref<52x58x32xf32, #tpu.memory_space<vmem>>, vector<16x16x8xf32>
    %95 = vector.shape_cast %94 : vector<16x16x8xf32> to vector<256x8xf32>
    %96 = tpu.concatenate %63, %67, %71, %75, %79, %83, %87, %91, %95 in 1 : vector<256x8xf32>, vector<256x8xf32>, vector<256x8xf32>, vector<256x8xf32>, vector<256x8xf32>, vector<256x8xf32>, vector<256x8xf32>, vector<256x8xf32>, vector<256x8xf32> -> vector<256x72xf32>
    %c1 = arith.constant 1 : index
    %c0_53 = arith.constant 0 : index
    %c0_54 = arith.constant 0 : index
    %97 = vector.load %arg3[%c1, %c0_53, %c0_54] : memref<4x72x8xf32, #tpu.memory_space<vmem>>, vector<1x72x8xf32>
    %98 = vector.shape_cast %97 : vector<1x72x8xf32> to vector<72x8xf32>
    %cst_55 = arith.constant dense<0.000000e+00> : vector<256x8xf32>
    %99 = tpu.matmul %96, %98, %cst_55 {dimension_numbers = #tpu.dot_dimension_numbers<[1], [0], [0], [1], [0, 0, 1, 1], [], []>} : vector<256x72xf32>, vector<72x8xf32>, vector<256x8xf32> -> vector<256x8xf32>
    %c1_56 = arith.constant 1 : index
    %c0_57 = arith.constant 0 : index
    %c0_58 = arith.constant 0 : index
    %100 = vector.load %arg4[%c1_56, %c0_57, %c0_58] : memref<4x1x8xf32, #tpu.memory_space<vmem>>, vector<1x1x8xf32>
    %101 = vector.shape_cast %100 : vector<1x1x8xf32> to vector<1x8xf32>
    %102 = vector.broadcast %101 : vector<1x8xf32> to vector<256x8xf32>
    %103 = arith.addf %99, %102 : vector<256x8xf32>
    %104 = arith.addf %103, %11 : vector<256x8xf32>
    %c-12_i32 = arith.constant -12 : i32
    %105 = arith.addi %4, %c-12_i32 : i32
    %106 = arith.index_cast %105 : i32 to index
    %c12 = arith.constant 12 : index
    %c16 = arith.constant 16 : index
    %107 = vector.load %arg10[%106, %c12, %c16] : memref<52x58x32xf32, #tpu.memory_space<vmem>>, vector<16x16x8xf32>
    %108 = vector.shape_cast %107 : vector<16x16x8xf32> to vector<256x8xf32>
    %c-12_i32_59 = arith.constant -12 : i32
    %109 = arith.addi %4, %c-12_i32_59 : i32
    %110 = arith.index_cast %109 : i32 to index
    %c24_60 = arith.constant 24 : index
    %c16_61 = arith.constant 16 : index
    %111 = vector.load %arg10[%110, %c24_60, %c16_61] : memref<52x58x32xf32, #tpu.memory_space<vmem>>, vector<16x16x8xf32>
    %112 = vector.shape_cast %111 : vector<16x16x8xf32> to vector<256x8xf32>
    %c-12_i32_62 = arith.constant -12 : i32
    %113 = arith.addi %4, %c-12_i32_62 : i32
    %114 = arith.index_cast %113 : i32 to index
    %c36 = arith.constant 36 : index
    %c16_63 = arith.constant 16 : index
    %115 = vector.load %arg10[%114, %c36, %c16_63] : memref<52x58x32xf32, #tpu.memory_space<vmem>>, vector<16x16x8xf32>
    %116 = vector.shape_cast %115 : vector<16x16x8xf32> to vector<256x8xf32>
    %c0_i32_64 = arith.constant 0 : i32
    %117 = arith.addi %4, %c0_i32_64 : i32
    %118 = arith.index_cast %117 : i32 to index
    %c12_65 = arith.constant 12 : index
    %c16_66 = arith.constant 16 : index
    %119 = vector.load %arg10[%118, %c12_65, %c16_66] : memref<52x58x32xf32, #tpu.memory_space<vmem>>, vector<16x16x8xf32>
    %120 = vector.shape_cast %119 : vector<16x16x8xf32> to vector<256x8xf32>
    %c0_i32_67 = arith.constant 0 : i32
    %121 = arith.addi %4, %c0_i32_67 : i32
    %122 = arith.index_cast %121 : i32 to index
    %c24_68 = arith.constant 24 : index
    %c16_69 = arith.constant 16 : index
    %123 = vector.load %arg10[%122, %c24_68, %c16_69] : memref<52x58x32xf32, #tpu.memory_space<vmem>>, vector<16x16x8xf32>
    %124 = vector.shape_cast %123 : vector<16x16x8xf32> to vector<256x8xf32>
    %c0_i32_70 = arith.constant 0 : i32
    %125 = arith.addi %4, %c0_i32_70 : i32
    %126 = arith.index_cast %125 : i32 to index
    %c36_71 = arith.constant 36 : index
    %c16_72 = arith.constant 16 : index
    %127 = vector.load %arg10[%126, %c36_71, %c16_72] : memref<52x58x32xf32, #tpu.memory_space<vmem>>, vector<16x16x8xf32>
    %128 = vector.shape_cast %127 : vector<16x16x8xf32> to vector<256x8xf32>
    %c12_i32 = arith.constant 12 : i32
    %129 = arith.addi %4, %c12_i32 : i32
    %130 = arith.index_cast %129 : i32 to index
    %c12_73 = arith.constant 12 : index
    %c16_74 = arith.constant 16 : index
    %131 = vector.load %arg10[%130, %c12_73, %c16_74] : memref<52x58x32xf32, #tpu.memory_space<vmem>>, vector<16x16x8xf32>
    %132 = vector.shape_cast %131 : vector<16x16x8xf32> to vector<256x8xf32>
    %c12_i32_75 = arith.constant 12 : i32
    %133 = arith.addi %4, %c12_i32_75 : i32
    %134 = arith.index_cast %133 : i32 to index
    %c24_76 = arith.constant 24 : index
    %c16_77 = arith.constant 16 : index
    %135 = vector.load %arg10[%134, %c24_76, %c16_77] : memref<52x58x32xf32, #tpu.memory_space<vmem>>, vector<16x16x8xf32>
    %136 = vector.shape_cast %135 : vector<16x16x8xf32> to vector<256x8xf32>
    %c12_i32_78 = arith.constant 12 : i32
    %137 = arith.addi %4, %c12_i32_78 : i32
    %138 = arith.index_cast %137 : i32 to index
    %c36_79 = arith.constant 36 : index
    %c16_80 = arith.constant 16 : index
    %139 = vector.load %arg10[%138, %c36_79, %c16_80] : memref<52x58x32xf32, #tpu.memory_space<vmem>>, vector<16x16x8xf32>
    %140 = vector.shape_cast %139 : vector<16x16x8xf32> to vector<256x8xf32>
    %141 = tpu.concatenate %108, %112, %116, %120, %124, %128, %132, %136, %140 in 1 : vector<256x8xf32>, vector<256x8xf32>, vector<256x8xf32>, vector<256x8xf32>, vector<256x8xf32>, vector<256x8xf32>, vector<256x8xf32>, vector<256x8xf32>, vector<256x8xf32> -> vector<256x72xf32>
    %c2 = arith.constant 2 : index
    %c0_81 = arith.constant 0 : index
    %c0_82 = arith.constant 0 : index
    %142 = vector.load %arg3[%c2, %c0_81, %c0_82] : memref<4x72x8xf32, #tpu.memory_space<vmem>>, vector<1x72x8xf32>
    %143 = vector.shape_cast %142 : vector<1x72x8xf32> to vector<72x8xf32>
    %cst_83 = arith.constant dense<0.000000e+00> : vector<256x8xf32>
    %144 = tpu.matmul %141, %143, %cst_83 {dimension_numbers = #tpu.dot_dimension_numbers<[1], [0], [0], [1], [0, 0, 1, 1], [], []>} : vector<256x72xf32>, vector<72x8xf32>, vector<256x8xf32> -> vector<256x8xf32>
    %c2_84 = arith.constant 2 : index
    %c0_85 = arith.constant 0 : index
    %c0_86 = arith.constant 0 : index
    %145 = vector.load %arg4[%c2_84, %c0_85, %c0_86] : memref<4x1x8xf32, #tpu.memory_space<vmem>>, vector<1x1x8xf32>
    %146 = vector.shape_cast %145 : vector<1x1x8xf32> to vector<1x8xf32>
    %147 = vector.broadcast %146 : vector<1x8xf32> to vector<256x8xf32>
    %148 = arith.addf %144, %147 : vector<256x8xf32>
    %149 = arith.addf %148, %14 : vector<256x8xf32>
    %c-18_i32 = arith.constant -18 : i32
    %150 = arith.addi %4, %c-18_i32 : i32
    %151 = arith.index_cast %150 : i32 to index
    %c6 = arith.constant 6 : index
    %c24_87 = arith.constant 24 : index
    %152 = vector.load %arg10[%151, %c6, %c24_87] : memref<52x58x32xf32, #tpu.memory_space<vmem>>, vector<16x16x8xf32>
    %153 = vector.shape_cast %152 : vector<16x16x8xf32> to vector<256x8xf32>
    %c-18_i32_88 = arith.constant -18 : i32
    %154 = arith.addi %4, %c-18_i32_88 : i32
    %155 = arith.index_cast %154 : i32 to index
    %c24_89 = arith.constant 24 : index
    %c24_90 = arith.constant 24 : index
    %156 = vector.load %arg10[%155, %c24_89, %c24_90] : memref<52x58x32xf32, #tpu.memory_space<vmem>>, vector<16x16x8xf32>
    %157 = vector.shape_cast %156 : vector<16x16x8xf32> to vector<256x8xf32>
    %c-18_i32_91 = arith.constant -18 : i32
    %158 = arith.addi %4, %c-18_i32_91 : i32
    %159 = arith.index_cast %158 : i32 to index
    %c42 = arith.constant 42 : index
    %c24_92 = arith.constant 24 : index
    %160 = vector.load %arg10[%159, %c42, %c24_92] : memref<52x58x32xf32, #tpu.memory_space<vmem>>, vector<16x16x8xf32>
    %161 = vector.shape_cast %160 : vector<16x16x8xf32> to vector<256x8xf32>
    %c0_i32_93 = arith.constant 0 : i32
    %162 = arith.addi %4, %c0_i32_93 : i32
    %163 = arith.index_cast %162 : i32 to index
    %c6_94 = arith.constant 6 : index
    %c24_95 = arith.constant 24 : index
    %164 = vector.load %arg10[%163, %c6_94, %c24_95] : memref<52x58x32xf32, #tpu.memory_space<vmem>>, vector<16x16x8xf32>
    %165 = vector.shape_cast %164 : vector<16x16x8xf32> to vector<256x8xf32>
    %c0_i32_96 = arith.constant 0 : i32
    %166 = arith.addi %4, %c0_i32_96 : i32
    %167 = arith.index_cast %166 : i32 to index
    %c24_97 = arith.constant 24 : index
    %c24_98 = arith.constant 24 : index
    %168 = vector.load %arg10[%167, %c24_97, %c24_98] : memref<52x58x32xf32, #tpu.memory_space<vmem>>, vector<16x16x8xf32>
    %169 = vector.shape_cast %168 : vector<16x16x8xf32> to vector<256x8xf32>
    %c0_i32_99 = arith.constant 0 : i32
    %170 = arith.addi %4, %c0_i32_99 : i32
    %171 = arith.index_cast %170 : i32 to index
    %c42_100 = arith.constant 42 : index
    %c24_101 = arith.constant 24 : index
    %172 = vector.load %arg10[%171, %c42_100, %c24_101] : memref<52x58x32xf32, #tpu.memory_space<vmem>>, vector<16x16x8xf32>
    %173 = vector.shape_cast %172 : vector<16x16x8xf32> to vector<256x8xf32>
    %c18_i32_102 = arith.constant 18 : i32
    %174 = arith.addi %4, %c18_i32_102 : i32
    %175 = arith.index_cast %174 : i32 to index
    %c6_103 = arith.constant 6 : index
    %c24_104 = arith.constant 24 : index
    %176 = vector.load %arg10[%175, %c6_103, %c24_104] : memref<52x58x32xf32, #tpu.memory_space<vmem>>, vector<16x16x8xf32>
    %177 = vector.shape_cast %176 : vector<16x16x8xf32> to vector<256x8xf32>
    %c18_i32_105 = arith.constant 18 : i32
    %178 = arith.addi %4, %c18_i32_105 : i32
    %179 = arith.index_cast %178 : i32 to index
    %c24_106 = arith.constant 24 : index
    %c24_107 = arith.constant 24 : index
    %180 = vector.load %arg10[%179, %c24_106, %c24_107] : memref<52x58x32xf32, #tpu.memory_space<vmem>>, vector<16x16x8xf32>
    %181 = vector.shape_cast %180 : vector<16x16x8xf32> to vector<256x8xf32>
    %c18_i32_108 = arith.constant 18 : i32
    %182 = arith.addi %4, %c18_i32_108 : i32
    %183 = arith.index_cast %182 : i32 to index
    %c42_109 = arith.constant 42 : index
    %c24_110 = arith.constant 24 : index
    %184 = vector.load %arg10[%183, %c42_109, %c24_110] : memref<52x58x32xf32, #tpu.memory_space<vmem>>, vector<16x16x8xf32>
    %185 = vector.shape_cast %184 : vector<16x16x8xf32> to vector<256x8xf32>
    %186 = tpu.concatenate %153, %157, %161, %165, %169, %173, %177, %181, %185 in 1 : vector<256x8xf32>, vector<256x8xf32>, vector<256x8xf32>, vector<256x8xf32>, vector<256x8xf32>, vector<256x8xf32>, vector<256x8xf32>, vector<256x8xf32>, vector<256x8xf32> -> vector<256x72xf32>
    %c3 = arith.constant 3 : index
    %c0_111 = arith.constant 0 : index
    %c0_112 = arith.constant 0 : index
    %187 = vector.load %arg3[%c3, %c0_111, %c0_112] : memref<4x72x8xf32, #tpu.memory_space<vmem>>, vector<1x72x8xf32>
    %188 = vector.shape_cast %187 : vector<1x72x8xf32> to vector<72x8xf32>
    %cst_113 = arith.constant dense<0.000000e+00> : vector<256x8xf32>
    %189 = tpu.matmul %186, %188, %cst_113 {dimension_numbers = #tpu.dot_dimension_numbers<[1], [0], [0], [1], [0, 0, 1, 1], [], []>} : vector<256x72xf32>, vector<72x8xf32>, vector<256x8xf32> -> vector<256x8xf32>
    %c3_114 = arith.constant 3 : index
    %c0_115 = arith.constant 0 : index
    %c0_116 = arith.constant 0 : index
    %190 = vector.load %arg4[%c3_114, %c0_115, %c0_116] : memref<4x1x8xf32, #tpu.memory_space<vmem>>, vector<1x1x8xf32>
    %191 = vector.shape_cast %190 : vector<1x1x8xf32> to vector<1x8xf32>
    %192 = vector.broadcast %191 : vector<1x8xf32> to vector<256x8xf32>
    %193 = arith.addf %189, %192 : vector<256x8xf32>
    %194 = arith.addf %193, %14 : vector<256x8xf32>
    %c0_117 = arith.constant 0 : index
    %c0_118 = arith.constant 0 : index
    %195 = vector.load %arg5[%c0_117, %c0_118] : memref<16x16xf32, #tpu.memory_space<vmem>>, vector<8x16xf32>
    %cst_119 = arith.constant dense<0.000000e+00> : vector<256x16xf32>
    %196 = tpu.matmul %59, %195, %cst_119 {dimension_numbers = #tpu.dot_dimension_numbers<[1], [0], [0], [1], [0, 0, 1, 1], [], []>} : vector<256x8xf32>, vector<8x16xf32>, vector<256x16xf32> -> vector<256x16xf32>
    %c8_120 = arith.constant 8 : index
    %c0_121 = arith.constant 0 : index
    %197 = vector.load %arg5[%c8_120, %c0_121] : memref<16x16xf32, #tpu.memory_space<vmem>>, vector<8x16xf32>
    %cst_122 = arith.constant dense<0.000000e+00> : vector<256x16xf32>
    %198 = tpu.matmul %104, %197, %cst_122 {dimension_numbers = #tpu.dot_dimension_numbers<[1], [0], [0], [1], [0, 0, 1, 1], [], []>} : vector<256x8xf32>, vector<8x16xf32>, vector<256x16xf32> -> vector<256x16xf32>
    %199 = arith.addf %196, %198 : vector<256x16xf32>
    %c0_123 = arith.constant 0 : index
    %c0_124 = arith.constant 0 : index
    %200 = vector.load %arg6[%c0_123, %c0_124] : memref<1x16xf32, #tpu.memory_space<vmem>>, vector<1x16xf32>
    %201 = vector.broadcast %200 : vector<1x16xf32> to vector<256x16xf32>
    %202 = arith.addf %199, %201 : vector<256x16xf32>
    %cst_125 = arith.constant 0.000000e+00 : f32
    %203 = vector.broadcast %cst_125 : f32 to vector<256x16xf32>
    %204 = arith.subf %203, %202 : vector<256x16xf32>
    %205 = math.exp %204 : vector<256x16xf32>
    %cst_126 = arith.constant 1.000000e+00 : f32
    %206 = vector.broadcast %cst_126 : f32 to vector<256x16xf32>
    %207 = arith.addf %206, %205 : vector<256x16xf32>
    %208 = tpu.reciprocal %207 : vector<256x16xf32> -> vector<256x16xf32>
    %209 = arith.mulf %202, %208 : vector<256x16xf32>
    %c0_127 = arith.constant 0 : index
    %c0_128 = arith.constant 0 : index
    %210 = vector.load %arg5[%c0_127, %c0_128] : memref<16x16xf32, #tpu.memory_space<vmem>>, vector<8x16xf32>
    %cst_129 = arith.constant dense<0.000000e+00> : vector<256x16xf32>
    %211 = tpu.matmul %149, %210, %cst_129 {dimension_numbers = #tpu.dot_dimension_numbers<[1], [0], [0], [1], [0, 0, 1, 1], [], []>} : vector<256x8xf32>, vector<8x16xf32>, vector<256x16xf32> -> vector<256x16xf32>
    %c8_130 = arith.constant 8 : index
    %c0_131 = arith.constant 0 : index
    %212 = vector.load %arg5[%c8_130, %c0_131] : memref<16x16xf32, #tpu.memory_space<vmem>>, vector<8x16xf32>
    %cst_132 = arith.constant dense<0.000000e+00> : vector<256x16xf32>
    %213 = tpu.matmul %194, %212, %cst_132 {dimension_numbers = #tpu.dot_dimension_numbers<[1], [0], [0], [1], [0, 0, 1, 1], [], []>} : vector<256x8xf32>, vector<8x16xf32>, vector<256x16xf32> -> vector<256x16xf32>
    %214 = arith.addf %211, %213 : vector<256x16xf32>
    %c0_133 = arith.constant 0 : index
    %c0_134 = arith.constant 0 : index
    %215 = vector.load %arg6[%c0_133, %c0_134] : memref<1x16xf32, #tpu.memory_space<vmem>>, vector<1x16xf32>
    %216 = vector.broadcast %215 : vector<1x16xf32> to vector<256x16xf32>
    %217 = arith.addf %214, %216 : vector<256x16xf32>
    %cst_135 = arith.constant 0.000000e+00 : f32
    %218 = vector.broadcast %cst_135 : f32 to vector<256x16xf32>
    %219 = arith.subf %218, %217 : vector<256x16xf32>
    %220 = math.exp %219 : vector<256x16xf32>
    %cst_136 = arith.constant 1.000000e+00 : f32
    %221 = vector.broadcast %cst_136 : f32 to vector<256x16xf32>
    %222 = arith.addf %221, %220 : vector<256x16xf32>
    %223 = tpu.reciprocal %222 : vector<256x16xf32> -> vector<256x16xf32>
    %224 = arith.mulf %217, %223 : vector<256x16xf32>
    %c0_137 = arith.constant 0 : index
    %c0_138 = arith.constant 0 : index
    %225 = vector.load %arg7[%c0_137, %c0_138] : memref<32x32xf32, #tpu.memory_space<vmem>>, vector<16x32xf32>
    %cst_139 = arith.constant dense<0.000000e+00> : vector<256x32xf32>
    %226 = tpu.matmul %209, %225, %cst_139 {dimension_numbers = #tpu.dot_dimension_numbers<[1], [0], [0], [1], [0, 0, 1, 1], [], []>} : vector<256x16xf32>, vector<16x32xf32>, vector<256x32xf32> -> vector<256x32xf32>
    %c16_140 = arith.constant 16 : index
    %c0_141 = arith.constant 0 : index
    %227 = vector.load %arg7[%c16_140, %c0_141] : memref<32x32xf32, #tpu.memory_space<vmem>>, vector<16x32xf32>
    %cst_142 = arith.constant dense<0.000000e+00> : vector<256x32xf32>
    %228 = tpu.matmul %224, %227, %cst_142 {dimension_numbers = #tpu.dot_dimension_numbers<[1], [0], [0], [1], [0, 0, 1, 1], [], []>} : vector<256x16xf32>, vector<16x32xf32>, vector<256x32xf32> -> vector<256x32xf32>
    %229 = arith.addf %226, %228 : vector<256x32xf32>
    %c0_143 = arith.constant 0 : index
    %c0_144 = arith.constant 0 : index
    %230 = vector.load %arg8[%c0_143, %c0_144] : memref<1x32xf32, #tpu.memory_space<vmem>>, vector<1x32xf32>
    %231 = vector.broadcast %230 : vector<1x32xf32> to vector<256x32xf32>
    %232 = arith.addf %229, %231 : vector<256x32xf32>
    %cst_145 = arith.constant 0.000000e+00 : f32
    %233 = vector.broadcast %cst_145 : f32 to vector<256x32xf32>
    %234 = arith.subf %233, %232 : vector<256x32xf32>
    %235 = math.exp %234 : vector<256x32xf32>
    %cst_146 = arith.constant 1.000000e+00 : f32
    %236 = vector.broadcast %cst_146 : f32 to vector<256x32xf32>
    %237 = arith.addf %236, %235 : vector<256x32xf32>
    %238 = tpu.reciprocal %237 : vector<256x32xf32> -> vector<256x32xf32>
    %239 = arith.mulf %232, %238 : vector<256x32xf32>
    %c0_147 = arith.constant 0 : index
    %c0_148 = arith.constant 0 : index
    %c0_149 = arith.constant 0 : index
    %240 = vector.load %arg9[%c0_147, %c0_148, %c0_149] : memref<1x256x32xf32, #tpu.memory_space<vmem>>, vector<1x256x32xf32>
    %241 = vector.shape_cast %240 : vector<1x256x32xf32> to vector<256x32xf32>
    %242 = vector.shape_cast %239 : vector<256x32xf32> to vector<1x256x32xf32>
    tpu.vector_store %arg9[%c0_147, %c0_148, %c0_149], %242 {strides = array<i32>} : memref<1x256x32xf32, #tpu.memory_space<vmem>>, vector<1x256x32xf32>,
    return
  }
  func.func @transform_0(%arg0: i32, %arg1: i32) -> (i32, i32, i32, i32) {
    %c0_i32 = arith.constant 0 : i32
    %c0_i32_0 = arith.constant 0 : i32
    %c0_i32_1 = arith.constant 0 : i32
    %c0_i32_2 = arith.constant 0 : i32
    return %arg0, %c0_i32, %c0_i32_0, %c0_i32_1 : i32, i32, i32, i32
  }
  func.func @transform_1(%arg0: i32, %arg1: i32) -> (i32, i32, i32) {
    %c0_i32 = arith.constant 0 : i32
    %c0_i32_0 = arith.constant 0 : i32
    %c0_i32_1 = arith.constant 0 : i32
    %c0_i32_2 = arith.constant 0 : i32
    return %c0_i32, %c0_i32_0, %c0_i32_1 : i32, i32, i32
  }
  func.func @transform_2(%arg0: i32, %arg1: i32) -> (i32, i32, i32) {
    %c0_i32 = arith.constant 0 : i32
    %c0_i32_0 = arith.constant 0 : i32
    %c0_i32_1 = arith.constant 0 : i32
    %c0_i32_2 = arith.constant 0 : i32
    return %c0_i32, %c0_i32_0, %c0_i32_1 : i32, i32, i32
  }
  func.func @transform_3(%arg0: i32, %arg1: i32) -> (i32, i32) {
    %c0_i32 = arith.constant 0 : i32
    %c0_i32_0 = arith.constant 0 : i32
    %c0_i32_1 = arith.constant 0 : i32
    return %c0_i32, %c0_i32_0 : i32, i32
  }
  func.func @transform_4(%arg0: i32, %arg1: i32) -> (i32, i32) {
    %c0_i32 = arith.constant 0 : i32
    %c0_i32_0 = arith.constant 0 : i32
    %c0_i32_1 = arith.constant 0 : i32
    return %c0_i32, %c0_i32_0 : i32, i32
  }
  func.func @transform_5(%arg0: i32, %arg1: i32) -> (i32, i32) {
    %c0_i32 = arith.constant 0 : i32
    %c0_i32_0 = arith.constant 0 : i32
    %c0_i32_1 = arith.constant 0 : i32
    return %c0_i32, %c0_i32_0 : i32, i32
  }
  func.func @transform_6(%arg0: i32, %arg1: i32) -> (i32, i32) {
    %c0_i32 = arith.constant 0 : i32
    %c0_i32_0 = arith.constant 0 : i32
    %c0_i32_1 = arith.constant 0 : i32
    return %c0_i32, %c0_i32_0 : i32, i32
  }
  func.func @transform_7(%arg0: i32, %arg1: i32) -> (i32, i32, i32) {
    %c0_i32 = arith.constant 0 : i32
    %c0_i32_0 = arith.constant 0 : i32
    return %arg0, %arg1, %c0_i32 : i32, i32, i32
  }
}

</mosaic_0001>

<llo_original>
// kernel: _lambda_.2
$region0: #{_lambda_.2}
  #allocation0 [shape = 'u32[]', space=smem, size = 0x4, offset = 0x4, fixed_abs, tag = 'smem constant byte address 0x4 - core index']
  #allocation1 [shape = 'u32[144,128]{1,0:T(1,128)}', space=vmem, size = 0x12000, scoped, tag = 'internal scratch']
  %s0 = inlined_call_operand.vmem [shape: f32[512,32], index: 0, kind: input, shape index: {}]
  %s1 = inlined_call_operand.vmem [shape: f32[32,32], index: 1, kind: input, shape index: {}]
  %s2 = inlined_call_operand.vmem [shape: f32[1,32], index: 2, kind: input, shape index: {}]
  %s3 = inlined_call_operand.vmem [shape: f32[512,32], index: 3, kind: output, shape index: {}]
  %s4 = sld [smem:[#allocation0]]
  $region22: #{_lambda_.2} parent=0
    _
  %s6 = ssub.s32 1, %s4
  %s7 = scalar_select 0, %s6, %s4
  // Predicated region
  $region2: #{_lambda_.2} parent=0 // pred_check
    _
  $region3: #{_lambda_.2} parent=0 // pred_check_branch
    %9 = sbr.rel (0) target = $region5
  $region4: #{_lambda_.2} parent=0 // pred_region
    _
  $region5: #{_lambda_.2} parent=0 // pred_fallthru
    _
  // Predicated region
  $region6: #{_lambda_.2} parent=0 // pred_check
    _
  $region7: #{_lambda_.2} parent=0 // pred_check_branch
    %11 = sbr.rel (0) target = $region9
  $region8: #{_lambda_.2} parent=0 // pred_region
    _
  $region9: #{_lambda_.2} parent=0 // pred_fallthru
    _
  // Predicated region
  $region10: #{_lambda_.2} parent=0 // pred_check
    _
  $region11: #{_lambda_.2} parent=0 // pred_check_branch
    %13 = sbr.rel (0) target = $region13
  $region12: #{_lambda_.2} parent=0 // pred_region
    _
  $region13: #{_lambda_.2} parent=0 // pred_fallthru
    _
  %v14 = vld [vmem:[%s0] sm:$0xff]
  %v15 = vld [vmem:[%s0 + $0x8] sm:$0xff]
  %v16 = vld [vmem:[%s0 + $0x10] sm:$0xff]
  %v17 = vld [vmem:[%s0 + $0x18] sm:$0xff]
  %v18 = vld [vmem:[%s0 + $0x20] sm:$0xff]
  %v19 = vld [vmem:[%s0 + $0x28] sm:$0xff]
  %v20 = vld [vmem:[%s0 + $0x30] sm:$0xff]
  %v21 = vld [vmem:[%s0 + $0x38] sm:$0xff]
  %v22 = vld [vmem:[%s0 + $0x40] sm:$0xff]
  %v23 = vld [vmem:[%s0 + $0x48] sm:$0xff]
  %v24 = vld [vmem:[%s0 + $0x50] sm:$0xff]
  %v25 = vld [vmem:[%s0 + $0x58] sm:$0xff]
  %v26 = vld [vmem:[%s0 + $0x60] sm:$0xff]
  %v27 = vld [vmem:[%s0 + $0x68] sm:$0xff]
  %v28 = vld [vmem:[%s0 + $0x70] sm:$0xff]
  %v29 = vld [vmem:[%s0 + $0x78] sm:$0xff]
  %v30 = vld [vmem:[%s0 + $0x80] sm:$0xff]
  %v31 = vld [vmem:[%s0 + $0x88] sm:$0xff]
  %v32 = vld [vmem:[%s0 + $0x90] sm:$0xff]
  %v33 = vld [vmem:[%s0 + $0x98] sm:$0xff]
  %v34 = vld [vmem:[%s0 + $0xa0] sm:$0xff]
  %v35 = vld [vmem:[%s0 + $0xa8] sm:$0xff]
  %v36 = vld [vmem:[%s0 + $0xb0] sm:$0xff]
  %v37 = vld [vmem:[%s0 + $0xb8] sm:$0xff]
  %v38 = vld [vmem:[%s0 + $0xc0] sm:$0xff]
  %v39 = vld [vmem:[%s0 + $0xc8] sm:$0xff]
  %v40 = vld [vmem:[%s0 + $0xd0] sm:$0xff]
  %v41 = vld [vmem:[%s0 + $0xd8] sm:$0xff]
  %v42 = vld [vmem:[%s0 + $0xe0] sm:$0xff]
  %v43 = vld [vmem:[%s0 + $0xe8] sm:$0xff]
  %v44 = vld [vmem:[%s0 + $0xf0] sm:$0xff]
  %v45 = vld [vmem:[%s0 + $0xf8] sm:$0xff]
  %v46 = vld [vmem:[%s0 + $0x100] sm:$0xff]
  %v47 = vld [vmem:[%s0 + $0x108] sm:$0xff]
  %v48 = vld [vmem:[%s0 + $0x110] sm:$0xff]
  %v49 = vld [vmem:[%s0 + $0x118] sm:$0xff]
  %v50 = vld [vmem:[%s0 + $0x120] sm:$0xff]
  %v51 = vld [vmem:[%s0 + $0x128] sm:$0xff]
  %v52 = vld [vmem:[%s0 + $0x130] sm:$0xff]
  %v53 = vld [vmem:[%s0 + $0x138] sm:$0xff]
  %v54 = vld [vmem:[%s0 + $0x140] sm:$0xff]
  %v55 = vld [vmem:[%s0 + $0x148] sm:$0xff]
  %v56 = vld [vmem:[%s0 + $0x150] sm:$0xff]
  %v57 = vld [vmem:[%s0 + $0x158] sm:$0xff]
  %v58 = vld [vmem:[%s0 + $0x160] sm:$0xff]
  %v59 = vld [vmem:[%s0 + $0x168] sm:$0xff]
  %v60 = vld [vmem:[%s0 + $0x170] sm:$0xff]
  %v61 = vld [vmem:[%s0 + $0x178] sm:$0xff]
  %v62 = vld [vmem:[%s0 + $0x180] sm:$0xff]
  %v63 = vld [vmem:[%s0 + $0x188] sm:$0xff]
  %v64 = vld [vmem:[%s0 + $0x190] sm:$0xff]
  %v65 = vld [vmem:[%s0 + $0x198] sm:$0xff]
  %v66 = vld [vmem:[%s0 + $0x1a0] sm:$0xff]
  %v67 = vld [vmem:[%s0 + $0x1a8] sm:$0xff]
  %v68 = vld [vmem:[%s0 + $0x1b0] sm:$0xff]
  %v69 = vld [vmem:[%s0 + $0x1b8] sm:$0xff]
  %v70 = vld [vmem:[%s0 + $0x1c0] sm:$0xff]
  %v71 = vld [vmem:[%s0 + $0x1c8] sm:$0xff]
  %v72 = vld [vmem:[%s0 + $0x1d0] sm:$0xff]
  %v73 = vld [vmem:[%s0 + $0x1d8] sm:$0xff]
  %v74 = vld [vmem:[%s0 + $0x1e0] sm:$0xff]
  %v75 = vld [vmem:[%s0 + $0x1e8] sm:$0xff]
  %v76 = vld [vmem:[%s0 + $0x1f0] sm:$0xff]
  %v77 = vld [vmem:[%s0 + $0x1f8] sm:$0xff]
  %v78 = vld [vmem:[%s1] sm:$0xff]
  %v79 = vld [vmem:[%s1 + $0x8] sm:$0xff]
  %v80 = vld [vmem:[%s1 + $0x10] sm:$0xff]
  %v81 = vld [vmem:[%s1 + $0x18] sm:$0xff]
  %v82 = vld [vmem:[%s2] sm:$0x1]
  %v84 = vlaneseq
  %v85 = vshrl.u32 %v84, 7
  %v86 = vsub.s32 0, %v85
  %v87 = vrot.slane %v82, %v86
  %vm89 = vcmask 261120
  %v91 = vsel %vm89, %v14, 0
  %v94 = vsel %vm89, %v15, 0
  %v97 = vsel %vm89, %v16, 0
  %v100 = vsel %vm89, %v17, 0
  %v103 = vsel %vm89, %v18, 0
  %v106 = vsel %vm89, %v19, 0
  %v109 = vsel %vm89, %v20, 0
  %v112 = vsel %vm89, %v21, 0
  %v115 = vsel %vm89, %v22, 0
  %v118 = vsel %vm89, %v23, 0
  %v121 = vsel %vm89, %v24, 0
  %v124 = vsel %vm89, %v25, 0
  %v127 = vsel %vm89, %v26, 0
  %v130 = vsel %vm89, %v27, 0
  %v133 = vsel %vm89, %v28, 0
  %v136 = vsel %vm89, %v29, 0
  %v139 = vsel %vm89, %v30, 0
  %v142 = vsel %vm89, %v31, 0
  %v145 = vsel %vm89, %v32, 0
  %v148 = vsel %vm89, %v33, 0
  %v151 = vsel %vm89, %v34, 0
  %v154 = vsel %vm89, %v35, 0
  %v157 = vsel %vm89, %v36, 0
  %v160 = vsel %vm89, %v37, 0
  %v163 = vsel %vm89, %v38, 0
  %v166 = vsel %vm89, %v39, 0
  %v169 = vsel %vm89, %v40, 0
  %v172 = vsel %vm89, %v41, 0
  %v175 = vsel %vm89, %v42, 0
  %v178 = vsel %vm89, %v43, 0
  %v181 = vsel %vm89, %v44, 0
  %v184 = vsel %vm89, %v45, 0
  %v187 = vsel %vm89, %v46, 0
  %v190 = vsel %vm89, %v47, 0
  %v193 = vsel %vm89, %v48, 0
  %v196 = vsel %vm89, %v49, 0
  %v199 = vsel %vm89, %v50, 0
  %v202 = vsel %vm89, %v51, 0
  %v205 = vsel %vm89, %v52, 0
  %v208 = vsel %vm89, %v53, 0
  %v211 = vsel %vm89, %v54, 0
  %v214 = vsel %vm89, %v55, 0
  %v217 = vsel %vm89, %v56, 0
  %v220 = vsel %vm89, %v57, 0
  %v223 = vsel %vm89, %v58, 0
  %v226 = vsel %vm89, %v59, 0
  %v229 = vsel %vm89, %v60, 0
  %v232 = vsel %vm89, %v61, 0
  %v235 = vsel %vm89, %v62, 0
  %v238 = vsel %vm89, %v63, 0
  %v241 = vsel %vm89, %v64, 0
  %v244 = vsel %vm89, %v65, 0
  %v247 = vsel %vm89, %v66, 0
  %v250 = vsel %vm89, %v67, 0
  %v253 = vsel %vm89, %v68, 0
  %v256 = vsel %vm89, %v69, 0
  %v259 = vsel %vm89, %v70, 0
  %v262 = vsel %vm89, %v71, 0
  %v265 = vsel %vm89, %v72, 0
  %v268 = vsel %vm89, %v73, 0
  %v271 = vsel %vm89, %v74, 0
  %v274 = vsel %vm89, %v75, 0
  %v277 = vsel %vm89, %v76, 0
  %v280 = vsel %vm89, %v77, 0
  %282 = vmatprep.subr.mxu0 0.0
  %283 = vmatpush1.msra.mxu0 0.0
  %284 = vmatprep.subr.mxu0 0.0
  %285 = vmatpush1.msra.mxu0 0.0
  %286 = vmatprep.subr.mxu0 0.0
  %287 = vmatpush1.msra.mxu0 0.0
  %288 = vmatprep.subr.mxu0 0.0
  %289 = vmatpush1.msra.mxu0 0.0
  %290 = vmatprep.subr.mxu0 0.0
  %291 = vmatpush1.msra.mxu0 0.0
  %292 = vmatprep.subr.mxu0 0.0
  %293 = vmatpush1.msra.mxu0 0.0
  %294 = vmatprep.subr.mxu0 0.0
  %295 = vmatpush1.msra.mxu0 0.0
  %296 = vmatprep.subr.mxu0 0.0
  %297 = vmatpush1.msra.mxu0 0.0
  %298 = vmatprep.subr.mxu0 0.0
  %299 = vmatpush1.msra.mxu0 0.0
  %300 = vmatprep.subr.mxu0 0.0
  %301 = vmatpush1.msra.mxu0 0.0
  %302 = vmatprep.subr.mxu0 0.0
  %303 = vmatpush1.msra.mxu0 0.0
  %304 = vmatprep.subr.mxu0 0.0
  %305 = vmatpush1.msra.mxu0 0.0
  %306 = vmatprep.subr.mxu0 0.0
  %307 = vmatpush1.msra.mxu0 %v81
  %308 = vmatprep.subr.mxu0 0.0
  %309 = vmatpush1.msra.mxu0 %v80
  %310 = vmatprep.subr.mxu0 0.0
  %311 = vmatpush1.msra.mxu0 %v79
  %312 = vmatprep.subr.mxu0 0.0
  %313 = vmatpush1.msra.mxu0 %v78
  %314 = vmatprep.subr.mxu0 0.0
  %315 = vmatpush2.msra.mxu0 0.0
  %316 = vmatprep.subr.mxu0 0.0
  %317 = vmatpush2.msra.mxu0 0.0
  %318 = vmatprep.subr.mxu0 0.0
  %319 = vmatpush2.msra.mxu0 0.0
  %320 = vmatprep.subr.mxu0 0.0
  %321 = vmatpush2.msra.mxu0 0.0
  %322 = vmatprep.subr.mxu0 0.0
  %323 = vmatpush2.msra.mxu0 0.0
  %324 = vmatprep.subr.mxu0 0.0
  %325 = vmatpush2.msra.mxu0 0.0
  %326 = vmatprep.subr.mxu0 0.0
  %327 = vmatpush2.msra.mxu0 0.0
  %328 = vmatprep.subr.mxu0 0.0
  %329 = vmatpush2.msra.mxu0 0.0
  %330 = vmatprep.subr.mxu0 0.0
  %331 = vmatpush2.msra.mxu0 0.0
  %332 = vmatprep.subr.mxu0 0.0
  %333 = vmatpush2.msra.mxu0 0.0
  %334 = vmatprep.subr.mxu0 0.0
  %335 = vmatpush2.msra.mxu0 0.0
  %336 = vmatprep.subr.mxu0 0.0
  %337 = vmatpush2.msra.mxu0 0.0
  %338 = vmatprep.subr.mxu0 0.0
  %339 = vmatpush2.msra.mxu0 0.0
  %340 = vmatprep.subr.mxu0 0.0
  %341 = vmatpush2.msra.mxu0 0.0
  %342 = vmatprep.subr.mxu0 0.0
  %343 = vmatpush2.msra.mxu0 0.0
  %344 = vmatprep.subr.mxu0 0.0
  %345 = vmatpush2.msra.mxu0 0.0
  %346 = vmatprep.mubr.f32.mxu0 0.0
  %347 = vmatmul.mubr.f32.gmra.mxu0 %v91
  %v348 = vpop.f32.mrf.mxu0
  %v349 = vadd.f32 %v87, %v348
  %v350 = vpop.f32.mrf.mxu0
  %351 = vmatprep.mubr.f32.mxu0 0.0
  %352 = vmatmul.mubr.f32.gmra.mxu0 %v94
  %v353 = vpop.f32.mrf.mxu0
  %v354 = vadd.f32 %v87, %v353
  %v355 = vpop.f32.mrf.mxu0
  %356 = vmatprep.mubr.f32.mxu0 0.0
  %357 = vmatmul.mubr.f32.gmra.mxu0 %v97
  %v358 = vpop.f32.mrf.mxu0
  %v359 = vadd.f32 %v87, %v358
  %v360 = vpop.f32.mrf.mxu0
  %361 = vmatprep.mubr.f32.mxu0 0.0
  %362 = vmatmul.mubr.f32.gmra.mxu0 %v100
  %v363 = vpop.f32.mrf.mxu0
  %v364 = vadd.f32 %v87, %v363
  %v365 = vpop.f32.mrf.mxu0
  %366 = vmatprep.mubr.f32.mxu0 0.0
  %367 = vmatmul.mubr.f32.gmra.mxu0 %v103
  %v368 = vpop.f32.mrf.mxu0
  %v369 = vadd.f32 %v87, %v368
  %v370 = vpop.f32.mrf.mxu0
  %371 = vmatprep.mubr.f32.mxu0 0.0
  %372 = vmatmul.mubr.f32.gmra.mxu0 %v106
  %v373 = vpop.f32.mrf.mxu0
  %v374 = vadd.f32 %v87, %v373
  %v375 = vpop.f32.mrf.mxu0
  %376 = vmatprep.mubr.f32.mxu0 0.0
  %377 = vmatmul.mubr.f32.gmra.mxu0 %v109
  %v378 = vpop.f32.mrf.mxu0
  %v379 = vadd.f32 %v87, %v378
  %v380 = vpop.f32.mrf.mxu0
  %381 = vmatprep.mubr.f32.mxu0 0.0
  %382 = vmatmul.mubr.f32.gmra.mxu0 %v112
  %v383 = vpop.f32.mrf.mxu0
  %v384 = vadd.f32 %v87, %v383
  %v385 = vpop.f32.mrf.mxu0
  %386 = vmatprep.mubr.f32.mxu0 0.0
  %387 = vmatmul.mubr.f32.gmra.mxu0 %v115
  %v388 = vpop.f32.mrf.mxu0
  %v389 = vadd.f32 %v87, %v388
  %v390 = vpop.f32.mrf.mxu0
  %391 = vmatprep.mubr.f32.mxu0 0.0
  %392 = vmatmul.mubr.f32.gmra.mxu0 %v118
  %v393 = vpop.f32.mrf.mxu0
  %v394 = vadd.f32 %v87, %v393
  %v395 = vpop.f32.mrf.mxu0
  %396 = vmatprep.mubr.f32.mxu0 0.0
  %397 = vmatmul.mubr.f32.gmra.mxu0 %v121
  %v398 = vpop.f32.mrf.mxu0
  %v399 = vadd.f32 %v87, %v398
  %v400 = vpop.f32.mrf.mxu0
  %401 = vmatprep.mubr.f32.mxu0 0.0
  %402 = vmatmul.mubr.f32.gmra.mxu0 %v124
  %v403 = vpop.f32.mrf.mxu0
  %v404 = vadd.f32 %v87, %v403
  %v405 = vpop.f32.mrf.mxu0
  %406 = vmatprep.mubr.f32.mxu0 0.0
  %407 = vmatmul.mubr.f32.gmra.mxu0 %v127
  %v408 = vpop.f32.mrf.mxu0
  %v409 = vadd.f32 %v87, %v408
  %v410 = vpop.f32.mrf.mxu0
  %411 = vmatprep.mubr.f32.mxu0 0.0
  %412 = vmatmul.mubr.f32.gmra.mxu0 %v130
  %v413 = vpop.f32.mrf.mxu0
  %v414 = vadd.f32 %v87, %v413
  %v415 = vpop.f32.mrf.mxu0
  %416 = vmatprep.mubr.f32.mxu0 0.0
  %417 = vmatmul.mubr.f32.gmra.mxu0 %v133
  %v418 = vpop.f32.mrf.mxu0
  %v419 = vadd.f32 %v87, %v418
  %v420 = vpop.f32.mrf.mxu0
  %421 = vmatprep.mubr.f32.mxu0 0.0
  %422 = vmatmul.mubr.f32.gmra.mxu0 %v136
  %v423 = vpop.f32.mrf.mxu0
  %v424 = vadd.f32 %v87, %v423
  %v425 = vpop.f32.mrf.mxu0
  %426 = vmatprep.mubr.f32.mxu0 0.0
  %427 = vmatmul.mubr.f32.gmra.mxu0 %v139
  %v428 = vpop.f32.mrf.mxu0
  %v429 = vadd.f32 %v87, %v428
  %v430 = vpop.f32.mrf.mxu0
  %431 = vmatprep.mubr.f32.mxu0 0.0
  %432 = vmatmul.mubr.f32.gmra.mxu0 %v142
  %v433 = vpop.f32.mrf.mxu0
  %v434 = vadd.f32 %v87, %v433
  %v435 = vpop.f32.mrf.mxu0
  %436 = vmatprep.mubr.f32.mxu0 0.0
  %437 = vmatmul.mubr.f32.gmra.mxu0 %v145
  %v438 = vpop.f32.mrf.mxu0
  %v439 = vadd.f32 %v87, %v438
  %v440 = vpop.f32.mrf.mxu0
  %441 = vmatprep.mubr.f32.mxu0 0.0
  %442 = vmatmul.mubr.f32.gmra.mxu0 %v148
  %v443 = vpop.f32.mrf.mxu0
  %v444 = vadd.f32 %v87, %v443
  %v445 = vpop.f32.mrf.mxu0
  %446 = vmatprep.mubr.f32.mxu0 0.0
  %447 = vmatmul.mubr.f32.gmra.mxu0 %v151
  %v448 = vpop.f32.mrf.mxu0
  %v449 = vadd.f32 %v87, %v448
  %v450 = vpop.f32.mrf.mxu0
  %451 = vmatprep.mubr.f32.mxu0 0.0
  %452 = vmatmul.mubr.f32.gmra.mxu0 %v154
  %v453 = vpop.f32.mrf.mxu0
  %v454 = vadd.f32 %v87, %v453
  %v455 = vpop.f32.mrf.mxu0
  %456 = vmatprep.mubr.f32.mxu0 0.0
  %457 = vmatmul.mubr.f32.gmra.mxu0 %v157
  %v458 = vpop.f32.mrf.mxu0
  %v459 = vadd.f32 %v87, %v458
  %v460 = vpop.f32.mrf.mxu0
  %461 = vmatprep.mubr.f32.mxu0 0.0
  %462 = vmatmul.mubr.f32.gmra.mxu0 %v160
  %v463 = vpop.f32.mrf.mxu0
  %v464 = vadd.f32 %v87, %v463
  %v465 = vpop.f32.mrf.mxu0
  %466 = vmatprep.mubr.f32.mxu0 0.0
  %467 = vmatmul.mubr.f32.gmra.mxu0 %v163
  %v468 = vpop.f32.mrf.mxu0
  %v469 = vadd.f32 %v87, %v468
  %v470 = vpop.f32.mrf.mxu0
  %471 = vmatprep.mubr.f32.mxu0 0.0
  %472 = vmatmul.mubr.f32.gmra.mxu0 %v166
  %v473 = vpop.f32.mrf.mxu0
  %v474 = vadd.f32 %v87, %v473
  %v475 = vpop.f32.mrf.mxu0
  %476 = vmatprep.mubr.f32.mxu0 0.0
  %477 = vmatmul.mubr.f32.gmra.mxu0 %v169
  %v478 = vpop.f32.mrf.mxu0
  %v479 = vadd.f32 %v87, %v478
  %v480 = vpop.f32.mrf.mxu0
  %481 = vmatprep.mubr.f32.mxu0 0.0
  %482 = vmatmul.mubr.f32.gmra.mxu0 %v172
  %v483 = vpop.f32.mrf.mxu0
  %v484 = vadd.f32 %v87, %v483
  %v485 = vpop.f32.mrf.mxu0
  %486 = vmatprep.mubr.f32.mxu0 0.0
  %487 = vmatmul.mubr.f32.gmra.mxu0 %v175
  %v488 = vpop.f32.mrf.mxu0
  %v489 = vadd.f32 %v87, %v488
  %v490 = vpop.f32.mrf.mxu0
  %491 = vmatprep.mubr.f32.mxu0 0.0
  %492 = vmatmul.mubr.f32.gmra.mxu0 %v178
  %v493 = vpop.f32.mrf.mxu0
  %v494 = vadd.f32 %v87, %v493
  %v495 = vpop.f32.mrf.mxu0
  %496 = vmatprep.mubr.f32.mxu0 0.0
  %497 = vmatmul.mubr.f32.gmra.mxu0 %v181
  %v498 = vpop.f32.mrf.mxu0
  %v499 = vadd.f32 %v87, %v498
  %v500 = vpop.f32.mrf.mxu0
  %501 = vmatprep.mubr.f32.mxu0 0.0
  %502 = vmatmul.mubr.f32.gmra.mxu0 %v184
  %v503 = vpop.f32.mrf.mxu0
  %v504 = vadd.f32 %v87, %v503
  %v505 = vpop.f32.mrf.mxu0
  %506 = vmatprep.mubr.f32.mxu0 0.0
  %507 = vmatmul.mubr.f32.gmra.mxu0 %v187
  %v508 = vpop.f32.mrf.mxu0
  %v509 = vadd.f32 %v87, %v508
  %v510 = vpop.f32.mrf.mxu0
  %511 = vmatprep.mubr.f32.mxu0 0.0
  %512 = vmatmul.mubr.f32.gmra.mxu0 %v190
  %v513 = vpop.f32.mrf.mxu0
  %v514 = vadd.f32 %v87, %v513
  %v515 = vpop.f32.mrf.mxu0
  %516 = vmatprep.mubr.f32.mxu0 0.0
  %517 = vmatmul.mubr.f32.gmra.mxu0 %v193
  %v518 = vpop.f32.mrf.mxu0
  %v519 = vadd.f32 %v87, %v518
  %v520 = vpop.f32.mrf.mxu0
  %521 = vmatprep.mubr.f32.mxu0 0.0
  %522 = vmatmul.mubr.f32.gmra.mxu0 %v196
  %v523 = vpop.f32.mrf.mxu0
  %v524 = vadd.f32 %v87, %v523
  %v525 = vpop.f32.mrf.mxu0
  %526 = vmatprep.mubr.f32.mxu0 0.0
  %527 = vmatmul.mubr.f32.gmra.mxu0 %v199
  %v528 = vpop.f32.mrf.mxu0
  %v529 = vadd.f32 %v87, %v528
  %v530 = vpop.f32.mrf.mxu0
  %531 = vmatprep.mubr.f32.mxu0 0.0
  %532 = vmatmul.mubr.f32.gmra.mxu0 %v202
  %v533 = vpop.f32.mrf.mxu0
  %v534 = vadd.f32 %v87, %v533
  %v535 = vpop.f32.mrf.mxu0
  %536 = vmatprep.mubr.f32.mxu0 0.0
  %537 = vmatmul.mubr.f32.gmra.mxu0 %v205
  %v538 = vpop.f32.mrf.mxu0
  %v539 = vadd.f32 %v87, %v538
  %v540 = vpop.f32.mrf.mxu0
  %541 = vmatprep.mubr.f32.mxu0 0.0
  %542 = vmatmul.mubr.f32.gmra.mxu0 %v208
  %v543 = vpop.f32.mrf.mxu0
  %v544 = vadd.f32 %v87, %v543
  %v545 = vpop.f32.mrf.mxu0
  %546 = vmatprep.mubr.f32.mxu0 0.0
  %547 = vmatmul.mubr.f32.gmra.mxu0 %v211
  %v548 = vpop.f32.mrf.mxu0
  %v549 = vadd.f32 %v87, %v548
  %v550 = vpop.f32.mrf.mxu0
  %551 = vmatprep.mubr.f32.mxu0 0.0
  %552 = vmatmul.mubr.f32.gmra.mxu0 %v214
  %v553 = vpop.f32.mrf.mxu0
  %v554 = vadd.f32 %v87, %v553
  %v555 = vpop.f32.mrf.mxu0
  %556 = vmatprep.mubr.f32.mxu0 0.0
  %557 = vmatmul.mubr.f32.gmra.mxu0 %v217
  %v558 = vpop.f32.mrf.mxu0
  %v559 = vadd.f32 %v87, %v558
  %v560 = vpop.f32.mrf.mxu0
  %561 = vmatprep.mubr.f32.mxu0 0.0
  %562 = vmatmul.mubr.f32.gmra.mxu0 %v220
  %v563 = vpop.f32.mrf.mxu0
  %v564 = vadd.f32 %v87, %v563
  %v565 = vpop.f32.mrf.mxu0
  %566 = vmatprep.mubr.f32.mxu0 0.0
  %567 = vmatmul.mubr.f32.gmra.mxu0 %v223
  %v568 = vpop.f32.mrf.mxu0
  %v569 = vadd.f32 %v87, %v568
  %v570 = vpop.f32.mrf.mxu0
  %571 = vmatprep.mubr.f32.mxu0 0.0
  %572 = vmatmul.mubr.f32.gmra.mxu0 %v226
  %v573 = vpop.f32.mrf.mxu0
  %v574 = vadd.f32 %v87, %v573
  %v575 = vpop.f32.mrf.mxu0
  %576 = vmatprep.mubr.f32.mxu0 0.0
  %577 = vmatmul.mubr.f32.gmra.mxu0 %v229
  %v578 = vpop.f32.mrf.mxu0
  %v579 = vadd.f32 %v87, %v578
  %v580 = vpop.f32.mrf.mxu0
  %581 = vmatprep.mubr.f32.mxu0 0.0
  %582 = vmatmul.mubr.f32.gmra.mxu0 %v232
  %v583 = vpop.f32.mrf.mxu0
  %v584 = vadd.f32 %v87, %v583
  %v585 = vpop.f32.mrf.mxu0
  %586 = vmatprep.mubr.f32.mxu0 0.0
  %587 = vmatmul.mubr.f32.gmra.mxu0 %v235
  %v588 = vpop.f32.mrf.mxu0
  %v589 = vadd.f32 %v87, %v588
  %v590 = vpop.f32.mrf.mxu0
  %591 = vmatprep.mubr.f32.mxu0 0.0
  %592 = vmatmul.mubr.f32.gmra.mxu0 %v238
  %v593 = vpop.f32.mrf.mxu0
  %v594 = vadd.f32 %v87, %v593
  %v595 = vpop.f32.mrf.mxu0
  %596 = vmatprep.mubr.f32.mxu0 0.0
  %597 = vmatmul.mubr.f32.gmra.mxu0 %v241
  %v598 = vpop.f32.mrf.mxu0
  %v599 = vadd.f32 %v87, %v598
  %v600 = vpop.f32.mrf.mxu0
  %601 = vmatprep.mubr.f32.mxu0 0.0
  %602 = vmatmul.mubr.f32.gmra.mxu0 %v244
  %v603 = vpop.f32.mrf.mxu0
  %v604 = vadd.f32 %v87, %v603
  %v605 = vpop.f32.mrf.mxu0
  %606 = vmatprep.mubr.f32.mxu0 0.0
  %607 = vmatmul.mubr.f32.gmra.mxu0 %v247
  %v608 = vpop.f32.mrf.mxu0
  %v609 = vadd.f32 %v87, %v608
  %v610 = vpop.f32.mrf.mxu0
  %611 = vmatprep.mubr.f32.mxu0 0.0
  %612 = vmatmul.mubr.f32.gmra.mxu0 %v250
  %v613 = vpop.f32.mrf.mxu0
  %v614 = vadd.f32 %v87, %v613
  %v615 = vpop.f32.mrf.mxu0
  %616 = vmatprep.mubr.f32.mxu0 0.0
  %617 = vmatmul.mubr.f32.gmra.mxu0 %v253
  %v618 = vpop.f32.mrf.mxu0
  %v619 = vadd.f32 %v87, %v618
  %v620 = vpop.f32.mrf.mxu0
  %621 = vmatprep.mubr.f32.mxu0 0.0
  %622 = vmatmul.mubr.f32.gmra.mxu0 %v256
  %v623 = vpop.f32.mrf.mxu0
  %v624 = vadd.f32 %v87, %v623
  %v625 = vpop.f32.mrf.mxu0
  %626 = vmatprep.mubr.f32.mxu0 0.0
  %627 = vmatmul.mubr.f32.gmra.mxu0 %v259
  %v628 = vpop.f32.mrf.mxu0
  %v629 = vadd.f32 %v87, %v628
  %v630 = vpop.f32.mrf.mxu0
  %631 = vmatprep.mubr.f32.mxu0 0.0
  %632 = vmatmul.mubr.f32.gmra.mxu0 %v262
  %v633 = vpop.f32.mrf.mxu0
  %v634 = vadd.f32 %v87, %v633
  %v635 = vpop.f32.mrf.mxu0
  %636 = vmatprep.mubr.f32.mxu0 0.0
  %637 = vmatmul.mubr.f32.gmra.mxu0 %v265
  %v638 = vpop.f32.mrf.mxu0
  %v639 = vadd.f32 %v87, %v638
  %v640 = vpop.f32.mrf.mxu0
  %641 = vmatprep.mubr.f32.mxu0 0.0
  %642 = vmatmul.mubr.f32.gmra.mxu0 %v268
  %v643 = vpop.f32.mrf.mxu0
  %v644 = vadd.f32 %v87, %v643
  %v645 = vpop.f32.mrf.mxu0
  %646 = vmatprep.mubr.f32.mxu0 0.0
  %647 = vmatmul.mubr.f32.gmra.mxu0 %v271
  %v648 = vpop.f32.mrf.mxu0
  %v649 = vadd.f32 %v87, %v648
  %v650 = vpop.f32.mrf.mxu0
  %651 = vmatprep.mubr.f32.mxu0 0.0
  %652 = vmatmul.mubr.f32.gmra.mxu0 %v274
  %v653 = vpop.f32.mrf.mxu0
  %v654 = vadd.f32 %v87, %v653
  %v655 = vpop.f32.mrf.mxu0
  %656 = vmatprep.mubr.f32.mxu0 0.0
  %657 = vmatmul.mubr.f32.gmra.mxu0 %v277
  %v658 = vpop.f32.mrf.mxu0
  %v659 = vadd.f32 %v87, %v658
  %v660 = vpop.f32.mrf.mxu0
  %661 = vmatprep.mubr.f32.mxu0 0.0
  %662 = vmatmul.mubr.f32.gmra.mxu0 %v280
  %v663 = vpop.f32.mrf.mxu0
  %v664 = vadd.f32 %v87, %v663
  %v665 = vpop.f32.mrf.mxu0
  %666 = vdwg.mxu0
  %v667 = vsub.f32 0.0, %v349
  %v668 = vsub.f32 0.0, %v354
  %v669 = vsub.f32 0.0, %v359
  %v670 = vsub.f32 0.0, %v364
  %v671 = vsub.f32 0.0, %v369
  %v672 = vsub.f32 0.0, %v374
  %v673 = vsub.f32 0.0, %v379
  %v674 = vsub.f32 0.0, %v384
  %v675 = vsub.f32 0.0, %v389
  %v676 = vsub.f32 0.0, %v394
  %v677 = vsub.f32 0.0, %v399
  %v678 = vsub.f32 0.0, %v404
  %v679 = vsub.f32 0.0, %v409
  %v680 = vsub.f32 0.0, %v414
  %v681 = vsub.f32 0.0, %v419
  %v682 = vsub.f32 0.0, %v424
  %v683 = vsub.f32 0.0, %v429
  %v684 = vsub.f32 0.0, %v434
  %v685 = vsub.f32 0.0, %v439
  %v686 = vsub.f32 0.0, %v444
  %v687 = vsub.f32 0.0, %v449
  %v688 = vsub.f32 0.0, %v454
  %v689 = vsub.f32 0.0, %v459
  %v690 = vsub.f32 0.0, %v464
  %v691 = vsub.f32 0.0, %v469
  %v692 = vsub.f32 0.0, %v474
  %v693 = vsub.f32 0.0, %v479
  %v694 = vsub.f32 0.0, %v484
  %v695 = vsub.f32 0.0, %v489
  %v696 = vsub.f32 0.0, %v494
  %v697 = vsub.f32 0.0, %v499
  %v698 = vsub.f32 0.0, %v504
  %v699 = vsub.f32 0.0, %v509
  %v700 = vsub.f32 0.0, %v514
  %v701 = vsub.f32 0.0, %v519
  %v702 = vsub.f32 0.0, %v524
  %v703 = vsub.f32 0.0, %v529
  %v704 = vsub.f32 0.0, %v534
  %v705 = vsub.f32 0.0, %v539
  %v706 = vsub.f32 0.0, %v544
  %v707 = vsub.f32 0.0, %v549
  %v708 = vsub.f32 0.0, %v554
  %v709 = vsub.f32 0.0, %v559
  %v710 = vsub.f32 0.0, %v564
  %v711 = vsub.f32 0.0, %v569
  %v712 = vsub.f32 0.0, %v574
  %v713 = vsub.f32 0.0, %v579
  %v714 = vsub.f32 0.0, %v584
  %v715 = vsub.f32 0.0, %v589
  %v716 = vsub.f32 0.0, %v594
  %v717 = vsub.f32 0.0, %v599
  %v718 = vsub.f32 0.0, %v604
  %v719 = vsub.f32 0.0, %v609
  %v720 = vsub.f32 0.0, %v614
  %v721 = vsub.f32 0.0, %v619
  %v722 = vsub.f32 0.0, %v624
  %v723 = vsub.f32 0.0, %v629
  %v724 = vsub.f32 0.0, %v634
  %v725 = vsub.f32 0.0, %v639
  %v726 = vsub.f32 0.0, %v644
  %v727 = vsub.f32 0.0, %v649
  %v728 = vsub.f32 0.0, %v654
  %v729 = vsub.f32 0.0, %v659
  %v730 = vsub.f32 0.0, %v664
  %v731 = vmul.f32 %v667, 1.442695
  %v732 = vpow.pop %v731
  %v733 = vmul.f32 %v668, 1.442695
  %v734 = vpow.pop %v733
  %v735 = vmul.f32 %v669, 1.442695
  %v736 = vpow.pop %v735
  %v737 = vmul.f32 %v670, 1.442695
  %v738 = vpow.pop %v737
  %v739 = vmul.f32 %v671, 1.442695
  %v740 = vpow.pop %v739
  %v741 = vmul.f32 %v672, 1.442695
  %v742 = vpow.pop %v741
  %v743 = vmul.f32 %v673, 1.442695
  %v744 = vpow.pop %v743
  %v745 = vmul.f32 %v674, 1.442695
  %v746 = vpow.pop %v745
  %v747 = vmul.f32 %v675, 1.442695
  %v748 = vpow.pop %v747
  %v749 = vmul.f32 %v676, 1.442695
  %v750 = vpow.pop %v749
  %v751 = vmul.f32 %v677, 1.442695
  %v752 = vpow.pop %v751
  %v753 = vmul.f32 %v678, 1.442695
  %v754 = vpow.pop %v753
  %v755 = vmul.f32 %v679, 1.442695
  %v756 = vpow.pop %v755
  %v757 = vmul.f32 %v680, 1.442695
  %v758 = vpow.pop %v757
  %v759 = vmul.f32 %v681, 1.442695
  %v760 = vpow.pop %v759
  %v761 = vmul.f32 %v682, 1.442695
  %v762 = vpow.pop %v761
  %v763 = vmul.f32 %v683, 1.442695
  %v764 = vpow.pop %v763
  %v765 = vmul.f32 %v684, 1.442695
  %v766 = vpow.pop %v765
  %v767 = vmul.f32 %v685, 1.442695
  %v768 = vpow.pop %v767
  %v769 = vmul.f32 %v686, 1.442695
  %v770 = vpow.pop %v769
  %v771 = vmul.f32 %v687, 1.442695
  %v772 = vpow.pop %v771
  %v773 = vmul.f32 %v688, 1.442695
  %v774 = vpow.pop %v773
  %v775 = vmul.f32 %v689, 1.442695
  %v776 = vpow.pop %v775
  %v777 = vmul.f32 %v690, 1.442695
  %v778 = vpow.pop %v777
  %v779 = vmul.f32 %v691, 1.442695
  %v780 = vpow.pop %v779
  %v781 = vmul.f32 %v692, 1.442695
  %v782 = vpow.pop %v781
  %v783 = vmul.f32 %v693, 1.442695
  %v784 = vpow.pop %v783
  %v785 = vmul.f32 %v694, 1.442695
  %v786 = vpow.pop %v785
  %v787 = vmul.f32 %v695, 1.442695
  %v788 = vpow.pop %v787
  %v789 = vmul.f32 %v696, 1.442695
  %v790 = vpow.pop %v789
  %v791 = vmul.f32 %v697, 1.442695
  %v792 = vpow.pop %v791
  %v793 = vmul.f32 %v698, 1.442695
  %v794 = vpow.pop %v793
  %v795 = vmul.f32 %v699, 1.442695
  %v796 = vpow.pop %v795
  %v797 = vmul.f32 %v700, 1.442695
  %v798 = vpow.pop %v797
  %v799 = vmul.f32 %v701, 1.442695
  %v800 = vpow.pop %v799
  %v801 = vmul.f32 %v702, 1.442695
  %v802 = vpow.pop %v801
  %v803 = vmul.f32 %v703, 1.442695
  %v804 = vpow.pop %v803
  %v805 = vmul.f32 %v704, 1.442695
  %v806 = vpow.pop %v805
  %v807 = vmul.f32 %v705, 1.442695
  %v808 = vpow.pop %v807
  %v809 = vmul.f32 %v706, 1.442695
  %v810 = vpow.pop %v809
  %v811 = vmul.f32 %v707, 1.442695
  %v812 = vpow.pop %v811
  %v813 = vmul.f32 %v708, 1.442695
  %v814 = vpow.pop %v813
  %v815 = vmul.f32 %v709, 1.442695
  %v816 = vpow.pop %v815
  %v817 = vmul.f32 %v710, 1.442695
  %v818 = vpow.pop %v817
  %v819 = vmul.f32 %v711, 1.442695
  %v820 = vpow.pop %v819
  %v821 = vmul.f32 %v712, 1.442695
  %v822 = vpow.pop %v821
  %v823 = vmul.f32 %v713, 1.442695
  %v824 = vpow.pop %v823
  %v825 = vmul.f32 %v714, 1.442695
  %v826 = vpow.pop %v825
  %v827 = vmul.f32 %v715, 1.442695
  %v828 = vpow.pop %v827
  %v829 = vmul.f32 %v716, 1.442695
  %v830 = vpow.pop %v829
  %v831 = vmul.f32 %v717, 1.442695
  %v832 = vpow.pop %v831
  %v833 = vmul.f32 %v718, 1.442695
  %v834 = vpow.pop %v833
  %v835 = vmul.f32 %v719, 1.442695
  %v836 = vpow.pop %v835
  %v837 = vmul.f32 %v720, 1.442695
  %v838 = vpow.pop %v837
  %v839 = vmul.f32 %v721, 1.442695
  %v840 = vpow.pop %v839
  %v841 = vmul.f32 %v722, 1.442695
  %v842 = vpow.pop %v841
  %v843 = vmul.f32 %v723, 1.442695
  %v844 = vpow.pop %v843
  %v845 = vmul.f32 %v724, 1.442695
  %v846 = vpow.pop %v845
  %v847 = vmul.f32 %v725, 1.442695
  %v848 = vpow.pop %v847
  %v849 = vmul.f32 %v726, 1.442695
  %v850 = vpow.pop %v849
  %v851 = vmul.f32 %v727, 1.442695
  %v852 = vpow.pop %v851
  %v853 = vmul.f32 %v728, 1.442695
  %v854 = vpow.pop %v853
  %v855 = vmul.f32 %v729, 1.442695
  %v856 = vpow.pop %v855
  %v857 = vmul.f32 %v730, 1.442695
  %v858 = vpow.pop %v857
  %v859 = vadd.f32 %v732, 1.0
  %v860 = vadd.f32 %v734, 1.0
  %v861 = vadd.f32 %v736, 1.0
  %v862 = vadd.f32 %v738, 1.0
  %v863 = vadd.f32 %v740, 1.0
  %v864 = vadd.f32 %v742, 1.0
  %v865 = vadd.f32 %v744, 1.0
  %v866 = vadd.f32 %v746, 1.0
  %v867 = vadd.f32 %v748, 1.0
  %v868 = vadd.f32 %v750, 1.0
  %v869 = vadd.f32 %v752, 1.0
  %v870 = vadd.f32 %v754, 1.0
  %v871 = vadd.f32 %v756, 1.0
  %v872 = vadd.f32 %v758, 1.0
  %v873 = vadd.f32 %v760, 1.0
  %v874 = vadd.f32 %v762, 1.0
  %v875 = vadd.f32 %v764, 1.0
  %v876 = vadd.f32 %v766, 1.0
  %v877 = vadd.f32 %v768, 1.0
  %v878 = vadd.f32 %v770, 1.0
  %v879 = vadd.f32 %v772, 1.0
  %v880 = vadd.f32 %v774, 1.0
  %v881 = vadd.f32 %v776, 1.0
  %v882 = vadd.f32 %v778, 1.0
  %v883 = vadd.f32 %v780, 1.0
  %v884 = vadd.f32 %v782, 1.0
  %v885 = vadd.f32 %v784, 1.0
  %v886 = vadd.f32 %v786, 1.0
  %v887 = vadd.f32 %v788, 1.0
  %v888 = vadd.f32 %v790, 1.0
  %v889 = vadd.f32 %v792, 1.0
  %v890 = vadd.f32 %v794, 1.0
  %v891 = vadd.f32 %v796, 1.0
  %v892 = vadd.f32 %v798, 1.0
  %v893 = vadd.f32 %v800, 1.0
  %v894 = vadd.f32 %v802, 1.0
  %v895 = vadd.f32 %v804, 1.0
  %v896 = vadd.f32 %v806, 1.0
  %v897 = vadd.f32 %v808, 1.0
  %v898 = vadd.f32 %v810, 1.0
  %v899 = vadd.f32 %v812, 1.0
  %v900 = vadd.f32 %v814, 1.0
  %v901 = vadd.f32 %v816, 1.0
  %v902 = vadd.f32 %v818, 1.0
  %v903 = vadd.f32 %v820, 1.0
  %v904 = vadd.f32 %v822, 1.0
  %v905 = vadd.f32 %v824, 1.0
  %v906 = vadd.f32 %v826, 1.0
  %v907 = vadd.f32 %v828, 1.0
  %v908 = vadd.f32 %v830, 1.0
  %v909 = vadd.f32 %v832, 1.0
  %v910 = vadd.f32 %v834, 1.0
  %v911 = vadd.f32 %v836, 1.0
  %v912 = vadd.f32 %v838, 1.0
  %v913 = vadd.f32 %v840, 1.0
  %v914 = vadd.f32 %v842, 1.0
  %v915 = vadd.f32 %v844, 1.0
  %v916 = vadd.f32 %v846, 1.0
  %v917 = vadd.f32 %v848, 1.0
  %v918 = vadd.f32 %v850, 1.0
  %v919 = vadd.f32 %v852, 1.0
  %v920 = vadd.f32 %v854, 1.0
  %v921 = vadd.f32 %v856, 1.0
  %v922 = vadd.f32 %v858, 1.0
  %v923 = vrcp.pop %v859
  %v924 = vrcp.pop %v860
  %v925 = vrcp.pop %v861
  %v926 = vrcp.pop %v862
  %v927 = vrcp.pop %v863
  %v928 = vrcp.pop %v864
  %v929 = vrcp.pop %v865
  %v930 = vrcp.pop %v866
  %v931 = vrcp.pop %v867
  %v932 = vrcp.pop %v868
  %v933 = vrcp.pop %v869
  %v934 = vrcp.pop %v870
  %v935 = vrcp.pop %v871
  %v936 = vrcp.pop %v872
  %v937 = vrcp.pop %v873
  %v938 = vrcp.pop %v874
  %v939 = vrcp.pop %v875
  %v940 = vrcp.pop %v876
  %v941 = vrcp.pop %v877
  %v942 = vrcp.pop %v878
  %v943 = vrcp.pop %v879
  %v944 = vrcp.pop %v880
  %v945 = vrcp.pop %v881
  %v946 = vrcp.pop %v882
  %v947 = vrcp.pop %v883
  %v948 = vrcp.pop %v884
  %v949 = vrcp.pop %v885
  %v950 = vrcp.pop %v886
  %v951 = vrcp.pop %v887
  %v952 = vrcp.pop %v888
  %v953 = vrcp.pop %v889
  %v954 = vrcp.pop %v890
  %v955 = vrcp.pop %v891
  %v956 = vrcp.pop %v892
  %v957 = vrcp.pop %v893
  %v958 = vrcp.pop %v894
  %v959 = vrcp.pop %v895
  %v960 = vrcp.pop %v896
  %v961 = vrcp.pop %v897
  %v962 = vrcp.pop %v898
  %v963 = vrcp.pop %v899
  %v964 = vrcp.pop %v900
  %v965 = vrcp.pop %v901
  %v966 = vrcp.pop %v902
  %v967 = vrcp.pop %v903
  %v968 = vrcp.pop %v904
  %v969 = vrcp.pop %v905
  %v970 = vrcp.pop %v906
  %v971 = vrcp.pop %v907
  %v972 = vrcp.pop %v908
  %v973 = vrcp.pop %v909
  %v974 = vrcp.pop %v910
  %v975 = vrcp.pop %v911
  %v976 = vrcp.pop %v912
  %v977 = vrcp.pop %v913
  %v978 = vrcp.pop %v914
  %v979 = vrcp.pop %v915
  %v980 = vrcp.pop %v916
  %v981 = vrcp.pop %v917
  %v982 = vrcp.pop %v918
  %v983 = vrcp.pop %v919
  %v984 = vrcp.pop %v920
  %v985 = vrcp.pop %v921
  %v986 = vrcp.pop %v922
  %v987 = vmul.f32 %v349, %v923
  %v988 = vmul.f32 %v354, %v924
  %v989 = vmul.f32 %v359, %v925
  %v990 = vmul.f32 %v364, %v926
  %v991 = vmul.f32 %v369, %v927
  %v992 = vmul.f32 %v374, %v928
  %v993 = vmul.f32 %v379, %v929
  %v994 = vmul.f32 %v384, %v930
  %v995 = vmul.f32 %v389, %v931
  %v996 = vmul.f32 %v394, %v932
  %v997 = vmul.f32 %v399, %v933
  %v998 = vmul.f32 %v404, %v934
  %v999 = vmul.f32 %v409, %v935
  %v1000 = vmul.f32 %v414, %v936
  %v1001 = vmul.f32 %v419, %v937
  %v1002 = vmul.f32 %v424, %v938
  %v1003 = vmul.f32 %v429, %v939
  %v1004 = vmul.f32 %v434, %v940
  %v1005 = vmul.f32 %v439, %v941
  %v1006 = vmul.f32 %v444, %v942
  %v1007 = vmul.f32 %v449, %v943
  %v1008 = vmul.f32 %v454, %v944
  %v1009 = vmul.f32 %v459, %v945
  %v1010 = vmul.f32 %v464, %v946
  %v1011 = vmul.f32 %v469, %v947
  %v1012 = vmul.f32 %v474, %v948
  %v1013 = vmul.f32 %v479, %v949
  %v1014 = vmul.f32 %v484, %v950
  %v1015 = vmul.f32 %v489, %v951
  %v1016 = vmul.f32 %v494, %v952
  %v1017 = vmul.f32 %v499, %v953
  %v1018 = vmul.f32 %v504, %v954
  %v1019 = vmul.f32 %v509, %v955
  %v1020 = vmul.f32 %v514, %v956
  %v1021 = vmul.f32 %v519, %v957
  %v1022 = vmul.f32 %v524, %v958
  %v1023 = vmul.f32 %v529, %v959
  %v1024 = vmul.f32 %v534, %v960
  %v1025 = vmul.f32 %v539, %v961
  %v1026 = vmul.f32 %v544, %v962
  %v1027 = vmul.f32 %v549, %v963
  %v1028 = vmul.f32 %v554, %v964
  %v1029 = vmul.f32 %v559, %v965
  %v1030 = vmul.f32 %v564, %v966
  %v1031 = vmul.f32 %v569, %v967
  %v1032 = vmul.f32 %v574, %v968
  %v1033 = vmul.f32 %v579, %v969
  %v1034 = vmul.f32 %v584, %v970
  %v1035 = vmul.f32 %v589, %v971
  %v1036 = vmul.f32 %v594, %v972
  %v1037 = vmul.f32 %v599, %v973
  %v1038 = vmul.f32 %v604, %v974
  %v1039 = vmul.f32 %v609, %v975
  %v1040 = vmul.f32 %v614, %v976
  %v1041 = vmul.f32 %v619, %v977
  %v1042 = vmul.f32 %v624, %v978
  %v1043 = vmul.f32 %v629, %v979
  %v1044 = vmul.f32 %v634, %v980
  %v1045 = vmul.f32 %v639, %v981
  %v1046 = vmul.f32 %v644, %v982
  %v1047 = vmul.f32 %v649, %v983
  %v1048 = vmul.f32 %v654, %v984
  %v1049 = vmul.f32 %v659, %v985
  %v1050 = vmul.f32 %v664, %v986
  %1051 = vst.msk [vmem:[%s3] sm:$0xff] %vm89, %v987
  %1052 = vst.msk [vmem:[%s3 + $0x8] sm:$0xff] %vm89, %v988
  %1053 = vst.msk [vmem:[%s3 + $0x10] sm:$0xff] %vm89, %v989
  %1054 = vst.msk [vmem:[%s3 + $0x18] sm:$0xff] %vm89, %v990
  %1055 = vst.msk [vmem:[%s3 + $0x20] sm:$0xff] %vm89, %v991
  %1056 = vst.msk [vmem:[%s3 + $0x28] sm:$0xff] %vm89, %v992
  %1057 = vst.msk [vmem:[%s3 + $0x30] sm:$0xff] %vm89, %v993
  %1058 = vst.msk [vmem:[%s3 + $0x38] sm:$0xff] %vm89, %v994
  %1059 = vst.msk [vmem:[%s3 + $0x40] sm:$0xff] %vm89, %v995
  %1060 = vst.msk [vmem:[%s3 + $0x48] sm:$0xff] %vm89, %v996
  %1061 = vst.msk [vmem:[%s3 + $0x50] sm:$0xff] %vm89, %v997
  %1062 = vst.msk [vmem:[%s3 + $0x58] sm:$0xff] %vm89, %v998
  %1063 = vst.msk [vmem:[%s3 + $0x60] sm:$0xff] %vm89, %v999
  %1064 = vst.msk [vmem:[%s3 + $0x68] sm:$0xff] %vm89, %v1000
  %1065 = vst.msk [vmem:[%s3 + $0x70] sm:$0xff] %vm89, %v1001
  %1066 = vst.msk [vmem:[%s3 + $0x78] sm:$0xff] %vm89, %v1002
  %1067 = vst.msk [vmem:[%s3 + $0x80] sm:$0xff] %vm89, %v1003
  %1068 = vst.msk [vmem:[%s3 + $0x88] sm:$0xff] %vm89, %v1004
  %1069 = vst.msk [vmem:[%s3 + $0x90] sm:$0xff] %vm89, %v1005
  %1070 = vst.msk [vmem:[%s3 + $0x98] sm:$0xff] %vm89, %v1006
  %1071 = vst.msk [vmem:[%s3 + $0xa0] sm:$0xff] %vm89, %v1007
  %1072 = vst.msk [vmem:[%s3 + $0xa8] sm:$0xff] %vm89, %v1008
  %1073 = vst.msk [vmem:[%s3 + $0xb0] sm:$0xff] %vm89, %v1009
  %1074 = vst.msk [vmem:[%s3 + $0xb8] sm:$0xff] %vm89, %v1010
  %1075 = vst.msk [vmem:[%s3 + $0xc0] sm:$0xff] %vm89, %v1011
  %1076 = vst.msk [vmem:[%s3 + $0xc8] sm:$0xff] %vm89, %v1012
  %1077 = vst.msk [vmem:[%s3 + $0xd0] sm:$0xff] %vm89, %v1013
  %1078 = vst.msk [vmem:[%s3 + $0xd8] sm:$0xff] %vm89, %v1014
  %1079 = vst.msk [vmem:[%s3 + $0xe0] sm:$0xff] %vm89, %v1015
  %1080 = vst.msk [vmem:[%s3 + $0xe8] sm:$0xff] %vm89, %v1016
  %1081 = vst.msk [vmem:[%s3 + $0xf0] sm:$0xff] %vm89, %v1017
  %1082 = vst.msk [vmem:[%s3 + $0xf8] sm:$0xff] %vm89, %v1018
  %1083 = vst.msk [vmem:[%s3 + $0x100] sm:$0xff] %vm89, %v1019
  %1084 = vst.msk [vmem:[%s3 + $0x108] sm:$0xff] %vm89, %v1020
  %1085 = vst.msk [vmem:[%s3 + $0x110] sm:$0xff] %vm89, %v1021
  %1086 = vst.msk [vmem:[%s3 + $0x118] sm:$0xff] %vm89, %v1022
  %1087 = vst.msk [vmem:[%s3 + $0x120] sm:$0xff] %vm89, %v1023
  %1088 = vst.msk [vmem:[%s3 + $0x128] sm:$0xff] %vm89, %v1024
  %1089 = vst.msk [vmem:[%s3 + $0x130] sm:$0xff] %vm89, %v1025
  %1090 = vst.msk [vmem:[%s3 + $0x138] sm:$0xff] %vm89, %v1026
  %1091 = vst.msk [vmem:[%s3 + $0x140] sm:$0xff] %vm89, %v1027
  %1092 = vst.msk [vmem:[%s3 + $0x148] sm:$0xff] %vm89, %v1028
  %1093 = vst.msk [vmem:[%s3 + $0x150] sm:$0xff] %vm89, %v1029
  %1094 = vst.msk [vmem:[%s3 + $0x158] sm:$0xff] %vm89, %v1030
  %1095 = vst.msk [vmem:[%s3 + $0x160] sm:$0xff] %vm89, %v1031
  %1096 = vst.msk [vmem:[%s3 + $0x168] sm:$0xff] %vm89, %v1032
  %1097 = vst.msk [vmem:[%s3 + $0x170] sm:$0xff] %vm89, %v1033
  %1098 = vst.msk [vmem:[%s3 + $0x178] sm:$0xff] %vm89, %v1034
  %1099 = vst.msk [vmem:[%s3 + $0x180] sm:$0xff] %vm89, %v1035
  %1100 = vst.msk [vmem:[%s3 + $0x188] sm:$0xff] %vm89, %v1036
  %1101 = vst.msk [vmem:[%s3 + $0x190] sm:$0xff] %vm89, %v1037
  %1102 = vst.msk [vmem:[%s3 + $0x198] sm:$0xff] %vm89, %v1038
  %1103 = vst.msk [vmem:[%s3 + $0x1a0] sm:$0xff] %vm89, %v1039
  %1104 = vst.msk [vmem:[%s3 + $0x1a8] sm:$0xff] %vm89, %v1040
  %1105 = vst.msk [vmem:[%s3 + $0x1b0] sm:$0xff] %vm89, %v1041
  %1106 = vst.msk [vmem:[%s3 + $0x1b8] sm:$0xff] %vm89, %v1042
  %1107 = vst.msk [vmem:[%s3 + $0x1c0] sm:$0xff] %vm89, %v1043
  %1108 = vst.msk [vmem:[%s3 + $0x1c8] sm:$0xff] %vm89, %v1044
  %1109 = vst.msk [vmem:[%s3 + $0x1d0] sm:$0xff] %vm89, %v1045
  %1110 = vst.msk [vmem:[%s3 + $0x1d8] sm:$0xff] %vm89, %v1046
  %1111 = vst.msk [vmem:[%s3 + $0x1e0] sm:$0xff] %vm89, %v1047
  %1112 = vst.msk [vmem:[%s3 + $0x1e8] sm:$0xff] %vm89, %v1048
  %1113 = vst.msk [vmem:[%s3 + $0x1f0] sm:$0xff] %vm89, %v1049
  %1114 = vst.msk [vmem:[%s3 + $0x1f8] sm:$0xff] %vm89, %v1050
  // Predicated region
  $region14: #{_lambda_.2} parent=0 // pred_check
    _
  $region15: #{_lambda_.2} parent=0 // pred_check_branch
    %1116 = sbr.rel (0) target = $region17
  $region16: #{_lambda_.2} parent=0 // pred_region
    _
  $region17: #{_lambda_.2} parent=0 // pred_fallthru
    _
  // Predicated region
  $region18: #{_lambda_.2} parent=0 // pred_check
    _
  $region19: #{_lambda_.2} parent=0 // pred_check_branch
    %1118 = sbr.rel (0) target = $region21
  $region20: #{_lambda_.2} parent=0 // pred_region
    _
  $region21: #{_lambda_.2} parent=0 // pred_fallthru
    _

// kernel: _lambda_.3
$region0: #{_lambda_.3}
  #allocation0 [shape = 'u32[]', space=smem, size = 0x4, offset = 0x4, fixed_abs, tag = 'smem constant byte address 0x4 - core index']
  #allocation1 [shape = 'u32[144,128]{1,0:T(1,128)}', space=vmem, size = 0x12000, scoped, tag = 'internal scratch']
  #allocation2 [shape = 'f32[52,58,32]{2,1,0:T(8,128)}', space=vmem, size = 0x1a0000, scoped, tag = 'scratch operand']
  %s0 = inlined_call_operand.vmem [shape: f32[2,16,16,32], index: 0, kind: input, shape index: {}]
  %s1 = inlined_call_operand.vmem [shape: f32[4,72,8], index: 1, kind: input, shape index: {}]
  %s2 = inlined_call_operand.vmem [shape: f32[4,1,8], index: 2, kind: input, shape index: {}]
  %s3 = inlined_call_operand.vmem [shape: f32[16,16], index: 3, kind: input, shape index: {}]
  %s4 = inlined_call_operand.vmem [shape: f32[1,16], index: 4, kind: input, shape index: {}]
  %s5 = inlined_call_operand.vmem [shape: f32[32,32], index: 5, kind: input, shape index: {}]
  %s6 = inlined_call_operand.vmem [shape: f32[1,32], index: 6, kind: input, shape index: {}]
  %s7 = inlined_call_operand.hbm [shape: f32[2,256,32], index: 7, kind: output, shape index: {}]
  %s8 = sld [smem:[#allocation0]]
  $region65: #{_lambda_.3} parent=0
    _
  %s10 = ssub.s32 1, %s8
  %s11 = scalar_select 0, %s10, %s8
  $region1: #{_lambda_.3} parent=0
    #allocation3 [shape = 'u8[262144]{0}', space=vmem, size = 0x40000, scoped, tag = 'output window, operand 0']
    #allocation4 [shape = 's32[2]{0}', space=sflag, size = 0x8, scoped, tag = 'scoped memory for _lambda_.3']
    %12 = vsyncpa [#allocation4], 0
    %s13 = scalar_lea.sflag [#allocation4], 1
    %14 = vsyncpa %s13, 0
    loop: start=0, step=1, limit=4
    $region2: #{_lambda_.3} parent=1 // loop_pre_header
      _
    $region3: #{_lambda_.3} parent=1 // loop_header
      %s16 = sphi 0, %s20
      %p17 = scmp.ge.s32.totalorder %s16, 4
      %s23 = sphi 0, %s35
      %s24 = sphi 0, %s31
      %s25 = sphi 0, %s23
      %s26 = sphi 0, %s24
      %s27 = sphi 0, %s25
      %s28 = sphi 0, %s26
      %s38 = sphi 0, %s40
      %s41 = sphi 0, %s38
      %s42 = sphi 0, %s41
      %s58 = sphi 0, %s42
      %s62 = sphi 0, %s62
      %s64 = sphi 0, %s62
      %s65 = sphi 0, %s64
      %s79 = sphi 0, %s65
      %s83 = sphi 0, %s83
      %s85 = sphi 0, %s83
      %s86 = sphi 0, %s85
      %s100 = sphi 0, %s86
      %s104 = sphi 0, %s104
      %s106 = sphi 0, %s104
      %s107 = sphi 0, %s106
      %s121 = sphi 0, %s107
      %s125 = sphi 0, %s125
      %s127 = sphi 0, %s125
      %s128 = sphi 0, %s127
      %s142 = sphi 0, %s128
      %s146 = sphi 0, %s146
      %s148 = sphi 0, %s146
      %s149 = sphi 0, %s148
      %s163 = sphi 0, %s149
      %s167 = sphi 0, %s167
      %s169 = sphi 0, %s167
      %s170 = sphi 0, %s169
      %s184 = sphi 0, %s170
      %s192 = sphi 0, %s194
      %s195 = sphi 0, %s192
      %s196 = sphi 0, %s195
      %s212 = sphi 0, %s196
    $region4: #{_lambda_.3} parent=1 // loop_header_branch
      %19 = sbr.rel (%p17) target = $region8
    $region5: #{_lambda_.3} parent=1 // loop_body
      %s21 = ssub.s32 %s16, 1
      %s22 = ssub.s32 %s16, 2
      %s29 = sadd.s32 1, %s24
      %p30 = scmp.ge.s32.totalorder %s29, 1
      %s31 = scalar_select %p30, 0, %s29
      %s32 = sadd.s32 1, %s23
      %s33 = scalar_select %p30, %s32, %s23
      %p34 = scmp.ge.s32.totalorder %s33, 2
      %s35 = scalar_select %p34, 0, %s33
      %s36 = ssub.s32 %s23, %s35
      %p37 = scmp.eq.s32.totalorder %s36, 0
      %s39 = sadd.s32 %s38, 1
      %s40 = scalar_select %p37, %s38, %s39
      %p43 = pneg %p37
      %p44 = scmp.eq.s32.totalorder %s16, 1
      %p45 = por %p43, %p44
      %p46 = scmp.ne.s32.totalorder %s38, %s41
      %p47 = scmp.eq.s32.totalorder %s16, 0
      %p48 = por %p46, %p47
      %p49 = scmp.ne.s32.totalorder %s38, %s41
      %p50 = scmp.eq.s32.totalorder %s21, 1
      %p51 = por %p49, %p50
      %p52 = scmp.ne.s32.totalorder %s41, %s42
      %p53 = scmp.eq.s32.totalorder %s21, 0
      %p54 = por %p52, %p53
      %p55 = scmp.ne.s32.totalorder %s41, %s42
      %p56 = scmp.eq.s32.totalorder %s22, 1
      %p57 = por %p55, %p56
      %p59 = scmp.ne.s32.totalorder %s42, %s58
      %p60 = scmp.eq.s32.totalorder %s22, 0
      %p61 = por %p59, %p60
      %s63 = sadd.s32 %s62, 1
      %p66 = scmp.eq.s32.totalorder %s16, 1
      %p67 = scmp.ne.s32.totalorder %s62, %s64
      %p68 = scmp.eq.s32.totalorder %s16, 0
      %p69 = por %p67, %p68
      %p70 = scmp.ne.s32.totalorder %s62, %s64
      %p71 = scmp.eq.s32.totalorder %s21, 1
      %p72 = por %p70, %p71
      %p73 = scmp.ne.s32.totalorder %s64, %s65
      %p74 = scmp.eq.s32.totalorder %s21, 0
      %p75 = por %p73, %p74
      %p76 = scmp.ne.s32.totalorder %s64, %s65
      %p77 = scmp.eq.s32.totalorder %s22, 1
      %p78 = por %p76, %p77
      %p80 = scmp.ne.s32.totalorder %s65, %s79
      %p81 = scmp.eq.s32.totalorder %s22, 0
      %p82 = por %p80, %p81
      %s84 = sadd.s32 %s83, 1
      %p87 = scmp.eq.s32.totalorder %s16, 1
      %p88 = scmp.ne.s32.totalorder %s83, %s85
      %p89 = scmp.eq.s32.totalorder %s16, 0
      %p90 = por %p88, %p89
      %p91 = scmp.ne.s32.totalorder %s83, %s85
      %p92 = scmp.eq.s32.totalorder %s21, 1
      %p93 = por %p91, %p92
      %p94 = scmp.ne.s32.totalorder %s85, %s86
      %p95 = scmp.eq.s32.totalorder %s21, 0
      %p96 = por %p94, %p95
      %p97 = scmp.ne.s32.totalorder %s85, %s86
      %p98 = scmp.eq.s32.totalorder %s22, 1
      %p99 = por %p97, %p98
      %p101 = scmp.ne.s32.totalorder %s86, %s100
      %p102 = scmp.eq.s32.totalorder %s22, 0
      %p103 = por %p101, %p102
      %s105 = sadd.s32 %s104, 1
      %p108 = scmp.eq.s32.totalorder %s16, 1
      %p109 = scmp.ne.s32.totalorder %s104, %s106
      %p110 = scmp.eq.s32.totalorder %s16, 0
      %p111 = por %p109, %p110
      %p112 = scmp.ne.s32.totalorder %s104, %s106
      %p113 = scmp.eq.s32.totalorder %s21, 1
      %p114 = por %p112, %p113
      %p115 = scmp.ne.s32.totalorder %s106, %s107
      %p116 = scmp.eq.s32.totalorder %s21, 0
      %p117 = por %p115, %p116
      %p118 = scmp.ne.s32.totalorder %s106, %s107
      %p119 = scmp.eq.s32.totalorder %s22, 1
      %p120 = por %p118, %p119
      %p122 = scmp.ne.s32.totalorder %s107, %s121
      %p123 = scmp.eq.s32.totalorder %s22, 0
      %p124 = por %p122, %p123
      %s126 = sadd.s32 %s125, 1
      %p129 = scmp.eq.s32.totalorder %s16, 1
      %p130 = scmp.ne.s32.totalorder %s125, %s127
      %p131 = scmp.eq.s32.totalorder %s16, 0
      %p132 = por %p130, %p131
      %p133 = scmp.ne.s32.totalorder %s125, %s127
      %p134 = scmp.eq.s32.totalorder %s21, 1
      %p135 = por %p133, %p134
      %p136 = scmp.ne.s32.totalorder %s127, %s128
      %p137 = scmp.eq.s32.totalorder %s21, 0
      %p138 = por %p136, %p137
      %p139 = scmp.ne.s32.totalorder %s127, %s128
      %p140 = scmp.eq.s32.totalorder %s22, 1
      %p141 = por %p139, %p140
      %p143 = scmp.ne.s32.totalorder %s128, %s142
      %p144 = scmp.eq.s32.totalorder %s22, 0
      %p145 = por %p143, %p144
      %s147 = sadd.s32 %s146, 1
      %p150 = scmp.eq.s32.totalorder %s16, 1
      %p151 = scmp.ne.s32.totalorder %s146, %s148
      %p152 = scmp.eq.s32.totalorder %s16, 0
      %p153 = por %p151, %p152
      %p154 = scmp.ne.s32.totalorder %s146, %s148
      %p155 = scmp.eq.s32.totalorder %s21, 1
      %p156 = por %p154, %p155
      %p157 = scmp.ne.s32.totalorder %s148, %s149
      %p158 = scmp.eq.s32.totalorder %s21, 0
      %p159 = por %p157, %p158
      %p160 = scmp.ne.s32.totalorder %s148, %s149
      %p161 = scmp.eq.s32.totalorder %s22, 1
      %p162 = por %p160, %p161
      %p164 = scmp.ne.s32.totalorder %s149, %s163
      %p165 = scmp.eq.s32.totalorder %s22, 0
      %p166 = por %p164, %p165
      %s168 = sadd.s32 %s167, 1
      %p171 = scmp.eq.s32.totalorder %s16, 1
      %p172 = scmp.ne.s32.totalorder %s167, %s169
      %p173 = scmp.eq.s32.totalorder %s16, 0
      %p174 = por %p172, %p173
      %p175 = scmp.ne.s32.totalorder %s167, %s169
      %p176 = scmp.eq.s32.totalorder %s21, 1
      %p177 = por %p175, %p176
      %p178 = scmp.ne.s32.totalorder %s169, %s170
      %p179 = scmp.eq.s32.totalorder %s21, 0
      %p180 = por %p178, %p179
      %p181 = scmp.ne.s32.totalorder %s169, %s170
      %p182 = scmp.eq.s32.totalorder %s22, 1
      %p183 = por %p181, %p182
      %p185 = scmp.ne.s32.totalorder %s170, %s184
      %p186 = scmp.eq.s32.totalorder %s22, 0
      %p187 = por %p185, %p186
      %s188 = ssub.s32 %s23, %s35
      %s189 = ssub.s32 %s24, %s31
      %s190 = sor.u32 %s188, %s189
      %p191 = scmp.eq.s32.totalorder %s190, 0
      %s193 = sadd.s32 %s192, 1
      %s194 = scalar_select %p191, %s192, %s193
      %p197 = pneg %p191
      %p198 = scmp.eq.s32.totalorder %s16, 1
      %p199 = por %p197, %p198
      %p200 = scmp.ne.s32.totalorder %s192, %s195
      %p201 = scmp.eq.s32.totalorder %s16, 0
      %p202 = por %p200, %p201
      %p203 = scmp.ne.s32.totalorder %s192, %s195
      %p204 = scmp.eq.s32.totalorder %s21, 1
      %p205 = por %p203, %p204
      %p206 = scmp.ne.s32.totalorder %s195, %s196
      %p207 = scmp.eq.s32.totalorder %s21, 0
      %p208 = por %p206, %p207
      %p209 = scmp.ne.s32.totalorder %s195, %s196
      %p210 = scmp.eq.s32.totalorder %s22, 1
      %p211 = por %p209, %p210
      %p213 = scmp.ne.s32.totalorder %s196, %s212
      %p214 = scmp.eq.s32.totalorder %s22, 0
      %p215 = por %p213, %p214
      %p216 = scmp.le.s32.totalorder 1, %s16
      %p217 = scmp.lt.s32.totalorder %s16, 3
      %p218 = pnand %p216, %p217
      %p219 = pneg %p218
      // Predicated region
      $region9: #{_lambda_.3} parent=5 // pred_check
        _
      $region10: #{_lambda_.3} parent=5 // pred_check_branch
        %221 = sbr.rel (%p218) target = $region12
      $region11: #{_lambda_.3} parent=5 // pred_region
        %s222 = ssub.s32 %s16, 1
        // Predicated region
        $region13: #{_lambda_.3} parent=11 // pred_check
          %p223 = pneg %p75
        $region14: #{_lambda_.3} parent=11 // pred_check_branch
          %225 = sbr.rel (%p223) target = $region16
        $region15: #{_lambda_.3} parent=11 // pred_region
          _
        $region16: #{_lambda_.3} parent=11 // pred_fallthru
          _
        // Predicated region
        $region17: #{_lambda_.3} parent=11 // pred_check
          %p226 = pneg %p96
        $region18: #{_lambda_.3} parent=11 // pred_check_branch
          %228 = sbr.rel (%p226) target = $region20
        $region19: #{_lambda_.3} parent=11 // pred_region
          _
        $region20: #{_lambda_.3} parent=11 // pred_fallthru
          _
        // Predicated region
        $region21: #{_lambda_.3} parent=11 // pred_check
          %p229 = pneg %p117
        $region22: #{_lambda_.3} parent=11 // pred_check_branch
          %231 = sbr.rel (%p229) target = $region24
        $region23: #{_lambda_.3} parent=11 // pred_region
          _
        $region24: #{_lambda_.3} parent=11 // pred_fallthru
          _
        // Predicated region
        $region25: #{_lambda_.3} parent=11 // pred_check
          %p232 = pneg %p138
        $region26: #{_lambda_.3} parent=11 // pred_check_branch
          %234 = sbr.rel (%p232) target = $region28
        $region27: #{_lambda_.3} parent=11 // pred_region
          _
        $region28: #{_lambda_.3} parent=11 // pred_fallthru
          _
        // Predicated region
        $region29: #{_lambda_.3} parent=11 // pred_check
          %p235 = pneg %p159
        $region30: #{_lambda_.3} parent=11 // pred_check_branch
          %237 = sbr.rel (%p235) target = $region32
        $region31: #{_lambda_.3} parent=11 // pred_region
          _
        $region32: #{_lambda_.3} parent=11 // pred_fallthru
          _
        // Predicated region
        $region33: #{_lambda_.3} parent=11 // pred_check
          %p238 = pneg %p180
        $region34: #{_lambda_.3} parent=11 // pred_check_branch
          %240 = sbr.rel (%p238) target = $region36
        $region35: #{_lambda_.3} parent=11 // pred_region
          _
        $region36: #{_lambda_.3} parent=11 // pred_fallthru
          _
      $region12: #{_lambda_.3} parent=5 // pred_fallthru
        _
      %p241 = scmp.lt.s32.totalorder %s16, 2
      // Predicated region
      $region37: #{_lambda_.3} parent=5 // pred_check
        %p242 = pneg %p241
      $region38: #{_lambda_.3} parent=5 // pred_check_branch
        %244 = sbr.rel (%p242) target = $region40
      $region39: #{_lambda_.3} parent=5 // pred_region
        // Predicated region
        $region41: #{_lambda_.3} parent=39 // pred_check
          %p245 = pneg %p48
        $region42: #{_lambda_.3} parent=39 // pred_check_branch
          %247 = sbr.rel (%p245) target = $region44
        $region43: #{_lambda_.3} parent=39 // pred_region
          %p248 = scmp.lt.s32.totalorder %s23, 1
          %s249 = scalar_select %p248, %s23, 1
          %s250 = smul.addr %s249, 32
          %s251 = smul.addr %s250, 8
          %s252 = scalar_lea.vmem %s0, %s251
        $region44: #{_lambda_.3} parent=39 // pred_fallthru
          _
      $region40: #{_lambda_.3} parent=5 // pred_fallthru
        _
      %p253 = scmp.le.s32.totalorder 1, %s16
      %p254 = scmp.lt.s32.totalorder %s16, 3
      %p255 = pnand %p253, %p254
      %p256 = pneg %p255
      // Predicated region
      $region45: #{_lambda_.3} parent=5 // pred_check
        _
      $region46: #{_lambda_.3} parent=5 // pred_check_branch
        %258 = sbr.rel (%p255) target = $region48
      $region47: #{_lambda_.3} parent=5 // pred_region
        %s259 = ssub.s32 %s16, 1
        %p260 = scmp.lt.s32.totalorder %s25, 1
        %s261 = scalar_select %p260, %s25, 1
        %s262 = smul.addr %s261, 32
        %s263 = smul.addr %s262, 8
        %s264 = scalar_lea.vmem %s0, %s263
        %p265 = pneg %p54
        %p266 = pneg %p51
        %p267 = pneg %p75
        %p268 = pneg %p72
        %p269 = pneg %p96
        %p270 = pneg %p93
        %p271 = pneg %p117
        %p272 = pneg %p114
        %p273 = pneg %p138
        %p274 = pneg %p135
        %p275 = pneg %p159
        %p276 = pneg %p156
        %p277 = pneg %p180
        %p278 = pneg %p177
        %p279 = pneg %p208
        %p280 = pneg %p205
        %s281 = sand.u32 %s195, 1
        %s282 = scalar_lea.sflag [#allocation4], %s281
        %s283 = sand.u32 %s195, 1
        %s284 = smul.addr %s283, 256
        %s285 = scalar_lea.vmem [#allocation3], %s284
        %p286 = scmp.lt.s32.totalorder %s25, 1
        %s287 = scalar_select %p286, %s25, 1
        %s288 = smul.addr %s287, 32
        %s289 = smul.addr %s288, 8
        %s290 = scalar_lea.vmem %s0, %s289
        %s291 = smul.u32 32, %s26
        %p292 = scmp.eq.s32.totalorder %s26, 0
        // Predicated region
        $region49: #{_lambda_.3} parent=47 // pred_check
          %p293 = pneg %p292
        $region50: #{_lambda_.3} parent=47 // pred_check_branch
          %295 = sbr.rel (%p293) target = $region52
        $region51: #{_lambda_.3} parent=47 // pred_region
          %vm296 = vcmask 261120
          %297 = vst.msk [vmem:[#allocation2] sm:$0xff] %vm296, 0.0
          %298 = vst.msk [vmem:[#allocation2 + $0x8] sm:$0xff] %vm296, 0.0
          %299 = vst.msk [vmem:[#allocation2 + $0x10] sm:$0xff] %vm296, 0.0
          %300 = vst.msk [vmem:[#allocation2 + $0x18] sm:$0xff] %vm296, 0.0
          %301 = vst.msk [vmem:[#allocation2 + $0x20] sm:$0xff] %vm296, 0.0
          %302 = vst.msk [vmem:[#allocation2 + $0x28] sm:$0xff] %vm296, 0.0
          %303 = vst.msk [vmem:[#allocation2 + $0x30] sm:$0xff] %vm296, 0.0
          %vm304 = vcmask 254976
          %305 = vst.msk [vmem:[#allocation2 + $0x38] sm:$0x3] %vm304, 0.0
          %306 = vst.msk [vmem:[#allocation2 + $0x40] sm:$0xff] %vm296, 0.0
          %307 = vst.msk [vmem:[#allocation2 + $0x48] sm:$0xff] %vm296, 0.0
          %308 = vst.msk [vmem:[#allocation2 + $0x50] sm:$0xff] %vm296, 0.0
          %309 = vst.msk [vmem:[#allocation2 + $0x58] sm:$0xff] %vm296, 0.0
          %310 = vst.msk [vmem:[#allocation2 + $0x60] sm:$0xff] %vm296, 0.0
          %311 = vst.msk [vmem:[#allocation2 + $0x68] sm:$0xff] %vm296, 0.0
          %312 = vst.msk [vmem:[#allocation2 + $0x70] sm:$0xff] %vm296, 0.0
          %313 = vst.msk [vmem:[#allocation2 + $0x78] sm:$0x3] %vm304, 0.0
          %314 = vst.msk [vmem:[#allocation2 + $0x80] sm:$0xff] %vm296, 0.0
          %315 = vst.msk [vmem:[#allocation2 + $0x88] sm:$0xff] %vm296, 0.0
          %316 = vst.msk [vmem:[#allocation2 + $0x90] sm:$0xff] %vm296, 0.0
          %317 = vst.msk [vmem:[#allocation2 + $0x98] sm:$0xff] %vm296, 0.0
          %318 = vst.msk [vmem:[#allocation2 + $0xa0] sm:$0xff] %vm296, 0.0
          %319 = vst.msk [vmem:[#allocation2 + $0xa8] sm:$0xff] %vm296, 0.0
          %320 = vst.msk [vmem:[#allocation2 + $0xb0] sm:$0xff] %vm296, 0.0
          %321 = vst.msk [vmem:[#allocation2 + $0xb8] sm:$0x3] %vm304, 0.0
          %322 = vst.msk [vmem:[#allocation2 + $0xc0] sm:$0xff] %vm296, 0.0
          %323 = vst.msk [vmem:[#allocation2 + $0xc8] sm:$0xff] %vm296, 0.0
          %324 = vst.msk [vmem:[#allocation2 + $0xd0] sm:$0xff] %vm296, 0.0
          %325 = vst.msk [vmem:[#allocation2 + $0xd8] sm:$0xff] %vm296, 0.0
          %326 = vst.msk [vmem:[#allocation2 + $0xe0] sm:$0xff] %vm296, 0.0
          %327 = vst.msk [vmem:[#allocation2 + $0xe8] sm:$0xff] %vm296, 0.0
          %328 = vst.msk [vmem:[#allocation2 + $0xf0] sm:$0xff] %vm296, 0.0
          %329 = vst.msk [vmem:[#allocation2 + $0xf8] sm:$0x3] %vm304, 0.0
          %330 = vst.msk [vmem:[#allocation2 + $0x100] sm:$0xff] %vm296, 0.0
          %331 = vst.msk [vmem:[#allocation2 + $0x108] sm:$0xff] %vm296, 0.0
          %332 = vst.msk [vmem:[#allocation2 + $0x110] sm:$0xff] %vm296, 0.0
          %333 = vst.msk [vmem:[#allocation2 + $0x118] sm:$0xff] %vm296, 0.0
          %334 = vst.msk [vmem:[#allocation2 + $0x120] sm:$0xff] %vm296, 0.0
          %335 = vst.msk [vmem:[#allocation2 + $0x128] sm:$0xff] %vm296, 0.0
          %336 = vst.msk [vmem:[#allocation2 + $0x130] sm:$0xff] %vm296, 0.0
          %337 = vst.msk [vmem:[#allocation2 + $0x138] sm:$0x3] %vm304, 0.0
          %338 = vst.msk [vmem:[#allocation2 + $0x140] sm:$0xff] %vm296, 0.0
          %339 = vst.msk [vmem:[#allocation2 + $0x148] sm:$0xff] %vm296, 0.0
          %340 = vst.msk [vmem:[#allocation2 + $0x150] sm:$0xff] %vm296, 0.0
          %341 = vst.msk [vmem:[#allocation2 + $0x158] sm:$0xff] %vm296, 0.0
          %342 = vst.msk [vmem:[#allocation2 + $0x160] sm:$0xff] %vm296, 0.0
          %343 = vst.msk [vmem:[#allocation2 + $0x168] sm:$0xff] %vm296, 0.0
          %344 = vst.msk [vmem:[#allocation2 + $0x170] sm:$0xff] %vm296, 0.0
          %345 = vst.msk [vmem:[#allocation2 + $0x178] sm:$0x3] %vm304, 0.0
          %346 = vst.msk [vmem:[#allocation2 + $0x180] sm:$0xff] %vm296, 0.0
          %347 = vst.msk [vmem:[#allocation2 + $0x188] sm:$0xff] %vm296, 0.0
          %348 = vst.msk [vmem:[#allocation2 + $0x190] sm:$0xff] %vm296, 0.0
          %349 = vst.msk [vmem:[#allocation2 + $0x198] sm:$0xff] %vm296, 0.0
          %350 = vst.msk [vmem:[#allocation2 + $0x1a0] sm:$0xff] %vm296, 0.0
          %351 = vst.msk [vmem:[#allocation2 + $0x1a8] sm:$0xff] %vm296, 0.0
          %352 = vst.msk [vmem:[#allocation2 + $0x1b0] sm:$0xff] %vm296, 0.0
          %353 = vst.msk [vmem:[#allocation2 + $0x1b8] sm:$0x3] %vm304, 0.0
          %354 = vst.msk [vmem:[#allocation2 + $0x1c0] sm:$0xff] %vm296, 0.0
          %355 = vst.msk [vmem:[#allocation2 + $0x1c8] sm:$0xff] %vm296, 0.0
          %356 = vst.msk [vmem:[#allocation2 + $0x1d0] sm:$0xff] %vm296, 0.0
          %357 = vst.msk [vmem:[#allocation2 + $0x1d8] sm:$0xff] %vm296, 0.0
          %358 = vst.msk [vmem:[#allocation2 + $0x1e0] sm:$0xff] %vm296, 0.0
          %359 = vst.msk [vmem:[#allocation2 + $0x1e8] sm:$0xff] %vm296, 0.0
          %360 = vst.msk [vmem:[#allocation2 + $0x1f0] sm:$0xff] %vm296, 0.0
          %361 = vst.msk [vmem:[#allocation2 + $0x1f8] sm:$0x3] %vm304, 0.0
          %362 = vst.msk [vmem:[#allocation2 + $0x200] sm:$0xff] %vm296, 0.0
          %363 = vst.msk [vmem:[#allocation2 + $0x208] sm:$0xff] %vm296, 0.0
          %364 = vst.msk [vmem:[#allocation2 + $0x210] sm:$0xff] %vm296, 0.0
          %365 = vst.msk [vmem:[#allocation2 + $0x218] sm:$0xff] %vm296, 0.0
          %366 = vst.msk [vmem:[#allocation2 + $0x220] sm:$0xff] %vm296, 0.0
          %367 = vst.msk [vmem:[#allocation2 + $0x228] sm:$0xff] %vm296, 0.0
          %368 = vst.msk [vmem:[#allocation2 + $0x230] sm:$0xff] %vm296, 0.0
          %369 = vst.msk [vmem:[#allocation2 + $0x238] sm:$0x3] %vm304, 0.0
          %370 = vst.msk [vmem:[#allocation2 + $0x240] sm:$0xff] %vm296, 0.0
          %371 = vst.msk [vmem:[#allocation2 + $0x248] sm:$0xff] %vm296, 0.0
          %372 = vst.msk [vmem:[#allocation2 + $0x250] sm:$0xff] %vm296, 0.0
          %373 = vst.msk [vmem:[#allocation2 + $0x258] sm:$0xff] %vm296, 0.0
          %374 = vst.msk [vmem:[#allocation2 + $0x260] sm:$0xff] %vm296, 0.0
          %375 = vst.msk [vmem:[#allocation2 + $0x268] sm:$0xff] %vm296, 0.0
          %376 = vst.msk [vmem:[#allocation2 + $0x270] sm:$0xff] %vm296, 0.0
          %377 = vst.msk [vmem:[#allocation2 + $0x278] sm:$0x3] %vm304, 0.0
          %378 = vst.msk [vmem:[#allocation2 + $0x280] sm:$0xff] %vm296, 0.0
          %379 = vst.msk [vmem:[#allocation2 + $0x288] sm:$0xff] %vm296, 0.0
          %380 = vst.msk [vmem:[#allocation2 + $0x290] sm:$0xff] %vm296, 0.0
          %381 = vst.msk [vmem:[#allocation2 + $0x298] sm:$0xff] %vm296, 0.0
          %382 = vst.msk [vmem:[#allocation2 + $0x2a0] sm:$0xff] %vm296, 0.0
          %383 = vst.msk [vmem:[#allocation2 + $0x2a8] sm:$0xff] %vm296, 0.0
          %384 = vst.msk [vmem:[#allocation2 + $0x2b0] sm:$0xff] %vm296, 0.0
          %385 = vst.msk [vmem:[#allocation2 + $0x2b8] sm:$0x3] %vm304, 0.0
          %386 = vst.msk [vmem:[#allocation2 + $0x2c0] sm:$0xff] %vm296, 0.0
          %387 = vst.msk [vmem:[#allocation2 + $0x2c8] sm:$0xff] %vm296, 0.0
          %388 = vst.msk [vmem:[#allocation2 + $0x2d0] sm:$0xff] %vm296, 0.0
          %389 = vst.msk [vmem:[#allocation2 + $0x2d8] sm:$0xff] %vm296, 0.0
          %390 = vst.msk [vmem:[#allocation2 + $0x2e0] sm:$0xff] %vm296, 0.0
          %391 = vst.msk [vmem:[#allocation2 + $0x2e8] sm:$0xff] %vm296, 0.0
          %392 = vst.msk [vmem:[#allocation2 + $0x2f0] sm:$0xff] %vm296, 0.0
          %393 = vst.msk [vmem:[#allocation2 + $0x2f8] sm:$0x3] %vm304, 0.0
          %394 = vst.msk [vmem:[#allocation2 + $0x300] sm:$0xff] %vm296, 0.0
          %395 = vst.msk [vmem:[#allocation2 + $0x308] sm:$0xff] %vm296, 0.0
          %396 = vst.msk [vmem:[#allocation2 + $0x310] sm:$0xff] %vm296, 0.0
          %397 = vst.msk [vmem:[#allocation2 + $0x318] sm:$0xff] %vm296, 0.0
          %398 = vst.msk [vmem:[#allocation2 + $0x320] sm:$0xff] %vm296, 0.0
          %399 = vst.msk [vmem:[#allocation2 + $0x328] sm:$0xff] %vm296, 0.0
          %400 = vst.msk [vmem:[#allocation2 + $0x330] sm:$0xff] %vm296, 0.0
          %401 = vst.msk [vmem:[#allocation2 + $0x338] sm:$0x3] %vm304, 0.0
          %402 = vst.msk [vmem:[#allocation2 + $0x340] sm:$0xff] %vm296, 0.0
          %403 = vst.msk [vmem:[#allocation2 + $0x348] sm:$0xff] %vm296, 0.0
          %404 = vst.msk [vmem:[#allocation2 + $0x350] sm:$0xff] %vm296, 0.0
          %405 = vst.msk [vmem:[#allocation2 + $0x358] sm:$0xff] %vm296, 0.0
          %406 = vst.msk [vmem:[#allocation2 + $0x360] sm:$0xff] %vm296, 0.0
          %407 = vst.msk [vmem:[#allocation2 + $0x368] sm:$0xff] %vm296, 0.0
          %408 = vst.msk [vmem:[#allocation2 + $0x370] sm:$0xff] %vm296, 0.0
          %409 = vst.msk [vmem:[#allocation2 + $0x378] sm:$0x3] %vm304, 0.0
          %410 = vst.msk [vmem:[#allocation2 + $0x380] sm:$0xff] %vm296, 0.0
          %411 = vst.msk [vmem:[#allocation2 + $0x388] sm:$0xff] %vm296, 0.0
          %412 = vst.msk [vmem:[#allocation2 + $0x390] sm:$0xff] %vm296, 0.0
          %413 = vst.msk [vmem:[#allocation2 + $0x398] sm:$0xff] %vm296, 0.0
          %414 = vst.msk [vmem:[#allocation2 + $0x3a0] sm:$0xff] %vm296, 0.0
          %415 = vst.msk [vmem:[#allocation2 + $0x3a8] sm:$0xff] %vm296, 0.0
          %416 = vst.msk [vmem:[#allocation2 + $0x3b0] sm:$0xff] %vm296, 0.0
          %417 = vst.msk [vmem:[#allocation2 + $0x3b8] sm:$0x3] %vm304, 0.0
          %418 = vst.msk [vmem:[#allocation2 + $0x3c0] sm:$0xff] %vm296, 0.0
          %419 = vst.msk [vmem:[#allocation2 + $0x3c8] sm:$0xff] %vm296, 0.0
          %420 = vst.msk [vmem:[#allocation2 + $0x3d0] sm:$0xff] %vm296, 0.0
          %421 = vst.msk [vmem:[#allocation2 + $0x3d8] sm:$0xff] %vm296, 0.0
          %422 = vst.msk [vmem:[#allocation2 + $0x3e0] sm:$0xff] %vm296, 0.0
          %423 = vst.msk [vmem:[#allocation2 + $0x3e8] sm:$0xff] %vm296, 0.0
          %424 = vst.msk [vmem:[#allocation2 + $0x3f0] sm:$0xff] %vm296, 0.0
          %425 = vst.msk [vmem:[#allocation2 + $0x3f8] sm:$0x3] %vm304, 0.0
          %426 = vst.msk [vmem:[#allocation2 + $0x400] sm:$0xff] %vm296, 0.0
          %427 = vst.msk [vmem:[#allocation2 + $0x408] sm:$0xff] %vm296, 0.0
          %428 = vst.msk [vmem:[#allocation2 + $0x410] sm:$0xff] %vm296, 0.0
          %429 = vst.msk [vmem:[#allocation2 + $0x418] sm:$0xff] %vm296, 0.0
          %430 = vst.msk [vmem:[#allocation2 + $0x420] sm:$0xff] %vm296, 0.0
          %431 = vst.msk [vmem:[#allocation2 + $0x428] sm:$0xff] %vm296, 0.0
          %432 = vst.msk [vmem:[#allocation2 + $0x430] sm:$0xff] %vm296, 0.0
          %433 = vst.msk [vmem:[#allocation2 + $0x438] sm:$0x3] %vm304, 0.0
          %434 = vst.msk [vmem:[#allocation2 + $0x440] sm:$0xff] %vm296, 0.0
          %435 = vst.msk [vmem:[#allocation2 + $0x448] sm:$0xff] %vm296, 0.0
          %436 = vst.msk [vmem:[#allocation2 + $0x450] sm:$0xff] %vm296, 0.0
          %437 = vst.msk [vmem:[#allocation2 + $0x458] sm:$0xff] %vm296, 0.0
          %438 = vst.msk [vmem:[#allocation2 + $0x460] sm:$0xff] %vm296, 0.0
          %439 = vst.msk [vmem:[#allocation2 + $0x468] sm:$0xff] %vm296, 0.0
          %440 = vst.msk [vmem:[#allocation2 + $0x470] sm:$0xff] %vm296, 0.0
          %441 = vst.msk [vmem:[#allocation2 + $0x478] sm:$0x3] %vm304, 0.0
          %s442 = scalar_lea.vmem [#allocation2], 2176
          %443 = vst.msk [vmem:[%s442] sm:$0xff] %vm296, 0.0
          %444 = vst.msk [vmem:[%s442 + $0x8] sm:$0xff] %vm296, 0.0
          %445 = vst.msk [vmem:[%s442 + $0x10] sm:$0xff] %vm296, 0.0
          %446 = vst.msk [vmem:[%s442 + $0x18] sm:$0xff] %vm296, 0.0
          %447 = vst.msk [vmem:[%s442 + $0x20] sm:$0xff] %vm296, 0.0
          %448 = vst.msk [vmem:[%s442 + $0x28] sm:$0xff] %vm296, 0.0
          %449 = vst.msk [vmem:[%s442 + $0x30] sm:$0xff] %vm296, 0.0
          %450 = vst.msk [vmem:[%s442 + $0x38] sm:$0x3] %vm304, 0.0
          %451 = vst.msk [vmem:[%s442 + $0x40] sm:$0xff] %vm296, 0.0
          %452 = vst.msk [vmem:[%s442 + $0x48] sm:$0xff] %vm296, 0.0
          %453 = vst.msk [vmem:[%s442 + $0x50] sm:$0xff] %vm296, 0.0
          %454 = vst.msk [vmem:[%s442 + $0x58] sm:$0xff] %vm296, 0.0
          %455 = vst.msk [vmem:[%s442 + $0x60] sm:$0xff] %vm296, 0.0
          %456 = vst.msk [vmem:[%s442 + $0x68] sm:$0xff] %vm296, 0.0
          %457 = vst.msk [vmem:[%s442 + $0x70] sm:$0xff] %vm296, 0.0
          %458 = vst.msk [vmem:[%s442 + $0x78] sm:$0x3] %vm304, 0.0
          %459 = vst.msk [vmem:[%s442 + $0x80] sm:$0xff] %vm296, 0.0
          %460 = vst.msk [vmem:[%s442 + $0x88] sm:$0xff] %vm296, 0.0
          %461 = vst.msk [vmem:[%s442 + $0x90] sm:$0xff] %vm296, 0.0
          %462 = vst.msk [vmem:[%s442 + $0x98] sm:$0xff] %vm296, 0.0
          %463 = vst.msk [vmem:[%s442 + $0xa0] sm:$0xff] %vm296, 0.0
          %464 = vst.msk [vmem:[%s442 + $0xa8] sm:$0xff] %vm296, 0.0
          %465 = vst.msk [vmem:[%s442 + $0xb0] sm:$0xff] %vm296, 0.0
          %466 = vst.msk [vmem:[%s442 + $0xb8] sm:$0x3] %vm304, 0.0
          %467 = vst.msk [vmem:[%s442 + $0xc0] sm:$0xff] %vm296, 0.0
          %468 = vst.msk [vmem:[%s442 + $0xc8] sm:$0xff] %vm296, 0.0
          %469 = vst.msk [vmem:[%s442 + $0xd0] sm:$0xff] %vm296, 0.0
          %470 = vst.msk [vmem:[%s442 + $0xd8] sm:$0xff] %vm296, 0.0
          %471 = vst.msk [vmem:[%s442 + $0xe0] sm:$0xff] %vm296, 0.0
          %472 = vst.msk [vmem:[%s442 + $0xe8] sm:$0xff] %vm296, 0.0
          %473 = vst.msk [vmem:[%s442 + $0xf0] sm:$0xff] %vm296, 0.0
          %474 = vst.msk [vmem:[%s442 + $0xf8] sm:$0x3] %vm304, 0.0
          %475 = vst.msk [vmem:[%s442 + $0x100] sm:$0xff] %vm296, 0.0
          %476 = vst.msk [vmem:[%s442 + $0x108] sm:$0xff] %vm296, 0.0
          %477 = vst.msk [vmem:[%s442 + $0x110] sm:$0xff] %vm296, 0.0
          %478 = vst.msk [vmem:[%s442 + $0x118] sm:$0xff] %vm296, 0.0
          %479 = vst.msk [vmem:[%s442 + $0x120] sm:$0xff] %vm296, 0.0
          %480 = vst.msk [vmem:[%s442 + $0x128] sm:$0xff] %vm296, 0.0
          %481 = vst.msk [vmem:[%s442 + $0x130] sm:$0xff] %vm296, 0.0
          %482 = vst.msk [vmem:[%s442 + $0x138] sm:$0x3] %vm304, 0.0
          %483 = vst.msk [vmem:[%s442 + $0x140] sm:$0xff] %vm296, 0.0
          %484 = vst.msk [vmem:[%s442 + $0x148] sm:$0xff] %vm296, 0.0
          %485 = vst.msk [vmem:[%s442 + $0x150] sm:$0xff] %vm296, 0.0
          %486 = vst.msk [vmem:[%s442 + $0x158] sm:$0xff] %vm296, 0.0
          %487 = vst.msk [vmem:[%s442 + $0x160] sm:$0xff] %vm296, 0.0
          %488 = vst.msk [vmem:[%s442 + $0x168] sm:$0xff] %vm296, 0.0
          %489 = vst.msk [vmem:[%s442 + $0x170] sm:$0xff] %vm296, 0.0
          %490 = vst.msk [vmem:[%s442 + $0x178] sm:$0x3] %vm304, 0.0
          %491 = vst.msk [vmem:[%s442 + $0x180] sm:$0xff] %vm296, 0.0
          %492 = vst.msk [vmem:[%s442 + $0x188] sm:$0xff] %vm296, 0.0
          %493 = vst.msk [vmem:[%s442 + $0x190] sm:$0xff] %vm296, 0.0
          %494 = vst.msk [vmem:[%s442 + $0x198] sm:$0xff] %vm296, 0.0
          %495 = vst.msk [vmem:[%s442 + $0x1a0] sm:$0xff] %vm296, 0.0
          %496 = vst.msk [vmem:[%s442 + $0x1a8] sm:$0xff] %vm296, 0.0
          %497 = vst.msk [vmem:[%s442 + $0x1b0] sm:$0xff] %vm296, 0.0
          %498 = vst.msk [vmem:[%s442 + $0x1b8] sm:$0x3] %vm304, 0.0
          %499 = vst.msk [vmem:[%s442 + $0x1c0] sm:$0xff] %vm296, 0.0
          %500 = vst.msk [vmem:[%s442 + $0x1c8] sm:$0xff] %vm296, 0.0
          %501 = vst.msk [vmem:[%s442 + $0x1d0] sm:$0xff] %vm296, 0.0
          %502 = vst.msk [vmem:[%s442 + $0x1d8] sm:$0xff] %vm296, 0.0
          %503 = vst.msk [vmem:[%s442 + $0x1e0] sm:$0xff] %vm296, 0.0
          %504 = vst.msk [vmem:[%s442 + $0x1e8] sm:$0xff] %vm296, 0.0
          %505 = vst.msk [vmem:[%s442 + $0x1f0] sm:$0xff] %vm296, 0.0
          %506 = vst.msk [vmem:[%s442 + $0x1f8] sm:$0x3] %vm304, 0.0
          %507 = vst.msk [vmem:[%s442 + $0x200] sm:$0xff] %vm296, 0.0
          %508 = vst.msk [vmem:[%s442 + $0x208] sm:$0xff] %vm296, 0.0
          %509 = vst.msk [vmem:[%s442 + $0x210] sm:$0xff] %vm296, 0.0
          %510 = vst.msk [vmem:[%s442 + $0x218] sm:$0xff] %vm296, 0.0
          %511 = vst.msk [vmem:[%s442 + $0x220] sm:$0xff] %vm296, 0.0
          %512 = vst.msk [vmem:[%s442 + $0x228] sm:$0xff] %vm296, 0.0
          %513 = vst.msk [vmem:[%s442 + $0x230] sm:$0xff] %vm296, 0.0
          %514 = vst.msk [vmem:[%s442 + $0x238] sm:$0x3] %vm304, 0.0
          %515 = vst.msk [vmem:[%s442 + $0x240] sm:$0xff] %vm296, 0.0
          %516 = vst.msk [vmem:[%s442 + $0x248] sm:$0xff] %vm296, 0.0
          %517 = vst.msk [vmem:[%s442 + $0x250] sm:$0xff] %vm296, 0.0
          %518 = vst.msk [vmem:[%s442 + $0x258] sm:$0xff] %vm296, 0.0
          %519 = vst.msk [vmem:[%s442 + $0x260] sm:$0xff] %vm296, 0.0
          %520 = vst.msk [vmem:[%s442 + $0x268] sm:$0xff] %vm296, 0.0
          %521 = vst.msk [vmem:[%s442 + $0x270] sm:$0xff] %vm296, 0.0
          %522 = vst.msk [vmem:[%s442 + $0x278] sm:$0x3] %vm304, 0.0
          %523 = vst.msk [vmem:[%s442 + $0x280] sm:$0xff] %vm296, 0.0
          %524 = vst.msk [vmem:[%s442 + $0x288] sm:$0xff] %vm296, 0.0
          %525 = vst.msk [vmem:[%s442 + $0x290] sm:$0xff] %vm296, 0.0
          %526 = vst.msk [vmem:[%s442 + $0x298] sm:$0xff] %vm296, 0.0
          %527 = vst.msk [vmem:[%s442 + $0x2a0] sm:$0xff] %vm296, 0.0
          %528 = vst.msk [vmem:[%s442 + $0x2a8] sm:$0xff] %vm296, 0.0
          %529 = vst.msk [vmem:[%s442 + $0x2b0] sm:$0xff] %vm296, 0.0
          %530 = vst.msk [vmem:[%s442 + $0x2b8] sm:$0x3] %vm304, 0.0
          %531 = vst.msk [vmem:[%s442 + $0x2c0] sm:$0xff] %vm296, 0.0
          %532 = vst.msk [vmem:[%s442 + $0x2c8] sm:$0xff] %vm296, 0.0
          %533 = vst.msk [vmem:[%s442 + $0x2d0] sm:$0xff] %vm296, 0.0
          %534 = vst.msk [vmem:[%s442 + $0x2d8] sm:$0xff] %vm296, 0.0
          %535 = vst.msk [vmem:[%s442 + $0x2e0] sm:$0xff] %vm296, 0.0
          %536 = vst.msk [vmem:[%s442 + $0x2e8] sm:$0xff] %vm296, 0.0
          %537 = vst.msk [vmem:[%s442 + $0x2f0] sm:$0xff] %vm296, 0.0
          %538 = vst.msk [vmem:[%s442 + $0x2f8] sm:$0x3] %vm304, 0.0
          %539 = vst.msk [vmem:[%s442 + $0x300] sm:$0xff] %vm296, 0.0
          %540 = vst.msk [vmem:[%s442 + $0x308] sm:$0xff] %vm296, 0.0
          %541 = vst.msk [vmem:[%s442 + $0x310] sm:$0xff] %vm296, 0.0
          %542 = vst.msk [vmem:[%s442 + $0x318] sm:$0xff] %vm296, 0.0
          %543 = vst.msk [vmem:[%s442 + $0x320] sm:$0xff] %vm296, 0.0
          %544 = vst.msk [vmem:[%s442 + $0x328] sm:$0xff] %vm296, 0.0
          %545 = vst.msk [vmem:[%s442 + $0x330] sm:$0xff] %vm296, 0.0
          %546 = vst.msk [vmem:[%s442 + $0x338] sm:$0x3] %vm304, 0.0
          %547 = vst.msk [vmem:[%s442 + $0x340] sm:$0xff] %vm296, 0.0
          %548 = vst.msk [vmem:[%s442 + $0x348] sm:$0xff] %vm296, 0.0
          %549 = vst.msk [vmem:[%s442 + $0x350] sm:$0xff] %vm296, 0.0
          %550 = vst.msk [vmem:[%s442 + $0x358] sm:$0xff] %vm296, 0.0
          %551 = vst.msk [vmem:[%s442 + $0x360] sm:$0xff] %vm296, 0.0
          %552 = vst.msk [vmem:[%s442 + $0x368] sm:$0xff] %vm296, 0.0
          %553 = vst.msk [vmem:[%s442 + $0x370] sm:$0xff] %vm296, 0.0
          %554 = vst.msk [vmem:[%s442 + $0x378] sm:$0x3] %vm304, 0.0
          %555 = vst.msk [vmem:[%s442 + $0x380] sm:$0xff] %vm296, 0.0
          %556 = vst.msk [vmem:[%s442 + $0x388] sm:$0xff] %vm296, 0.0
          %557 = vst.msk [vmem:[%s442 + $0x390] sm:$0xff] %vm296, 0.0
          %558 = vst.msk [vmem:[%s442 + $0x398] sm:$0xff] %vm296, 0.0
          %559 = vst.msk [vmem:[%s442 + $0x3a0] sm:$0xff] %vm296, 0.0
          %560 = vst.msk [vmem:[%s442 + $0x3a8] sm:$0xff] %vm296, 0.0
          %561 = vst.msk [vmem:[%s442 + $0x3b0] sm:$0xff] %vm296, 0.0
          %562 = vst.msk [vmem:[%s442 + $0x3b8] sm:$0x3] %vm304, 0.0
          %563 = vst.msk [vmem:[%s442 + $0x3c0] sm:$0xff] %vm296, 0.0
          %564 = vst.msk [vmem:[%s442 + $0x3c8] sm:$0xff] %vm296, 0.0
          %565 = vst.msk [vmem:[%s442 + $0x3d0] sm:$0xff] %vm296, 0.0
          %566 = vst.msk [vmem:[%s442 + $0x3d8] sm:$0xff] %vm296, 0.0
          %567 = vst.msk [vmem:[%s442 + $0x3e0] sm:$0xff] %vm296, 0.0
          %568 = vst.msk [vmem:[%s442 + $0x3e8] sm:$0xff] %vm296, 0.0
          %569 = vst.msk [vmem:[%s442 + $0x3f0] sm:$0xff] %vm296, 0.0
          %570 = vst.msk [vmem:[%s442 + $0x3f8] sm:$0x3] %vm304, 0.0
          %571 = vst.msk [vmem:[%s442 + $0x400] sm:$0xff] %vm296, 0.0
          %572 = vst.msk [vmem:[%s442 + $0x408] sm:$0xff] %vm296, 0.0
          %573 = vst.msk [vmem:[%s442 + $0x410] sm:$0xff] %vm296, 0.0
          %574 = vst.msk [vmem:[%s442 + $0x418] sm:$0xff] %vm296, 0.0
          %575 = vst.msk [vmem:[%s442 + $0x420] sm:$0xff] %vm296, 0.0
          %576 = vst.msk [vmem:[%s442 + $0x428] sm:$0xff] %vm296, 0.0
          %577 = vst.msk [vmem:[%s442 + $0x430] sm:$0xff] %vm296, 0.0
          %578 = vst.msk [vmem:[%s442 + $0x438] sm:$0x3] %vm304, 0.0
          %579 = vst.msk [vmem:[%s442 + $0x440] sm:$0xff] %vm296, 0.0
          %580 = vst.msk [vmem:[%s442 + $0x448] sm:$0xff] %vm296, 0.0
          %581 = vst.msk [vmem:[%s442 + $0x450] sm:$0xff] %vm296, 0.0
          %582 = vst.msk [vmem:[%s442 + $0x458] sm:$0xff] %vm296, 0.0
          %583 = vst.msk [vmem:[%s442 + $0x460] sm:$0xff] %vm296, 0.0
          %584 = vst.msk [vmem:[%s442 + $0x468] sm:$0xff] %vm296, 0.0
          %585 = vst.msk [vmem:[%s442 + $0x470] sm:$0xff] %vm296, 0.0
          %586 = vst.msk [vmem:[%s442 + $0x478] sm:$0x3] %vm304, 0.0
          %s587 = scalar_lea.vmem [#allocation2], 1152
          %588 = vst.msk [vmem:[%s587] sm:$0xff] %vm296, 0.0
          %589 = vst.msk [vmem:[%s587 + $0x8] sm:$0xff] %vm296, 0.0
          %590 = vst.msk [vmem:[%s587 + $0x10] sm:$0xff] %vm296, 0.0
          %591 = vst.msk [vmem:[%s587 + $0x40] sm:$0xff] %vm296, 0.0
          %592 = vst.msk [vmem:[%s587 + $0x48] sm:$0xff] %vm296, 0.0
          %593 = vst.msk [vmem:[%s587 + $0x50] sm:$0xff] %vm296, 0.0
          %594 = vst.msk [vmem:[%s587 + $0x80] sm:$0xff] %vm296, 0.0
          %595 = vst.msk [vmem:[%s587 + $0x88] sm:$0xff] %vm296, 0.0
          %596 = vst.msk [vmem:[%s587 + $0x90] sm:$0xff] %vm296, 0.0
          %597 = vst.msk [vmem:[%s587 + $0xc0] sm:$0xff] %vm296, 0.0
          %598 = vst.msk [vmem:[%s587 + $0xc8] sm:$0xff] %vm296, 0.0
          %599 = vst.msk [vmem:[%s587 + $0xd0] sm:$0xff] %vm296, 0.0
          %600 = vst.msk [vmem:[%s587 + $0x100] sm:$0xff] %vm296, 0.0
          %601 = vst.msk [vmem:[%s587 + $0x108] sm:$0xff] %vm296, 0.0
          %602 = vst.msk [vmem:[%s587 + $0x110] sm:$0xff] %vm296, 0.0
          %603 = vst.msk [vmem:[%s587 + $0x140] sm:$0xff] %vm296, 0.0
          %604 = vst.msk [vmem:[%s587 + $0x148] sm:$0xff] %vm296, 0.0
          %605 = vst.msk [vmem:[%s587 + $0x150] sm:$0xff] %vm296, 0.0
          %606 = vst.msk [vmem:[%s587 + $0x180] sm:$0xff] %vm296, 0.0
          %607 = vst.msk [vmem:[%s587 + $0x188] sm:$0xff] %vm296, 0.0
          %608 = vst.msk [vmem:[%s587 + $0x190] sm:$0xff] %vm296, 0.0
          %609 = vst.msk [vmem:[%s587 + $0x1c0] sm:$0xff] %vm296, 0.0
          %610 = vst.msk [vmem:[%s587 + $0x1c8] sm:$0xff] %vm296, 0.0
          %611 = vst.msk [vmem:[%s587 + $0x1d0] sm:$0xff] %vm296, 0.0
          %612 = vst.msk [vmem:[%s587 + $0x200] sm:$0xff] %vm296, 0.0
          %613 = vst.msk [vmem:[%s587 + $0x208] sm:$0xff] %vm296, 0.0
          %614 = vst.msk [vmem:[%s587 + $0x210] sm:$0xff] %vm296, 0.0
          %615 = vst.msk [vmem:[%s587 + $0x240] sm:$0xff] %vm296, 0.0
          %616 = vst.msk [vmem:[%s587 + $0x248] sm:$0xff] %vm296, 0.0
          %617 = vst.msk [vmem:[%s587 + $0x250] sm:$0xff] %vm296, 0.0
          %618 = vst.msk [vmem:[%s587 + $0x280] sm:$0xff] %vm296, 0.0
          %619 = vst.msk [vmem:[%s587 + $0x288] sm:$0xff] %vm296, 0.0
          %620 = vst.msk [vmem:[%s587 + $0x290] sm:$0xff] %vm296, 0.0
          %621 = vst.msk [vmem:[%s587 + $0x2c0] sm:$0xff] %vm296, 0.0
          %622 = vst.msk [vmem:[%s587 + $0x2c8] sm:$0xff] %vm296, 0.0
          %623 = vst.msk [vmem:[%s587 + $0x2d0] sm:$0xff] %vm296, 0.0
          %624 = vst.msk [vmem:[%s587 + $0x300] sm:$0xff] %vm296, 0.0
          %625 = vst.msk [vmem:[%s587 + $0x308] sm:$0xff] %vm296, 0.0
          %626 = vst.msk [vmem:[%s587 + $0x310] sm:$0xff] %vm296, 0.0
          %627 = vst.msk [vmem:[%s587 + $0x340] sm:$0xff] %vm296, 0.0
          %628 = vst.msk [vmem:[%s587 + $0x348] sm:$0xff] %vm296, 0.0
          %629 = vst.msk [vmem:[%s587 + $0x350] sm:$0xff] %vm296, 0.0
          %630 = vst.msk [vmem:[%s587 + $0x380] sm:$0xff] %vm296, 0.0
          %631 = vst.msk [vmem:[%s587 + $0x388] sm:$0xff] %vm296, 0.0
          %632 = vst.msk [vmem:[%s587 + $0x390] sm:$0xff] %vm296, 0.0
          %633 = vst.msk [vmem:[%s587 + $0x3c0] sm:$0xff] %vm296, 0.0
          %634 = vst.msk [vmem:[%s587 + $0x3c8] sm:$0xff] %vm296, 0.0
          %635 = vst.msk [vmem:[%s587 + $0x3d0] sm:$0xff] %vm296, 0.0
          %636 = vst.msk [vmem:[%s587 + $0x28] sm:$0xff] %vm296, 0.0
          %637 = vst.msk [vmem:[%s587 + $0x30] sm:$0xff] %vm296, 0.0
          %638 = vst.msk [vmem:[%s587 + $0x38] sm:$0x3] %vm304, 0.0
          %639 = vst.msk [vmem:[%s587 + $0x68] sm:$0xff] %vm296, 0.0
          %640 = vst.msk [vmem:[%s587 + $0x70] sm:$0xff] %vm296, 0.0
          %641 = vst.msk [vmem:[%s587 + $0x78] sm:$0x3] %vm304, 0.0
          %642 = vst.msk [vmem:[%s587 + $0xa8] sm:$0xff] %vm296, 0.0
          %643 = vst.msk [vmem:[%s587 + $0xb0] sm:$0xff] %vm296, 0.0
          %644 = vst.msk [vmem:[%s587 + $0xb8] sm:$0x3] %vm304, 0.0
          %645 = vst.msk [vmem:[%s587 + $0xe8] sm:$0xff] %vm296, 0.0
          %646 = vst.msk [vmem:[%s587 + $0xf0] sm:$0xff] %vm296, 0.0
          %647 = vst.msk [vmem:[%s587 + $0xf8] sm:$0x3] %vm304, 0.0
          %648 = vst.msk [vmem:[%s587 + $0x128] sm:$0xff] %vm296, 0.0
          %649 = vst.msk [vmem:[%s587 + $0x130] sm:$0xff] %vm296, 0.0
          %650 = vst.msk [vmem:[%s587 + $0x138] sm:$0x3] %vm304, 0.0
          %651 = vst.msk [vmem:[%s587 + $0x168] sm:$0xff] %vm296, 0.0
          %652 = vst.msk [vmem:[%s587 + $0x170] sm:$0xff] %vm296, 0.0
          %653 = vst.msk [vmem:[%s587 + $0x178] sm:$0x3] %vm304, 0.0
          %654 = vst.msk [vmem:[%s587 + $0x1a8] sm:$0xff] %vm296, 0.0
          %655 = vst.msk [vmem:[%s587 + $0x1b0] sm:$0xff] %vm296, 0.0
          %656 = vst.msk [vmem:[%s587 + $0x1b8] sm:$0x3] %vm304, 0.0
          %657 = vst.msk [vmem:[%s587 + $0x1e8] sm:$0xff] %vm296, 0.0
          %658 = vst.msk [vmem:[%s587 + $0x1f0] sm:$0xff] %vm296, 0.0
          %659 = vst.msk [vmem:[%s587 + $0x1f8] sm:$0x3] %vm304, 0.0
          %660 = vst.msk [vmem:[%s587 + $0x228] sm:$0xff] %vm296, 0.0
          %661 = vst.msk [vmem:[%s587 + $0x230] sm:$0xff] %vm296, 0.0
          %662 = vst.msk [vmem:[%s587 + $0x238] sm:$0x3] %vm304, 0.0
          %663 = vst.msk [vmem:[%s587 + $0x268] sm:$0xff] %vm296, 0.0
          %664 = vst.msk [vmem:[%s587 + $0x270] sm:$0xff] %vm296, 0.0
          %665 = vst.msk [vmem:[%s587 + $0x278] sm:$0x3] %vm304, 0.0
          %666 = vst.msk [vmem:[%s587 + $0x2a8] sm:$0xff] %vm296, 0.0
          %667 = vst.msk [vmem:[%s587 + $0x2b0] sm:$0xff] %vm296, 0.0
          %668 = vst.msk [vmem:[%s587 + $0x2b8] sm:$0x3] %vm304, 0.0
          %669 = vst.msk [vmem:[%s587 + $0x2e8] sm:$0xff] %vm296, 0.0
          %670 = vst.msk [vmem:[%s587 + $0x2f0] sm:$0xff] %vm296, 0.0
          %671 = vst.msk [vmem:[%s587 + $0x2f8] sm:$0x3] %vm304, 0.0
          %672 = vst.msk [vmem:[%s587 + $0x328] sm:$0xff] %vm296, 0.0
          %673 = vst.msk [vmem:[%s587 + $0x330] sm:$0xff] %vm296, 0.0
          %674 = vst.msk [vmem:[%s587 + $0x338] sm:$0x3] %vm304, 0.0
          %675 = vst.msk [vmem:[%s587 + $0x368] sm:$0xff] %vm296, 0.0
          %676 = vst.msk [vmem:[%s587 + $0x370] sm:$0xff] %vm296, 0.0
          %677 = vst.msk [vmem:[%s587 + $0x378] sm:$0x3] %vm304, 0.0
          %678 = vst.msk [vmem:[%s587 + $0x3a8] sm:$0xff] %vm296, 0.0
          %679 = vst.msk [vmem:[%s587 + $0x3b0] sm:$0xff] %vm296, 0.0
          %680 = vst.msk [vmem:[%s587 + $0x3b8] sm:$0x3] %vm304, 0.0
          %681 = vst.msk [vmem:[%s587 + $0x3e8] sm:$0xff] %vm296, 0.0
          %682 = vst.msk [vmem:[%s587 + $0x3f0] sm:$0xff] %vm296, 0.0
          %683 = vst.msk [vmem:[%s587 + $0x3f8] sm:$0x3] %vm304, 0.0
          %v684 = vld [vmem:[%s290] sm:$0xff]
          %v685 = vld [vmem:[%s290 + $0x8] sm:$0xff]
          %v686 = vld [vmem:[%s290 + $0x10] sm:$0xff]
          %v687 = vld [vmem:[%s290 + $0x18] sm:$0xff]
          %v688 = vld [vmem:[%s290 + $0x20] sm:$0xff]
          %v689 = vld [vmem:[%s290 + $0x28] sm:$0xff]
          %v690 = vld [vmem:[%s290 + $0x30] sm:$0xff]
          %v691 = vld [vmem:[%s290 + $0x38] sm:$0xff]
          %v692 = vld [vmem:[%s290 + $0x40] sm:$0xff]
          %v693 = vld [vmem:[%s290 + $0x48] sm:$0xff]
          %v694 = vld [vmem:[%s290 + $0x50] sm:$0xff]
          %v695 = vld [vmem:[%s290 + $0x58] sm:$0xff]
          %v696 = vld [vmem:[%s290 + $0x60] sm:$0xff]
          %v697 = vld [vmem:[%s290 + $0x68] sm:$0xff]
          %v698 = vld [vmem:[%s290 + $0x70] sm:$0xff]
          %v699 = vld [vmem:[%s290 + $0x78] sm:$0xff]
          %v700 = vld [vmem:[%s290 + $0x80] sm:$0xff]
          %v701 = vld [vmem:[%s290 + $0x88] sm:$0xff]
          %v702 = vld [vmem:[%s290 + $0x90] sm:$0xff]
          %v703 = vld [vmem:[%s290 + $0x98] sm:$0xff]
          %v704 = vld [vmem:[%s290 + $0xa0] sm:$0xff]
          %v705 = vld [vmem:[%s290 + $0xa8] sm:$0xff]
          %v706 = vld [vmem:[%s290 + $0xb0] sm:$0xff]
          %v707 = vld [vmem:[%s290 + $0xb8] sm:$0xff]
          %v708 = vld [vmem:[%s290 + $0xc0] sm:$0xff]
          %v709 = vld [vmem:[%s290 + $0xc8] sm:$0xff]
          %v710 = vld [vmem:[%s290 + $0xd0] sm:$0xff]
          %v711 = vld [vmem:[%s290 + $0xd8] sm:$0xff]
          %v712 = vld [vmem:[%s290 + $0xe0] sm:$0xff]
          %v713 = vld [vmem:[%s290 + $0xe8] sm:$0xff]
          %v714 = vld [vmem:[%s290 + $0xf0] sm:$0xff]
          %v715 = vld [vmem:[%s290 + $0xf8] sm:$0xff]
          %716 = vst.msk [vmem:[%s587 + $0x18] sm:$0xff] %vm296, %v684
          %717 = vst.msk [vmem:[%s587 + $0x20] sm:$0xff] %vm296, %v685
          %718 = vst.msk [vmem:[%s587 + $0x58] sm:$0xff] %vm296, %v686
          %719 = vst.msk [vmem:[%s587 + $0x60] sm:$0xff] %vm296, %v687
          %720 = vst.msk [vmem:[%s587 + $0x98] sm:$0xff] %vm296, %v688
          %721 = vst.msk [vmem:[%s587 + $0xa0] sm:$0xff] %vm296, %v689
          %722 = vst.msk [vmem:[%s587 + $0xd8] sm:$0xff] %vm296, %v690
          %723 = vst.msk [vmem:[%s587 + $0xe0] sm:$0xff] %vm296, %v691
          %724 = vst.msk [vmem:[%s587 + $0x118] sm:$0xff] %vm296, %v692
          %725 = vst.msk [vmem:[%s587 + $0x120] sm:$0xff] %vm296, %v693
          %726 = vst.msk [vmem:[%s587 + $0x158] sm:$0xff] %vm296, %v694
          %727 = vst.msk [vmem:[%s587 + $0x160] sm:$0xff] %vm296, %v695
          %728 = vst.msk [vmem:[%s587 + $0x198] sm:$0xff] %vm296, %v696
          %729 = vst.msk [vmem:[%s587 + $0x1a0] sm:$0xff] %vm296, %v697
          %730 = vst.msk [vmem:[%s587 + $0x1d8] sm:$0xff] %vm296, %v698
          %731 = vst.msk [vmem:[%s587 + $0x1e0] sm:$0xff] %vm296, %v699
          %732 = vst.msk [vmem:[%s587 + $0x218] sm:$0xff] %vm296, %v700
          %733 = vst.msk [vmem:[%s587 + $0x220] sm:$0xff] %vm296, %v701
          %734 = vst.msk [vmem:[%s587 + $0x258] sm:$0xff] %vm296, %v702
          %735 = vst.msk [vmem:[%s587 + $0x260] sm:$0xff] %vm296, %v703
          %736 = vst.msk [vmem:[%s587 + $0x298] sm:$0xff] %vm296, %v704
          %737 = vst.msk [vmem:[%s587 + $0x2a0] sm:$0xff] %vm296, %v705
          %738 = vst.msk [vmem:[%s587 + $0x2d8] sm:$0xff] %vm296, %v706
          %739 = vst.msk [vmem:[%s587 + $0x2e0] sm:$0xff] %vm296, %v707
          %740 = vst.msk [vmem:[%s587 + $0x318] sm:$0xff] %vm296, %v708
          %741 = vst.msk [vmem:[%s587 + $0x320] sm:$0xff] %vm296, %v709
          %742 = vst.msk [vmem:[%s587 + $0x358] sm:$0xff] %vm296, %v710
          %743 = vst.msk [vmem:[%s587 + $0x360] sm:$0xff] %vm296, %v711
          %744 = vst.msk [vmem:[%s587 + $0x398] sm:$0xff] %vm296, %v712
          %745 = vst.msk [vmem:[%s587 + $0x3a0] sm:$0xff] %vm296, %v713
          %746 = vst.msk [vmem:[%s587 + $0x3d8] sm:$0xff] %vm296, %v714
          %747 = vst.msk [vmem:[%s587 + $0x3e0] sm:$0xff] %vm296, %v715
        $region52: #{_lambda_.3} parent=47 // pred_fallthru
          _
        %s748 = smul.u32 %s26, 16
        %s749 = sadd.s32 %s748, 18
        %s750 = smul.u32 %s749, 64
        %s751 = scalar_lea.vmem [#allocation2], %s750
        %v752 = vld [vmem:[%s751 + $0x18] sm:$0xff]
        %v753 = vld [vmem:[%s751 + $0x20] sm:$0xff]
        %v754 = vld [vmem:[%s751 + $0x58] sm:$0xff]
        %v755 = vld [vmem:[%s751 + $0x60] sm:$0xff]
        %v756 = vld [vmem:[%s751 + $0x98] sm:$0xff]
        %v757 = vld [vmem:[%s751 + $0xa0] sm:$0xff]
        %v758 = vld [vmem:[%s751 + $0xd8] sm:$0xff]
        %v759 = vld [vmem:[%s751 + $0xe0] sm:$0xff]
        %v760 = vld [vmem:[%s751 + $0x118] sm:$0xff]
        %v761 = vld [vmem:[%s751 + $0x120] sm:$0xff]
        %v762 = vld [vmem:[%s751 + $0x158] sm:$0xff]
        %v763 = vld [vmem:[%s751 + $0x160] sm:$0xff]
        %v764 = vld [vmem:[%s751 + $0x198] sm:$0xff]
        %v765 = vld [vmem:[%s751 + $0x1a0] sm:$0xff]
        %v766 = vld [vmem:[%s751 + $0x1d8] sm:$0xff]
        %v767 = vld [vmem:[%s751 + $0x1e0] sm:$0xff]
        %v768 = vld [vmem:[%s751 + $0x218] sm:$0xff]
        %v769 = vld [vmem:[%s751 + $0x220] sm:$0xff]
        %v770 = vld [vmem:[%s751 + $0x258] sm:$0xff]
        %v771 = vld [vmem:[%s751 + $0x260] sm:$0xff]
        %v772 = vld [vmem:[%s751 + $0x298] sm:$0xff]
        %v773 = vld [vmem:[%s751 + $0x2a0] sm:$0xff]
        %v774 = vld [vmem:[%s751 + $0x2d8] sm:$0xff]
        %v775 = vld [vmem:[%s751 + $0x2e0] sm:$0xff]
        %v776 = vld [vmem:[%s751 + $0x318] sm:$0xff]
        %v777 = vld [vmem:[%s751 + $0x320] sm:$0xff]
        %v778 = vld [vmem:[%s751 + $0x358] sm:$0xff]
        %v779 = vld [vmem:[%s751 + $0x360] sm:$0xff]
        %v780 = vld [vmem:[%s751 + $0x398] sm:$0xff]
        %v781 = vld [vmem:[%s751 + $0x3a0] sm:$0xff]
        %v782 = vld [vmem:[%s751 + $0x3d8] sm:$0xff]
        %v783 = vld [vmem:[%s751 + $0x3e0] sm:$0xff]
        %816 = vrot.lane.b32.xlu0 %v752, 120
        %v817 = vpop.permute.xlu0 %816
        %818 = vrot.lane.b32.xlu0 %v753, 120
        %v819 = vpop.permute.xlu0 %818
        %820 = vrot.lane.b32.xlu0 %v754, 120
        %v821 = vpop.permute.xlu0 %820
        %822 = vrot.lane.b32.xlu0 %v755, 120
        %v823 = vpop.permute.xlu0 %822
        %824 = vrot.lane.b32.xlu0 %v756, 120
        %v825 = vpop.permute.xlu0 %824
        %826 = vrot.lane.b32.xlu0 %v757, 120
        %v827 = vpop.permute.xlu0 %826
        %828 = vrot.lane.b32.xlu0 %v758, 120
        %v829 = vpop.permute.xlu0 %828
        %830 = vrot.lane.b32.xlu0 %v759, 120
        %v831 = vpop.permute.xlu0 %830
        %832 = vrot.lane.b32.xlu0 %v760, 120
        %v833 = vpop.permute.xlu0 %832
        %834 = vrot.lane.b32.xlu0 %v761, 120
        %v835 = vpop.permute.xlu0 %834
        %836 = vrot.lane.b32.xlu0 %v762, 120
        %v837 = vpop.permute.xlu0 %836
        %838 = vrot.lane.b32.xlu0 %v763, 120
        %v839 = vpop.permute.xlu0 %838
        %840 = vrot.lane.b32.xlu0 %v764, 120
        %v841 = vpop.permute.xlu0 %840
        %842 = vrot.lane.b32.xlu0 %v765, 120
        %v843 = vpop.permute.xlu0 %842
        %844 = vrot.lane.b32.xlu0 %v766, 120
        %v845 = vpop.permute.xlu0 %844
        %846 = vrot.lane.b32.xlu0 %v767, 120
        %v847 = vpop.permute.xlu0 %846
        %848 = vrot.lane.b32.xlu0 %v768, 120
        %v849 = vpop.permute.xlu0 %848
        %850 = vrot.lane.b32.xlu0 %v769, 120
        %v851 = vpop.permute.xlu0 %850
        %852 = vrot.lane.b32.xlu0 %v770, 120
        %v853 = vpop.permute.xlu0 %852
        %854 = vrot.lane.b32.xlu0 %v771, 120
        %v855 = vpop.permute.xlu0 %854
        %856 = vrot.lane.b32.xlu0 %v772, 120
        %v857 = vpop.permute.xlu0 %856
        %858 = vrot.lane.b32.xlu0 %v773, 120
        %v859 = vpop.permute.xlu0 %858
        %860 = vrot.lane.b32.xlu0 %v774, 120
        %v861 = vpop.permute.xlu0 %860
        %862 = vrot.lane.b32.xlu0 %v775, 120
        %v863 = vpop.permute.xlu0 %862
        %864 = vrot.lane.b32.xlu0 %v776, 120
        %v865 = vpop.permute.xlu0 %864
        %866 = vrot.lane.b32.xlu0 %v777, 120
        %v867 = vpop.permute.xlu0 %866
        %868 = vrot.lane.b32.xlu0 %v778, 120
        %v869 = vpop.permute.xlu0 %868
        %870 = vrot.lane.b32.xlu0 %v779, 120
        %v871 = vpop.permute.xlu0 %870
        %872 = vrot.lane.b32.xlu0 %v780, 120
        %v873 = vpop.permute.xlu0 %872
        %874 = vrot.lane.b32.xlu0 %v781, 120
        %v875 = vpop.permute.xlu0 %874
        %876 = vrot.lane.b32.xlu0 %v782, 120
        %v877 = vpop.permute.xlu0 %876
        %878 = vrot.lane.b32.xlu0 %v783, 120
        %v879 = vpop.permute.xlu0 %878
        %v912 = vadd.f32 %v752, %v817
        %v913 = vadd.f32 %v753, %v819
        %v914 = vadd.f32 %v754, %v821
        %v915 = vadd.f32 %v755, %v823
        %v916 = vadd.f32 %v756, %v825
        %v917 = vadd.f32 %v757, %v827
        %v918 = vadd.f32 %v758, %v829
        %v919 = vadd.f32 %v759, %v831
        %v920 = vadd.f32 %v760, %v833
        %v921 = vadd.f32 %v761, %v835
        %v922 = vadd.f32 %v762, %v837
        %v923 = vadd.f32 %v763, %v839
        %v924 = vadd.f32 %v764, %v841
        %v925 = vadd.f32 %v765, %v843
        %v926 = vadd.f32 %v766, %v845
        %v927 = vadd.f32 %v767, %v847
        %v928 = vadd.f32 %v768, %v849
        %v929 = vadd.f32 %v769, %v851
        %v930 = vadd.f32 %v770, %v853
        %v931 = vadd.f32 %v771, %v855
        %v932 = vadd.f32 %v772, %v857
        %v933 = vadd.f32 %v773, %v859
        %v934 = vadd.f32 %v774, %v861
        %v935 = vadd.f32 %v775, %v863
        %v936 = vadd.f32 %v776, %v865
        %v937 = vadd.f32 %v777, %v867
        %v938 = vadd.f32 %v778, %v869
        %v939 = vadd.f32 %v779, %v871
        %v940 = vadd.f32 %v780, %v873
        %v941 = vadd.f32 %v781, %v875
        %v942 = vadd.f32 %v782, %v877
        %v943 = vadd.f32 %v783, %v879
        %s944 = sadd.s32 %s748, 17
        %s945 = smul.u32 %s944, 64
        %s946 = scalar_lea.vmem [#allocation2], %s945
        %v947 = vld [vmem:[%s946 + $0x17] sm:$0xff]
        %v948 = vld [vmem:[%s946 + $0x1f] sm:$0xff]
        %v949 = vld [vmem:[%s946 + $0x57] sm:$0xff]
        %v950 = vld [vmem:[%s946 + $0x5f] sm:$0xff]
        %v951 = vld [vmem:[%s946 + $0x97] sm:$0xff]
        %v952 = vld [vmem:[%s946 + $0x9f] sm:$0xff]
        %v953 = vld [vmem:[%s946 + $0xd7] sm:$0xff]
        %v954 = vld [vmem:[%s946 + $0xdf] sm:$0xff]
        %v955 = vld [vmem:[%s946 + $0x117] sm:$0xff]
        %v956 = vld [vmem:[%s946 + $0x11f] sm:$0xff]
        %v957 = vld [vmem:[%s946 + $0x157] sm:$0xff]
        %v958 = vld [vmem:[%s946 + $0x15f] sm:$0xff]
        %v959 = vld [vmem:[%s946 + $0x197] sm:$0xff]
        %v960 = vld [vmem:[%s946 + $0x19f] sm:$0xff]
        %v961 = vld [vmem:[%s946 + $0x1d7] sm:$0xff]
        %v962 = vld [vmem:[%s946 + $0x1df] sm:$0xff]
        %v963 = vld [vmem:[%s946 + $0x217] sm:$0xff]
        %v964 = vld [vmem:[%s946 + $0x21f] sm:$0xff]
        %v965 = vld [vmem:[%s946 + $0x257] sm:$0xff]
        %v966 = vld [vmem:[%s946 + $0x25f] sm:$0xff]
        %v967 = vld [vmem:[%s946 + $0x297] sm:$0xff]
        %v968 = vld [vmem:[%s946 + $0x29f] sm:$0xff]
        %v969 = vld [vmem:[%s946 + $0x2d7] sm:$0xff]
        %v970 = vld [vmem:[%s946 + $0x2df] sm:$0xff]
        %v971 = vld [vmem:[%s946 + $0x317] sm:$0xff]
        %v972 = vld [vmem:[%s946 + $0x31f] sm:$0xff]
        %v973 = vld [vmem:[%s946 + $0x357] sm:$0xff]
        %v974 = vld [vmem:[%s946 + $0x35f] sm:$0xff]
        %v975 = vld [vmem:[%s946 + $0x397] sm:$0xff]
        %v976 = vld [vmem:[%s946 + $0x39f] sm:$0xff]
        %v977 = vld [vmem:[%s946 + $0x3d7] sm:$0xff]
        %v978 = vld [vmem:[%s946 + $0x3df] sm:$0xff]
        %v979 = vld [vmem:[%s946 + $0x18] sm:$0xff]
        %v980 = vld [vmem:[%s946 + $0x20] sm:$0xff]
        %v981 = vld [vmem:[%s946 + $0x58] sm:$0xff]
        %v982 = vld [vmem:[%s946 + $0x60] sm:$0xff]
        %v983 = vld [vmem:[%s946 + $0x98] sm:$0xff]
        %v984 = vld [vmem:[%s946 + $0xa0] sm:$0xff]
        %v985 = vld [vmem:[%s946 + $0xd8] sm:$0xff]
        %v986 = vld [vmem:[%s946 + $0xe0] sm:$0xff]
        %v987 = vld [vmem:[%s946 + $0x118] sm:$0xff]
        %v988 = vld [vmem:[%s946 + $0x120] sm:$0xff]
        %v989 = vld [vmem:[%s946 + $0x158] sm:$0xff]
        %v990 = vld [vmem:[%s946 + $0x160] sm:$0xff]
        %v991 = vld [vmem:[%s946 + $0x198] sm:$0xff]
        %v992 = vld [vmem:[%s946 + $0x1a0] sm:$0xff]
        %v993 = vld [vmem:[%s946 + $0x1d8] sm:$0xff]
        %v994 = vld [vmem:[%s946 + $0x1e0] sm:$0xff]
        %v995 = vld [vmem:[%s946 + $0x218] sm:$0xff]
        %v996 = vld [vmem:[%s946 + $0x220] sm:$0xff]
        %v997 = vld [vmem:[%s946 + $0x258] sm:$0xff]
        %v998 = vld [vmem:[%s946 + $0x260] sm:$0xff]
        %v999 = vld [vmem:[%s946 + $0x298] sm:$0xff]
        %v1000 = vld [vmem:[%s946 + $0x2a0] sm:$0xff]
        %v1001 = vld [vmem:[%s946 + $0x2d8] sm:$0xff]
        %v1002 = vld [vmem:[%s946 + $0x2e0] sm:$0xff]
        %v1003 = vld [vmem:[%s946 + $0x318] sm:$0xff]
        %v1004 = vld [vmem:[%s946 + $0x320] sm:$0xff]
        %v1005 = vld [vmem:[%s946 + $0x358] sm:$0xff]
        %v1006 = vld [vmem:[%s946 + $0x360] sm:$0xff]
        %v1007 = vld [vmem:[%s946 + $0x398] sm:$0xff]
        %v1008 = vld [vmem:[%s946 + $0x3a0] sm:$0xff]
        %v1009 = vld [vmem:[%s946 + $0x3d8] sm:$0xff]
        %v1010 = vld [vmem:[%s946 + $0x3e0] sm:$0xff]
        %v1011 = vld [vmem:[%s946 + $0x19] sm:$0xff]
        %v1012 = vld [vmem:[%s946 + $0x21] sm:$0xff]
        %v1013 = vld [vmem:[%s946 + $0x59] sm:$0xff]
        %v1014 = vld [vmem:[%s946 + $0x61] sm:$0xff]
        %v1015 = vld [vmem:[%s946 + $0x99] sm:$0xff]
        %v1016 = vld [vmem:[%s946 + $0xa1] sm:$0xff]
        %v1017 = vld [vmem:[%s946 + $0xd9] sm:$0xff]
        %v1018 = vld [vmem:[%s946 + $0xe1] sm:$0xff]
        %v1019 = vld [vmem:[%s946 + $0x119] sm:$0xff]
        %v1020 = vld [vmem:[%s946 + $0x121] sm:$0xff]
        %v1021 = vld [vmem:[%s946 + $0x159] sm:$0xff]
        %v1022 = vld [vmem:[%s946 + $0x161] sm:$0xff]
        %v1023 = vld [vmem:[%s946 + $0x199] sm:$0xff]
        %v1024 = vld [vmem:[%s946 + $0x1a1] sm:$0xff]
        %v1025 = vld [vmem:[%s946 + $0x1d9] sm:$0xff]
        %v1026 = vld [vmem:[%s946 + $0x1e1] sm:$0xff]
        %v1027 = vld [vmem:[%s946 + $0x219] sm:$0xff]
        %v1028 = vld [vmem:[%s946 + $0x221] sm:$0xff]
        %v1029 = vld [vmem:[%s946 + $0x259] sm:$0xff]
        %v1030 = vld [vmem:[%s946 + $0x261] sm:$0xff]
        %v1031 = vld [vmem:[%s946 + $0x299] sm:$0xff]
        %v1032 = vld [vmem:[%s946 + $0x2a1] sm:$0xff]
        %v1033 = vld [vmem:[%s946 + $0x2d9] sm:$0xff]
        %v1034 = vld [vmem:[%s946 + $0x2e1] sm:$0xff]
        %v1035 = vld [vmem:[%s946 + $0x319] sm:$0xff]
        %v1036 = vld [vmem:[%s946 + $0x321] sm:$0xff]
        %v1037 = vld [vmem:[%s946 + $0x359] sm:$0xff]
        %v1038 = vld [vmem:[%s946 + $0x361] sm:$0xff]
        %v1039 = vld [vmem:[%s946 + $0x399] sm:$0xff]
        %v1040 = vld [vmem:[%s946 + $0x3a1] sm:$0xff]
        %v1041 = vld [vmem:[%s946 + $0x3d9] sm:$0xff]
        %v1042 = vld [vmem:[%s946 + $0x3e1] sm:$0xff]
        %v1043 = vld [vmem:[%s751 + $0x17] sm:$0xff]
        %v1044 = vld [vmem:[%s751 + $0x1f] sm:$0xff]
        %v1045 = vld [vmem:[%s751 + $0x57] sm:$0xff]
        %v1046 = vld [vmem:[%s751 + $0x5f] sm:$0xff]
        %v1047 = vld [vmem:[%s751 + $0x97] sm:$0xff]
        %v1048 = vld [vmem:[%s751 + $0x9f] sm:$0xff]
        %v1049 = vld [vmem:[%s751 + $0xd7] sm:$0xff]
        %v1050 = vld [vmem:[%s751 + $0xdf] sm:$0xff]
        %v1051 = vld [vmem:[%s751 + $0x117] sm:$0xff]
        %v1052 = vld [vmem:[%s751 + $0x11f] sm:$0xff]
        %v1053 = vld [vmem:[%s751 + $0x157] sm:$0xff]
        %v1054 = vld [vmem:[%s751 + $0x15f] sm:$0xff]
        %v1055 = vld [vmem:[%s751 + $0x197] sm:$0xff]
        %v1056 = vld [vmem:[%s751 + $0x19f] sm:$0xff]
        %v1057 = vld [vmem:[%s751 + $0x1d7] sm:$0xff]
        %v1058 = vld [vmem:[%s751 + $0x1df] sm:$0xff]
        %v1059 = vld [vmem:[%s751 + $0x217] sm:$0xff]
        %v1060 = vld [vmem:[%s751 + $0x21f] sm:$0xff]
        %v1061 = vld [vmem:[%s751 + $0x257] sm:$0xff]
        %v1062 = vld [vmem:[%s751 + $0x25f] sm:$0xff]
        %v1063 = vld [vmem:[%s751 + $0x297] sm:$0xff]
        %v1064 = vld [vmem:[%s751 + $0x29f] sm:$0xff]
        %v1065 = vld [vmem:[%s751 + $0x2d7] sm:$0xff]
        %v1066 = vld [vmem:[%s751 + $0x2df] sm:$0xff]
        %v1067 = vld [vmem:[%s751 + $0x317] sm:$0xff]
        %v1068 = vld [vmem:[%s751 + $0x31f] sm:$0xff]
        %v1069 = vld [vmem:[%s751 + $0x357] sm:$0xff]
        %v1070 = vld [vmem:[%s751 + $0x35f] sm:$0xff]
        %v1071 = vld [vmem:[%s751 + $0x397] sm:$0xff]
        %v1072 = vld [vmem:[%s751 + $0x39f] sm:$0xff]
        %v1073 = vld [vmem:[%s751 + $0x3d7] sm:$0xff]
        %v1074 = vld [vmem:[%s751 + $0x3df] sm:$0xff]
        %v1075 = vld [vmem:[%s751 + $0x19] sm:$0xff]
        %v1076 = vld [vmem:[%s751 + $0x21] sm:$0xff]
        %v1077 = vld [vmem:[%s751 + $0x59] sm:$0xff]
        %v1078 = vld [vmem:[%s751 + $0x61] sm:$0xff]
        %v1079 = vld [vmem:[%s751 + $0x99] sm:$0xff]
        %v1080 = vld [vmem:[%s751 + $0xa1] sm:$0xff]
        %v1081 = vld [vmem:[%s751 + $0xd9] sm:$0xff]
        %v1082 = vld [vmem:[%s751 + $0xe1] sm:$0xff]
        %v1083 = vld [vmem:[%s751 + $0x119] sm:$0xff]
        %v1084 = vld [vmem:[%s751 + $0x121] sm:$0xff]
        %v1085 = vld [vmem:[%s751 + $0x159] sm:$0xff]
        %v1086 = vld [vmem:[%s751 + $0x161] sm:$0xff]
        %v1087 = vld [vmem:[%s751 + $0x199] sm:$0xff]
        %v1088 = vld [vmem:[%s751 + $0x1a1] sm:$0xff]
        %v1089 = vld [vmem:[%s751 + $0x1d9] sm:$0xff]
        %v1090 = vld [vmem:[%s751 + $0x1e1] sm:$0xff]
        %v1091 = vld [vmem:[%s751 + $0x219] sm:$0xff]
        %v1092 = vld [vmem:[%s751 + $0x221] sm:$0xff]
        %v1093 = vld [vmem:[%s751 + $0x259] sm:$0xff]
        %v1094 = vld [vmem:[%s751 + $0x261] sm:$0xff]
        %v1095 = vld [vmem:[%s751 + $0x299] sm:$0xff]
        %v1096 = vld [vmem:[%s751 + $0x2a1] sm:$0xff]
        %v1097 = vld [vmem:[%s751 + $0x2d9] sm:$0xff]
        %v1098 = vld [vmem:[%s751 + $0x2e1] sm:$0xff]
        %v1099 = vld [vmem:[%s751 + $0x319] sm:$0xff]
        %v1100 = vld [vmem:[%s751 + $0x321] sm:$0xff]
        %v1101 = vld [vmem:[%s751 + $0x359] sm:$0xff]
        %v1102 = vld [vmem:[%s751 + $0x361] sm:$0xff]
        %v1103 = vld [vmem:[%s751 + $0x399] sm:$0xff]
        %v1104 = vld [vmem:[%s751 + $0x3a1] sm:$0xff]
        %v1105 = vld [vmem:[%s751 + $0x3d9] sm:$0xff]
        %v1106 = vld [vmem:[%s751 + $0x3e1] sm:$0xff]
        %s1107 = sadd.s32 %s748, 19
        %s1108 = smul.u32 %s1107, 64
        %s1109 = scalar_lea.vmem [#allocation2], %s1108
        %v1110 = vld [vmem:[%s1109 + $0x17] sm:$0xff]
        %v1111 = vld [vmem:[%s1109 + $0x1f] sm:$0xff]
        %v1112 = vld [vmem:[%s1109 + $0x57] sm:$0xff]
        %v1113 = vld [vmem:[%s1109 + $0x5f] sm:$0xff]
        %v1114 = vld [vmem:[%s1109 + $0x97] sm:$0xff]
        %v1115 = vld [vmem:[%s1109 + $0x9f] sm:$0xff]
        %v1116 = vld [vmem:[%s1109 + $0xd7] sm:$0xff]
        %v1117 = vld [vmem:[%s1109 + $0xdf] sm:$0xff]
        %v1118 = vld [vmem:[%s1109 + $0x117] sm:$0xff]
        %v1119 = vld [vmem:[%s1109 + $0x11f] sm:$0xff]
        %v1120 = vld [vmem:[%s1109 + $0x157] sm:$0xff]
        %v1121 = vld [vmem:[%s1109 + $0x15f] sm:$0xff]
        %v1122 = vld [vmem:[%s1109 + $0x197] sm:$0xff]
        %v1123 = vld [vmem:[%s1109 + $0x19f] sm:$0xff]
        %v1124 = vld [vmem:[%s1109 + $0x1d7] sm:$0xff]
        %v1125 = vld [vmem:[%s1109 + $0x1df] sm:$0xff]
        %v1126 = vld [vmem:[%s1109 + $0x217] sm:$0xff]
        %v1127 = vld [vmem:[%s1109 + $0x21f] sm:$0xff]
        %v1128 = vld [vmem:[%s1109 + $0x257] sm:$0xff]
        %v1129 = vld [vmem:[%s1109 + $0x25f] sm:$0xff]
        %v1130 = vld [vmem:[%s1109 + $0x297] sm:$0xff]
        %v1131 = vld [vmem:[%s1109 + $0x29f] sm:$0xff]
        %v1132 = vld [vmem:[%s1109 + $0x2d7] sm:$0xff]
        %v1133 = vld [vmem:[%s1109 + $0x2df] sm:$0xff]
        %v1134 = vld [vmem:[%s1109 + $0x317] sm:$0xff]
        %v1135 = vld [vmem:[%s1109 + $0x31f] sm:$0xff]
        %v1136 = vld [vmem:[%s1109 + $0x357] sm:$0xff]
        %v1137 = vld [vmem:[%s1109 + $0x35f] sm:$0xff]
        %v1138 = vld [vmem:[%s1109 + $0x397] sm:$0xff]
        %v1139 = vld [vmem:[%s1109 + $0x39f] sm:$0xff]
        %v1140 = vld [vmem:[%s1109 + $0x3d7] sm:$0xff]
        %v1141 = vld [vmem:[%s1109 + $0x3df] sm:$0xff]
        %v1142 = vld [vmem:[%s1109 + $0x18] sm:$0xff]
        %v1143 = vld [vmem:[%s1109 + $0x20] sm:$0xff]
        %v1144 = vld [vmem:[%s1109 + $0x58] sm:$0xff]
        %v1145 = vld [vmem:[%s1109 + $0x60] sm:$0xff]
        %v1146 = vld [vmem:[%s1109 + $0x98] sm:$0xff]
        %v1147 = vld [vmem:[%s1109 + $0xa0] sm:$0xff]
        %v1148 = vld [vmem:[%s1109 + $0xd8] sm:$0xff]
        %v1149 = vld [vmem:[%s1109 + $0xe0] sm:$0xff]
        %v1150 = vld [vmem:[%s1109 + $0x118] sm:$0xff]
        %v1151 = vld [vmem:[%s1109 + $0x120] sm:$0xff]
        %v1152 = vld [vmem:[%s1109 + $0x158] sm:$0xff]
        %v1153 = vld [vmem:[%s1109 + $0x160] sm:$0xff]
        %v1154 = vld [vmem:[%s1109 + $0x198] sm:$0xff]
        %v1155 = vld [vmem:[%s1109 + $0x1a0] sm:$0xff]
        %v1156 = vld [vmem:[%s1109 + $0x1d8] sm:$0xff]
        %v1157 = vld [vmem:[%s1109 + $0x1e0] sm:$0xff]
        %v1158 = vld [vmem:[%s1109 + $0x218] sm:$0xff]
        %v1159 = vld [vmem:[%s1109 + $0x220] sm:$0xff]
        %v1160 = vld [vmem:[%s1109 + $0x258] sm:$0xff]
        %v1161 = vld [vmem:[%s1109 + $0x260] sm:$0xff]
        %v1162 = vld [vmem:[%s1109 + $0x298] sm:$0xff]
        %v1163 = vld [vmem:[%s1109 + $0x2a0] sm:$0xff]
        %v1164 = vld [vmem:[%s1109 + $0x2d8] sm:$0xff]
        %v1165 = vld [vmem:[%s1109 + $0x2e0] sm:$0xff]
        %v1166 = vld [vmem:[%s1109 + $0x318] sm:$0xff]
        %v1167 = vld [vmem:[%s1109 + $0x320] sm:$0xff]
        %v1168 = vld [vmem:[%s1109 + $0x358] sm:$0xff]
        %v1169 = vld [vmem:[%s1109 + $0x360] sm:$0xff]
        %v1170 = vld [vmem:[%s1109 + $0x398] sm:$0xff]
        %v1171 = vld [vmem:[%s1109 + $0x3a0] sm:$0xff]
        %v1172 = vld [vmem:[%s1109 + $0x3d8] sm:$0xff]
        %v1173 = vld [vmem:[%s1109 + $0x3e0] sm:$0xff]
        %v1174 = vld [vmem:[%s1109 + $0x19] sm:$0xff]
        %v1175 = vld [vmem:[%s1109 + $0x21] sm:$0xff]
        %v1176 = vld [vmem:[%s1109 + $0x59] sm:$0xff]
        %v1177 = vld [vmem:[%s1109 + $0x61] sm:$0xff]
        %v1178 = vld [vmem:[%s1109 + $0x99] sm:$0xff]
        %v1179 = vld [vmem:[%s1109 + $0xa1] sm:$0xff]
        %v1180 = vld [vmem:[%s1109 + $0xd9] sm:$0xff]
        %v1181 = vld [vmem:[%s1109 + $0xe1] sm:$0xff]
        %v1182 = vld [vmem:[%s1109 + $0x119] sm:$0xff]
        %v1183 = vld [vmem:[%s1109 + $0x121] sm:$0xff]
        %v1184 = vld [vmem:[%s1109 + $0x159] sm:$0xff]
        %v1185 = vld [vmem:[%s1109 + $0x161] sm:$0xff]
        %v1186 = vld [vmem:[%s1109 + $0x199] sm:$0xff]
        %v1187 = vld [vmem:[%s1109 + $0x1a1] sm:$0xff]
        %v1188 = vld [vmem:[%s1109 + $0x1d9] sm:$0xff]
        %v1189 = vld [vmem:[%s1109 + $0x1e1] sm:$0xff]
        %v1190 = vld [vmem:[%s1109 + $0x219] sm:$0xff]
        %v1191 = vld [vmem:[%s1109 + $0x221] sm:$0xff]
        %v1192 = vld [vmem:[%s1109 + $0x259] sm:$0xff]
        %v1193 = vld [vmem:[%s1109 + $0x261] sm:$0xff]
        %v1194 = vld [vmem:[%s1109 + $0x299] sm:$0xff]
        %v1195 = vld [vmem:[%s1109 + $0x2a1] sm:$0xff]
        %v1196 = vld [vmem:[%s1109 + $0x2d9] sm:$0xff]
        %v1197 = vld [vmem:[%s1109 + $0x2e1] sm:$0xff]
        %v1198 = vld [vmem:[%s1109 + $0x319] sm:$0xff]
        %v1199 = vld [vmem:[%s1109 + $0x321] sm:$0xff]
        %v1200 = vld [vmem:[%s1109 + $0x359] sm:$0xff]
        %v1201 = vld [vmem:[%s1109 + $0x361] sm:$0xff]
        %v1202 = vld [vmem:[%s1109 + $0x399] sm:$0xff]
        %v1203 = vld [vmem:[%s1109 + $0x3a1] sm:$0xff]
        %v1204 = vld [vmem:[%s1109 + $0x3d9] sm:$0xff]
        %v1205 = vld [vmem:[%s1109 + $0x3e1] sm:$0xff]
        %1238 = vrot.lane.b32.xlu0 %v979, 8
        %v1239 = vpop.permute.xlu0 %1238
        %1240 = vrot.lane.b32.xlu0 %v980, 8
        %v1241 = vpop.permute.xlu0 %1240
        %1242 = vrot.lane.b32.xlu0 %v981, 8
        %v1243 = vpop.permute.xlu0 %1242
        %1244 = vrot.lane.b32.xlu0 %v982, 8
        %v1245 = vpop.permute.xlu0 %1244
        %1246 = vrot.lane.b32.xlu0 %v983, 8
        %v1247 = vpop.permute.xlu0 %1246
        %1248 = vrot.lane.b32.xlu0 %v984, 8
        %v1249 = vpop.permute.xlu0 %1248
        %1250 = vrot.lane.b32.xlu0 %v985, 8
        %v1251 = vpop.permute.xlu0 %1250
        %1252 = vrot.lane.b32.xlu0 %v986, 8
        %v1253 = vpop.permute.xlu0 %1252
        %1254 = vrot.lane.b32.xlu0 %v987, 8
        %v1255 = vpop.permute.xlu0 %1254
        %1256 = vrot.lane.b32.xlu0 %v988, 8
        %v1257 = vpop.permute.xlu0 %1256
        %1258 = vrot.lane.b32.xlu0 %v989, 8
        %v1259 = vpop.permute.xlu0 %1258
        %1260 = vrot.lane.b32.xlu0 %v990, 8
        %v1261 = vpop.permute.xlu0 %1260
        %1262 = vrot.lane.b32.xlu0 %v991, 8
        %v1263 = vpop.permute.xlu0 %1262
        %1264 = vrot.lane.b32.xlu0 %v992, 8
        %v1265 = vpop.permute.xlu0 %1264
        %1266 = vrot.lane.b32.xlu0 %v993, 8
        %v1267 = vpop.permute.xlu0 %1266
        %1268 = vrot.lane.b32.xlu0 %v994, 8
        %v1269 = vpop.permute.xlu0 %1268
        %1270 = vrot.lane.b32.xlu0 %v995, 8
        %v1271 = vpop.permute.xlu0 %1270
        %1272 = vrot.lane.b32.xlu0 %v996, 8
        %v1273 = vpop.permute.xlu0 %1272
        %1274 = vrot.lane.b32.xlu0 %v997, 8
        %v1275 = vpop.permute.xlu0 %1274
        %1276 = vrot.lane.b32.xlu0 %v998, 8
        %v1277 = vpop.permute.xlu0 %1276
        %1278 = vrot.lane.b32.xlu0 %v999, 8
        %v1279 = vpop.permute.xlu0 %1278
        %1280 = vrot.lane.b32.xlu0 %v1000, 8
        %v1281 = vpop.permute.xlu0 %1280
        %1282 = vrot.lane.b32.xlu0 %v1001, 8
        %v1283 = vpop.permute.xlu0 %1282
        %1284 = vrot.lane.b32.xlu0 %v1002, 8
        %v1285 = vpop.permute.xlu0 %1284
        %1286 = vrot.lane.b32.xlu0 %v1003, 8
        %v1287 = vpop.permute.xlu0 %1286
        %1288 = vrot.lane.b32.xlu0 %v1004, 8
        %v1289 = vpop.permute.xlu0 %1288
        %1290 = vrot.lane.b32.xlu0 %v1005, 8
        %v1291 = vpop.permute.xlu0 %1290
        %1292 = vrot.lane.b32.xlu0 %v1006, 8
        %v1293 = vpop.permute.xlu0 %1292
        %1294 = vrot.lane.b32.xlu0 %v1007, 8
        %v1295 = vpop.permute.xlu0 %1294
        %1296 = vrot.lane.b32.xlu0 %v1008, 8
        %v1297 = vpop.permute.xlu0 %1296
        %1298 = vrot.lane.b32.xlu0 %v1009, 8
        %v1299 = vpop.permute.xlu0 %1298
        %1300 = vrot.lane.b32.xlu0 %v1010, 8
        %v1301 = vpop.permute.xlu0 %1300
        %1366 = vrot.lane.b32.xlu0 %v1011, 16
        %v1367 = vpop.permute.xlu0 %1366
        %1368 = vrot.lane.b32.xlu0 %v1012, 16
        %v1369 = vpop.permute.xlu0 %1368
        %1370 = vrot.lane.b32.xlu0 %v1013, 16
        %v1371 = vpop.permute.xlu0 %1370
        %1372 = vrot.lane.b32.xlu0 %v1014, 16
        %v1373 = vpop.permute.xlu0 %1372
        %1374 = vrot.lane.b32.xlu0 %v1015, 16
        %v1375 = vpop.permute.xlu0 %1374
        %1376 = vrot.lane.b32.xlu0 %v1016, 16
        %v1377 = vpop.permute.xlu0 %1376
        %1378 = vrot.lane.b32.xlu0 %v1017, 16
        %v1379 = vpop.permute.xlu0 %1378
        %1380 = vrot.lane.b32.xlu0 %v1018, 16
        %v1381 = vpop.permute.xlu0 %1380
        %1382 = vrot.lane.b32.xlu0 %v1019, 16
        %v1383 = vpop.permute.xlu0 %1382
        %1384 = vrot.lane.b32.xlu0 %v1020, 16
        %v1385 = vpop.permute.xlu0 %1384
        %1386 = vrot.lane.b32.xlu0 %v1021, 16
        %v1387 = vpop.permute.xlu0 %1386
        %1388 = vrot.lane.b32.xlu0 %v1022, 16
        %v1389 = vpop.permute.xlu0 %1388
        %1390 = vrot.lane.b32.xlu0 %v1023, 16
        %v1391 = vpop.permute.xlu0 %1390
        %1392 = vrot.lane.b32.xlu0 %v1024, 16
        %v1393 = vpop.permute.xlu0 %1392
        %1394 = vrot.lane.b32.xlu0 %v1025, 16
        %v1395 = vpop.permute.xlu0 %1394
        %1396 = vrot.lane.b32.xlu0 %v1026, 16
        %v1397 = vpop.permute.xlu0 %1396
        %1398 = vrot.lane.b32.xlu0 %v1027, 16
        %v1399 = vpop.permute.xlu0 %1398
        %1400 = vrot.lane.b32.xlu0 %v1028, 16
        %v1401 = vpop.permute.xlu0 %1400
        %1402 = vrot.lane.b32.xlu0 %v1029, 16
        %v1403 = vpop.permute.xlu0 %1402
        %1404 = vrot.lane.b32.xlu0 %v1030, 16
        %v1405 = vpop.permute.xlu0 %1404
        %1406 = vrot.lane.b32.xlu0 %v1031, 16
        %v1407 = vpop.permute.xlu0 %1406
        %1408 = vrot.lane.b32.xlu0 %v1032, 16
        %v1409 = vpop.permute.xlu0 %1408
        %1410 = vrot.lane.b32.xlu0 %v1033, 16
        %v1411 = vpop.permute.xlu0 %1410
        %1412 = vrot.lane.b32.xlu0 %v1034, 16
        %v1413 = vpop.permute.xlu0 %1412
        %1414 = vrot.lane.b32.xlu0 %v1035, 16
        %v1415 = vpop.permute.xlu0 %1414
        %1416 = vrot.lane.b32.xlu0 %v1036, 16
        %v1417 = vpop.permute.xlu0 %1416
        %1418 = vrot.lane.b32.xlu0 %v1037, 16
        %v1419 = vpop.permute.xlu0 %1418
        %1420 = vrot.lane.b32.xlu0 %v1038, 16
        %v1421 = vpop.permute.xlu0 %1420
        %1422 = vrot.lane.b32.xlu0 %v1039, 16
        %v1423 = vpop.permute.xlu0 %1422
        %1424 = vrot.lane.b32.xlu0 %v1040, 16
        %v1425 = vpop.permute.xlu0 %1424
        %1426 = vrot.lane.b32.xlu0 %v1041, 16
        %v1427 = vpop.permute.xlu0 %1426
        %1428 = vrot.lane.b32.xlu0 %v1042, 16
        %v1429 = vpop.permute.xlu0 %1428
        %1494 = vrot.lane.b32.xlu0 %v1043, 24
        %v1495 = vpop.permute.xlu0 %1494
        %1496 = vrot.lane.b32.xlu0 %v1044, 24
        %v1497 = vpop.permute.xlu0 %1496
        %1498 = vrot.lane.b32.xlu0 %v1045, 24
        %v1499 = vpop.permute.xlu0 %1498
        %1500 = vrot.lane.b32.xlu0 %v1046, 24
        %v1501 = vpop.permute.xlu0 %1500
        %1502 = vrot.lane.b32.xlu0 %v1047, 24
        %v1503 = vpop.permute.xlu0 %1502
        %1504 = vrot.lane.b32.xlu0 %v1048, 24
        %v1505 = vpop.permute.xlu0 %1504
        %1506 = vrot.lane.b32.xlu0 %v1049, 24
        %v1507 = vpop.permute.xlu0 %1506
        %1508 = vrot.lane.b32.xlu0 %v1050, 24
        %v1509 = vpop.permute.xlu0 %1508
        %1510 = vrot.lane.b32.xlu0 %v1051, 24
        %v1511 = vpop.permute.xlu0 %1510
        %1512 = vrot.lane.b32.xlu0 %v1052, 24
        %v1513 = vpop.permute.xlu0 %1512
        %1514 = vrot.lane.b32.xlu0 %v1053, 24
        %v1515 = vpop.permute.xlu0 %1514
        %1516 = vrot.lane.b32.xlu0 %v1054, 24
        %v1517 = vpop.permute.xlu0 %1516
        %1518 = vrot.lane.b32.xlu0 %v1055, 24
        %v1519 = vpop.permute.xlu0 %1518
        %1520 = vrot.lane.b32.xlu0 %v1056, 24
        %v1521 = vpop.permute.xlu0 %1520
        %1522 = vrot.lane.b32.xlu0 %v1057, 24
        %v1523 = vpop.permute.xlu0 %1522
        %1524 = vrot.lane.b32.xlu0 %v1058, 24
        %v1525 = vpop.permute.xlu0 %1524
        %1526 = vrot.lane.b32.xlu0 %v1059, 24
        %v1527 = vpop.permute.xlu0 %1526
        %1528 = vrot.lane.b32.xlu0 %v1060, 24
        %v1529 = vpop.permute.xlu0 %1528
        %1530 = vrot.lane.b32.xlu0 %v1061, 24
        %v1531 = vpop.permute.xlu0 %1530
        %1532 = vrot.lane.b32.xlu0 %v1062, 24
        %v1533 = vpop.permute.xlu0 %1532
        %1534 = vrot.lane.b32.xlu0 %v1063, 24
        %v1535 = vpop.permute.xlu0 %1534
        %1536 = vrot.lane.b32.xlu0 %v1064, 24
        %v1537 = vpop.permute.xlu0 %1536
        %1538 = vrot.lane.b32.xlu0 %v1065, 24
        %v1539 = vpop.permute.xlu0 %1538
        %1540 = vrot.lane.b32.xlu0 %v1066, 24
        %v1541 = vpop.permute.xlu0 %1540
        %1542 = vrot.lane.b32.xlu0 %v1067, 24
        %v1543 = vpop.permute.xlu0 %1542
        %1544 = vrot.lane.b32.xlu0 %v1068, 24
        %v1545 = vpop.permute.xlu0 %1544
        %1546 = vrot.lane.b32.xlu0 %v1069, 24
        %v1547 = vpop.permute.xlu0 %1546
        %1548 = vrot.lane.b32.xlu0 %v1070, 24
        %v1549 = vpop.permute.xlu0 %1548
        %1550 = vrot.lane.b32.xlu0 %v1071, 24
        %v1551 = vpop.permute.xlu0 %1550
        %1552 = vrot.lane.b32.xlu0 %v1072, 24
        %v1553 = vpop.permute.xlu0 %1552
        %1554 = vrot.lane.b32.xlu0 %v1073, 24
        %v1555 = vpop.permute.xlu0 %1554
        %1556 = vrot.lane.b32.xlu0 %v1074, 24
        %v1557 = vpop.permute.xlu0 %1556
        %1590 = vrot.lane.b32.xlu0 %v752, 32
        %v1591 = vpop.permute.xlu0 %1590
        %1592 = vrot.lane.b32.xlu0 %v753, 32
        %v1593 = vpop.permute.xlu0 %1592
        %1594 = vrot.lane.b32.xlu0 %v754, 32
        %v1595 = vpop.permute.xlu0 %1594
        %1596 = vrot.lane.b32.xlu0 %v755, 32
        %v1597 = vpop.permute.xlu0 %1596
        %1598 = vrot.lane.b32.xlu0 %v756, 32
        %v1599 = vpop.permute.xlu0 %1598
        %1600 = vrot.lane.b32.xlu0 %v757, 32
        %v1601 = vpop.permute.xlu0 %1600
        %1602 = vrot.lane.b32.xlu0 %v758, 32
        %v1603 = vpop.permute.xlu0 %1602
        %1604 = vrot.lane.b32.xlu0 %v759, 32
        %v1605 = vpop.permute.xlu0 %1604
        %1606 = vrot.lane.b32.xlu0 %v760, 32
        %v1607 = vpop.permute.xlu0 %1606
        %1608 = vrot.lane.b32.xlu0 %v761, 32
        %v1609 = vpop.permute.xlu0 %1608
        %1610 = vrot.lane.b32.xlu0 %v762, 32
        %v1611 = vpop.permute.xlu0 %1610
        %1612 = vrot.lane.b32.xlu0 %v763, 32
        %v1613 = vpop.permute.xlu0 %1612
        %1614 = vrot.lane.b32.xlu0 %v764, 32
        %v1615 = vpop.permute.xlu0 %1614
        %1616 = vrot.lane.b32.xlu0 %v765, 32
        %v1617 = vpop.permute.xlu0 %1616
        %1618 = vrot.lane.b32.xlu0 %v766, 32
        %v1619 = vpop.permute.xlu0 %1618
        %1620 = vrot.lane.b32.xlu0 %v767, 32
        %v1621 = vpop.permute.xlu0 %1620
        %1622 = vrot.lane.b32.xlu0 %v768, 32
        %v1623 = vpop.permute.xlu0 %1622
        %1624 = vrot.lane.b32.xlu0 %v769, 32
        %v1625 = vpop.permute.xlu0 %1624
        %1626 = vrot.lane.b32.xlu0 %v770, 32
        %v1627 = vpop.permute.xlu0 %1626
        %1628 = vrot.lane.b32.xlu0 %v771, 32
        %v1629 = vpop.permute.xlu0 %1628
        %1630 = vrot.lane.b32.xlu0 %v772, 32
        %v1631 = vpop.permute.xlu0 %1630
        %1632 = vrot.lane.b32.xlu0 %v773, 32
        %v1633 = vpop.permute.xlu0 %1632
        %1634 = vrot.lane.b32.xlu0 %v774, 32
        %v1635 = vpop.permute.xlu0 %1634
        %1636 = vrot.lane.b32.xlu0 %v775, 32
        %v1637 = vpop.permute.xlu0 %1636
        %1638 = vrot.lane.b32.xlu0 %v776, 32
        %v1639 = vpop.permute.xlu0 %1638
        %1640 = vrot.lane.b32.xlu0 %v777, 32
        %v1641 = vpop.permute.xlu0 %1640
        %1642 = vrot.lane.b32.xlu0 %v778, 32
        %v1643 = vpop.permute.xlu0 %1642
        %1644 = vrot.lane.b32.xlu0 %v779, 32
        %v1645 = vpop.permute.xlu0 %1644
        %1646 = vrot.lane.b32.xlu0 %v780, 32
        %v1647 = vpop.permute.xlu0 %1646
        %1648 = vrot.lane.b32.xlu0 %v781, 32
        %v1649 = vpop.permute.xlu0 %1648
        %1650 = vrot.lane.b32.xlu0 %v782, 32
        %v1651 = vpop.permute.xlu0 %1650
        %1652 = vrot.lane.b32.xlu0 %v783, 32
        %v1653 = vpop.permute.xlu0 %1652
        %1718 = vrot.lane.b32.xlu0 %v1075, 40
        %v1719 = vpop.permute.xlu0 %1718
        %1720 = vrot.lane.b32.xlu0 %v1076, 40
        %v1721 = vpop.permute.xlu0 %1720
        %1722 = vrot.lane.b32.xlu0 %v1077, 40
        %v1723 = vpop.permute.xlu0 %1722
        %1724 = vrot.lane.b32.xlu0 %v1078, 40
        %v1725 = vpop.permute.xlu0 %1724
        %1726 = vrot.lane.b32.xlu0 %v1079, 40
        %v1727 = vpop.permute.xlu0 %1726
        %1728 = vrot.lane.b32.xlu0 %v1080, 40
        %v1729 = vpop.permute.xlu0 %1728
        %1730 = vrot.lane.b32.xlu0 %v1081, 40
        %v1731 = vpop.permute.xlu0 %1730
        %1732 = vrot.lane.b32.xlu0 %v1082, 40
        %v1733 = vpop.permute.xlu0 %1732
        %1734 = vrot.lane.b32.xlu0 %v1083, 40
        %v1735 = vpop.permute.xlu0 %1734
        %1736 = vrot.lane.b32.xlu0 %v1084, 40
        %v1737 = vpop.permute.xlu0 %1736
        %1738 = vrot.lane.b32.xlu0 %v1085, 40
        %v1739 = vpop.permute.xlu0 %1738
        %1740 = vrot.lane.b32.xlu0 %v1086, 40
        %v1741 = vpop.permute.xlu0 %1740
        %1742 = vrot.lane.b32.xlu0 %v1087, 40
        %v1743 = vpop.permute.xlu0 %1742
        %1744 = vrot.lane.b32.xlu0 %v1088, 40
        %v1745 = vpop.permute.xlu0 %1744
        %1746 = vrot.lane.b32.xlu0 %v1089, 40
        %v1747 = vpop.permute.xlu0 %1746
        %1748 = vrot.lane.b32.xlu0 %v1090, 40
        %v1749 = vpop.permute.xlu0 %1748
        %1750 = vrot.lane.b32.xlu0 %v1091, 40
        %v1751 = vpop.permute.xlu0 %1750
        %1752 = vrot.lane.b32.xlu0 %v1092, 40
        %v1753 = vpop.permute.xlu0 %1752
        %1754 = vrot.lane.b32.xlu0 %v1093, 40
        %v1755 = vpop.permute.xlu0 %1754
        %1756 = vrot.lane.b32.xlu0 %v1094, 40
        %v1757 = vpop.permute.xlu0 %1756
        %1758 = vrot.lane.b32.xlu0 %v1095, 40
        %v1759 = vpop.permute.xlu0 %1758
        %1760 = vrot.lane.b32.xlu0 %v1096, 40
        %v1761 = vpop.permute.xlu0 %1760
        %1762 = vrot.lane.b32.xlu0 %v1097, 40
        %v1763 = vpop.permute.xlu0 %1762
        %1764 = vrot.lane.b32.xlu0 %v1098, 40
        %v1765 = vpop.permute.xlu0 %1764
        %1766 = vrot.lane.b32.xlu0 %v1099, 40
        %v1767 = vpop.permute.xlu0 %1766
        %1768 = vrot.lane.b32.xlu0 %v1100, 40
        %v1769 = vpop.permute.xlu0 %1768
        %1770 = vrot.lane.b32.xlu0 %v1101, 40
        %v1771 = vpop.permute.xlu0 %1770
        %1772 = vrot.lane.b32.xlu0 %v1102, 40
        %v1773 = vpop.permute.xlu0 %1772
        %1774 = vrot.lane.b32.xlu0 %v1103, 40
        %v1775 = vpop.permute.xlu0 %1774
        %1776 = vrot.lane.b32.xlu0 %v1104, 40
        %v1777 = vpop.permute.xlu0 %1776
        %1778 = vrot.lane.b32.xlu0 %v1105, 40
        %v1779 = vpop.permute.xlu0 %1778
        %1780 = vrot.lane.b32.xlu0 %v1106, 40
        %v1781 = vpop.permute.xlu0 %1780
        %1846 = vrot.lane.b32.xlu0 %v1110, 48
        %v1847 = vpop.permute.xlu0 %1846
        %1848 = vrot.lane.b32.xlu0 %v1111, 48
        %v1849 = vpop.permute.xlu0 %1848
        %1850 = vrot.lane.b32.xlu0 %v1112, 48
        %v1851 = vpop.permute.xlu0 %1850
        %1852 = vrot.lane.b32.xlu0 %v1113, 48
        %v1853 = vpop.permute.xlu0 %1852
        %1854 = vrot.lane.b32.xlu0 %v1114, 48
        %v1855 = vpop.permute.xlu0 %1854
        %1856 = vrot.lane.b32.xlu0 %v1115, 48
        %v1857 = vpop.permute.xlu0 %1856
        %1858 = vrot.lane.b32.xlu0 %v1116, 48
        %v1859 = vpop.permute.xlu0 %1858
        %1860 = vrot.lane.b32.xlu0 %v1117, 48
        %v1861 = vpop.permute.xlu0 %1860
        %1862 = vrot.lane.b32.xlu0 %v1118, 48
        %v1863 = vpop.permute.xlu0 %1862
        %1864 = vrot.lane.b32.xlu0 %v1119, 48
        %v1865 = vpop.permute.xlu0 %1864
        %1866 = vrot.lane.b32.xlu0 %v1120, 48
        %v1867 = vpop.permute.xlu0 %1866
        %1868 = vrot.lane.b32.xlu0 %v1121, 48
        %v1869 = vpop.permute.xlu0 %1868
        %1870 = vrot.lane.b32.xlu0 %v1122, 48
        %v1871 = vpop.permute.xlu0 %1870
        %1872 = vrot.lane.b32.xlu0 %v1123, 48
        %v1873 = vpop.permute.xlu0 %1872
        %1874 = vrot.lane.b32.xlu0 %v1124, 48
        %v1875 = vpop.permute.xlu0 %1874
        %1876 = vrot.lane.b32.xlu0 %v1125, 48
        %v1877 = vpop.permute.xlu0 %1876
        %1878 = vrot.lane.b32.xlu0 %v1126, 48
        %v1879 = vpop.permute.xlu0 %1878
        %1880 = vrot.lane.b32.xlu0 %v1127, 48
        %v1881 = vpop.permute.xlu0 %1880
        %1882 = vrot.lane.b32.xlu0 %v1128, 48
        %v1883 = vpop.permute.xlu0 %1882
        %1884 = vrot.lane.b32.xlu0 %v1129, 48
        %v1885 = vpop.permute.xlu0 %1884
        %1886 = vrot.lane.b32.xlu0 %v1130, 48
        %v1887 = vpop.permute.xlu0 %1886
        %1888 = vrot.lane.b32.xlu0 %v1131, 48
        %v1889 = vpop.permute.xlu0 %1888
        %1890 = vrot.lane.b32.xlu0 %v1132, 48
        %v1891 = vpop.permute.xlu0 %1890
        %1892 = vrot.lane.b32.xlu0 %v1133, 48
        %v1893 = vpop.permute.xlu0 %1892
        %1894 = vrot.lane.b32.xlu0 %v1134, 48
        %v1895 = vpop.permute.xlu0 %1894
        %1896 = vrot.lane.b32.xlu0 %v1135, 48
        %v1897 = vpop.permute.xlu0 %1896
        %1898 = vrot.lane.b32.xlu0 %v1136, 48
        %v1899 = vpop.permute.xlu0 %1898
        %1900 = vrot.lane.b32.xlu0 %v1137, 48
        %v1901 = vpop.permute.xlu0 %1900
        %1902 = vrot.lane.b32.xlu0 %v1138, 48
        %v1903 = vpop.permute.xlu0 %1902
        %1904 = vrot.lane.b32.xlu0 %v1139, 48
        %v1905 = vpop.permute.xlu0 %1904
        %1906 = vrot.lane.b32.xlu0 %v1140, 48
        %v1907 = vpop.permute.xlu0 %1906
        %1908 = vrot.lane.b32.xlu0 %v1141, 48
        %v1909 = vpop.permute.xlu0 %1908
        %1974 = vrot.lane.b32.xlu0 %v1142, 56
        %v1975 = vpop.permute.xlu0 %1974
        %1976 = vrot.lane.b32.xlu0 %v1143, 56
        %v1977 = vpop.permute.xlu0 %1976
        %1978 = vrot.lane.b32.xlu0 %v1144, 56
        %v1979 = vpop.permute.xlu0 %1978
        %1980 = vrot.lane.b32.xlu0 %v1145, 56
        %v1981 = vpop.permute.xlu0 %1980
        %1982 = vrot.lane.b32.xlu0 %v1146, 56
        %v1983 = vpop.permute.xlu0 %1982
        %1984 = vrot.lane.b32.xlu0 %v1147, 56
        %v1985 = vpop.permute.xlu0 %1984
        %1986 = vrot.lane.b32.xlu0 %v1148, 56
        %v1987 = vpop.permute.xlu0 %1986
        %1988 = vrot.lane.b32.xlu0 %v1149, 56
        %v1989 = vpop.permute.xlu0 %1988
        %1990 = vrot.lane.b32.xlu0 %v1150, 56
        %v1991 = vpop.permute.xlu0 %1990
        %1992 = vrot.lane.b32.xlu0 %v1151, 56
        %v1993 = vpop.permute.xlu0 %1992
        %1994 = vrot.lane.b32.xlu0 %v1152, 56
        %v1995 = vpop.permute.xlu0 %1994
        %1996 = vrot.lane.b32.xlu0 %v1153, 56
        %v1997 = vpop.permute.xlu0 %1996
        %1998 = vrot.lane.b32.xlu0 %v1154, 56
        %v1999 = vpop.permute.xlu0 %1998
        %2000 = vrot.lane.b32.xlu0 %v1155, 56
        %v2001 = vpop.permute.xlu0 %2000
        %2002 = vrot.lane.b32.xlu0 %v1156, 56
        %v2003 = vpop.permute.xlu0 %2002
        %2004 = vrot.lane.b32.xlu0 %v1157, 56
        %v2005 = vpop.permute.xlu0 %2004
        %2006 = vrot.lane.b32.xlu0 %v1158, 56
        %v2007 = vpop.permute.xlu0 %2006
        %2008 = vrot.lane.b32.xlu0 %v1159, 56
        %v2009 = vpop.permute.xlu0 %2008
        %2010 = vrot.lane.b32.xlu0 %v1160, 56
        %v2011 = vpop.permute.xlu0 %2010
        %2012 = vrot.lane.b32.xlu0 %v1161, 56
        %v2013 = vpop.permute.xlu0 %2012
        %2014 = vrot.lane.b32.xlu0 %v1162, 56
        %v2015 = vpop.permute.xlu0 %2014
        %2016 = vrot.lane.b32.xlu0 %v1163, 56
        %v2017 = vpop.permute.xlu0 %2016
        %2018 = vrot.lane.b32.xlu0 %v1164, 56
        %v2019 = vpop.permute.xlu0 %2018
        %2020 = vrot.lane.b32.xlu0 %v1165, 56
        %v2021 = vpop.permute.xlu0 %2020
        %2022 = vrot.lane.b32.xlu0 %v1166, 56
        %v2023 = vpop.permute.xlu0 %2022
        %2024 = vrot.lane.b32.xlu0 %v1167, 56
        %v2025 = vpop.permute.xlu0 %2024
        %2026 = vrot.lane.b32.xlu0 %v1168, 56
        %v2027 = vpop.permute.xlu0 %2026
        %2028 = vrot.lane.b32.xlu0 %v1169, 56
        %v2029 = vpop.permute.xlu0 %2028
        %2030 = vrot.lane.b32.xlu0 %v1170, 56
        %v2031 = vpop.permute.xlu0 %2030
        %2032 = vrot.lane.b32.xlu0 %v1171, 56
        %v2033 = vpop.permute.xlu0 %2032
        %2034 = vrot.lane.b32.xlu0 %v1172, 56
        %v2035 = vpop.permute.xlu0 %2034
        %2036 = vrot.lane.b32.xlu0 %v1173, 56
        %v2037 = vpop.permute.xlu0 %2036
        %2102 = vrot.lane.b32.xlu0 %v1174, 64
        %v2103 = vpop.permute.xlu0 %2102
        %2104 = vrot.lane.b32.xlu0 %v1175, 64
        %v2105 = vpop.permute.xlu0 %2104
        %2106 = vrot.lane.b32.xlu0 %v1176, 64
        %v2107 = vpop.permute.xlu0 %2106
        %2108 = vrot.lane.b32.xlu0 %v1177, 64
        %v2109 = vpop.permute.xlu0 %2108
        %2110 = vrot.lane.b32.xlu0 %v1178, 64
        %v2111 = vpop.permute.xlu0 %2110
        %2112 = vrot.lane.b32.xlu0 %v1179, 64
        %v2113 = vpop.permute.xlu0 %2112
        %2114 = vrot.lane.b32.xlu0 %v1180, 64
        %v2115 = vpop.permute.xlu0 %2114
        %2116 = vrot.lane.b32.xlu0 %v1181, 64
        %v2117 = vpop.permute.xlu0 %2116
        %2118 = vrot.lane.b32.xlu0 %v1182, 64
        %v2119 = vpop.permute.xlu0 %2118
        %2120 = vrot.lane.b32.xlu0 %v1183, 64
        %v2121 = vpop.permute.xlu0 %2120
        %2122 = vrot.lane.b32.xlu0 %v1184, 64
        %v2123 = vpop.permute.xlu0 %2122
        %2124 = vrot.lane.b32.xlu0 %v1185, 64
        %v2125 = vpop.permute.xlu0 %2124
        %2126 = vrot.lane.b32.xlu0 %v1186, 64
        %v2127 = vpop.permute.xlu0 %2126
        %2128 = vrot.lane.b32.xlu0 %v1187, 64
        %v2129 = vpop.permute.xlu0 %2128
        %2130 = vrot.lane.b32.xlu0 %v1188, 64
        %v2131 = vpop.permute.xlu0 %2130
        %2132 = vrot.lane.b32.xlu0 %v1189, 64
        %v2133 = vpop.permute.xlu0 %2132
        %2134 = vrot.lane.b32.xlu0 %v1190, 64
        %v2135 = vpop.permute.xlu0 %2134
        %2136 = vrot.lane.b32.xlu0 %v1191, 64
        %v2137 = vpop.permute.xlu0 %2136
        %2138 = vrot.lane.b32.xlu0 %v1192, 64
        %v2139 = vpop.permute.xlu0 %2138
        %2140 = vrot.lane.b32.xlu0 %v1193, 64
        %v2141 = vpop.permute.xlu0 %2140
        %2142 = vrot.lane.b32.xlu0 %v1194, 64
        %v2143 = vpop.permute.xlu0 %2142
        %2144 = vrot.lane.b32.xlu0 %v1195, 64
        %v2145 = vpop.permute.xlu0 %2144
        %2146 = vrot.lane.b32.xlu0 %v1196, 64
        %v2147 = vpop.permute.xlu0 %2146
        %2148 = vrot.lane.b32.xlu0 %v1197, 64
        %v2149 = vpop.permute.xlu0 %2148
        %2150 = vrot.lane.b32.xlu0 %v1198, 64
        %v2151 = vpop.permute.xlu0 %2150
        %2152 = vrot.lane.b32.xlu0 %v1199, 64
        %v2153 = vpop.permute.xlu0 %2152
        %2154 = vrot.lane.b32.xlu0 %v1200, 64
        %v2155 = vpop.permute.xlu0 %2154
        %2156 = vrot.lane.b32.xlu0 %v1201, 64
        %v2157 = vpop.permute.xlu0 %2156
        %2158 = vrot.lane.b32.xlu0 %v1202, 64
        %v2159 = vpop.permute.xlu0 %2158
        %2160 = vrot.lane.b32.xlu0 %v1203, 64
        %v2161 = vpop.permute.xlu0 %2160
        %2162 = vrot.lane.b32.xlu0 %v1204, 64
        %v2163 = vpop.permute.xlu0 %2162
        %2164 = vrot.lane.b32.xlu0 %v1205, 64
        %v2165 = vpop.permute.xlu0 %2164
        %vm2198 = vcmask 64512
        %v2199 = vsel %vm2198, %v947, %v1239
        %v2200 = vsel %vm2198, %v948, %v1241
        %v2201 = vsel %vm2198, %v949, %v1243
        %v2202 = vsel %vm2198, %v950, %v1245
        %v2203 = vsel %vm2198, %v951, %v1247
        %v2204 = vsel %vm2198, %v952, %v1249
        %v2205 = vsel %vm2198, %v953, %v1251
        %v2206 = vsel %vm2198, %v954, %v1253
        %v2207 = vsel %vm2198, %v955, %v1255
        %v2208 = vsel %vm2198, %v956, %v1257
        %v2209 = vsel %vm2198, %v957, %v1259
        %v2210 = vsel %vm2198, %v958, %v1261
        %v2211 = vsel %vm2198, %v959, %v1263
        %v2212 = vsel %vm2198, %v960, %v1265
        %v2213 = vsel %vm2198, %v961, %v1267
        %v2214 = vsel %vm2198, %v962, %v1269
        %v2215 = vsel %vm2198, %v963, %v1271
        %v2216 = vsel %vm2198, %v964, %v1273
        %v2217 = vsel %vm2198, %v965, %v1275
        %v2218 = vsel %vm2198, %v966, %v1277
        %v2219 = vsel %vm2198, %v967, %v1279
        %v2220 = vsel %vm2198, %v968, %v1281
        %v2221 = vsel %vm2198, %v969, %v1283
        %v2222 = vsel %vm2198, %v970, %v1285
        %v2223 = vsel %vm2198, %v971, %v1287
        %v2224 = vsel %vm2198, %v972, %v1289
        %v2225 = vsel %vm2198, %v973, %v1291
        %v2226 = vsel %vm2198, %v974, %v1293
        %v2227 = vsel %vm2198, %v975, %v1295
        %v2228 = vsel %vm2198, %v976, %v1297
        %v2229 = vsel %vm2198, %v977, %v1299
        %v2230 = vsel %vm2198, %v978, %v1301
        %vm2231 = vcmask 130048
        %v2232 = vsel %vm2231, %v2199, %v1367
        %v2233 = vsel %vm2231, %v2200, %v1369
        %v2234 = vsel %vm2231, %v2201, %v1371
        %v2235 = vsel %vm2231, %v2202, %v1373
        %v2236 = vsel %vm2231, %v2203, %v1375
        %v2237 = vsel %vm2231, %v2204, %v1377
        %v2238 = vsel %vm2231, %v2205, %v1379
        %v2239 = vsel %vm2231, %v2206, %v1381
        %v2240 = vsel %vm2231, %v2207, %v1383
        %v2241 = vsel %vm2231, %v2208, %v1385
        %v2242 = vsel %vm2231, %v2209, %v1387
        %v2243 = vsel %vm2231, %v2210, %v1389
        %v2244 = vsel %vm2231, %v2211, %v1391
        %v2245 = vsel %vm2231, %v2212, %v1393
        %v2246 = vsel %vm2231, %v2213, %v1395
        %v2247 = vsel %vm2231, %v2214, %v1397
        %v2248 = vsel %vm2231, %v2215, %v1399
        %v2249 = vsel %vm2231, %v2216, %v1401
        %v2250 = vsel %vm2231, %v2217, %v1403
        %v2251 = vsel %vm2231, %v2218, %v1405
        %v2252 = vsel %vm2231, %v2219, %v1407
        %v2253 = vsel %vm2231, %v2220, %v1409
        %v2254 = vsel %vm2231, %v2221, %v1411
        %v2255 = vsel %vm2231, %v2222, %v1413
        %v2256 = vsel %vm2231, %v2223, %v1415
        %v2257 = vsel %vm2231, %v2224, %v1417
        %v2258 = vsel %vm2231, %v2225, %v1419
        %v2259 = vsel %vm2231, %v2226, %v1421
        %v2260 = vsel %vm2231, %v2227, %v1423
        %v2261 = vsel %vm2231, %v2228, %v1425
        %v2262 = vsel %vm2231, %v2229, %v1427
        %v2263 = vsel %vm2231, %v2230, %v1429
        %vm2264 = vcmask 195584
        %v2265 = vsel %vm2264, %v2232, %v1495
        %v2266 = vsel %vm2264, %v2233, %v1497
        %v2267 = vsel %vm2264, %v2234, %v1499
        %v2268 = vsel %vm2264, %v2235, %v1501
        %v2269 = vsel %vm2264, %v2236, %v1503
        %v2270 = vsel %vm2264, %v2237, %v1505
        %v2271 = vsel %vm2264, %v2238, %v1507
        %v2272 = vsel %vm2264, %v2239, %v1509
        %v2273 = vsel %vm2264, %v2240, %v1511
        %v2274 = vsel %vm2264, %v2241, %v1513
        %v2275 = vsel %vm2264, %v2242, %v1515
        %v2276 = vsel %vm2264, %v2243, %v1517
        %v2277 = vsel %vm2264, %v2244, %v1519
        %v2278 = vsel %vm2264, %v2245, %v1521
        %v2279 = vsel %vm2264, %v2246, %v1523
        %v2280 = vsel %vm2264, %v2247, %v1525
        %v2281 = vsel %vm2264, %v2248, %v1527
        %v2282 = vsel %vm2264, %v2249, %v1529
        %v2283 = vsel %vm2264, %v2250, %v1531
        %v2284 = vsel %vm2264, %v2251, %v1533
        %v2285 = vsel %vm2264, %v2252, %v1535
        %v2286 = vsel %vm2264, %v2253, %v1537
        %v2287 = vsel %vm2264, %v2254, %v1539
        %v2288 = vsel %vm2264, %v2255, %v1541
        %v2289 = vsel %vm2264, %v2256, %v1543
        %v2290 = vsel %vm2264, %v2257, %v1545
        %v2291 = vsel %vm2264, %v2258, %v1547
        %v2292 = vsel %vm2264, %v2259, %v1549
        %v2293 = vsel %vm2264, %v2260, %v1551
        %v2294 = vsel %vm2264, %v2261, %v1553
        %v2295 = vsel %vm2264, %v2262, %v1555
        %v2296 = vsel %vm2264, %v2263, %v1557
        %vm2297 = vcmask 261120
        %v2298 = vsel %vm2297, %v2265, %v1591
        %v2299 = vsel %vm2297, %v2266, %v1593
        %v2300 = vsel %vm2297, %v2267, %v1595
        %v2301 = vsel %vm2297, %v2268, %v1597
        %v2302 = vsel %vm2297, %v2269, %v1599
        %v2303 = vsel %vm2297, %v2270, %v1601
        %v2304 = vsel %vm2297, %v2271, %v1603
        %v2305 = vsel %vm2297, %v2272, %v1605
        %v2306 = vsel %vm2297, %v2273, %v1607
        %v2307 = vsel %vm2297, %v2274, %v1609
        %v2308 = vsel %vm2297, %v2275, %v1611
        %v2309 = vsel %vm2297, %v2276, %v1613
        %v2310 = vsel %vm2297, %v2277, %v1615
        %v2311 = vsel %vm2297, %v2278, %v1617
        %v2312 = vsel %vm2297, %v2279, %v1619
        %v2313 = vsel %vm2297, %v2280, %v1621
        %v2314 = vsel %vm2297, %v2281, %v1623
        %v2315 = vsel %vm2297, %v2282, %v1625
        %v2316 = vsel %vm2297, %v2283, %v1627
        %v2317 = vsel %vm2297, %v2284, %v1629
        %v2318 = vsel %vm2297, %v2285, %v1631
        %v2319 = vsel %vm2297, %v2286, %v1633
        %v2320 = vsel %vm2297, %v2287, %v1635
        %v2321 = vsel %vm2297, %v2288, %v1637
        %v2322 = vsel %vm2297, %v2289, %v1639
        %v2323 = vsel %vm2297, %v2290, %v1641
        %v2324 = vsel %vm2297, %v2291, %v1643
        %v2325 = vsel %vm2297, %v2292, %v1645
        %v2326 = vsel %vm2297, %v2293, %v1647
        %v2327 = vsel %vm2297, %v2294, %v1649
        %v2328 = vsel %vm2297, %v2295, %v1651
        %v2329 = vsel %vm2297, %v2296, %v1653
        %vm2330 = vcmask 326656
        %v2331 = vsel %vm2330, %v2298, %v1719
        %v2332 = vsel %vm2330, %v2299, %v1721
        %v2333 = vsel %vm2330, %v2300, %v1723
        %v2334 = vsel %vm2330, %v2301, %v1725
        %v2335 = vsel %vm2330, %v2302, %v1727
        %v2336 = vsel %vm2330, %v2303, %v1729
        %v2337 = vsel %vm2330, %v2304, %v1731
        %v2338 = vsel %vm2330, %v2305, %v1733
        %v2339 = vsel %vm2330, %v2306, %v1735
        %v2340 = vsel %vm2330, %v2307, %v1737
        %v2341 = vsel %vm2330, %v2308, %v1739
        %v2342 = vsel %vm2330, %v2309, %v1741
        %v2343 = vsel %vm2330, %v2310, %v1743
        %v2344 = vsel %vm2330, %v2311, %v1745
        %v2345 = vsel %vm2330, %v2312, %v1747
        %v2346 = vsel %vm2330, %v2313, %v1749
        %v2347 = vsel %vm2330, %v2314, %v1751
        %v2348 = vsel %vm2330, %v2315, %v1753
        %v2349 = vsel %vm2330, %v2316, %v1755
        %v2350 = vsel %vm2330, %v2317, %v1757
        %v2351 = vsel %vm2330, %v2318, %v1759
        %v2352 = vsel %vm2330, %v2319, %v1761
        %v2353 = vsel %vm2330, %v2320, %v1763
        %v2354 = vsel %vm2330, %v2321, %v1765
        %v2355 = vsel %vm2330, %v2322, %v1767
        %v2356 = vsel %vm2330, %v2323, %v1769
        %v2357 = vsel %vm2330, %v2324, %v1771
        %v2358 = vsel %vm2330, %v2325, %v1773
        %v2359 = vsel %vm2330, %v2326, %v1775
        %v2360 = vsel %vm2330, %v2327, %v1777
        %v2361 = vsel %vm2330, %v2328, %v1779
        %v2362 = vsel %vm2330, %v2329, %v1781
        %vm2363 = vcmask 392192
        %v2364 = vsel %vm2363, %v2331, %v1847
        %v2365 = vsel %vm2363, %v2332, %v1849
        %v2366 = vsel %vm2363, %v2333, %v1851
        %v2367 = vsel %vm2363, %v2334, %v1853
        %v2368 = vsel %vm2363, %v2335, %v1855
        %v2369 = vsel %vm2363, %v2336, %v1857
        %v2370 = vsel %vm2363, %v2337, %v1859
        %v2371 = vsel %vm2363, %v2338, %v1861
        %v2372 = vsel %vm2363, %v2339, %v1863
        %v2373 = vsel %vm2363, %v2340, %v1865
        %v2374 = vsel %vm2363, %v2341, %v1867
        %v2375 = vsel %vm2363, %v2342, %v1869
        %v2376 = vsel %vm2363, %v2343, %v1871
        %v2377 = vsel %vm2363, %v2344, %v1873
        %v2378 = vsel %vm2363, %v2345, %v1875
        %v2379 = vsel %vm2363, %v2346, %v1877
        %v2380 = vsel %vm2363, %v2347, %v1879
        %v2381 = vsel %vm2363, %v2348, %v1881
        %v2382 = vsel %vm2363, %v2349, %v1883
        %v2383 = vsel %vm2363, %v2350, %v1885
        %v2384 = vsel %vm2363, %v2351, %v1887
        %v2385 = vsel %vm2363, %v2352, %v1889
        %v2386 = vsel %vm2363, %v2353, %v1891
        %v2387 = vsel %vm2363, %v2354, %v1893
        %v2388 = vsel %vm2363, %v2355, %v1895
        %v2389 = vsel %vm2363, %v2356, %v1897
        %v2390 = vsel %vm2363, %v2357, %v1899
        %v2391 = vsel %vm2363, %v2358, %v1901
        %v2392 = vsel %vm2363, %v2359, %v1903
        %v2393 = vsel %vm2363, %v2360, %v1905
        %v2394 = vsel %vm2363, %v2361, %v1907
        %v2395 = vsel %vm2363, %v2362, %v1909
        %vm2396 = vcmask 457728
        %v2397 = vsel %vm2396, %v2364, %v1975
        %v2398 = vsel %vm2396, %v2365, %v1977
        %v2399 = vsel %vm2396, %v2366, %v1979
        %v2400 = vsel %vm2396, %v2367, %v1981
        %v2401 = vsel %vm2396, %v2368, %v1983
        %v2402 = vsel %vm2396, %v2369, %v1985
        %v2403 = vsel %vm2396, %v2370, %v1987
        %v2404 = vsel %vm2396, %v2371, %v1989
        %v2405 = vsel %vm2396, %v2372, %v1991
        %v2406 = vsel %vm2396, %v2373, %v1993
        %v2407 = vsel %vm2396, %v2374, %v1995
        %v2408 = vsel %vm2396, %v2375, %v1997
        %v2409 = vsel %vm2396, %v2376, %v1999
        %v2410 = vsel %vm2396, %v2377, %v2001
        %v2411 = vsel %vm2396, %v2378, %v2003
        %v2412 = vsel %vm2396, %v2379, %v2005
        %v2413 = vsel %vm2396, %v2380, %v2007
        %v2414 = vsel %vm2396, %v2381, %v2009
        %v2415 = vsel %vm2396, %v2382, %v2011
        %v2416 = vsel %vm2396, %v2383, %v2013
        %v2417 = vsel %vm2396, %v2384, %v2015
        %v2418 = vsel %vm2396, %v2385, %v2017
        %v2419 = vsel %vm2396, %v2386, %v2019
        %v2420 = vsel %vm2396, %v2387, %v2021
        %v2421 = vsel %vm2396, %v2388, %v2023
        %v2422 = vsel %vm2396, %v2389, %v2025
        %v2423 = vsel %vm2396, %v2390, %v2027
        %v2424 = vsel %vm2396, %v2391, %v2029
        %v2425 = vsel %vm2396, %v2392, %v2031
        %v2426 = vsel %vm2396, %v2393, %v2033
        %v2427 = vsel %vm2396, %v2394, %v2035
        %v2428 = vsel %vm2396, %v2395, %v2037
        %vm2429 = vcmask 523264
        %v2430 = vsel %vm2429, %v2397, %v2103
        %v2431 = vsel %vm2429, %v2398, %v2105
        %v2432 = vsel %vm2429, %v2399, %v2107
        %v2433 = vsel %vm2429, %v2400, %v2109
        %v2434 = vsel %vm2429, %v2401, %v2111
        %v2435 = vsel %vm2429, %v2402, %v2113
        %v2436 = vsel %vm2429, %v2403, %v2115
        %v2437 = vsel %vm2429, %v2404, %v2117
        %v2438 = vsel %vm2429, %v2405, %v2119
        %v2439 = vsel %vm2429, %v2406, %v2121
        %v2440 = vsel %vm2429, %v2407, %v2123
        %v2441 = vsel %vm2429, %v2408, %v2125
        %v2442 = vsel %vm2429, %v2409, %v2127
        %v2443 = vsel %vm2429, %v2410, %v2129
        %v2444 = vsel %vm2429, %v2411, %v2131
        %v2445 = vsel %vm2429, %v2412, %v2133
        %v2446 = vsel %vm2429, %v2413, %v2135
        %v2447 = vsel %vm2429, %v2414, %v2137
        %v2448 = vsel %vm2429, %v2415, %v2139
        %v2449 = vsel %vm2429, %v2416, %v2141
        %v2450 = vsel %vm2429, %v2417, %v2143
        %v2451 = vsel %vm2429, %v2418, %v2145
        %v2452 = vsel %vm2429, %v2419, %v2147
        %v2453 = vsel %vm2429, %v2420, %v2149
        %v2454 = vsel %vm2429, %v2421, %v2151
        %v2455 = vsel %vm2429, %v2422, %v2153
        %v2456 = vsel %vm2429, %v2423, %v2155
        %v2457 = vsel %vm2429, %v2424, %v2157
        %v2458 = vsel %vm2429, %v2425, %v2159
        %v2459 = vsel %vm2429, %v2426, %v2161
        %v2460 = vsel %vm2429, %v2427, %v2163
        %v2461 = vsel %vm2429, %v2428, %v2165
        %v2462 = vld [vmem:[%s1] sm:$0xff]
        %v2463 = vld [vmem:[%s1 + $0x8] sm:$0xff]
        %v2464 = vld [vmem:[%s1 + $0x10] sm:$0xff]
        %v2465 = vld [vmem:[%s1 + $0x18] sm:$0xff]
        %v2466 = vld [vmem:[%s1 + $0x20] sm:$0xff]
        %v2467 = vld [vmem:[%s1 + $0x28] sm:$0xff]
        %v2468 = vld [vmem:[%s1 + $0x30] sm:$0xff]
        %v2469 = vld [vmem:[%s1 + $0x38] sm:$0xff]
        %v2470 = vld [vmem:[%s1 + $0x40] sm:$0xff]
        %v2471 = vld [vmem:[%s2] sm:$0x1]
        %v2473 = vlaneseq
        %v2474 = vshrl.u32 %v2473, 7
        %v2475 = vsub.s32 0, %v2474
        %v2476 = vrot.slane %v2471, %v2475
        %vm2478 = vcmask 588800
        %v2480 = vsel %vm2478, %v2430, 0
        %v2483 = vsel %vm2478, %v2431, 0
        %v2486 = vsel %vm2478, %v2432, 0
        %v2489 = vsel %vm2478, %v2433, 0
        %v2492 = vsel %vm2478, %v2434, 0
        %v2495 = vsel %vm2478, %v2435, 0
        %v2498 = vsel %vm2478, %v2436, 0
        %v2501 = vsel %vm2478, %v2437, 0
        %v2504 = vsel %vm2478, %v2438, 0
        %v2507 = vsel %vm2478, %v2439, 0
        %v2510 = vsel %vm2478, %v2440, 0
        %v2513 = vsel %vm2478, %v2441, 0
        %v2516 = vsel %vm2478, %v2442, 0
        %v2519 = vsel %vm2478, %v2443, 0
        %v2522 = vsel %vm2478, %v2444, 0
        %v2525 = vsel %vm2478, %v2445, 0
        %v2528 = vsel %vm2478, %v2446, 0
        %v2531 = vsel %vm2478, %v2447, 0
        %v2534 = vsel %vm2478, %v2448, 0
        %v2537 = vsel %vm2478, %v2449, 0
        %v2540 = vsel %vm2478, %v2450, 0
        %v2543 = vsel %vm2478, %v2451, 0
        %v2546 = vsel %vm2478, %v2452, 0
        %v2549 = vsel %vm2478, %v2453, 0
        %v2552 = vsel %vm2478, %v2454, 0
        %v2555 = vsel %vm2478, %v2455, 0
        %v2558 = vsel %vm2478, %v2456, 0
        %v2561 = vsel %vm2478, %v2457, 0
        %v2564 = vsel %vm2478, %v2458, 0
        %v2567 = vsel %vm2478, %v2459, 0
        %v2570 = vsel %vm2478, %v2460, 0
        %v2573 = vsel %vm2478, %v2461, 0
        %2575 = vmatprep.subr.mxu0 0.0
        %2576 = vmatpush1.msra.mxu0 0.0
        %2577 = vmatprep.subr.mxu0 0.0
        %2578 = vmatpush1.msra.mxu0 0.0
        %2579 = vmatprep.subr.mxu0 0.0
        %2580 = vmatpush1.msra.mxu0 0.0
        %2581 = vmatprep.subr.mxu0 0.0
        %2582 = vmatpush1.msra.mxu0 0.0
        %2583 = vmatprep.subr.mxu0 0.0
        %2584 = vmatpush1.msra.mxu0 0.0
        %2585 = vmatprep.subr.mxu0 0.0
        %2586 = vmatpush1.msra.mxu0 0.0
        %2587 = vmatprep.subr.mxu0 0.0
        %2588 = vmatpush1.msra.mxu0 0.0
        %2589 = vmatprep.subr.mxu0 0.0
        %2590 = vmatpush1.msra.mxu0 %v2470
        %2591 = vmatprep.subr.mxu0 0.0
        %2592 = vmatpush1.msra.mxu0 %v2469
        %2593 = vmatprep.subr.mxu0 0.0
        %2594 = vmatpush1.msra.mxu0 %v2468
        %2595 = vmatprep.subr.mxu0 0.0
        %2596 = vmatpush1.msra.mxu0 %v2467
        %2597 = vmatprep.subr.mxu0 0.0
        %2598 = vmatpush1.msra.mxu0 %v2466
        %2599 = vmatprep.subr.mxu0 0.0
        %2600 = vmatpush1.msra.mxu0 %v2465
        %2601 = vmatprep.subr.mxu0 0.0
        %2602 = vmatpush1.msra.mxu0 %v2464
        %2603 = vmatprep.subr.mxu0 0.0
        %2604 = vmatpush1.msra.mxu0 %v2463
        %2605 = vmatprep.subr.mxu0 0.0
        %2606 = vmatpush1.msra.mxu0 %v2462
        %2607 = vmatprep.subr.mxu0 0.0
        %2608 = vmatpush2.msra.mxu0 0.0
        %2609 = vmatprep.subr.mxu0 0.0
        %2610 = vmatpush2.msra.mxu0 0.0
        %2611 = vmatprep.subr.mxu0 0.0
        %2612 = vmatpush2.msra.mxu0 0.0
        %2613 = vmatprep.subr.mxu0 0.0
        %2614 = vmatpush2.msra.mxu0 0.0
        %2615 = vmatprep.subr.mxu0 0.0
        %2616 = vmatpush2.msra.mxu0 0.0
        %2617 = vmatprep.subr.mxu0 0.0
        %2618 = vmatpush2.msra.mxu0 0.0
        %2619 = vmatprep.subr.mxu0 0.0
        %2620 = vmatpush2.msra.mxu0 0.0
        %2621 = vmatprep.subr.mxu0 0.0
        %2622 = vmatpush2.msra.mxu0 0.0
        %2623 = vmatprep.subr.mxu0 0.0
        %2624 = vmatpush2.msra.mxu0 0.0
        %2625 = vmatprep.subr.mxu0 0.0
        %2626 = vmatpush2.msra.mxu0 0.0
        %2627 = vmatprep.subr.mxu0 0.0
        %2628 = vmatpush2.msra.mxu0 0.0
        %2629 = vmatprep.subr.mxu0 0.0
        %2630 = vmatpush2.msra.mxu0 0.0
        %2631 = vmatprep.subr.mxu0 0.0
        %2632 = vmatpush2.msra.mxu0 0.0
        %2633 = vmatprep.subr.mxu0 0.0
        %2634 = vmatpush2.msra.mxu0 0.0
        %2635 = vmatprep.subr.mxu0 0.0
        %2636 = vmatpush2.msra.mxu0 0.0
        %2637 = vmatprep.subr.mxu0 0.0
        %2638 = vmatpush2.msra.mxu0 0.0
        %2639 = vmatprep.mubr.f32.mxu0 0.0
        %2640 = vmatmul.mubr.f32.gmra.mxu0 %v2480
        %v2641 = vpop.f32.mrf.mxu0
        %v2642 = vadd.f32 %v2476, %v2641
        %v2643 = vpop.f32.mrf.mxu0
        %2644 = vmatprep.mubr.f32.mxu0 0.0
        %2645 = vmatmul.mubr.f32.gmra.mxu0 %v2483
        %v2646 = vpop.f32.mrf.mxu0
        %v2647 = vadd.f32 %v2476, %v2646
        %v2648 = vpop.f32.mrf.mxu0
        %2649 = vmatprep.mubr.f32.mxu0 0.0
        %2650 = vmatmul.mubr.f32.gmra.mxu0 %v2486
        %v2651 = vpop.f32.mrf.mxu0
        %v2652 = vadd.f32 %v2476, %v2651
        %v2653 = vpop.f32.mrf.mxu0
        %2654 = vmatprep.mubr.f32.mxu0 0.0
        %2655 = vmatmul.mubr.f32.gmra.mxu0 %v2489
        %v2656 = vpop.f32.mrf.mxu0
        %v2657 = vadd.f32 %v2476, %v2656
        %v2658 = vpop.f32.mrf.mxu0
        %2659 = vmatprep.mubr.f32.mxu0 0.0
        %2660 = vmatmul.mubr.f32.gmra.mxu0 %v2492
        %v2661 = vpop.f32.mrf.mxu0
        %v2662 = vadd.f32 %v2476, %v2661
        %v2663 = vpop.f32.mrf.mxu0
        %2664 = vmatprep.mubr.f32.mxu0 0.0
        %2665 = vmatmul.mubr.f32.gmra.mxu0 %v2495
        %v2666 = vpop.f32.mrf.mxu0
        %v2667 = vadd.f32 %v2476, %v2666
        %v2668 = vpop.f32.mrf.mxu0
        %2669 = vmatprep.mubr.f32.mxu0 0.0
        %2670 = vmatmul.mubr.f32.gmra.mxu0 %v2498
        %v2671 = vpop.f32.mrf.mxu0
        %v2672 = vadd.f32 %v2476, %v2671
        %v2673 = vpop.f32.mrf.mxu0
        %2674 = vmatprep.mubr.f32.mxu0 0.0
        %2675 = vmatmul.mubr.f32.gmra.mxu0 %v2501
        %v2676 = vpop.f32.mrf.mxu0
        %v2677 = vadd.f32 %v2476, %v2676
        %v2678 = vpop.f32.mrf.mxu0
        %2679 = vmatprep.mubr.f32.mxu0 0.0
        %2680 = vmatmul.mubr.f32.gmra.mxu0 %v2504
        %v2681 = vpop.f32.mrf.mxu0
        %v2682 = vadd.f32 %v2476, %v2681
        %v2683 = vpop.f32.mrf.mxu0
        %2684 = vmatprep.mubr.f32.mxu0 0.0
        %2685 = vmatmul.mubr.f32.gmra.mxu0 %v2507
        %v2686 = vpop.f32.mrf.mxu0
        %v2687 = vadd.f32 %v2476, %v2686
        %v2688 = vpop.f32.mrf.mxu0
        %2689 = vmatprep.mubr.f32.mxu0 0.0
        %2690 = vmatmul.mubr.f32.gmra.mxu0 %v2510
        %v2691 = vpop.f32.mrf.mxu0
        %v2692 = vadd.f32 %v2476, %v2691
        %v2693 = vpop.f32.mrf.mxu0
        %2694 = vmatprep.mubr.f32.mxu0 0.0
        %2695 = vmatmul.mubr.f32.gmra.mxu0 %v2513
        %v2696 = vpop.f32.mrf.mxu0
        %v2697 = vadd.f32 %v2476, %v2696
        %v2698 = vpop.f32.mrf.mxu0
        %2699 = vmatprep.mubr.f32.mxu0 0.0
        %2700 = vmatmul.mubr.f32.gmra.mxu0 %v2516
        %v2701 = vpop.f32.mrf.mxu0
        %v2702 = vadd.f32 %v2476, %v2701
        %v2703 = vpop.f32.mrf.mxu0
        %2704 = vmatprep.mubr.f32.mxu0 0.0
        %2705 = vmatmul.mubr.f32.gmra.mxu0 %v2519
        %v2706 = vpop.f32.mrf.mxu0
        %v2707 = vadd.f32 %v2476, %v2706
        %v2708 = vpop.f32.mrf.mxu0
        %2709 = vmatprep.mubr.f32.mxu0 0.0
        %2710 = vmatmul.mubr.f32.gmra.mxu0 %v2522
        %v2711 = vpop.f32.mrf.mxu0
        %v2712 = vadd.f32 %v2476, %v2711
        %v2713 = vpop.f32.mrf.mxu0
        %2714 = vmatprep.mubr.f32.mxu0 0.0
        %2715 = vmatmul.mubr.f32.gmra.mxu0 %v2525
        %v2716 = vpop.f32.mrf.mxu0
        %v2717 = vadd.f32 %v2476, %v2716
        %v2718 = vpop.f32.mrf.mxu0
        %2719 = vmatprep.mubr.f32.mxu0 0.0
        %2720 = vmatmul.mubr.f32.gmra.mxu0 %v2528
        %v2721 = vpop.f32.mrf.mxu0
        %v2722 = vadd.f32 %v2476, %v2721
        %v2723 = vpop.f32.mrf.mxu0
        %2724 = vmatprep.mubr.f32.mxu0 0.0
        %2725 = vmatmul.mubr.f32.gmra.mxu0 %v2531
        %v2726 = vpop.f32.mrf.mxu0
        %v2727 = vadd.f32 %v2476, %v2726
        %v2728 = vpop.f32.mrf.mxu0
        %2729 = vmatprep.mubr.f32.mxu0 0.0
        %2730 = vmatmul.mubr.f32.gmra.mxu0 %v2534
        %v2731 = vpop.f32.mrf.mxu0
        %v2732 = vadd.f32 %v2476, %v2731
        %v2733 = vpop.f32.mrf.mxu0
        %2734 = vmatprep.mubr.f32.mxu0 0.0
        %2735 = vmatmul.mubr.f32.gmra.mxu0 %v2537
        %v2736 = vpop.f32.mrf.mxu0
        %v2737 = vadd.f32 %v2476, %v2736
        %v2738 = vpop.f32.mrf.mxu0
        %2739 = vmatprep.mubr.f32.mxu0 0.0
        %2740 = vmatmul.mubr.f32.gmra.mxu0 %v2540
        %v2741 = vpop.f32.mrf.mxu0
        %v2742 = vadd.f32 %v2476, %v2741
        %v2743 = vpop.f32.mrf.mxu0
        %2744 = vmatprep.mubr.f32.mxu0 0.0
        %2745 = vmatmul.mubr.f32.gmra.mxu0 %v2543
        %v2746 = vpop.f32.mrf.mxu0
        %v2747 = vadd.f32 %v2476, %v2746
        %v2748 = vpop.f32.mrf.mxu0
        %2749 = vmatprep.mubr.f32.mxu0 0.0
        %2750 = vmatmul.mubr.f32.gmra.mxu0 %v2546
        %v2751 = vpop.f32.mrf.mxu0
        %v2752 = vadd.f32 %v2476, %v2751
        %v2753 = vpop.f32.mrf.mxu0
        %2754 = vmatprep.mubr.f32.mxu0 0.0
        %2755 = vmatmul.mubr.f32.gmra.mxu0 %v2549
        %v2756 = vpop.f32.mrf.mxu0
        %v2757 = vadd.f32 %v2476, %v2756
        %v2758 = vpop.f32.mrf.mxu0
        %2759 = vmatprep.mubr.f32.mxu0 0.0
        %2760 = vmatmul.mubr.f32.gmra.mxu0 %v2552
        %v2761 = vpop.f32.mrf.mxu0
        %v2762 = vadd.f32 %v2476, %v2761
        %v2763 = vpop.f32.mrf.mxu0
        %2764 = vmatprep.mubr.f32.mxu0 0.0
        %2765 = vmatmul.mubr.f32.gmra.mxu0 %v2555
        %v2766 = vpop.f32.mrf.mxu0
        %v2767 = vadd.f32 %v2476, %v2766
        %v2768 = vpop.f32.mrf.mxu0
        %2769 = vmatprep.mubr.f32.mxu0 0.0
        %2770 = vmatmul.mubr.f32.gmra.mxu0 %v2558
        %v2771 = vpop.f32.mrf.mxu0
        %v2772 = vadd.f32 %v2476, %v2771
        %v2773 = vpop.f32.mrf.mxu0
        %2774 = vmatprep.mubr.f32.mxu0 0.0
        %2775 = vmatmul.mubr.f32.gmra.mxu0 %v2561
        %v2776 = vpop.f32.mrf.mxu0
        %v2777 = vadd.f32 %v2476, %v2776
        %v2778 = vpop.f32.mrf.mxu0
        %2779 = vmatprep.mubr.f32.mxu0 0.0
        %2780 = vmatmul.mubr.f32.gmra.mxu0 %v2564
        %v2781 = vpop.f32.mrf.mxu0
        %v2782 = vadd.f32 %v2476, %v2781
        %v2783 = vpop.f32.mrf.mxu0
        %2784 = vmatprep.mubr.f32.mxu0 0.0
        %2785 = vmatmul.mubr.f32.gmra.mxu0 %v2567
        %v2786 = vpop.f32.mrf.mxu0
        %v2787 = vadd.f32 %v2476, %v2786
        %v2788 = vpop.f32.mrf.mxu0
        %2789 = vmatprep.mubr.f32.mxu0 0.0
        %2790 = vmatmul.mubr.f32.gmra.mxu0 %v2570
        %v2791 = vpop.f32.mrf.mxu0
        %v2792 = vadd.f32 %v2476, %v2791
        %v2793 = vpop.f32.mrf.mxu0
        %2794 = vmatprep.mubr.f32.mxu0 0.0
        %2795 = vmatmul.mubr.f32.gmra.mxu0 %v2573
        %v2796 = vpop.f32.mrf.mxu0
        %v2797 = vadd.f32 %v2476, %v2796
        %v2798 = vpop.f32.mrf.mxu0
        %2799 = vdwg.mxu0
        %v2800 = vadd.f32 %v2642, %v912
        %v2801 = vadd.f32 %v2647, %v913
        %v2802 = vadd.f32 %v2652, %v914
        %v2803 = vadd.f32 %v2657, %v915
        %v2804 = vadd.f32 %v2662, %v916
        %v2805 = vadd.f32 %v2667, %v917
        %v2806 = vadd.f32 %v2672, %v918
        %v2807 = vadd.f32 %v2677, %v919
        %v2808 = vadd.f32 %v2682, %v920
        %v2809 = vadd.f32 %v2687, %v921
        %v2810 = vadd.f32 %v2692, %v922
        %v2811 = vadd.f32 %v2697, %v923
        %v2812 = vadd.f32 %v2702, %v924
        %v2813 = vadd.f32 %v2707, %v925
        %v2814 = vadd.f32 %v2712, %v926
        %v2815 = vadd.f32 %v2717, %v927
        %v2816 = vadd.f32 %v2722, %v928
        %v2817 = vadd.f32 %v2727, %v929
        %v2818 = vadd.f32 %v2732, %v930
        %v2819 = vadd.f32 %v2737, %v931
        %v2820 = vadd.f32 %v2742, %v932
        %v2821 = vadd.f32 %v2747, %v933
        %v2822 = vadd.f32 %v2752, %v934
        %v2823 = vadd.f32 %v2757, %v935
        %v2824 = vadd.f32 %v2762, %v936
        %v2825 = vadd.f32 %v2767, %v937
        %v2826 = vadd.f32 %v2772, %v938
        %v2827 = vadd.f32 %v2777, %v939
        %v2828 = vadd.f32 %v2782, %v940
        %v2829 = vadd.f32 %v2787, %v941
        %v2830 = vadd.f32 %v2792, %v942
        %v2831 = vadd.f32 %v2797, %v943
        %s2832 = sadd.s32 %s748, 12
        %s2833 = smul.u32 %s2832, 64
        %s2834 = scalar_lea.vmem [#allocation2], %s2833
        %v2835 = vld [vmem:[%s2834 + $0x12] sm:$0xff]
        %v2836 = vld [vmem:[%s2834 + $0x1a] sm:$0xff]
        %v2837 = vld [vmem:[%s2834 + $0x52] sm:$0xff]
        %v2838 = vld [vmem:[%s2834 + $0x5a] sm:$0xff]
        %v2839 = vld [vmem:[%s2834 + $0x92] sm:$0xff]
        %v2840 = vld [vmem:[%s2834 + $0x9a] sm:$0xff]
        %v2841 = vld [vmem:[%s2834 + $0xd2] sm:$0xff]
        %v2842 = vld [vmem:[%s2834 + $0xda] sm:$0xff]
        %v2843 = vld [vmem:[%s2834 + $0x112] sm:$0xff]
        %v2844 = vld [vmem:[%s2834 + $0x11a] sm:$0xff]
        %v2845 = vld [vmem:[%s2834 + $0x152] sm:$0xff]
        %v2846 = vld [vmem:[%s2834 + $0x15a] sm:$0xff]
        %v2847 = vld [vmem:[%s2834 + $0x192] sm:$0xff]
        %v2848 = vld [vmem:[%s2834 + $0x19a] sm:$0xff]
        %v2849 = vld [vmem:[%s2834 + $0x1d2] sm:$0xff]
        %v2850 = vld [vmem:[%s2834 + $0x1da] sm:$0xff]
        %v2851 = vld [vmem:[%s2834 + $0x212] sm:$0xff]
        %v2852 = vld [vmem:[%s2834 + $0x21a] sm:$0xff]
        %v2853 = vld [vmem:[%s2834 + $0x252] sm:$0xff]
        %v2854 = vld [vmem:[%s2834 + $0x25a] sm:$0xff]
        %v2855 = vld [vmem:[%s2834 + $0x292] sm:$0xff]
        %v2856 = vld [vmem:[%s2834 + $0x29a] sm:$0xff]
        %v2857 = vld [vmem:[%s2834 + $0x2d2] sm:$0xff]
        %v2858 = vld [vmem:[%s2834 + $0x2da] sm:$0xff]
        %v2859 = vld [vmem:[%s2834 + $0x312] sm:$0xff]
        %v2860 = vld [vmem:[%s2834 + $0x31a] sm:$0xff]
        %v2861 = vld [vmem:[%s2834 + $0x352] sm:$0xff]
        %v2862 = vld [vmem:[%s2834 + $0x35a] sm:$0xff]
        %v2863 = vld [vmem:[%s2834 + $0x392] sm:$0xff]
        %v2864 = vld [vmem:[%s2834 + $0x39a] sm:$0xff]
        %v2865 = vld [vmem:[%s2834 + $0x3d2] sm:$0xff]
        %v2866 = vld [vmem:[%s2834 + $0x3da] sm:$0xff]
        %v2867 = vld [vmem:[%s2834 + $0x18] sm:$0xff]
        %v2868 = vld [vmem:[%s2834 + $0x20] sm:$0xff]
        %v2869 = vld [vmem:[%s2834 + $0x58] sm:$0xff]
        %v2870 = vld [vmem:[%s2834 + $0x60] sm:$0xff]
        %v2871 = vld [vmem:[%s2834 + $0x98] sm:$0xff]
        %v2872 = vld [vmem:[%s2834 + $0xa0] sm:$0xff]
        %v2873 = vld [vmem:[%s2834 + $0xd8] sm:$0xff]
        %v2874 = vld [vmem:[%s2834 + $0xe0] sm:$0xff]
        %v2875 = vld [vmem:[%s2834 + $0x118] sm:$0xff]
        %v2876 = vld [vmem:[%s2834 + $0x120] sm:$0xff]
        %v2877 = vld [vmem:[%s2834 + $0x158] sm:$0xff]
        %v2878 = vld [vmem:[%s2834 + $0x160] sm:$0xff]
        %v2879 = vld [vmem:[%s2834 + $0x198] sm:$0xff]
        %v2880 = vld [vmem:[%s2834 + $0x1a0] sm:$0xff]
        %v2881 = vld [vmem:[%s2834 + $0x1d8] sm:$0xff]
        %v2882 = vld [vmem:[%s2834 + $0x1e0] sm:$0xff]
        %v2883 = vld [vmem:[%s2834 + $0x218] sm:$0xff]
        %v2884 = vld [vmem:[%s2834 + $0x220] sm:$0xff]
        %v2885 = vld [vmem:[%s2834 + $0x258] sm:$0xff]
        %v2886 = vld [vmem:[%s2834 + $0x260] sm:$0xff]
        %v2887 = vld [vmem:[%s2834 + $0x298] sm:$0xff]
        %v2888 = vld [vmem:[%s2834 + $0x2a0] sm:$0xff]
        %v2889 = vld [vmem:[%s2834 + $0x2d8] sm:$0xff]
        %v2890 = vld [vmem:[%s2834 + $0x2e0] sm:$0xff]
        %v2891 = vld [vmem:[%s2834 + $0x318] sm:$0xff]
        %v2892 = vld [vmem:[%s2834 + $0x320] sm:$0xff]
        %v2893 = vld [vmem:[%s2834 + $0x358] sm:$0xff]
        %v2894 = vld [vmem:[%s2834 + $0x360] sm:$0xff]
        %v2895 = vld [vmem:[%s2834 + $0x398] sm:$0xff]
        %v2896 = vld [vmem:[%s2834 + $0x3a0] sm:$0xff]
        %v2897 = vld [vmem:[%s2834 + $0x3d8] sm:$0xff]
        %v2898 = vld [vmem:[%s2834 + $0x3e0] sm:$0xff]
        %v2899 = vld [vmem:[%s2834 + $0x1e] sm:$0xff]
        %v2900 = vld [vmem:[%s2834 + $0x26] sm:$0xff]
        %v2901 = vld [vmem:[%s2834 + $0x5e] sm:$0xff]
        %v2902 = vld [vmem:[%s2834 + $0x66] sm:$0xff]
        %v2903 = vld [vmem:[%s2834 + $0x9e] sm:$0xff]
        %v2904 = vld [vmem:[%s2834 + $0xa6] sm:$0xff]
        %v2905 = vld [vmem:[%s2834 + $0xde] sm:$0xff]
        %v2906 = vld [vmem:[%s2834 + $0xe6] sm:$0xff]
        %v2907 = vld [vmem:[%s2834 + $0x11e] sm:$0xff]
        %v2908 = vld [vmem:[%s2834 + $0x126] sm:$0xff]
        %v2909 = vld [vmem:[%s2834 + $0x15e] sm:$0xff]
        %v2910 = vld [vmem:[%s2834 + $0x166] sm:$0xff]
        %v2911 = vld [vmem:[%s2834 + $0x19e] sm:$0xff]
        %v2912 = vld [vmem:[%s2834 + $0x1a6] sm:$0xff]
        %v2913 = vld [vmem:[%s2834 + $0x1de] sm:$0xff]
        %v2914 = vld [vmem:[%s2834 + $0x1e6] sm:$0xff]
        %v2915 = vld [vmem:[%s2834 + $0x21e] sm:$0xff]
        %v2916 = vld [vmem:[%s2834 + $0x226] sm:$0xff]
        %v2917 = vld [vmem:[%s2834 + $0x25e] sm:$0xff]
        %v2918 = vld [vmem:[%s2834 + $0x266] sm:$0xff]
        %v2919 = vld [vmem:[%s2834 + $0x29e] sm:$0xff]
        %v2920 = vld [vmem:[%s2834 + $0x2a6] sm:$0xff]
        %v2921 = vld [vmem:[%s2834 + $0x2de] sm:$0xff]
        %v2922 = vld [vmem:[%s2834 + $0x2e6] sm:$0xff]
        %v2923 = vld [vmem:[%s2834 + $0x31e] sm:$0xff]
        %v2924 = vld [vmem:[%s2834 + $0x326] sm:$0xff]
        %v2925 = vld [vmem:[%s2834 + $0x35e] sm:$0xff]
        %v2926 = vld [vmem:[%s2834 + $0x366] sm:$0xff]
        %v2927 = vld [vmem:[%s2834 + $0x39e] sm:$0xff]
        %v2928 = vld [vmem:[%s2834 + $0x3a6] sm:$0xff]
        %v2929 = vld [vmem:[%s2834 + $0x3de] sm:$0xff]
        %v2930 = vld [vmem:[%s2834 + $0x3e6] sm:$0xff]
        %v2931 = vld [vmem:[%s751 + $0x12] sm:$0xff]
        %v2932 = vld [vmem:[%s751 + $0x1a] sm:$0xff]
        %v2933 = vld [vmem:[%s751 + $0x52] sm:$0xff]
        %v2934 = vld [vmem:[%s751 + $0x5a] sm:$0xff]
        %v2935 = vld [vmem:[%s751 + $0x92] sm:$0xff]
        %v2936 = vld [vmem:[%s751 + $0x9a] sm:$0xff]
        %v2937 = vld [vmem:[%s751 + $0xd2] sm:$0xff]
        %v2938 = vld [vmem:[%s751 + $0xda] sm:$0xff]
        %v2939 = vld [vmem:[%s751 + $0x112] sm:$0xff]
        %v2940 = vld [vmem:[%s751 + $0x11a] sm:$0xff]
        %v2941 = vld [vmem:[%s751 + $0x152] sm:$0xff]
        %v2942 = vld [vmem:[%s751 + $0x15a] sm:$0xff]
        %v2943 = vld [vmem:[%s751 + $0x192] sm:$0xff]
        %v2944 = vld [vmem:[%s751 + $0x19a] sm:$0xff]
        %v2945 = vld [vmem:[%s751 + $0x1d2] sm:$0xff]
        %v2946 = vld [vmem:[%s751 + $0x1da] sm:$0xff]
        %v2947 = vld [vmem:[%s751 + $0x212] sm:$0xff]
        %v2948 = vld [vmem:[%s751 + $0x21a] sm:$0xff]
        %v2949 = vld [vmem:[%s751 + $0x252] sm:$0xff]
        %v2950 = vld [vmem:[%s751 + $0x25a] sm:$0xff]
        %v2951 = vld [vmem:[%s751 + $0x292] sm:$0xff]
        %v2952 = vld [vmem:[%s751 + $0x29a] sm:$0xff]
        %v2953 = vld [vmem:[%s751 + $0x2d2] sm:$0xff]
        %v2954 = vld [vmem:[%s751 + $0x2da] sm:$0xff]
        %v2955 = vld [vmem:[%s751 + $0x312] sm:$0xff]
        %v2956 = vld [vmem:[%s751 + $0x31a] sm:$0xff]
        %v2957 = vld [vmem:[%s751 + $0x352] sm:$0xff]
        %v2958 = vld [vmem:[%s751 + $0x35a] sm:$0xff]
        %v2959 = vld [vmem:[%s751 + $0x392] sm:$0xff]
        %v2960 = vld [vmem:[%s751 + $0x39a] sm:$0xff]
        %v2961 = vld [vmem:[%s751 + $0x3d2] sm:$0xff]
        %v2962 = vld [vmem:[%s751 + $0x3da] sm:$0xff]
        %v2963 = vld [vmem:[%s751 + $0x1e] sm:$0xff]
        %v2964 = vld [vmem:[%s751 + $0x26] sm:$0xff]
        %v2965 = vld [vmem:[%s751 + $0x5e] sm:$0xff]
        %v2966 = vld [vmem:[%s751 + $0x66] sm:$0xff]
        %v2967 = vld [vmem:[%s751 + $0x9e] sm:$0xff]
        %v2968 = vld [vmem:[%s751 + $0xa6] sm:$0xff]
        %v2969 = vld [vmem:[%s751 + $0xde] sm:$0xff]
        %v2970 = vld [vmem:[%s751 + $0xe6] sm:$0xff]
        %v2971 = vld [vmem:[%s751 + $0x11e] sm:$0xff]
        %v2972 = vld [vmem:[%s751 + $0x126] sm:$0xff]
        %v2973 = vld [vmem:[%s751 + $0x15e] sm:$0xff]
        %v2974 = vld [vmem:[%s751 + $0x166] sm:$0xff]
        %v2975 = vld [vmem:[%s751 + $0x19e] sm:$0xff]
        %v2976 = vld [vmem:[%s751 + $0x1a6] sm:$0xff]
        %v2977 = vld [vmem:[%s751 + $0x1de] sm:$0xff]
        %v2978 = vld [vmem:[%s751 + $0x1e6] sm:$0xff]
        %v2979 = vld [vmem:[%s751 + $0x21e] sm:$0xff]
        %v2980 = vld [vmem:[%s751 + $0x226] sm:$0xff]
        %v2981 = vld [vmem:[%s751 + $0x25e] sm:$0xff]
        %v2982 = vld [vmem:[%s751 + $0x266] sm:$0xff]
        %v2983 = vld [vmem:[%s751 + $0x29e] sm:$0xff]
        %v2984 = vld [vmem:[%s751 + $0x2a6] sm:$0xff]
        %v2985 = vld [vmem:[%s751 + $0x2de] sm:$0xff]
        %v2986 = vld [vmem:[%s751 + $0x2e6] sm:$0xff]
        %v2987 = vld [vmem:[%s751 + $0x31e] sm:$0xff]
        %v2988 = vld [vmem:[%s751 + $0x326] sm:$0xff]
        %v2989 = vld [vmem:[%s751 + $0x35e] sm:$0xff]
        %v2990 = vld [vmem:[%s751 + $0x366] sm:$0xff]
        %v2991 = vld [vmem:[%s751 + $0x39e] sm:$0xff]
        %v2992 = vld [vmem:[%s751 + $0x3a6] sm:$0xff]
        %v2993 = vld [vmem:[%s751 + $0x3de] sm:$0xff]
        %v2994 = vld [vmem:[%s751 + $0x3e6] sm:$0xff]
        %s2995 = sadd.s32 %s748, 24
        %s2996 = smul.u32 %s2995, 64
        %s2997 = scalar_lea.vmem [#allocation2], %s2996
        %v2998 = vld [vmem:[%s2997 + $0x12] sm:$0xff]
        %v2999 = vld [vmem:[%s2997 + $0x1a] sm:$0xff]
        %v3000 = vld [vmem:[%s2997 + $0x52] sm:$0xff]
        %v3001 = vld [vmem:[%s2997 + $0x5a] sm:$0xff]
        %v3002 = vld [vmem:[%s2997 + $0x92] sm:$0xff]
        %v3003 = vld [vmem:[%s2997 + $0x9a] sm:$0xff]
        %v3004 = vld [vmem:[%s2997 + $0xd2] sm:$0xff]
        %v3005 = vld [vmem:[%s2997 + $0xda] sm:$0xff]
        %v3006 = vld [vmem:[%s2997 + $0x112] sm:$0xff]
        %v3007 = vld [vmem:[%s2997 + $0x11a] sm:$0xff]
        %v3008 = vld [vmem:[%s2997 + $0x152] sm:$0xff]
        %v3009 = vld [vmem:[%s2997 + $0x15a] sm:$0xff]
        %v3010 = vld [vmem:[%s2997 + $0x192] sm:$0xff]
        %v3011 = vld [vmem:[%s2997 + $0x19a] sm:$0xff]
        %v3012 = vld [vmem:[%s2997 + $0x1d2] sm:$0xff]
        %v3013 = vld [vmem:[%s2997 + $0x1da] sm:$0xff]
        %v3014 = vld [vmem:[%s2997 + $0x212] sm:$0xff]
        %v3015 = vld [vmem:[%s2997 + $0x21a] sm:$0xff]
        %v3016 = vld [vmem:[%s2997 + $0x252] sm:$0xff]
        %v3017 = vld [vmem:[%s2997 + $0x25a] sm:$0xff]
        %v3018 = vld [vmem:[%s2997 + $0x292] sm:$0xff]
        %v3019 = vld [vmem:[%s2997 + $0x29a] sm:$0xff]
        %v3020 = vld [vmem:[%s2997 + $0x2d2] sm:$0xff]
        %v3021 = vld [vmem:[%s2997 + $0x2da] sm:$0xff]
        %v3022 = vld [vmem:[%s2997 + $0x312] sm:$0xff]
        %v3023 = vld [vmem:[%s2997 + $0x31a] sm:$0xff]
        %v3024 = vld [vmem:[%s2997 + $0x352] sm:$0xff]
        %v3025 = vld [vmem:[%s2997 + $0x35a] sm:$0xff]
        %v3026 = vld [vmem:[%s2997 + $0x392] sm:$0xff]
        %v3027 = vld [vmem:[%s2997 + $0x39a] sm:$0xff]
        %v3028 = vld [vmem:[%s2997 + $0x3d2] sm:$0xff]
        %v3029 = vld [vmem:[%s2997 + $0x3da] sm:$0xff]
        %v3030 = vld [vmem:[%s2997 + $0x18] sm:$0xff]
        %v3031 = vld [vmem:[%s2997 + $0x20] sm:$0xff]
        %v3032 = vld [vmem:[%s2997 + $0x58] sm:$0xff]
        %v3033 = vld [vmem:[%s2997 + $0x60] sm:$0xff]
        %v3034 = vld [vmem:[%s2997 + $0x98] sm:$0xff]
        %v3035 = vld [vmem:[%s2997 + $0xa0] sm:$0xff]
        %v3036 = vld [vmem:[%s2997 + $0xd8] sm:$0xff]
        %v3037 = vld [vmem:[%s2997 + $0xe0] sm:$0xff]
        %v3038 = vld [vmem:[%s2997 + $0x118] sm:$0xff]
        %v3039 = vld [vmem:[%s2997 + $0x120] sm:$0xff]
        %v3040 = vld [vmem:[%s2997 + $0x158] sm:$0xff]
        %v3041 = vld [vmem:[%s2997 + $0x160] sm:$0xff]
        %v3042 = vld [vmem:[%s2997 + $0x198] sm:$0xff]
        %v3043 = vld [vmem:[%s2997 + $0x1a0] sm:$0xff]
        %v3044 = vld [vmem:[%s2997 + $0x1d8] sm:$0xff]
        %v3045 = vld [vmem:[%s2997 + $0x1e0] sm:$0xff]
        %v3046 = vld [vmem:[%s2997 + $0x218] sm:$0xff]
        %v3047 = vld [vmem:[%s2997 + $0x220] sm:$0xff]
        %v3048 = vld [vmem:[%s2997 + $0x258] sm:$0xff]
        %v3049 = vld [vmem:[%s2997 + $0x260] sm:$0xff]
        %v3050 = vld [vmem:[%s2997 + $0x298] sm:$0xff]
        %v3051 = vld [vmem:[%s2997 + $0x2a0] sm:$0xff]
        %v3052 = vld [vmem:[%s2997 + $0x2d8] sm:$0xff]
        %v3053 = vld [vmem:[%s2997 + $0x2e0] sm:$0xff]
        %v3054 = vld [vmem:[%s2997 + $0x318] sm:$0xff]
        %v3055 = vld [vmem:[%s2997 + $0x320] sm:$0xff]
        %v3056 = vld [vmem:[%s2997 + $0x358] sm:$0xff]
        %v3057 = vld [vmem:[%s2997 + $0x360] sm:$0xff]
        %v3058 = vld [vmem:[%s2997 + $0x398] sm:$0xff]
        %v3059 = vld [vmem:[%s2997 + $0x3a0] sm:$0xff]
        %v3060 = vld [vmem:[%s2997 + $0x3d8] sm:$0xff]
        %v3061 = vld [vmem:[%s2997 + $0x3e0] sm:$0xff]
        %v3062 = vld [vmem:[%s2997 + $0x1e] sm:$0xff]
        %v3063 = vld [vmem:[%s2997 + $0x26] sm:$0xff]
        %v3064 = vld [vmem:[%s2997 + $0x5e] sm:$0xff]
        %v3065 = vld [vmem:[%s2997 + $0x66] sm:$0xff]
        %v3066 = vld [vmem:[%s2997 + $0x9e] sm:$0xff]
        %v3067 = vld [vmem:[%s2997 + $0xa6] sm:$0xff]
        %v3068 = vld [vmem:[%s2997 + $0xde] sm:$0xff]
        %v3069 = vld [vmem:[%s2997 + $0xe6] sm:$0xff]
        %v3070 = vld [vmem:[%s2997 + $0x11e] sm:$0xff]
        %v3071 = vld [vmem:[%s2997 + $0x126] sm:$0xff]
        %v3072 = vld [vmem:[%s2997 + $0x15e] sm:$0xff]
        %v3073 = vld [vmem:[%s2997 + $0x166] sm:$0xff]
        %v3074 = vld [vmem:[%s2997 + $0x19e] sm:$0xff]
        %v3075 = vld [vmem:[%s2997 + $0x1a6] sm:$0xff]
        %v3076 = vld [vmem:[%s2997 + $0x1de] sm:$0xff]
        %v3077 = vld [vmem:[%s2997 + $0x1e6] sm:$0xff]
        %v3078 = vld [vmem:[%s2997 + $0x21e] sm:$0xff]
        %v3079 = vld [vmem:[%s2997 + $0x226] sm:$0xff]
        %v3080 = vld [vmem:[%s2997 + $0x25e] sm:$0xff]
        %v3081 = vld [vmem:[%s2997 + $0x266] sm:$0xff]
        %v3082 = vld [vmem:[%s2997 + $0x29e] sm:$0xff]
        %v3083 = vld [vmem:[%s2997 + $0x2a6] sm:$0xff]
        %v3084 = vld [vmem:[%s2997 + $0x2de] sm:$0xff]
        %v3085 = vld [vmem:[%s2997 + $0x2e6] sm:$0xff]
        %v3086 = vld [vmem:[%s2997 + $0x31e] sm:$0xff]
        %v3087 = vld [vmem:[%s2997 + $0x326] sm:$0xff]
        %v3088 = vld [vmem:[%s2997 + $0x35e] sm:$0xff]
        %v3089 = vld [vmem:[%s2997 + $0x366] sm:$0xff]
        %v3090 = vld [vmem:[%s2997 + $0x39e] sm:$0xff]
        %v3091 = vld [vmem:[%s2997 + $0x3a6] sm:$0xff]
        %v3092 = vld [vmem:[%s2997 + $0x3de] sm:$0xff]
        %v3093 = vld [vmem:[%s2997 + $0x3e6] sm:$0xff]
        %3126 = vrot.lane.b32.xlu0 %v2835, 120
        %v3127 = vpop.permute.xlu0 %3126
        %3128 = vrot.lane.b32.xlu0 %v2836, 120
        %v3129 = vpop.permute.xlu0 %3128
        %3130 = vrot.lane.b32.xlu0 %v2837, 120
        %v3131 = vpop.permute.xlu0 %3130
        %3132 = vrot.lane.b32.xlu0 %v2838, 120
        %v3133 = vpop.permute.xlu0 %3132
        %3134 = vrot.lane.b32.xlu0 %v2839, 120
        %v3135 = vpop.permute.xlu0 %3134
        %3136 = vrot.lane.b32.xlu0 %v2840, 120
        %v3137 = vpop.permute.xlu0 %3136
        %3138 = vrot.lane.b32.xlu0 %v2841, 120
        %v3139 = vpop.permute.xlu0 %3138
        %3140 = vrot.lane.b32.xlu0 %v2842, 120
        %v3141 = vpop.permute.xlu0 %3140
        %3142 = vrot.lane.b32.xlu0 %v2843, 120
        %v3143 = vpop.permute.xlu0 %3142
        %3144 = vrot.lane.b32.xlu0 %v2844, 120
        %v3145 = vpop.permute.xlu0 %3144
        %3146 = vrot.lane.b32.xlu0 %v2845, 120
        %v3147 = vpop.permute.xlu0 %3146
        %3148 = vrot.lane.b32.xlu0 %v2846, 120
        %v3149 = vpop.permute.xlu0 %3148
        %3150 = vrot.lane.b32.xlu0 %v2847, 120
        %v3151 = vpop.permute.xlu0 %3150
        %3152 = vrot.lane.b32.xlu0 %v2848, 120
        %v3153 = vpop.permute.xlu0 %3152
        %3154 = vrot.lane.b32.xlu0 %v2849, 120
        %v3155 = vpop.permute.xlu0 %3154
        %3156 = vrot.lane.b32.xlu0 %v2850, 120
        %v3157 = vpop.permute.xlu0 %3156
        %3158 = vrot.lane.b32.xlu0 %v2851, 120
        %v3159 = vpop.permute.xlu0 %3158
        %3160 = vrot.lane.b32.xlu0 %v2852, 120
        %v3161 = vpop.permute.xlu0 %3160
        %3162 = vrot.lane.b32.xlu0 %v2853, 120
        %v3163 = vpop.permute.xlu0 %3162
        %3164 = vrot.lane.b32.xlu0 %v2854, 120
        %v3165 = vpop.permute.xlu0 %3164
        %3166 = vrot.lane.b32.xlu0 %v2855, 120
        %v3167 = vpop.permute.xlu0 %3166
        %3168 = vrot.lane.b32.xlu0 %v2856, 120
        %v3169 = vpop.permute.xlu0 %3168
        %3170 = vrot.lane.b32.xlu0 %v2857, 120
        %v3171 = vpop.permute.xlu0 %3170
        %3172 = vrot.lane.b32.xlu0 %v2858, 120
        %v3173 = vpop.permute.xlu0 %3172
        %3174 = vrot.lane.b32.xlu0 %v2859, 120
        %v3175 = vpop.permute.xlu0 %3174
        %3176 = vrot.lane.b32.xlu0 %v2860, 120
        %v3177 = vpop.permute.xlu0 %3176
        %3178 = vrot.lane.b32.xlu0 %v2861, 120
        %v3179 = vpop.permute.xlu0 %3178
        %3180 = vrot.lane.b32.xlu0 %v2862, 120
        %v3181 = vpop.permute.xlu0 %3180
        %3182 = vrot.lane.b32.xlu0 %v2863, 120
        %v3183 = vpop.permute.xlu0 %3182
        %3184 = vrot.lane.b32.xlu0 %v2864, 120
        %v3185 = vpop.permute.xlu0 %3184
        %3186 = vrot.lane.b32.xlu0 %v2865, 120
        %v3187 = vpop.permute.xlu0 %3186
        %3188 = vrot.lane.b32.xlu0 %v2866, 120
        %v3189 = vpop.permute.xlu0 %3188
        %3254 = vrot.lane.b32.xlu0 %v2899, 8
        %v3255 = vpop.permute.xlu0 %3254
        %3256 = vrot.lane.b32.xlu0 %v2900, 8
        %v3257 = vpop.permute.xlu0 %3256
        %3258 = vrot.lane.b32.xlu0 %v2901, 8
        %v3259 = vpop.permute.xlu0 %3258
        %3260 = vrot.lane.b32.xlu0 %v2902, 8
        %v3261 = vpop.permute.xlu0 %3260
        %3262 = vrot.lane.b32.xlu0 %v2903, 8
        %v3263 = vpop.permute.xlu0 %3262
        %3264 = vrot.lane.b32.xlu0 %v2904, 8
        %v3265 = vpop.permute.xlu0 %3264
        %3266 = vrot.lane.b32.xlu0 %v2905, 8
        %v3267 = vpop.permute.xlu0 %3266
        %3268 = vrot.lane.b32.xlu0 %v2906, 8
        %v3269 = vpop.permute.xlu0 %3268
        %3270 = vrot.lane.b32.xlu0 %v2907, 8
        %v3271 = vpop.permute.xlu0 %3270
        %3272 = vrot.lane.b32.xlu0 %v2908, 8
        %v3273 = vpop.permute.xlu0 %3272
        %3274 = vrot.lane.b32.xlu0 %v2909, 8
        %v3275 = vpop.permute.xlu0 %3274
        %3276 = vrot.lane.b32.xlu0 %v2910, 8
        %v3277 = vpop.permute.xlu0 %3276
        %3278 = vrot.lane.b32.xlu0 %v2911, 8
        %v3279 = vpop.permute.xlu0 %3278
        %3280 = vrot.lane.b32.xlu0 %v2912, 8
        %v3281 = vpop.permute.xlu0 %3280
        %3282 = vrot.lane.b32.xlu0 %v2913, 8
        %v3283 = vpop.permute.xlu0 %3282
        %3284 = vrot.lane.b32.xlu0 %v2914, 8
        %v3285 = vpop.permute.xlu0 %3284
        %3286 = vrot.lane.b32.xlu0 %v2915, 8
        %v3287 = vpop.permute.xlu0 %3286
        %3288 = vrot.lane.b32.xlu0 %v2916, 8
        %v3289 = vpop.permute.xlu0 %3288
        %3290 = vrot.lane.b32.xlu0 %v2917, 8
        %v3291 = vpop.permute.xlu0 %3290
        %3292 = vrot.lane.b32.xlu0 %v2918, 8
        %v3293 = vpop.permute.xlu0 %3292
        %3294 = vrot.lane.b32.xlu0 %v2919, 8
        %v3295 = vpop.permute.xlu0 %3294
        %3296 = vrot.lane.b32.xlu0 %v2920, 8
        %v3297 = vpop.permute.xlu0 %3296
        %3298 = vrot.lane.b32.xlu0 %v2921, 8
        %v3299 = vpop.permute.xlu0 %3298
        %3300 = vrot.lane.b32.xlu0 %v2922, 8
        %v3301 = vpop.permute.xlu0 %3300
        %3302 = vrot.lane.b32.xlu0 %v2923, 8
        %v3303 = vpop.permute.xlu0 %3302
        %3304 = vrot.lane.b32.xlu0 %v2924, 8
        %v3305 = vpop.permute.xlu0 %3304
        %3306 = vrot.lane.b32.xlu0 %v2925, 8
        %v3307 = vpop.permute.xlu0 %3306
        %3308 = vrot.lane.b32.xlu0 %v2926, 8
        %v3309 = vpop.permute.xlu0 %3308
        %3310 = vrot.lane.b32.xlu0 %v2927, 8
        %v3311 = vpop.permute.xlu0 %3310
        %3312 = vrot.lane.b32.xlu0 %v2928, 8
        %v3313 = vpop.permute.xlu0 %3312
        %3314 = vrot.lane.b32.xlu0 %v2929, 8
        %v3315 = vpop.permute.xlu0 %3314
        %3316 = vrot.lane.b32.xlu0 %v2930, 8
        %v3317 = vpop.permute.xlu0 %3316
        %3382 = vrot.lane.b32.xlu0 %v2931, 16
        %v3383 = vpop.permute.xlu0 %3382
        %3384 = vrot.lane.b32.xlu0 %v2932, 16
        %v3385 = vpop.permute.xlu0 %3384
        %3386 = vrot.lane.b32.xlu0 %v2933, 16
        %v3387 = vpop.permute.xlu0 %3386
        %3388 = vrot.lane.b32.xlu0 %v2934, 16
        %v3389 = vpop.permute.xlu0 %3388
        %3390 = vrot.lane.b32.xlu0 %v2935, 16
        %v3391 = vpop.permute.xlu0 %3390
        %3392 = vrot.lane.b32.xlu0 %v2936, 16
        %v3393 = vpop.permute.xlu0 %3392
        %3394 = vrot.lane.b32.xlu0 %v2937, 16
        %v3395 = vpop.permute.xlu0 %3394
        %3396 = vrot.lane.b32.xlu0 %v2938, 16
        %v3397 = vpop.permute.xlu0 %3396
        %3398 = vrot.lane.b32.xlu0 %v2939, 16
        %v3399 = vpop.permute.xlu0 %3398
        %3400 = vrot.lane.b32.xlu0 %v2940, 16
        %v3401 = vpop.permute.xlu0 %3400
        %3402 = vrot.lane.b32.xlu0 %v2941, 16
        %v3403 = vpop.permute.xlu0 %3402
        %3404 = vrot.lane.b32.xlu0 %v2942, 16
        %v3405 = vpop.permute.xlu0 %3404
        %3406 = vrot.lane.b32.xlu0 %v2943, 16
        %v3407 = vpop.permute.xlu0 %3406
        %3408 = vrot.lane.b32.xlu0 %v2944, 16
        %v3409 = vpop.permute.xlu0 %3408
        %3410 = vrot.lane.b32.xlu0 %v2945, 16
        %v3411 = vpop.permute.xlu0 %3410
        %3412 = vrot.lane.b32.xlu0 %v2946, 16
        %v3413 = vpop.permute.xlu0 %3412
        %3414 = vrot.lane.b32.xlu0 %v2947, 16
        %v3415 = vpop.permute.xlu0 %3414
        %3416 = vrot.lane.b32.xlu0 %v2948, 16
        %v3417 = vpop.permute.xlu0 %3416
        %3418 = vrot.lane.b32.xlu0 %v2949, 16
        %v3419 = vpop.permute.xlu0 %3418
        %3420 = vrot.lane.b32.xlu0 %v2950, 16
        %v3421 = vpop.permute.xlu0 %3420
        %3422 = vrot.lane.b32.xlu0 %v2951, 16
        %v3423 = vpop.permute.xlu0 %3422
        %3424 = vrot.lane.b32.xlu0 %v2952, 16
        %v3425 = vpop.permute.xlu0 %3424
        %3426 = vrot.lane.b32.xlu0 %v2953, 16
        %v3427 = vpop.permute.xlu0 %3426
        %3428 = vrot.lane.b32.xlu0 %v2954, 16
        %v3429 = vpop.permute.xlu0 %3428
        %3430 = vrot.lane.b32.xlu0 %v2955, 16
        %v3431 = vpop.permute.xlu0 %3430
        %3432 = vrot.lane.b32.xlu0 %v2956, 16
        %v3433 = vpop.permute.xlu0 %3432
        %3434 = vrot.lane.b32.xlu0 %v2957, 16
        %v3435 = vpop.permute.xlu0 %3434
        %3436 = vrot.lane.b32.xlu0 %v2958, 16
        %v3437 = vpop.permute.xlu0 %3436
        %3438 = vrot.lane.b32.xlu0 %v2959, 16
        %v3439 = vpop.permute.xlu0 %3438
        %3440 = vrot.lane.b32.xlu0 %v2960, 16
        %v3441 = vpop.permute.xlu0 %3440
        %3442 = vrot.lane.b32.xlu0 %v2961, 16
        %v3443 = vpop.permute.xlu0 %3442
        %3444 = vrot.lane.b32.xlu0 %v2962, 16
        %v3445 = vpop.permute.xlu0 %3444
        %3478 = vrot.lane.b32.xlu0 %v752, 24
        %v3479 = vpop.permute.xlu0 %3478
        %3480 = vrot.lane.b32.xlu0 %v753, 24
        %v3481 = vpop.permute.xlu0 %3480
        %3482 = vrot.lane.b32.xlu0 %v754, 24
        %v3483 = vpop.permute.xlu0 %3482
        %3484 = vrot.lane.b32.xlu0 %v755, 24
        %v3485 = vpop.permute.xlu0 %3484
        %3486 = vrot.lane.b32.xlu0 %v756, 24
        %v3487 = vpop.permute.xlu0 %3486
        %3488 = vrot.lane.b32.xlu0 %v757, 24
        %v3489 = vpop.permute.xlu0 %3488
        %3490 = vrot.lane.b32.xlu0 %v758, 24
        %v3491 = vpop.permute.xlu0 %3490
        %3492 = vrot.lane.b32.xlu0 %v759, 24
        %v3493 = vpop.permute.xlu0 %3492
        %3494 = vrot.lane.b32.xlu0 %v760, 24
        %v3495 = vpop.permute.xlu0 %3494
        %3496 = vrot.lane.b32.xlu0 %v761, 24
        %v3497 = vpop.permute.xlu0 %3496
        %3498 = vrot.lane.b32.xlu0 %v762, 24
        %v3499 = vpop.permute.xlu0 %3498
        %3500 = vrot.lane.b32.xlu0 %v763, 24
        %v3501 = vpop.permute.xlu0 %3500
        %3502 = vrot.lane.b32.xlu0 %v764, 24
        %v3503 = vpop.permute.xlu0 %3502
        %3504 = vrot.lane.b32.xlu0 %v765, 24
        %v3505 = vpop.permute.xlu0 %3504
        %3506 = vrot.lane.b32.xlu0 %v766, 24
        %v3507 = vpop.permute.xlu0 %3506
        %3508 = vrot.lane.b32.xlu0 %v767, 24
        %v3509 = vpop.permute.xlu0 %3508
        %3510 = vrot.lane.b32.xlu0 %v768, 24
        %v3511 = vpop.permute.xlu0 %3510
        %3512 = vrot.lane.b32.xlu0 %v769, 24
        %v3513 = vpop.permute.xlu0 %3512
        %3514 = vrot.lane.b32.xlu0 %v770, 24
        %v3515 = vpop.permute.xlu0 %3514
        %3516 = vrot.lane.b32.xlu0 %v771, 24
        %v3517 = vpop.permute.xlu0 %3516
        %3518 = vrot.lane.b32.xlu0 %v772, 24
        %v3519 = vpop.permute.xlu0 %3518
        %3520 = vrot.lane.b32.xlu0 %v773, 24
        %v3521 = vpop.permute.xlu0 %3520
        %3522 = vrot.lane.b32.xlu0 %v774, 24
        %v3523 = vpop.permute.xlu0 %3522
        %3524 = vrot.lane.b32.xlu0 %v775, 24
        %v3525 = vpop.permute.xlu0 %3524
        %3526 = vrot.lane.b32.xlu0 %v776, 24
        %v3527 = vpop.permute.xlu0 %3526
        %3528 = vrot.lane.b32.xlu0 %v777, 24
        %v3529 = vpop.permute.xlu0 %3528
        %3530 = vrot.lane.b32.xlu0 %v778, 24
        %v3531 = vpop.permute.xlu0 %3530
        %3532 = vrot.lane.b32.xlu0 %v779, 24
        %v3533 = vpop.permute.xlu0 %3532
        %3534 = vrot.lane.b32.xlu0 %v780, 24
        %v3535 = vpop.permute.xlu0 %3534
        %3536 = vrot.lane.b32.xlu0 %v781, 24
        %v3537 = vpop.permute.xlu0 %3536
        %3538 = vrot.lane.b32.xlu0 %v782, 24
        %v3539 = vpop.permute.xlu0 %3538
        %3540 = vrot.lane.b32.xlu0 %v783, 24
        %v3541 = vpop.permute.xlu0 %3540
        %3606 = vrot.lane.b32.xlu0 %v2963, 32
        %v3607 = vpop.permute.xlu0 %3606
        %3608 = vrot.lane.b32.xlu0 %v2964, 32
        %v3609 = vpop.permute.xlu0 %3608
        %3610 = vrot.lane.b32.xlu0 %v2965, 32
        %v3611 = vpop.permute.xlu0 %3610
        %3612 = vrot.lane.b32.xlu0 %v2966, 32
        %v3613 = vpop.permute.xlu0 %3612
        %3614 = vrot.lane.b32.xlu0 %v2967, 32
        %v3615 = vpop.permute.xlu0 %3614
        %3616 = vrot.lane.b32.xlu0 %v2968, 32
        %v3617 = vpop.permute.xlu0 %3616
        %3618 = vrot.lane.b32.xlu0 %v2969, 32
        %v3619 = vpop.permute.xlu0 %3618
        %3620 = vrot.lane.b32.xlu0 %v2970, 32
        %v3621 = vpop.permute.xlu0 %3620
        %3622 = vrot.lane.b32.xlu0 %v2971, 32
        %v3623 = vpop.permute.xlu0 %3622
        %3624 = vrot.lane.b32.xlu0 %v2972, 32
        %v3625 = vpop.permute.xlu0 %3624
        %3626 = vrot.lane.b32.xlu0 %v2973, 32
        %v3627 = vpop.permute.xlu0 %3626
        %3628 = vrot.lane.b32.xlu0 %v2974, 32
        %v3629 = vpop.permute.xlu0 %3628
        %3630 = vrot.lane.b32.xlu0 %v2975, 32
        %v3631 = vpop.permute.xlu0 %3630
        %3632 = vrot.lane.b32.xlu0 %v2976, 32
        %v3633 = vpop.permute.xlu0 %3632
        %3634 = vrot.lane.b32.xlu0 %v2977, 32
        %v3635 = vpop.permute.xlu0 %3634
        %3636 = vrot.lane.b32.xlu0 %v2978, 32
        %v3637 = vpop.permute.xlu0 %3636
        %3638 = vrot.lane.b32.xlu0 %v2979, 32
        %v3639 = vpop.permute.xlu0 %3638
        %3640 = vrot.lane.b32.xlu0 %v2980, 32
        %v3641 = vpop.permute.xlu0 %3640
        %3642 = vrot.lane.b32.xlu0 %v2981, 32
        %v3643 = vpop.permute.xlu0 %3642
        %3644 = vrot.lane.b32.xlu0 %v2982, 32
        %v3645 = vpop.permute.xlu0 %3644
        %3646 = vrot.lane.b32.xlu0 %v2983, 32
        %v3647 = vpop.permute.xlu0 %3646
        %3648 = vrot.lane.b32.xlu0 %v2984, 32
        %v3649 = vpop.permute.xlu0 %3648
        %3650 = vrot.lane.b32.xlu0 %v2985, 32
        %v3651 = vpop.permute.xlu0 %3650
        %3652 = vrot.lane.b32.xlu0 %v2986, 32
        %v3653 = vpop.permute.xlu0 %3652
        %3654 = vrot.lane.b32.xlu0 %v2987, 32
        %v3655 = vpop.permute.xlu0 %3654
        %3656 = vrot.lane.b32.xlu0 %v2988, 32
        %v3657 = vpop.permute.xlu0 %3656
        %3658 = vrot.lane.b32.xlu0 %v2989, 32
        %v3659 = vpop.permute.xlu0 %3658
        %3660 = vrot.lane.b32.xlu0 %v2990, 32
        %v3661 = vpop.permute.xlu0 %3660
        %3662 = vrot.lane.b32.xlu0 %v2991, 32
        %v3663 = vpop.permute.xlu0 %3662
        %3664 = vrot.lane.b32.xlu0 %v2992, 32
        %v3665 = vpop.permute.xlu0 %3664
        %3666 = vrot.lane.b32.xlu0 %v2993, 32
        %v3667 = vpop.permute.xlu0 %3666
        %3668 = vrot.lane.b32.xlu0 %v2994, 32
        %v3669 = vpop.permute.xlu0 %3668
        %3734 = vrot.lane.b32.xlu0 %v2998, 40
        %v3735 = vpop.permute.xlu0 %3734
        %3736 = vrot.lane.b32.xlu0 %v2999, 40
        %v3737 = vpop.permute.xlu0 %3736
        %3738 = vrot.lane.b32.xlu0 %v3000, 40
        %v3739 = vpop.permute.xlu0 %3738
        %3740 = vrot.lane.b32.xlu0 %v3001, 40
        %v3741 = vpop.permute.xlu0 %3740
        %3742 = vrot.lane.b32.xlu0 %v3002, 40
        %v3743 = vpop.permute.xlu0 %3742
        %3744 = vrot.lane.b32.xlu0 %v3003, 40
        %v3745 = vpop.permute.xlu0 %3744
        %3746 = vrot.lane.b32.xlu0 %v3004, 40
        %v3747 = vpop.permute.xlu0 %3746
        %3748 = vrot.lane.b32.xlu0 %v3005, 40
        %v3749 = vpop.permute.xlu0 %3748
        %3750 = vrot.lane.b32.xlu0 %v3006, 40
        %v3751 = vpop.permute.xlu0 %3750
        %3752 = vrot.lane.b32.xlu0 %v3007, 40
        %v3753 = vpop.permute.xlu0 %3752
        %3754 = vrot.lane.b32.xlu0 %v3008, 40
        %v3755 = vpop.permute.xlu0 %3754
        %3756 = vrot.lane.b32.xlu0 %v3009, 40
        %v3757 = vpop.permute.xlu0 %3756
        %3758 = vrot.lane.b32.xlu0 %v3010, 40
        %v3759 = vpop.permute.xlu0 %3758
        %3760 = vrot.lane.b32.xlu0 %v3011, 40
        %v3761 = vpop.permute.xlu0 %3760
        %3762 = vrot.lane.b32.xlu0 %v3012, 40
        %v3763 = vpop.permute.xlu0 %3762
        %3764 = vrot.lane.b32.xlu0 %v3013, 40
        %v3765 = vpop.permute.xlu0 %3764
        %3766 = vrot.lane.b32.xlu0 %v3014, 40
        %v3767 = vpop.permute.xlu0 %3766
        %3768 = vrot.lane.b32.xlu0 %v3015, 40
        %v3769 = vpop.permute.xlu0 %3768
        %3770 = vrot.lane.b32.xlu0 %v3016, 40
        %v3771 = vpop.permute.xlu0 %3770
        %3772 = vrot.lane.b32.xlu0 %v3017, 40
        %v3773 = vpop.permute.xlu0 %3772
        %3774 = vrot.lane.b32.xlu0 %v3018, 40
        %v3775 = vpop.permute.xlu0 %3774
        %3776 = vrot.lane.b32.xlu0 %v3019, 40
        %v3777 = vpop.permute.xlu0 %3776
        %3778 = vrot.lane.b32.xlu0 %v3020, 40
        %v3779 = vpop.permute.xlu0 %3778
        %3780 = vrot.lane.b32.xlu0 %v3021, 40
        %v3781 = vpop.permute.xlu0 %3780
        %3782 = vrot.lane.b32.xlu0 %v3022, 40
        %v3783 = vpop.permute.xlu0 %3782
        %3784 = vrot.lane.b32.xlu0 %v3023, 40
        %v3785 = vpop.permute.xlu0 %3784
        %3786 = vrot.lane.b32.xlu0 %v3024, 40
        %v3787 = vpop.permute.xlu0 %3786
        %3788 = vrot.lane.b32.xlu0 %v3025, 40
        %v3789 = vpop.permute.xlu0 %3788
        %3790 = vrot.lane.b32.xlu0 %v3026, 40
        %v3791 = vpop.permute.xlu0 %3790
        %3792 = vrot.lane.b32.xlu0 %v3027, 40
        %v3793 = vpop.permute.xlu0 %3792
        %3794 = vrot.lane.b32.xlu0 %v3028, 40
        %v3795 = vpop.permute.xlu0 %3794
        %3796 = vrot.lane.b32.xlu0 %v3029, 40
        %v3797 = vpop.permute.xlu0 %3796
        %3862 = vrot.lane.b32.xlu0 %v3030, 48
        %v3863 = vpop.permute.xlu0 %3862
        %3864 = vrot.lane.b32.xlu0 %v3031, 48
        %v3865 = vpop.permute.xlu0 %3864
        %3866 = vrot.lane.b32.xlu0 %v3032, 48
        %v3867 = vpop.permute.xlu0 %3866
        %3868 = vrot.lane.b32.xlu0 %v3033, 48
        %v3869 = vpop.permute.xlu0 %3868
        %3870 = vrot.lane.b32.xlu0 %v3034, 48
        %v3871 = vpop.permute.xlu0 %3870
        %3872 = vrot.lane.b32.xlu0 %v3035, 48
        %v3873 = vpop.permute.xlu0 %3872
        %3874 = vrot.lane.b32.xlu0 %v3036, 48
        %v3875 = vpop.permute.xlu0 %3874
        %3876 = vrot.lane.b32.xlu0 %v3037, 48
        %v3877 = vpop.permute.xlu0 %3876
        %3878 = vrot.lane.b32.xlu0 %v3038, 48
        %v3879 = vpop.permute.xlu0 %3878
        %3880 = vrot.lane.b32.xlu0 %v3039, 48
        %v3881 = vpop.permute.xlu0 %3880
        %3882 = vrot.lane.b32.xlu0 %v3040, 48
        %v3883 = vpop.permute.xlu0 %3882
        %3884 = vrot.lane.b32.xlu0 %v3041, 48
        %v3885 = vpop.permute.xlu0 %3884
        %3886 = vrot.lane.b32.xlu0 %v3042, 48
        %v3887 = vpop.permute.xlu0 %3886
        %3888 = vrot.lane.b32.xlu0 %v3043, 48
        %v3889 = vpop.permute.xlu0 %3888
        %3890 = vrot.lane.b32.xlu0 %v3044, 48
        %v3891 = vpop.permute.xlu0 %3890
        %3892 = vrot.lane.b32.xlu0 %v3045, 48
        %v3893 = vpop.permute.xlu0 %3892
        %3894 = vrot.lane.b32.xlu0 %v3046, 48
        %v3895 = vpop.permute.xlu0 %3894
        %3896 = vrot.lane.b32.xlu0 %v3047, 48
        %v3897 = vpop.permute.xlu0 %3896
        %3898 = vrot.lane.b32.xlu0 %v3048, 48
        %v3899 = vpop.permute.xlu0 %3898
        %3900 = vrot.lane.b32.xlu0 %v3049, 48
        %v3901 = vpop.permute.xlu0 %3900
        %3902 = vrot.lane.b32.xlu0 %v3050, 48
        %v3903 = vpop.permute.xlu0 %3902
        %3904 = vrot.lane.b32.xlu0 %v3051, 48
        %v3905 = vpop.permute.xlu0 %3904
        %3906 = vrot.lane.b32.xlu0 %v3052, 48
        %v3907 = vpop.permute.xlu0 %3906
        %3908 = vrot.lane.b32.xlu0 %v3053, 48
        %v3909 = vpop.permute.xlu0 %3908
        %3910 = vrot.lane.b32.xlu0 %v3054, 48
        %v3911 = vpop.permute.xlu0 %3910
        %3912 = vrot.lane.b32.xlu0 %v3055, 48
        %v3913 = vpop.permute.xlu0 %3912
        %3914 = vrot.lane.b32.xlu0 %v3056, 48
        %v3915 = vpop.permute.xlu0 %3914
        %3916 = vrot.lane.b32.xlu0 %v3057, 48
        %v3917 = vpop.permute.xlu0 %3916
        %3918 = vrot.lane.b32.xlu0 %v3058, 48
        %v3919 = vpop.permute.xlu0 %3918
        %3920 = vrot.lane.b32.xlu0 %v3059, 48
        %v3921 = vpop.permute.xlu0 %3920
        %3922 = vrot.lane.b32.xlu0 %v3060, 48
        %v3923 = vpop.permute.xlu0 %3922
        %3924 = vrot.lane.b32.xlu0 %v3061, 48
        %v3925 = vpop.permute.xlu0 %3924
        %3990 = vrot.lane.b32.xlu0 %v3062, 56
        %v3991 = vpop.permute.xlu0 %3990
        %3992 = vrot.lane.b32.xlu0 %v3063, 56
        %v3993 = vpop.permute.xlu0 %3992
        %3994 = vrot.lane.b32.xlu0 %v3064, 56
        %v3995 = vpop.permute.xlu0 %3994
        %3996 = vrot.lane.b32.xlu0 %v3065, 56
        %v3997 = vpop.permute.xlu0 %3996
        %3998 = vrot.lane.b32.xlu0 %v3066, 56
        %v3999 = vpop.permute.xlu0 %3998
        %4000 = vrot.lane.b32.xlu0 %v3067, 56
        %v4001 = vpop.permute.xlu0 %4000
        %4002 = vrot.lane.b32.xlu0 %v3068, 56
        %v4003 = vpop.permute.xlu0 %4002
        %4004 = vrot.lane.b32.xlu0 %v3069, 56
        %v4005 = vpop.permute.xlu0 %4004
        %4006 = vrot.lane.b32.xlu0 %v3070, 56
        %v4007 = vpop.permute.xlu0 %4006
        %4008 = vrot.lane.b32.xlu0 %v3071, 56
        %v4009 = vpop.permute.xlu0 %4008
        %4010 = vrot.lane.b32.xlu0 %v3072, 56
        %v4011 = vpop.permute.xlu0 %4010
        %4012 = vrot.lane.b32.xlu0 %v3073, 56
        %v4013 = vpop.permute.xlu0 %4012
        %4014 = vrot.lane.b32.xlu0 %v3074, 56
        %v4015 = vpop.permute.xlu0 %4014
        %4016 = vrot.lane.b32.xlu0 %v3075, 56
        %v4017 = vpop.permute.xlu0 %4016
        %4018 = vrot.lane.b32.xlu0 %v3076, 56
        %v4019 = vpop.permute.xlu0 %4018
        %4020 = vrot.lane.b32.xlu0 %v3077, 56
        %v4021 = vpop.permute.xlu0 %4020
        %4022 = vrot.lane.b32.xlu0 %v3078, 56
        %v4023 = vpop.permute.xlu0 %4022
        %4024 = vrot.lane.b32.xlu0 %v3079, 56
        %v4025 = vpop.permute.xlu0 %4024
        %4026 = vrot.lane.b32.xlu0 %v3080, 56
        %v4027 = vpop.permute.xlu0 %4026
        %4028 = vrot.lane.b32.xlu0 %v3081, 56
        %v4029 = vpop.permute.xlu0 %4028
        %4030 = vrot.lane.b32.xlu0 %v3082, 56
        %v4031 = vpop.permute.xlu0 %4030
        %4032 = vrot.lane.b32.xlu0 %v3083, 56
        %v4033 = vpop.permute.xlu0 %4032
        %4034 = vrot.lane.b32.xlu0 %v3084, 56
        %v4035 = vpop.permute.xlu0 %4034
        %4036 = vrot.lane.b32.xlu0 %v3085, 56
        %v4037 = vpop.permute.xlu0 %4036
        %4038 = vrot.lane.b32.xlu0 %v3086, 56
        %v4039 = vpop.permute.xlu0 %4038
        %4040 = vrot.lane.b32.xlu0 %v3087, 56
        %v4041 = vpop.permute.xlu0 %4040
        %4042 = vrot.lane.b32.xlu0 %v3088, 56
        %v4043 = vpop.permute.xlu0 %4042
        %4044 = vrot.lane.b32.xlu0 %v3089, 56
        %v4045 = vpop.permute.xlu0 %4044
        %4046 = vrot.lane.b32.xlu0 %v3090, 56
        %v4047 = vpop.permute.xlu0 %4046
        %4048 = vrot.lane.b32.xlu0 %v3091, 56
        %v4049 = vpop.permute.xlu0 %4048
        %4050 = vrot.lane.b32.xlu0 %v3092, 56
        %v4051 = vpop.permute.xlu0 %4050
        %4052 = vrot.lane.b32.xlu0 %v3093, 56
        %v4053 = vpop.permute.xlu0 %4052
        %v4086 = vsel %vm2198, %v3127, %v2867
        %v4087 = vsel %vm2198, %v3129, %v2868
        %v4088 = vsel %vm2198, %v3131, %v2869
        %v4089 = vsel %vm2198, %v3133, %v2870
        %v4090 = vsel %vm2198, %v3135, %v2871
        %v4091 = vsel %vm2198, %v3137, %v2872
        %v4092 = vsel %vm2198, %v3139, %v2873
        %v4093 = vsel %vm2198, %v3141, %v2874
        %v4094 = vsel %vm2198, %v3143, %v2875
        %v4095 = vsel %vm2198, %v3145, %v2876
        %v4096 = vsel %vm2198, %v3147, %v2877
        %v4097 = vsel %vm2198, %v3149, %v2878
        %v4098 = vsel %vm2198, %v3151, %v2879
        %v4099 = vsel %vm2198, %v3153, %v2880
        %v4100 = vsel %vm2198, %v3155, %v2881
        %v4101 = vsel %vm2198, %v3157, %v2882
        %v4102 = vsel %vm2198, %v3159, %v2883
        %v4103 = vsel %vm2198, %v3161, %v2884
        %v4104 = vsel %vm2198, %v3163, %v2885
        %v4105 = vsel %vm2198, %v3165, %v2886
        %v4106 = vsel %vm2198, %v3167, %v2887
        %v4107 = vsel %vm2198, %v3169, %v2888
        %v4108 = vsel %vm2198, %v3171, %v2889
        %v4109 = vsel %vm2198, %v3173, %v2890
        %v4110 = vsel %vm2198, %v3175, %v2891
        %v4111 = vsel %vm2198, %v3177, %v2892
        %v4112 = vsel %vm2198, %v3179, %v2893
        %v4113 = vsel %vm2198, %v3181, %v2894
        %v4114 = vsel %vm2198, %v3183, %v2895
        %v4115 = vsel %vm2198, %v3185, %v2896
        %v4116 = vsel %vm2198, %v3187, %v2897
        %v4117 = vsel %vm2198, %v3189, %v2898
        %v4118 = vsel %vm2231, %v4086, %v3255
        %v4119 = vsel %vm2231, %v4087, %v3257
        %v4120 = vsel %vm2231, %v4088, %v3259
        %v4121 = vsel %vm2231, %v4089, %v3261
        %v4122 = vsel %vm2231, %v4090, %v3263
        %v4123 = vsel %vm2231, %v4091, %v3265
        %v4124 = vsel %vm2231, %v4092, %v3267
        %v4125 = vsel %vm2231, %v4093, %v3269
        %v4126 = vsel %vm2231, %v4094, %v3271
        %v4127 = vsel %vm2231, %v4095, %v3273
        %v4128 = vsel %vm2231, %v4096, %v3275
        %v4129 = vsel %vm2231, %v4097, %v3277
        %v4130 = vsel %vm2231, %v4098, %v3279
        %v4131 = vsel %vm2231, %v4099, %v3281
        %v4132 = vsel %vm2231, %v4100, %v3283
        %v4133 = vsel %vm2231, %v4101, %v3285
        %v4134 = vsel %vm2231, %v4102, %v3287
        %v4135 = vsel %vm2231, %v4103, %v3289
        %v4136 = vsel %vm2231, %v4104, %v3291
        %v4137 = vsel %vm2231, %v4105, %v3293
        %v4138 = vsel %vm2231, %v4106, %v3295
        %v4139 = vsel %vm2231, %v4107, %v3297
        %v4140 = vsel %vm2231, %v4108, %v3299
        %v4141 = vsel %vm2231, %v4109, %v3301
        %v4142 = vsel %vm2231, %v4110, %v3303
        %v4143 = vsel %vm2231, %v4111, %v3305
        %v4144 = vsel %vm2231, %v4112, %v3307
        %v4145 = vsel %vm2231, %v4113, %v3309
        %v4146 = vsel %vm2231, %v4114, %v3311
        %v4147 = vsel %vm2231, %v4115, %v3313
        %v4148 = vsel %vm2231, %v4116, %v3315
        %v4149 = vsel %vm2231, %v4117, %v3317
        %v4150 = vsel %vm2264, %v4118, %v3383
        %v4151 = vsel %vm2264, %v4119, %v3385
        %v4152 = vsel %vm2264, %v4120, %v3387
        %v4153 = vsel %vm2264, %v4121, %v3389
        %v4154 = vsel %vm2264, %v4122, %v3391
        %v4155 = vsel %vm2264, %v4123, %v3393
        %v4156 = vsel %vm2264, %v4124, %v3395
        %v4157 = vsel %vm2264, %v4125, %v3397
        %v4158 = vsel %vm2264, %v4126, %v3399
        %v4159 = vsel %vm2264, %v4127, %v3401
        %v4160 = vsel %vm2264, %v4128, %v3403
        %v4161 = vsel %vm2264, %v4129, %v3405
        %v4162 = vsel %vm2264, %v4130, %v3407
        %v4163 = vsel %vm2264, %v4131, %v3409
        %v4164 = vsel %vm2264, %v4132, %v3411
        %v4165 = vsel %vm2264, %v4133, %v3413
        %v4166 = vsel %vm2264, %v4134, %v3415
        %v4167 = vsel %vm2264, %v4135, %v3417
        %v4168 = vsel %vm2264, %v4136, %v3419
        %v4169 = vsel %vm2264, %v4137, %v3421
        %v4170 = vsel %vm2264, %v4138, %v3423
        %v4171 = vsel %vm2264, %v4139, %v3425
        %v4172 = vsel %vm2264, %v4140, %v3427
        %v4173 = vsel %vm2264, %v4141, %v3429
        %v4174 = vsel %vm2264, %v4142, %v3431
        %v4175 = vsel %vm2264, %v4143, %v3433
        %v4176 = vsel %vm2264, %v4144, %v3435
        %v4177 = vsel %vm2264, %v4145, %v3437
        %v4178 = vsel %vm2264, %v4146, %v3439
        %v4179 = vsel %vm2264, %v4147, %v3441
        %v4180 = vsel %vm2264, %v4148, %v3443
        %v4181 = vsel %vm2264, %v4149, %v3445
        %v4182 = vsel %vm2297, %v4150, %v3479
        %v4183 = vsel %vm2297, %v4151, %v3481
        %v4184 = vsel %vm2297, %v4152, %v3483
        %v4185 = vsel %vm2297, %v4153, %v3485
        %v4186 = vsel %vm2297, %v4154, %v3487
        %v4187 = vsel %vm2297, %v4155, %v3489
        %v4188 = vsel %vm2297, %v4156, %v3491
        %v4189 = vsel %vm2297, %v4157, %v3493
        %v4190 = vsel %vm2297, %v4158, %v3495
        %v4191 = vsel %vm2297, %v4159, %v3497
        %v4192 = vsel %vm2297, %v4160, %v3499
        %v4193 = vsel %vm2297, %v4161, %v3501
        %v4194 = vsel %vm2297, %v4162, %v3503
        %v4195 = vsel %vm2297, %v4163, %v3505
        %v4196 = vsel %vm2297, %v4164, %v3507
        %v4197 = vsel %vm2297, %v4165, %v3509
        %v4198 = vsel %vm2297, %v4166, %v3511
        %v4199 = vsel %vm2297, %v4167, %v3513
        %v4200 = vsel %vm2297, %v4168, %v3515
        %v4201 = vsel %vm2297, %v4169, %v3517
        %v4202 = vsel %vm2297, %v4170, %v3519
        %v4203 = vsel %vm2297, %v4171, %v3521
        %v4204 = vsel %vm2297, %v4172, %v3523
        %v4205 = vsel %vm2297, %v4173, %v3525
        %v4206 = vsel %vm2297, %v4174, %v3527
        %v4207 = vsel %vm2297, %v4175, %v3529
        %v4208 = vsel %vm2297, %v4176, %v3531
        %v4209 = vsel %vm2297, %v4177, %v3533
        %v4210 = vsel %vm2297, %v4178, %v3535
        %v4211 = vsel %vm2297, %v4179, %v3537
        %v4212 = vsel %vm2297, %v4180, %v3539
        %v4213 = vsel %vm2297, %v4181, %v3541
        %v4214 = vsel %vm2330, %v4182, %v3607
        %v4215 = vsel %vm2330, %v4183, %v3609
        %v4216 = vsel %vm2330, %v4184, %v3611
        %v4217 = vsel %vm2330, %v4185, %v3613
        %v4218 = vsel %vm2330, %v4186, %v3615
        %v4219 = vsel %vm2330, %v4187, %v3617
        %v4220 = vsel %vm2330, %v4188, %v3619
        %v4221 = vsel %vm2330, %v4189, %v3621
        %v4222 = vsel %vm2330, %v4190, %v3623
        %v4223 = vsel %vm2330, %v4191, %v3625
        %v4224 = vsel %vm2330, %v4192, %v3627
        %v4225 = vsel %vm2330, %v4193, %v3629
        %v4226 = vsel %vm2330, %v4194, %v3631
        %v4227 = vsel %vm2330, %v4195, %v3633
        %v4228 = vsel %vm2330, %v4196, %v3635
        %v4229 = vsel %vm2330, %v4197, %v3637
        %v4230 = vsel %vm2330, %v4198, %v3639
        %v4231 = vsel %vm2330, %v4199, %v3641
        %v4232 = vsel %vm2330, %v4200, %v3643
        %v4233 = vsel %vm2330, %v4201, %v3645
        %v4234 = vsel %vm2330, %v4202, %v3647
        %v4235 = vsel %vm2330, %v4203, %v3649
        %v4236 = vsel %vm2330, %v4204, %v3651
        %v4237 = vsel %vm2330, %v4205, %v3653
        %v4238 = vsel %vm2330, %v4206, %v3655
        %v4239 = vsel %vm2330, %v4207, %v3657
        %v4240 = vsel %vm2330, %v4208, %v3659
        %v4241 = vsel %vm2330, %v4209, %v3661
        %v4242 = vsel %vm2330, %v4210, %v3663
        %v4243 = vsel %vm2330, %v4211, %v3665
        %v4244 = vsel %vm2330, %v4212, %v3667
        %v4245 = vsel %vm2330, %v4213, %v3669
        %v4246 = vsel %vm2363, %v4214, %v3735
        %v4247 = vsel %vm2363, %v4215, %v3737
        %v4248 = vsel %vm2363, %v4216, %v3739
        %v4249 = vsel %vm2363, %v4217, %v3741
        %v4250 = vsel %vm2363, %v4218, %v3743
        %v4251 = vsel %vm2363, %v4219, %v3745
        %v4252 = vsel %vm2363, %v4220, %v3747
        %v4253 = vsel %vm2363, %v4221, %v3749
        %v4254 = vsel %vm2363, %v4222, %v3751
        %v4255 = vsel %vm2363, %v4223, %v3753
        %v4256 = vsel %vm2363, %v4224, %v3755
        %v4257 = vsel %vm2363, %v4225, %v3757
        %v4258 = vsel %vm2363, %v4226, %v3759
        %v4259 = vsel %vm2363, %v4227, %v3761
        %v4260 = vsel %vm2363, %v4228, %v3763
        %v4261 = vsel %vm2363, %v4229, %v3765
        %v4262 = vsel %vm2363, %v4230, %v3767
        %v4263 = vsel %vm2363, %v4231, %v3769
        %v4264 = vsel %vm2363, %v4232, %v3771
        %v4265 = vsel %vm2363, %v4233, %v3773
        %v4266 = vsel %vm2363, %v4234, %v3775
        %v4267 = vsel %vm2363, %v4235, %v3777
        %v4268 = vsel %vm2363, %v4236, %v3779
        %v4269 = vsel %vm2363, %v4237, %v3781
        %v4270 = vsel %vm2363, %v4238, %v3783
        %v4271 = vsel %vm2363, %v4239, %v3785
        %v4272 = vsel %vm2363, %v4240, %v3787
        %v4273 = vsel %vm2363, %v4241, %v3789
        %v4274 = vsel %vm2363, %v4242, %v3791
        %v4275 = vsel %vm2363, %v4243, %v3793
        %v4276 = vsel %vm2363, %v4244, %v3795
        %v4277 = vsel %vm2363, %v4245, %v3797
        %v4278 = vsel %vm2396, %v4246, %v3863
        %v4279 = vsel %vm2396, %v4247, %v3865
        %v4280 = vsel %vm2396, %v4248, %v3867
        %v4281 = vsel %vm2396, %v4249, %v3869
        %v4282 = vsel %vm2396, %v4250, %v3871
        %v4283 = vsel %vm2396, %v4251, %v3873
        %v4284 = vsel %vm2396, %v4252, %v3875
        %v4285 = vsel %vm2396, %v4253, %v3877
        %v4286 = vsel %vm2396, %v4254, %v3879
        %v4287 = vsel %vm2396, %v4255, %v3881
        %v4288 = vsel %vm2396, %v4256, %v3883
        %v4289 = vsel %vm2396, %v4257, %v3885
        %v4290 = vsel %vm2396, %v4258, %v3887
        %v4291 = vsel %vm2396, %v4259, %v3889
        %v4292 = vsel %vm2396, %v4260, %v3891
        %v4293 = vsel %vm2396, %v4261, %v3893
        %v4294 = vsel %vm2396, %v4262, %v3895
        %v4295 = vsel %vm2396, %v4263, %v3897
        %v4296 = vsel %vm2396, %v4264, %v3899
        %v4297 = vsel %vm2396, %v4265, %v3901
        %v4298 = vsel %vm2396, %v4266, %v3903
        %v4299 = vsel %vm2396, %v4267, %v3905
        %v4300 = vsel %vm2396, %v4268, %v3907
        %v4301 = vsel %vm2396, %v4269, %v3909
        %v4302 = vsel %vm2396, %v4270, %v3911
        %v4303 = vsel %vm2396, %v4271, %v3913
        %v4304 = vsel %vm2396, %v4272, %v3915
        %v4305 = vsel %vm2396, %v4273, %v3917
        %v4306 = vsel %vm2396, %v4274, %v3919
        %v4307 = vsel %vm2396, %v4275, %v3921
        %v4308 = vsel %vm2396, %v4276, %v3923
        %v4309 = vsel %vm2396, %v4277, %v3925
        %v4310 = vsel %vm2429, %v4278, %v3991
        %v4311 = vsel %vm2429, %v4279, %v3993
        %v4312 = vsel %vm2429, %v4280, %v3995
        %v4313 = vsel %vm2429, %v4281, %v3997
        %v4314 = vsel %vm2429, %v4282, %v3999
        %v4315 = vsel %vm2429, %v4283, %v4001
        %v4316 = vsel %vm2429, %v4284, %v4003
        %v4317 = vsel %vm2429, %v4285, %v4005
        %v4318 = vsel %vm2429, %v4286, %v4007
        %v4319 = vsel %vm2429, %v4287, %v4009
        %v4320 = vsel %vm2429, %v4288, %v4011
        %v4321 = vsel %vm2429, %v4289, %v4013
        %v4322 = vsel %vm2429, %v4290, %v4015
        %v4323 = vsel %vm2429, %v4291, %v4017
        %v4324 = vsel %vm2429, %v4292, %v4019
        %v4325 = vsel %vm2429, %v4293, %v4021
        %v4326 = vsel %vm2429, %v4294, %v4023
        %v4327 = vsel %vm2429, %v4295, %v4025
        %v4328 = vsel %vm2429, %v4296, %v4027
        %v4329 = vsel %vm2429, %v4297, %v4029
        %v4330 = vsel %vm2429, %v4298, %v4031
        %v4331 = vsel %vm2429, %v4299, %v4033
        %v4332 = vsel %vm2429, %v4300, %v4035
        %v4333 = vsel %vm2429, %v4301, %v4037
        %v4334 = vsel %vm2429, %v4302, %v4039
        %v4335 = vsel %vm2429, %v4303, %v4041
        %v4336 = vsel %vm2429, %v4304, %v4043
        %v4337 = vsel %vm2429, %v4305, %v4045
        %v4338 = vsel %vm2429, %v4306, %v4047
        %v4339 = vsel %vm2429, %v4307, %v4049
        %v4340 = vsel %vm2429, %v4308, %v4051
        %v4341 = vsel %vm2429, %v4309, %v4053
        %s4342 = scalar_lea.vmem %s1, 72
        %v4343 = vld [vmem:[%s4342] sm:$0xff]
        %v4344 = vld [vmem:[%s4342 + $0x8] sm:$0xff]
        %v4345 = vld [vmem:[%s4342 + $0x10] sm:$0xff]
        %v4346 = vld [vmem:[%s4342 + $0x18] sm:$0xff]
        %v4347 = vld [vmem:[%s4342 + $0x20] sm:$0xff]
        %v4348 = vld [vmem:[%s4342 + $0x28] sm:$0xff]
        %v4349 = vld [vmem:[%s4342 + $0x30] sm:$0xff]
        %v4350 = vld [vmem:[%s4342 + $0x38] sm:$0xff]
        %v4351 = vld [vmem:[%s4342 + $0x40] sm:$0xff]
        %s4352 = scalar_lea.vmem %s2, 1
        %v4353 = vld [vmem:[%s4352] sm:$0x1]
        %v4355 = vlaneseq
        %v4356 = vshrl.u32 %v4355, 7
        %v4357 = vsub.s32 0, %v4356
        %v4358 = vrot.slane %v4353, %v4357
        %v4361 = vsel %vm2478, %v4310, 0
        %v4364 = vsel %vm2478, %v4311, 0
        %v4367 = vsel %vm2478, %v4312, 0
        %v4370 = vsel %vm2478, %v4313, 0
        %v4373 = vsel %vm2478, %v4314, 0
        %v4376 = vsel %vm2478, %v4315, 0
        %v4379 = vsel %vm2478, %v4316, 0
        %v4382 = vsel %vm2478, %v4317, 0
        %v4385 = vsel %vm2478, %v4318, 0
        %v4388 = vsel %vm2478, %v4319, 0
        %v4391 = vsel %vm2478, %v4320, 0
        %v4394 = vsel %vm2478, %v4321, 0
        %v4397 = vsel %vm2478, %v4322, 0
        %v4400 = vsel %vm2478, %v4323, 0
        %v4403 = vsel %vm2478, %v4324, 0
        %v4406 = vsel %vm2478, %v4325, 0
        %v4409 = vsel %vm2478, %v4326, 0
        %v4412 = vsel %vm2478, %v4327, 0
        %v4415 = vsel %vm2478, %v4328, 0
        %v4418 = vsel %vm2478, %v4329, 0
        %v4421 = vsel %vm2478, %v4330, 0
        %v4424 = vsel %vm2478, %v4331, 0
        %v4427 = vsel %vm2478, %v4332, 0
        %v4430 = vsel %vm2478, %v4333, 0
        %v4433 = vsel %vm2478, %v4334, 0
        %v4436 = vsel %vm2478, %v4335, 0
        %v4439 = vsel %vm2478, %v4336, 0
        %v4442 = vsel %vm2478, %v4337, 0
        %v4445 = vsel %vm2478, %v4338, 0
        %v4448 = vsel %vm2478, %v4339, 0
        %v4451 = vsel %vm2478, %v4340, 0
        %v4454 = vsel %vm2478, %v4341, 0
        %4456 = vmatprep.subr.mxu0 0.0
        %4457 = vmatpush1.msra.mxu0 0.0
        %4458 = vmatprep.subr.mxu0 0.0
        %4459 = vmatpush1.msra.mxu0 0.0
        %4460 = vmatprep.subr.mxu0 0.0
        %4461 = vmatpush1.msra.mxu0 0.0
        %4462 = vmatprep.subr.mxu0 0.0
        %4463 = vmatpush1.msra.mxu0 0.0
        %4464 = vmatprep.subr.mxu0 0.0
        %4465 = vmatpush1.msra.mxu0 0.0
        %4466 = vmatprep.subr.mxu0 0.0
        %4467 = vmatpush1.msra.mxu0 0.0
        %4468 = vmatprep.subr.mxu0 0.0
        %4469 = vmatpush1.msra.mxu0 0.0
        %4470 = vmatprep.subr.mxu0 0.0
        %4471 = vmatpush1.msra.mxu0 %v4351
        %4472 = vmatprep.subr.mxu0 0.0
        %4473 = vmatpush1.msra.mxu0 %v4350
        %4474 = vmatprep.subr.mxu0 0.0
        %4475 = vmatpush1.msra.mxu0 %v4349
        %4476 = vmatprep.subr.mxu0 0.0
        %4477 = vmatpush1.msra.mxu0 %v4348
        %4478 = vmatprep.subr.mxu0 0.0
        %4479 = vmatpush1.msra.mxu0 %v4347
        %4480 = vmatprep.subr.mxu0 0.0
        %4481 = vmatpush1.msra.mxu0 %v4346
        %4482 = vmatprep.subr.mxu0 0.0
        %4483 = vmatpush1.msra.mxu0 %v4345
        %4484 = vmatprep.subr.mxu0 0.0
        %4485 = vmatpush1.msra.mxu0 %v4344
        %4486 = vmatprep.subr.mxu0 0.0
        %4487 = vmatpush1.msra.mxu0 %v4343
        %4488 = vmatprep.subr.mxu0 0.0
        %4489 = vmatpush2.msra.mxu0 0.0
        %4490 = vmatprep.subr.mxu0 0.0
        %4491 = vmatpush2.msra.mxu0 0.0
        %4492 = vmatprep.subr.mxu0 0.0
        %4493 = vmatpush2.msra.mxu0 0.0
        %4494 = vmatprep.subr.mxu0 0.0
        %4495 = vmatpush2.msra.mxu0 0.0
        %4496 = vmatprep.subr.mxu0 0.0
        %4497 = vmatpush2.msra.mxu0 0.0
        %4498 = vmatprep.subr.mxu0 0.0
        %4499 = vmatpush2.msra.mxu0 0.0
        %4500 = vmatprep.subr.mxu0 0.0
        %4501 = vmatpush2.msra.mxu0 0.0
        %4502 = vmatprep.subr.mxu0 0.0
        %4503 = vmatpush2.msra.mxu0 0.0
        %4504 = vmatprep.subr.mxu0 0.0
        %4505 = vmatpush2.msra.mxu0 0.0
        %4506 = vmatprep.subr.mxu0 0.0
        %4507 = vmatpush2.msra.mxu0 0.0
        %4508 = vmatprep.subr.mxu0 0.0
        %4509 = vmatpush2.msra.mxu0 0.0
        %4510 = vmatprep.subr.mxu0 0.0
        %4511 = vmatpush2.msra.mxu0 0.0
        %4512 = vmatprep.subr.mxu0 0.0
        %4513 = vmatpush2.msra.mxu0 0.0
        %4514 = vmatprep.subr.mxu0 0.0
        %4515 = vmatpush2.msra.mxu0 0.0
        %4516 = vmatprep.subr.mxu0 0.0
        %4517 = vmatpush2.msra.mxu0 0.0
        %4518 = vmatprep.subr.mxu0 0.0
        %4519 = vmatpush2.msra.mxu0 0.0
        %4520 = vmatprep.mubr.f32.mxu0 0.0
        %4521 = vmatmul.mubr.f32.gmra.mxu0 %v4361
        %v4522 = vpop.f32.mrf.mxu0
        %v4523 = vadd.f32 %v4358, %v4522
        %v4524 = vpop.f32.mrf.mxu0
        %4525 = vmatprep.mubr.f32.mxu0 0.0
        %4526 = vmatmul.mubr.f32.gmra.mxu0 %v4364
        %v4527 = vpop.f32.mrf.mxu0
        %v4528 = vadd.f32 %v4358, %v4527
        %v4529 = vpop.f32.mrf.mxu0
        %4530 = vmatprep.mubr.f32.mxu0 0.0
        %4531 = vmatmul.mubr.f32.gmra.mxu0 %v4367
        %v4532 = vpop.f32.mrf.mxu0
        %v4533 = vadd.f32 %v4358, %v4532
        %v4534 = vpop.f32.mrf.mxu0
        %4535 = vmatprep.mubr.f32.mxu0 0.0
        %4536 = vmatmul.mubr.f32.gmra.mxu0 %v4370
        %v4537 = vpop.f32.mrf.mxu0
        %v4538 = vadd.f32 %v4358, %v4537
        %v4539 = vpop.f32.mrf.mxu0
        %4540 = vmatprep.mubr.f32.mxu0 0.0
        %4541 = vmatmul.mubr.f32.gmra.mxu0 %v4373
        %v4542 = vpop.f32.mrf.mxu0
        %v4543 = vadd.f32 %v4358, %v4542
        %v4544 = vpop.f32.mrf.mxu0
        %4545 = vmatprep.mubr.f32.mxu0 0.0
        %4546 = vmatmul.mubr.f32.gmra.mxu0 %v4376
        %v4547 = vpop.f32.mrf.mxu0
        %v4548 = vadd.f32 %v4358, %v4547
        %v4549 = vpop.f32.mrf.mxu0
        %4550 = vmatprep.mubr.f32.mxu0 0.0
        %4551 = vmatmul.mubr.f32.gmra.mxu0 %v4379
        %v4552 = vpop.f32.mrf.mxu0
        %v4553 = vadd.f32 %v4358, %v4552
        %v4554 = vpop.f32.mrf.mxu0
        %4555 = vmatprep.mubr.f32.mxu0 0.0
        %4556 = vmatmul.mubr.f32.gmra.mxu0 %v4382
        %v4557 = vpop.f32.mrf.mxu0
        %v4558 = vadd.f32 %v4358, %v4557
        %v4559 = vpop.f32.mrf.mxu0
        %4560 = vmatprep.mubr.f32.mxu0 0.0
        %4561 = vmatmul.mubr.f32.gmra.mxu0 %v4385
        %v4562 = vpop.f32.mrf.mxu0
        %v4563 = vadd.f32 %v4358, %v4562
        %v4564 = vpop.f32.mrf.mxu0
        %4565 = vmatprep.mubr.f32.mxu0 0.0
        %4566 = vmatmul.mubr.f32.gmra.mxu0 %v4388
        %v4567 = vpop.f32.mrf.mxu0
        %v4568 = vadd.f32 %v4358, %v4567
        %v4569 = vpop.f32.mrf.mxu0
        %4570 = vmatprep.mubr.f32.mxu0 0.0
        %4571 = vmatmul.mubr.f32.gmra.mxu0 %v4391
        %v4572 = vpop.f32.mrf.mxu0
        %v4573 = vadd.f32 %v4358, %v4572
        %v4574 = vpop.f32.mrf.mxu0
        %4575 = vmatprep.mubr.f32.mxu0 0.0
        %4576 = vmatmul.mubr.f32.gmra.mxu0 %v4394
        %v4577 = vpop.f32.mrf.mxu0
        %v4578 = vadd.f32 %v4358, %v4577
        %v4579 = vpop.f32.mrf.mxu0
        %4580 = vmatprep.mubr.f32.mxu0 0.0
        %4581 = vmatmul.mubr.f32.gmra.mxu0 %v4397
        %v4582 = vpop.f32.mrf.mxu0
        %v4583 = vadd.f32 %v4358, %v4582
        %v4584 = vpop.f32.mrf.mxu0
        %4585 = vmatprep.mubr.f32.mxu0 0.0
        %4586 = vmatmul.mubr.f32.gmra.mxu0 %v4400
        %v4587 = vpop.f32.mrf.mxu0
        %v4588 = vadd.f32 %v4358, %v4587
        %v4589 = vpop.f32.mrf.mxu0
        %4590 = vmatprep.mubr.f32.mxu0 0.0
        %4591 = vmatmul.mubr.f32.gmra.mxu0 %v4403
        %v4592 = vpop.f32.mrf.mxu0
        %v4593 = vadd.f32 %v4358, %v4592
        %v4594 = vpop.f32.mrf.mxu0
        %4595 = vmatprep.mubr.f32.mxu0 0.0
        %4596 = vmatmul.mubr.f32.gmra.mxu0 %v4406
        %v4597 = vpop.f32.mrf.mxu0
        %v4598 = vadd.f32 %v4358, %v4597
        %v4599 = vpop.f32.mrf.mxu0
        %4600 = vmatprep.mubr.f32.mxu0 0.0
        %4601 = vmatmul.mubr.f32.gmra.mxu0 %v4409
        %v4602 = vpop.f32.mrf.mxu0
        %v4603 = vadd.f32 %v4358, %v4602
        %v4604 = vpop.f32.mrf.mxu0
        %4605 = vmatprep.mubr.f32.mxu0 0.0
        %4606 = vmatmul.mubr.f32.gmra.mxu0 %v4412
        %v4607 = vpop.f32.mrf.mxu0
        %v4608 = vadd.f32 %v4358, %v4607
        %v4609 = vpop.f32.mrf.mxu0
        %4610 = vmatprep.mubr.f32.mxu0 0.0
        %4611 = vmatmul.mubr.f32.gmra.mxu0 %v4415
        %v4612 = vpop.f32.mrf.mxu0
        %v4613 = vadd.f32 %v4358, %v4612
        %v4614 = vpop.f32.mrf.mxu0
        %4615 = vmatprep.mubr.f32.mxu0 0.0
        %4616 = vmatmul.mubr.f32.gmra.mxu0 %v4418
        %v4617 = vpop.f32.mrf.mxu0
        %v4618 = vadd.f32 %v4358, %v4617
        %v4619 = vpop.f32.mrf.mxu0
        %4620 = vmatprep.mubr.f32.mxu0 0.0
        %4621 = vmatmul.mubr.f32.gmra.mxu0 %v4421
        %v4622 = vpop.f32.mrf.mxu0
        %v4623 = vadd.f32 %v4358, %v4622
        %v4624 = vpop.f32.mrf.mxu0
        %4625 = vmatprep.mubr.f32.mxu0 0.0
        %4626 = vmatmul.mubr.f32.gmra.mxu0 %v4424
        %v4627 = vpop.f32.mrf.mxu0
        %v4628 = vadd.f32 %v4358, %v4627
        %v4629 = vpop.f32.mrf.mxu0
        %4630 = vmatprep.mubr.f32.mxu0 0.0
        %4631 = vmatmul.mubr.f32.gmra.mxu0 %v4427
        %v4632 = vpop.f32.mrf.mxu0
        %v4633 = vadd.f32 %v4358, %v4632
        %v4634 = vpop.f32.mrf.mxu0
        %4635 = vmatprep.mubr.f32.mxu0 0.0
        %4636 = vmatmul.mubr.f32.gmra.mxu0 %v4430
        %v4637 = vpop.f32.mrf.mxu0
        %v4638 = vadd.f32 %v4358, %v4637
        %v4639 = vpop.f32.mrf.mxu0
        %4640 = vmatprep.mubr.f32.mxu0 0.0
        %4641 = vmatmul.mubr.f32.gmra.mxu0 %v4433
        %v4642 = vpop.f32.mrf.mxu0
        %v4643 = vadd.f32 %v4358, %v4642
        %v4644 = vpop.f32.mrf.mxu0
        %4645 = vmatprep.mubr.f32.mxu0 0.0
        %4646 = vmatmul.mubr.f32.gmra.mxu0 %v4436
        %v4647 = vpop.f32.mrf.mxu0
        %v4648 = vadd.f32 %v4358, %v4647
        %v4649 = vpop.f32.mrf.mxu0
        %4650 = vmatprep.mubr.f32.mxu0 0.0
        %4651 = vmatmul.mubr.f32.gmra.mxu0 %v4439
        %v4652 = vpop.f32.mrf.mxu0
        %v4653 = vadd.f32 %v4358, %v4652
        %v4654 = vpop.f32.mrf.mxu0
        %4655 = vmatprep.mubr.f32.mxu0 0.0
        %4656 = vmatmul.mubr.f32.gmra.mxu0 %v4442
        %v4657 = vpop.f32.mrf.mxu0
        %v4658 = vadd.f32 %v4358, %v4657
        %v4659 = vpop.f32.mrf.mxu0
        %4660 = vmatprep.mubr.f32.mxu0 0.0
        %4661 = vmatmul.mubr.f32.gmra.mxu0 %v4445
        %v4662 = vpop.f32.mrf.mxu0
        %v4663 = vadd.f32 %v4358, %v4662
        %v4664 = vpop.f32.mrf.mxu0
        %4665 = vmatprep.mubr.f32.mxu0 0.0
        %4666 = vmatmul.mubr.f32.gmra.mxu0 %v4448
        %v4667 = vpop.f32.mrf.mxu0
        %v4668 = vadd.f32 %v4358, %v4667
        %v4669 = vpop.f32.mrf.mxu0
        %4670 = vmatprep.mubr.f32.mxu0 0.0
        %4671 = vmatmul.mubr.f32.gmra.mxu0 %v4451
        %v4672 = vpop.f32.mrf.mxu0
        %v4673 = vadd.f32 %v4358, %v4672
        %v4674 = vpop.f32.mrf.mxu0
        %4675 = vmatprep.mubr.f32.mxu0 0.0
        %4676 = vmatmul.mubr.f32.gmra.mxu0 %v4454
        %v4677 = vpop.f32.mrf.mxu0
        %v4678 = vadd.f32 %v4358, %v4677
        %v4679 = vpop.f32.mrf.mxu0
        %4680 = vdwg.mxu0
        %v4681 = vadd.f32 %v4523, %v912
        %v4682 = vadd.f32 %v4528, %v913
        %v4683 = vadd.f32 %v4533, %v914
        %v4684 = vadd.f32 %v4538, %v915
        %v4685 = vadd.f32 %v4543, %v916
        %v4686 = vadd.f32 %v4548, %v917
        %v4687 = vadd.f32 %v4553, %v918
        %v4688 = vadd.f32 %v4558, %v919
        %v4689 = vadd.f32 %v4563, %v920
        %v4690 = vadd.f32 %v4568, %v921
        %v4691 = vadd.f32 %v4573, %v922
        %v4692 = vadd.f32 %v4578, %v923
        %v4693 = vadd.f32 %v4583, %v924
        %v4694 = vadd.f32 %v4588, %v925
        %v4695 = vadd.f32 %v4593, %v926
        %v4696 = vadd.f32 %v4598, %v927
        %v4697 = vadd.f32 %v4603, %v928
        %v4698 = vadd.f32 %v4608, %v929
        %v4699 = vadd.f32 %v4613, %v930
        %v4700 = vadd.f32 %v4618, %v931
        %v4701 = vadd.f32 %v4623, %v932
        %v4702 = vadd.f32 %v4628, %v933
        %v4703 = vadd.f32 %v4633, %v934
        %v4704 = vadd.f32 %v4638, %v935
        %v4705 = vadd.f32 %v4643, %v936
        %v4706 = vadd.f32 %v4648, %v937
        %v4707 = vadd.f32 %v4653, %v938
        %v4708 = vadd.f32 %v4658, %v939
        %v4709 = vadd.f32 %v4663, %v940
        %v4710 = vadd.f32 %v4668, %v941
        %v4711 = vadd.f32 %v4673, %v942
        %v4712 = vadd.f32 %v4678, %v943
        %s4713 = sadd.s32 %s748, 6
        %s4714 = smul.u32 %s4713, 64
        %s4715 = scalar_lea.vmem [#allocation2], %s4714
        %v4716 = vld [vmem:[%s4715 + $0xc] sm:$0xff]
        %v4717 = vld [vmem:[%s4715 + $0x14] sm:$0xff]
        %v4718 = vld [vmem:[%s4715 + $0x4c] sm:$0xff]
        %v4719 = vld [vmem:[%s4715 + $0x54] sm:$0xff]
        %v4720 = vld [vmem:[%s4715 + $0x8c] sm:$0xff]
        %v4721 = vld [vmem:[%s4715 + $0x94] sm:$0xff]
        %v4722 = vld [vmem:[%s4715 + $0xcc] sm:$0xff]
        %v4723 = vld [vmem:[%s4715 + $0xd4] sm:$0xff]
        %v4724 = vld [vmem:[%s4715 + $0x10c] sm:$0xff]
        %v4725 = vld [vmem:[%s4715 + $0x114] sm:$0xff]
        %v4726 = vld [vmem:[%s4715 + $0x14c] sm:$0xff]
        %v4727 = vld [vmem:[%s4715 + $0x154] sm:$0xff]
        %v4728 = vld [vmem:[%s4715 + $0x18c] sm:$0xff]
        %v4729 = vld [vmem:[%s4715 + $0x194] sm:$0xff]
        %v4730 = vld [vmem:[%s4715 + $0x1cc] sm:$0xff]
        %v4731 = vld [vmem:[%s4715 + $0x1d4] sm:$0xff]
        %v4732 = vld [vmem:[%s4715 + $0x20c] sm:$0xff]
        %v4733 = vld [vmem:[%s4715 + $0x214] sm:$0xff]
        %v4734 = vld [vmem:[%s4715 + $0x24c] sm:$0xff]
        %v4735 = vld [vmem:[%s4715 + $0x254] sm:$0xff]
        %v4736 = vld [vmem:[%s4715 + $0x28c] sm:$0xff]
        %v4737 = vld [vmem:[%s4715 + $0x294] sm:$0xff]
        %v4738 = vld [vmem:[%s4715 + $0x2cc] sm:$0xff]
        %v4739 = vld [vmem:[%s4715 + $0x2d4] sm:$0xff]
        %v4740 = vld [vmem:[%s4715 + $0x30c] sm:$0xff]
        %v4741 = vld [vmem:[%s4715 + $0x314] sm:$0xff]
        %v4742 = vld [vmem:[%s4715 + $0x34c] sm:$0xff]
        %v4743 = vld [vmem:[%s4715 + $0x354] sm:$0xff]
        %v4744 = vld [vmem:[%s4715 + $0x38c] sm:$0xff]
        %v4745 = vld [vmem:[%s4715 + $0x394] sm:$0xff]
        %v4746 = vld [vmem:[%s4715 + $0x3cc] sm:$0xff]
        %v4747 = vld [vmem:[%s4715 + $0x3d4] sm:$0xff]
        %v4748 = vld [vmem:[%s4715 + $0x18] sm:$0xff]
        %v4749 = vld [vmem:[%s4715 + $0x20] sm:$0xff]
        %v4750 = vld [vmem:[%s4715 + $0x58] sm:$0xff]
        %v4751 = vld [vmem:[%s4715 + $0x60] sm:$0xff]
        %v4752 = vld [vmem:[%s4715 + $0x98] sm:$0xff]
        %v4753 = vld [vmem:[%s4715 + $0xa0] sm:$0xff]
        %v4754 = vld [vmem:[%s4715 + $0xd8] sm:$0xff]
        %v4755 = vld [vmem:[%s4715 + $0xe0] sm:$0xff]
        %v4756 = vld [vmem:[%s4715 + $0x118] sm:$0xff]
        %v4757 = vld [vmem:[%s4715 + $0x120] sm:$0xff]
        %v4758 = vld [vmem:[%s4715 + $0x158] sm:$0xff]
        %v4759 = vld [vmem:[%s4715 + $0x160] sm:$0xff]
        %v4760 = vld [vmem:[%s4715 + $0x198] sm:$0xff]
        %v4761 = vld [vmem:[%s4715 + $0x1a0] sm:$0xff]
        %v4762 = vld [vmem:[%s4715 + $0x1d8] sm:$0xff]
        %v4763 = vld [vmem:[%s4715 + $0x1e0] sm:$0xff]
        %v4764 = vld [vmem:[%s4715 + $0x218] sm:$0xff]
        %v4765 = vld [vmem:[%s4715 + $0x220] sm:$0xff]
        %v4766 = vld [vmem:[%s4715 + $0x258] sm:$0xff]
        %v4767 = vld [vmem:[%s4715 + $0x260] sm:$0xff]
        %v4768 = vld [vmem:[%s4715 + $0x298] sm:$0xff]
        %v4769 = vld [vmem:[%s4715 + $0x2a0] sm:$0xff]
        %v4770 = vld [vmem:[%s4715 + $0x2d8] sm:$0xff]
        %v4771 = vld [vmem:[%s4715 + $0x2e0] sm:$0xff]
        %v4772 = vld [vmem:[%s4715 + $0x318] sm:$0xff]
        %v4773 = vld [vmem:[%s4715 + $0x320] sm:$0xff]
        %v4774 = vld [vmem:[%s4715 + $0x358] sm:$0xff]
        %v4775 = vld [vmem:[%s4715 + $0x360] sm:$0xff]
        %v4776 = vld [vmem:[%s4715 + $0x398] sm:$0xff]
        %v4777 = vld [vmem:[%s4715 + $0x3a0] sm:$0xff]
        %v4778 = vld [vmem:[%s4715 + $0x3d8] sm:$0xff]
        %v4779 = vld [vmem:[%s4715 + $0x3e0] sm:$0xff]
        %v4780 = vld [vmem:[%s4715 + $0x24] sm:$0xff]
        %v4781 = vld [vmem:[%s4715 + $0x2c] sm:$0xff]
        %v4782 = vld [vmem:[%s4715 + $0x64] sm:$0xff]
        %v4783 = vld [vmem:[%s4715 + $0x6c] sm:$0xff]
        %v4784 = vld [vmem:[%s4715 + $0xa4] sm:$0xff]
        %v4785 = vld [vmem:[%s4715 + $0xac] sm:$0xff]
        %v4786 = vld [vmem:[%s4715 + $0xe4] sm:$0xff]
        %v4787 = vld [vmem:[%s4715 + $0xec] sm:$0xff]
        %v4788 = vld [vmem:[%s4715 + $0x124] sm:$0xff]
        %v4789 = vld [vmem:[%s4715 + $0x12c] sm:$0xff]
        %v4790 = vld [vmem:[%s4715 + $0x164] sm:$0xff]
        %v4791 = vld [vmem:[%s4715 + $0x16c] sm:$0xff]
        %v4792 = vld [vmem:[%s4715 + $0x1a4] sm:$0xff]
        %v4793 = vld [vmem:[%s4715 + $0x1ac] sm:$0xff]
        %v4794 = vld [vmem:[%s4715 + $0x1e4] sm:$0xff]
        %v4795 = vld [vmem:[%s4715 + $0x1ec] sm:$0xff]
        %v4796 = vld [vmem:[%s4715 + $0x224] sm:$0xff]
        %v4797 = vld [vmem:[%s4715 + $0x22c] sm:$0xff]
        %v4798 = vld [vmem:[%s4715 + $0x264] sm:$0xff]
        %v4799 = vld [vmem:[%s4715 + $0x26c] sm:$0xff]
        %v4800 = vld [vmem:[%s4715 + $0x2a4] sm:$0xff]
        %v4801 = vld [vmem:[%s4715 + $0x2ac] sm:$0xff]
        %v4802 = vld [vmem:[%s4715 + $0x2e4] sm:$0xff]
        %v4803 = vld [vmem:[%s4715 + $0x2ec] sm:$0xff]
        %v4804 = vld [vmem:[%s4715 + $0x324] sm:$0xff]
        %v4805 = vld [vmem:[%s4715 + $0x32c] sm:$0xff]
        %v4806 = vld [vmem:[%s4715 + $0x364] sm:$0xff]
        %v4807 = vld [vmem:[%s4715 + $0x36c] sm:$0xff]
        %v4808 = vld [vmem:[%s4715 + $0x3a4] sm:$0xff]
        %v4809 = vld [vmem:[%s4715 + $0x3ac] sm:$0xff]
        %v4810 = vld [vmem:[%s4715 + $0x3e4] sm:$0xff]
        %v4811 = vld [vmem:[%s4715 + $0x3ec] sm:$0xff]
        %v4812 = vld [vmem:[%s751 + $0xc] sm:$0xff]
        %v4813 = vld [vmem:[%s751 + $0x14] sm:$0xff]
        %v4814 = vld [vmem:[%s751 + $0x4c] sm:$0xff]
        %v4815 = vld [vmem:[%s751 + $0x54] sm:$0xff]
        %v4816 = vld [vmem:[%s751 + $0x8c] sm:$0xff]
        %v4817 = vld [vmem:[%s751 + $0x94] sm:$0xff]
        %v4818 = vld [vmem:[%s751 + $0xcc] sm:$0xff]
        %v4819 = vld [vmem:[%s751 + $0xd4] sm:$0xff]
        %v4820 = vld [vmem:[%s751 + $0x10c] sm:$0xff]
        %v4821 = vld [vmem:[%s751 + $0x114] sm:$0xff]
        %v4822 = vld [vmem:[%s751 + $0x14c] sm:$0xff]
        %v4823 = vld [vmem:[%s751 + $0x154] sm:$0xff]
        %v4824 = vld [vmem:[%s751 + $0x18c] sm:$0xff]
        %v4825 = vld [vmem:[%s751 + $0x194] sm:$0xff]
        %v4826 = vld [vmem:[%s751 + $0x1cc] sm:$0xff]
        %v4827 = vld [vmem:[%s751 + $0x1d4] sm:$0xff]
        %v4828 = vld [vmem:[%s751 + $0x20c] sm:$0xff]
        %v4829 = vld [vmem:[%s751 + $0x214] sm:$0xff]
        %v4830 = vld [vmem:[%s751 + $0x24c] sm:$0xff]
        %v4831 = vld [vmem:[%s751 + $0x254] sm:$0xff]
        %v4832 = vld [vmem:[%s751 + $0x28c] sm:$0xff]
        %v4833 = vld [vmem:[%s751 + $0x294] sm:$0xff]
        %v4834 = vld [vmem:[%s751 + $0x2cc] sm:$0xff]
        %v4835 = vld [vmem:[%s751 + $0x2d4] sm:$0xff]
        %v4836 = vld [vmem:[%s751 + $0x30c] sm:$0xff]
        %v4837 = vld [vmem:[%s751 + $0x314] sm:$0xff]
        %v4838 = vld [vmem:[%s751 + $0x34c] sm:$0xff]
        %v4839 = vld [vmem:[%s751 + $0x354] sm:$0xff]
        %v4840 = vld [vmem:[%s751 + $0x38c] sm:$0xff]
        %v4841 = vld [vmem:[%s751 + $0x394] sm:$0xff]
        %v4842 = vld [vmem:[%s751 + $0x3cc] sm:$0xff]
        %v4843 = vld [vmem:[%s751 + $0x3d4] sm:$0xff]
        %v4844 = vld [vmem:[%s751 + $0x24] sm:$0xff]
        %v4845 = vld [vmem:[%s751 + $0x2c] sm:$0xff]
        %v4846 = vld [vmem:[%s751 + $0x64] sm:$0xff]
        %v4847 = vld [vmem:[%s751 + $0x6c] sm:$0xff]
        %v4848 = vld [vmem:[%s751 + $0xa4] sm:$0xff]
        %v4849 = vld [vmem:[%s751 + $0xac] sm:$0xff]
        %v4850 = vld [vmem:[%s751 + $0xe4] sm:$0xff]
        %v4851 = vld [vmem:[%s751 + $0xec] sm:$0xff]
        %v4852 = vld [vmem:[%s751 + $0x124] sm:$0xff]
        %v4853 = vld [vmem:[%s751 + $0x12c] sm:$0xff]
        %v4854 = vld [vmem:[%s751 + $0x164] sm:$0xff]
        %v4855 = vld [vmem:[%s751 + $0x16c] sm:$0xff]
        %v4856 = vld [vmem:[%s751 + $0x1a4] sm:$0xff]
        %v4857 = vld [vmem:[%s751 + $0x1ac] sm:$0xff]
        %v4858 = vld [vmem:[%s751 + $0x1e4] sm:$0xff]
        %v4859 = vld [vmem:[%s751 + $0x1ec] sm:$0xff]
        %v4860 = vld [vmem:[%s751 + $0x224] sm:$0xff]
        %v4861 = vld [vmem:[%s751 + $0x22c] sm:$0xff]
        %v4862 = vld [vmem:[%s751 + $0x264] sm:$0xff]
        %v4863 = vld [vmem:[%s751 + $0x26c] sm:$0xff]
        %v4864 = vld [vmem:[%s751 + $0x2a4] sm:$0xff]
        %v4865 = vld [vmem:[%s751 + $0x2ac] sm:$0xff]
        %v4866 = vld [vmem:[%s751 + $0x2e4] sm:$0xff]
        %v4867 = vld [vmem:[%s751 + $0x2ec] sm:$0xff]
        %v4868 = vld [vmem:[%s751 + $0x324] sm:$0xff]
        %v4869 = vld [vmem:[%s751 + $0x32c] sm:$0xff]
        %v4870 = vld [vmem:[%s751 + $0x364] sm:$0xff]
        %v4871 = vld [vmem:[%s751 + $0x36c] sm:$0xff]
        %v4872 = vld [vmem:[%s751 + $0x3a4] sm:$0xff]
        %v4873 = vld [vmem:[%s751 + $0x3ac] sm:$0xff]
        %v4874 = vld [vmem:[%s751 + $0x3e4] sm:$0xff]
        %v4875 = vld [vmem:[%s751 + $0x3ec] sm:$0xff]
        %s4876 = sadd.s32 %s748, 30
        %s4877 = smul.u32 %s4876, 64
        %s4878 = scalar_lea.vmem [#allocation2], %s4877
        %v4879 = vld [vmem:[%s4878 + $0xc] sm:$0xff]
        %v4880 = vld [vmem:[%s4878 + $0x14] sm:$0xff]
        %v4881 = vld [vmem:[%s4878 + $0x4c] sm:$0xff]
        %v4882 = vld [vmem:[%s4878 + $0x54] sm:$0xff]
        %v4883 = vld [vmem:[%s4878 + $0x8c] sm:$0xff]
        %v4884 = vld [vmem:[%s4878 + $0x94] sm:$0xff]
        %v4885 = vld [vmem:[%s4878 + $0xcc] sm:$0xff]
        %v4886 = vld [vmem:[%s4878 + $0xd4] sm:$0xff]
        %v4887 = vld [vmem:[%s4878 + $0x10c] sm:$0xff]
        %v4888 = vld [vmem:[%s4878 + $0x114] sm:$0xff]
        %v4889 = vld [vmem:[%s4878 + $0x14c] sm:$0xff]
        %v4890 = vld [vmem:[%s4878 + $0x154] sm:$0xff]
        %v4891 = vld [vmem:[%s4878 + $0x18c] sm:$0xff]
        %v4892 = vld [vmem:[%s4878 + $0x194] sm:$0xff]
        %v4893 = vld [vmem:[%s4878 + $0x1cc] sm:$0xff]
        %v4894 = vld [vmem:[%s4878 + $0x1d4] sm:$0xff]
        %v4895 = vld [vmem:[%s4878 + $0x20c] sm:$0xff]
        %v4896 = vld [vmem:[%s4878 + $0x214] sm:$0xff]
        %v4897 = vld [vmem:[%s4878 + $0x24c] sm:$0xff]
        %v4898 = vld [vmem:[%s4878 + $0x254] sm:$0xff]
        %v4899 = vld [vmem:[%s4878 + $0x28c] sm:$0xff]
        %v4900 = vld [vmem:[%s4878 + $0x294] sm:$0xff]
        %v4901 = vld [vmem:[%s4878 + $0x2cc] sm:$0xff]
        %v4902 = vld [vmem:[%s4878 + $0x2d4] sm:$0xff]
        %v4903 = vld [vmem:[%s4878 + $0x30c] sm:$0xff]
        %v4904 = vld [vmem:[%s4878 + $0x314] sm:$0xff]
        %v4905 = vld [vmem:[%s4878 + $0x34c] sm:$0xff]
        %v4906 = vld [vmem:[%s4878 + $0x354] sm:$0xff]
        %v4907 = vld [vmem:[%s4878 + $0x38c] sm:$0xff]
        %v4908 = vld [vmem:[%s4878 + $0x394] sm:$0xff]
        %v4909 = vld [vmem:[%s4878 + $0x3cc] sm:$0xff]
        %v4910 = vld [vmem:[%s4878 + $0x3d4] sm:$0xff]
        %v4911 = vld [vmem:[%s4878 + $0x18] sm:$0xff]
        %v4912 = vld [vmem:[%s4878 + $0x20] sm:$0xff]
        %v4913 = vld [vmem:[%s4878 + $0x58] sm:$0xff]
        %v4914 = vld [vmem:[%s4878 + $0x60] sm:$0xff]
        %v4915 = vld [vmem:[%s4878 + $0x98] sm:$0xff]
        %v4916 = vld [vmem:[%s4878 + $0xa0] sm:$0xff]
        %v4917 = vld [vmem:[%s4878 + $0xd8] sm:$0xff]
        %v4918 = vld [vmem:[%s4878 + $0xe0] sm:$0xff]
        %v4919 = vld [vmem:[%s4878 + $0x118] sm:$0xff]
        %v4920 = vld [vmem:[%s4878 + $0x120] sm:$0xff]
        %v4921 = vld [vmem:[%s4878 + $0x158] sm:$0xff]
        %v4922 = vld [vmem:[%s4878 + $0x160] sm:$0xff]
        %v4923 = vld [vmem:[%s4878 + $0x198] sm:$0xff]
        %v4924 = vld [vmem:[%s4878 + $0x1a0] sm:$0xff]
        %v4925 = vld [vmem:[%s4878 + $0x1d8] sm:$0xff]
        %v4926 = vld [vmem:[%s4878 + $0x1e0] sm:$0xff]
        %v4927 = vld [vmem:[%s4878 + $0x218] sm:$0xff]
        %v4928 = vld [vmem:[%s4878 + $0x220] sm:$0xff]
        %v4929 = vld [vmem:[%s4878 + $0x258] sm:$0xff]
        %v4930 = vld [vmem:[%s4878 + $0x260] sm:$0xff]
        %v4931 = vld [vmem:[%s4878 + $0x298] sm:$0xff]
        %v4932 = vld [vmem:[%s4878 + $0x2a0] sm:$0xff]
        %v4933 = vld [vmem:[%s4878 + $0x2d8] sm:$0xff]
        %v4934 = vld [vmem:[%s4878 + $0x2e0] sm:$0xff]
        %v4935 = vld [vmem:[%s4878 + $0x318] sm:$0xff]
        %v4936 = vld [vmem:[%s4878 + $0x320] sm:$0xff]
        %v4937 = vld [vmem:[%s4878 + $0x358] sm:$0xff]
        %v4938 = vld [vmem:[%s4878 + $0x360] sm:$0xff]
        %v4939 = vld [vmem:[%s4878 + $0x398] sm:$0xff]
        %v4940 = vld [vmem:[%s4878 + $0x3a0] sm:$0xff]
        %v4941 = vld [vmem:[%s4878 + $0x3d8] sm:$0xff]
        %v4942 = vld [vmem:[%s4878 + $0x3e0] sm:$0xff]
        %v4943 = vld [vmem:[%s4878 + $0x24] sm:$0xff]
        %v4944 = vld [vmem:[%s4878 + $0x2c] sm:$0xff]
        %v4945 = vld [vmem:[%s4878 + $0x64] sm:$0xff]
        %v4946 = vld [vmem:[%s4878 + $0x6c] sm:$0xff]
        %v4947 = vld [vmem:[%s4878 + $0xa4] sm:$0xff]
        %v4948 = vld [vmem:[%s4878 + $0xac] sm:$0xff]
        %v4949 = vld [vmem:[%s4878 + $0xe4] sm:$0xff]
        %v4950 = vld [vmem:[%s4878 + $0xec] sm:$0xff]
        %v4951 = vld [vmem:[%s4878 + $0x124] sm:$0xff]
        %v4952 = vld [vmem:[%s4878 + $0x12c] sm:$0xff]
        %v4953 = vld [vmem:[%s4878 + $0x164] sm:$0xff]
        %v4954 = vld [vmem:[%s4878 + $0x16c] sm:$0xff]
        %v4955 = vld [vmem:[%s4878 + $0x1a4] sm:$0xff]
        %v4956 = vld [vmem:[%s4878 + $0x1ac] sm:$0xff]
        %v4957 = vld [vmem:[%s4878 + $0x1e4] sm:$0xff]
        %v4958 = vld [vmem:[%s4878 + $0x1ec] sm:$0xff]
        %v4959 = vld [vmem:[%s4878 + $0x224] sm:$0xff]
        %v4960 = vld [vmem:[%s4878 + $0x22c] sm:$0xff]
        %v4961 = vld [vmem:[%s4878 + $0x264] sm:$0xff]
        %v4962 = vld [vmem:[%s4878 + $0x26c] sm:$0xff]
        %v4963 = vld [vmem:[%s4878 + $0x2a4] sm:$0xff]
        %v4964 = vld [vmem:[%s4878 + $0x2ac] sm:$0xff]
        %v4965 = vld [vmem:[%s4878 + $0x2e4] sm:$0xff]
        %v4966 = vld [vmem:[%s4878 + $0x2ec] sm:$0xff]
        %v4967 = vld [vmem:[%s4878 + $0x324] sm:$0xff]
        %v4968 = vld [vmem:[%s4878 + $0x32c] sm:$0xff]
        %v4969 = vld [vmem:[%s4878 + $0x364] sm:$0xff]
        %v4970 = vld [vmem:[%s4878 + $0x36c] sm:$0xff]
        %v4971 = vld [vmem:[%s4878 + $0x3a4] sm:$0xff]
        %v4972 = vld [vmem:[%s4878 + $0x3ac] sm:$0xff]
        %v4973 = vld [vmem:[%s4878 + $0x3e4] sm:$0xff]
        %v4974 = vld [vmem:[%s4878 + $0x3ec] sm:$0xff]
        %5007 = vrot.lane.b32.xlu0 %v4716, 112
        %v5008 = vpop.permute.xlu0 %5007
        %5009 = vrot.lane.b32.xlu0 %v4717, 112
        %v5010 = vpop.permute.xlu0 %5009
        %5011 = vrot.lane.b32.xlu0 %v4718, 112
        %v5012 = vpop.permute.xlu0 %5011
        %5013 = vrot.lane.b32.xlu0 %v4719, 112
        %v5014 = vpop.permute.xlu0 %5013
        %5015 = vrot.lane.b32.xlu0 %v4720, 112
        %v5016 = vpop.permute.xlu0 %5015
        %5017 = vrot.lane.b32.xlu0 %v4721, 112
        %v5018 = vpop.permute.xlu0 %5017
        %5019 = vrot.lane.b32.xlu0 %v4722, 112
        %v5020 = vpop.permute.xlu0 %5019
        %5021 = vrot.lane.b32.xlu0 %v4723, 112
        %v5022 = vpop.permute.xlu0 %5021
        %5023 = vrot.lane.b32.xlu0 %v4724, 112
        %v5024 = vpop.permute.xlu0 %5023
        %5025 = vrot.lane.b32.xlu0 %v4725, 112
        %v5026 = vpop.permute.xlu0 %5025
        %5027 = vrot.lane.b32.xlu0 %v4726, 112
        %v5028 = vpop.permute.xlu0 %5027
        %5029 = vrot.lane.b32.xlu0 %v4727, 112
        %v5030 = vpop.permute.xlu0 %5029
        %5031 = vrot.lane.b32.xlu0 %v4728, 112
        %v5032 = vpop.permute.xlu0 %5031
        %5033 = vrot.lane.b32.xlu0 %v4729, 112
        %v5034 = vpop.permute.xlu0 %5033
        %5035 = vrot.lane.b32.xlu0 %v4730, 112
        %v5036 = vpop.permute.xlu0 %5035
        %5037 = vrot.lane.b32.xlu0 %v4731, 112
        %v5038 = vpop.permute.xlu0 %5037
        %5039 = vrot.lane.b32.xlu0 %v4732, 112
        %v5040 = vpop.permute.xlu0 %5039
        %5041 = vrot.lane.b32.xlu0 %v4733, 112
        %v5042 = vpop.permute.xlu0 %5041
        %5043 = vrot.lane.b32.xlu0 %v4734, 112
        %v5044 = vpop.permute.xlu0 %5043
        %5045 = vrot.lane.b32.xlu0 %v4735, 112
        %v5046 = vpop.permute.xlu0 %5045
        %5047 = vrot.lane.b32.xlu0 %v4736, 112
        %v5048 = vpop.permute.xlu0 %5047
        %5049 = vrot.lane.b32.xlu0 %v4737, 112
        %v5050 = vpop.permute.xlu0 %5049
        %5051 = vrot.lane.b32.xlu0 %v4738, 112
        %v5052 = vpop.permute.xlu0 %5051
        %5053 = vrot.lane.b32.xlu0 %v4739, 112
        %v5054 = vpop.permute.xlu0 %5053
        %5055 = vrot.lane.b32.xlu0 %v4740, 112
        %v5056 = vpop.permute.xlu0 %5055
        %5057 = vrot.lane.b32.xlu0 %v4741, 112
        %v5058 = vpop.permute.xlu0 %5057
        %5059 = vrot.lane.b32.xlu0 %v4742, 112
        %v5060 = vpop.permute.xlu0 %5059
        %5061 = vrot.lane.b32.xlu0 %v4743, 112
        %v5062 = vpop.permute.xlu0 %5061
        %5063 = vrot.lane.b32.xlu0 %v4744, 112
        %v5064 = vpop.permute.xlu0 %5063
        %5065 = vrot.lane.b32.xlu0 %v4745, 112
        %v5066 = vpop.permute.xlu0 %5065
        %5067 = vrot.lane.b32.xlu0 %v4746, 112
        %v5068 = vpop.permute.xlu0 %5067
        %5069 = vrot.lane.b32.xlu0 %v4747, 112
        %v5070 = vpop.permute.xlu0 %5069
        %5135 = vrot.lane.b32.xlu0 %v4748, 120
        %v5136 = vpop.permute.xlu0 %5135
        %5137 = vrot.lane.b32.xlu0 %v4749, 120
        %v5138 = vpop.permute.xlu0 %5137
        %5139 = vrot.lane.b32.xlu0 %v4750, 120
        %v5140 = vpop.permute.xlu0 %5139
        %5141 = vrot.lane.b32.xlu0 %v4751, 120
        %v5142 = vpop.permute.xlu0 %5141
        %5143 = vrot.lane.b32.xlu0 %v4752, 120
        %v5144 = vpop.permute.xlu0 %5143
        %5145 = vrot.lane.b32.xlu0 %v4753, 120
        %v5146 = vpop.permute.xlu0 %5145
        %5147 = vrot.lane.b32.xlu0 %v4754, 120
        %v5148 = vpop.permute.xlu0 %5147
        %5149 = vrot.lane.b32.xlu0 %v4755, 120
        %v5150 = vpop.permute.xlu0 %5149
        %5151 = vrot.lane.b32.xlu0 %v4756, 120
        %v5152 = vpop.permute.xlu0 %5151
        %5153 = vrot.lane.b32.xlu0 %v4757, 120
        %v5154 = vpop.permute.xlu0 %5153
        %5155 = vrot.lane.b32.xlu0 %v4758, 120
        %v5156 = vpop.permute.xlu0 %5155
        %5157 = vrot.lane.b32.xlu0 %v4759, 120
        %v5158 = vpop.permute.xlu0 %5157
        %5159 = vrot.lane.b32.xlu0 %v4760, 120
        %v5160 = vpop.permute.xlu0 %5159
        %5161 = vrot.lane.b32.xlu0 %v4761, 120
        %v5162 = vpop.permute.xlu0 %5161
        %5163 = vrot.lane.b32.xlu0 %v4762, 120
        %v5164 = vpop.permute.xlu0 %5163
        %5165 = vrot.lane.b32.xlu0 %v4763, 120
        %v5166 = vpop.permute.xlu0 %5165
        %5167 = vrot.lane.b32.xlu0 %v4764, 120
        %v5168 = vpop.permute.xlu0 %5167
        %5169 = vrot.lane.b32.xlu0 %v4765, 120
        %v5170 = vpop.permute.xlu0 %5169
        %5171 = vrot.lane.b32.xlu0 %v4766, 120
        %v5172 = vpop.permute.xlu0 %5171
        %5173 = vrot.lane.b32.xlu0 %v4767, 120
        %v5174 = vpop.permute.xlu0 %5173
        %5175 = vrot.lane.b32.xlu0 %v4768, 120
        %v5176 = vpop.permute.xlu0 %5175
        %5177 = vrot.lane.b32.xlu0 %v4769, 120
        %v5178 = vpop.permute.xlu0 %5177
        %5179 = vrot.lane.b32.xlu0 %v4770, 120
        %v5180 = vpop.permute.xlu0 %5179
        %5181 = vrot.lane.b32.xlu0 %v4771, 120
        %v5182 = vpop.permute.xlu0 %5181
        %5183 = vrot.lane.b32.xlu0 %v4772, 120
        %v5184 = vpop.permute.xlu0 %5183
        %5185 = vrot.lane.b32.xlu0 %v4773, 120
        %v5186 = vpop.permute.xlu0 %5185
        %5187 = vrot.lane.b32.xlu0 %v4774, 120
        %v5188 = vpop.permute.xlu0 %5187
        %5189 = vrot.lane.b32.xlu0 %v4775, 120
        %v5190 = vpop.permute.xlu0 %5189
        %5191 = vrot.lane.b32.xlu0 %v4776, 120
        %v5192 = vpop.permute.xlu0 %5191
        %5193 = vrot.lane.b32.xlu0 %v4777, 120
        %v5194 = vpop.permute.xlu0 %5193
        %5195 = vrot.lane.b32.xlu0 %v4778, 120
        %v5196 = vpop.permute.xlu0 %5195
        %5197 = vrot.lane.b32.xlu0 %v4779, 120
        %v5198 = vpop.permute.xlu0 %5197
        %5263 = vrot.lane.b32.xlu0 %v4812, 8
        %v5264 = vpop.permute.xlu0 %5263
        %5265 = vrot.lane.b32.xlu0 %v4813, 8
        %v5266 = vpop.permute.xlu0 %5265
        %5267 = vrot.lane.b32.xlu0 %v4814, 8
        %v5268 = vpop.permute.xlu0 %5267
        %5269 = vrot.lane.b32.xlu0 %v4815, 8
        %v5270 = vpop.permute.xlu0 %5269
        %5271 = vrot.lane.b32.xlu0 %v4816, 8
        %v5272 = vpop.permute.xlu0 %5271
        %5273 = vrot.lane.b32.xlu0 %v4817, 8
        %v5274 = vpop.permute.xlu0 %5273
        %5275 = vrot.lane.b32.xlu0 %v4818, 8
        %v5276 = vpop.permute.xlu0 %5275
        %5277 = vrot.lane.b32.xlu0 %v4819, 8
        %v5278 = vpop.permute.xlu0 %5277
        %5279 = vrot.lane.b32.xlu0 %v4820, 8
        %v5280 = vpop.permute.xlu0 %5279
        %5281 = vrot.lane.b32.xlu0 %v4821, 8
        %v5282 = vpop.permute.xlu0 %5281
        %5283 = vrot.lane.b32.xlu0 %v4822, 8
        %v5284 = vpop.permute.xlu0 %5283
        %5285 = vrot.lane.b32.xlu0 %v4823, 8
        %v5286 = vpop.permute.xlu0 %5285
        %5287 = vrot.lane.b32.xlu0 %v4824, 8
        %v5288 = vpop.permute.xlu0 %5287
        %5289 = vrot.lane.b32.xlu0 %v4825, 8
        %v5290 = vpop.permute.xlu0 %5289
        %5291 = vrot.lane.b32.xlu0 %v4826, 8
        %v5292 = vpop.permute.xlu0 %5291
        %5293 = vrot.lane.b32.xlu0 %v4827, 8
        %v5294 = vpop.permute.xlu0 %5293
        %5295 = vrot.lane.b32.xlu0 %v4828, 8
        %v5296 = vpop.permute.xlu0 %5295
        %5297 = vrot.lane.b32.xlu0 %v4829, 8
        %v5298 = vpop.permute.xlu0 %5297
        %5299 = vrot.lane.b32.xlu0 %v4830, 8
        %v5300 = vpop.permute.xlu0 %5299
        %5301 = vrot.lane.b32.xlu0 %v4831, 8
        %v5302 = vpop.permute.xlu0 %5301
        %5303 = vrot.lane.b32.xlu0 %v4832, 8
        %v5304 = vpop.permute.xlu0 %5303
        %5305 = vrot.lane.b32.xlu0 %v4833, 8
        %v5306 = vpop.permute.xlu0 %5305
        %5307 = vrot.lane.b32.xlu0 %v4834, 8
        %v5308 = vpop.permute.xlu0 %5307
        %5309 = vrot.lane.b32.xlu0 %v4835, 8
        %v5310 = vpop.permute.xlu0 %5309
        %5311 = vrot.lane.b32.xlu0 %v4836, 8
        %v5312 = vpop.permute.xlu0 %5311
        %5313 = vrot.lane.b32.xlu0 %v4837, 8
        %v5314 = vpop.permute.xlu0 %5313
        %5315 = vrot.lane.b32.xlu0 %v4838, 8
        %v5316 = vpop.permute.xlu0 %5315
        %5317 = vrot.lane.b32.xlu0 %v4839, 8
        %v5318 = vpop.permute.xlu0 %5317
        %5319 = vrot.lane.b32.xlu0 %v4840, 8
        %v5320 = vpop.permute.xlu0 %5319
        %5321 = vrot.lane.b32.xlu0 %v4841, 8
        %v5322 = vpop.permute.xlu0 %5321
        %5323 = vrot.lane.b32.xlu0 %v4842, 8
        %v5324 = vpop.permute.xlu0 %5323
        %5325 = vrot.lane.b32.xlu0 %v4843, 8
        %v5326 = vpop.permute.xlu0 %5325
        %5359 = vrot.lane.b32.xlu0 %v752, 16
        %v5360 = vpop.permute.xlu0 %5359
        %5361 = vrot.lane.b32.xlu0 %v753, 16
        %v5362 = vpop.permute.xlu0 %5361
        %5363 = vrot.lane.b32.xlu0 %v754, 16
        %v5364 = vpop.permute.xlu0 %5363
        %5365 = vrot.lane.b32.xlu0 %v755, 16
        %v5366 = vpop.permute.xlu0 %5365
        %5367 = vrot.lane.b32.xlu0 %v756, 16
        %v5368 = vpop.permute.xlu0 %5367
        %5369 = vrot.lane.b32.xlu0 %v757, 16
        %v5370 = vpop.permute.xlu0 %5369
        %5371 = vrot.lane.b32.xlu0 %v758, 16
        %v5372 = vpop.permute.xlu0 %5371
        %5373 = vrot.lane.b32.xlu0 %v759, 16
        %v5374 = vpop.permute.xlu0 %5373
        %5375 = vrot.lane.b32.xlu0 %v760, 16
        %v5376 = vpop.permute.xlu0 %5375
        %5377 = vrot.lane.b32.xlu0 %v761, 16
        %v5378 = vpop.permute.xlu0 %5377
        %5379 = vrot.lane.b32.xlu0 %v762, 16
        %v5380 = vpop.permute.xlu0 %5379
        %5381 = vrot.lane.b32.xlu0 %v763, 16
        %v5382 = vpop.permute.xlu0 %5381
        %5383 = vrot.lane.b32.xlu0 %v764, 16
        %v5384 = vpop.permute.xlu0 %5383
        %5385 = vrot.lane.b32.xlu0 %v765, 16
        %v5386 = vpop.permute.xlu0 %5385
        %5387 = vrot.lane.b32.xlu0 %v766, 16
        %v5388 = vpop.permute.xlu0 %5387
        %5389 = vrot.lane.b32.xlu0 %v767, 16
        %v5390 = vpop.permute.xlu0 %5389
        %5391 = vrot.lane.b32.xlu0 %v768, 16
        %v5392 = vpop.permute.xlu0 %5391
        %5393 = vrot.lane.b32.xlu0 %v769, 16
        %v5394 = vpop.permute.xlu0 %5393
        %5395 = vrot.lane.b32.xlu0 %v770, 16
        %v5396 = vpop.permute.xlu0 %5395
        %5397 = vrot.lane.b32.xlu0 %v771, 16
        %v5398 = vpop.permute.xlu0 %5397
        %5399 = vrot.lane.b32.xlu0 %v772, 16
        %v5400 = vpop.permute.xlu0 %5399
        %5401 = vrot.lane.b32.xlu0 %v773, 16
        %v5402 = vpop.permute.xlu0 %5401
        %5403 = vrot.lane.b32.xlu0 %v774, 16
        %v5404 = vpop.permute.xlu0 %5403
        %5405 = vrot.lane.b32.xlu0 %v775, 16
        %v5406 = vpop.permute.xlu0 %5405
        %5407 = vrot.lane.b32.xlu0 %v776, 16
        %v5408 = vpop.permute.xlu0 %5407
        %5409 = vrot.lane.b32.xlu0 %v777, 16
        %v5410 = vpop.permute.xlu0 %5409
        %5411 = vrot.lane.b32.xlu0 %v778, 16
        %v5412 = vpop.permute.xlu0 %5411
        %5413 = vrot.lane.b32.xlu0 %v779, 16
        %v5414 = vpop.permute.xlu0 %5413
        %5415 = vrot.lane.b32.xlu0 %v780, 16
        %v5416 = vpop.permute.xlu0 %5415
        %5417 = vrot.lane.b32.xlu0 %v781, 16
        %v5418 = vpop.permute.xlu0 %5417
        %5419 = vrot.lane.b32.xlu0 %v782, 16
        %v5420 = vpop.permute.xlu0 %5419
        %5421 = vrot.lane.b32.xlu0 %v783, 16
        %v5422 = vpop.permute.xlu0 %5421
        %5487 = vrot.lane.b32.xlu0 %v4844, 24
        %v5488 = vpop.permute.xlu0 %5487
        %5489 = vrot.lane.b32.xlu0 %v4845, 24
        %v5490 = vpop.permute.xlu0 %5489
        %5491 = vrot.lane.b32.xlu0 %v4846, 24
        %v5492 = vpop.permute.xlu0 %5491
        %5493 = vrot.lane.b32.xlu0 %v4847, 24
        %v5494 = vpop.permute.xlu0 %5493
        %5495 = vrot.lane.b32.xlu0 %v4848, 24
        %v5496 = vpop.permute.xlu0 %5495
        %5497 = vrot.lane.b32.xlu0 %v4849, 24
        %v5498 = vpop.permute.xlu0 %5497
        %5499 = vrot.lane.b32.xlu0 %v4850, 24
        %v5500 = vpop.permute.xlu0 %5499
        %5501 = vrot.lane.b32.xlu0 %v4851, 24
        %v5502 = vpop.permute.xlu0 %5501
        %5503 = vrot.lane.b32.xlu0 %v4852, 24
        %v5504 = vpop.permute.xlu0 %5503
        %5505 = vrot.lane.b32.xlu0 %v4853, 24
        %v5506 = vpop.permute.xlu0 %5505
        %5507 = vrot.lane.b32.xlu0 %v4854, 24
        %v5508 = vpop.permute.xlu0 %5507
        %5509 = vrot.lane.b32.xlu0 %v4855, 24
        %v5510 = vpop.permute.xlu0 %5509
        %5511 = vrot.lane.b32.xlu0 %v4856, 24
        %v5512 = vpop.permute.xlu0 %5511
        %5513 = vrot.lane.b32.xlu0 %v4857, 24
        %v5514 = vpop.permute.xlu0 %5513
        %5515 = vrot.lane.b32.xlu0 %v4858, 24
        %v5516 = vpop.permute.xlu0 %5515
        %5517 = vrot.lane.b32.xlu0 %v4859, 24
        %v5518 = vpop.permute.xlu0 %5517
        %5519 = vrot.lane.b32.xlu0 %v4860, 24
        %v5520 = vpop.permute.xlu0 %5519
        %5521 = vrot.lane.b32.xlu0 %v4861, 24
        %v5522 = vpop.permute.xlu0 %5521
        %5523 = vrot.lane.b32.xlu0 %v4862, 24
        %v5524 = vpop.permute.xlu0 %5523
        %5525 = vrot.lane.b32.xlu0 %v4863, 24
        %v5526 = vpop.permute.xlu0 %5525
        %5527 = vrot.lane.b32.xlu0 %v4864, 24
        %v5528 = vpop.permute.xlu0 %5527
        %5529 = vrot.lane.b32.xlu0 %v4865, 24
        %v5530 = vpop.permute.xlu0 %5529
        %5531 = vrot.lane.b32.xlu0 %v4866, 24
        %v5532 = vpop.permute.xlu0 %5531
        %5533 = vrot.lane.b32.xlu0 %v4867, 24
        %v5534 = vpop.permute.xlu0 %5533
        %5535 = vrot.lane.b32.xlu0 %v4868, 24
        %v5536 = vpop.permute.xlu0 %5535
        %5537 = vrot.lane.b32.xlu0 %v4869, 24
        %v5538 = vpop.permute.xlu0 %5537
        %5539 = vrot.lane.b32.xlu0 %v4870, 24
        %v5540 = vpop.permute.xlu0 %5539
        %5541 = vrot.lane.b32.xlu0 %v4871, 24
        %v5542 = vpop.permute.xlu0 %5541
        %5543 = vrot.lane.b32.xlu0 %v4872, 24
        %v5544 = vpop.permute.xlu0 %5543
        %5545 = vrot.lane.b32.xlu0 %v4873, 24
        %v5546 = vpop.permute.xlu0 %5545
        %5547 = vrot.lane.b32.xlu0 %v4874, 24
        %v5548 = vpop.permute.xlu0 %5547
        %5549 = vrot.lane.b32.xlu0 %v4875, 24
        %v5550 = vpop.permute.xlu0 %5549
        %5615 = vrot.lane.b32.xlu0 %v4879, 32
        %v5616 = vpop.permute.xlu0 %5615
        %5617 = vrot.lane.b32.xlu0 %v4880, 32
        %v5618 = vpop.permute.xlu0 %5617
        %5619 = vrot.lane.b32.xlu0 %v4881, 32
        %v5620 = vpop.permute.xlu0 %5619
        %5621 = vrot.lane.b32.xlu0 %v4882, 32
        %v5622 = vpop.permute.xlu0 %5621
        %5623 = vrot.lane.b32.xlu0 %v4883, 32
        %v5624 = vpop.permute.xlu0 %5623
        %5625 = vrot.lane.b32.xlu0 %v4884, 32
        %v5626 = vpop.permute.xlu0 %5625
        %5627 = vrot.lane.b32.xlu0 %v4885, 32
        %v5628 = vpop.permute.xlu0 %5627
        %5629 = vrot.lane.b32.xlu0 %v4886, 32
        %v5630 = vpop.permute.xlu0 %5629
        %5631 = vrot.lane.b32.xlu0 %v4887, 32
        %v5632 = vpop.permute.xlu0 %5631
        %5633 = vrot.lane.b32.xlu0 %v4888, 32
        %v5634 = vpop.permute.xlu0 %5633
        %5635 = vrot.lane.b32.xlu0 %v4889, 32
        %v5636 = vpop.permute.xlu0 %5635
        %5637 = vrot.lane.b32.xlu0 %v4890, 32
        %v5638 = vpop.permute.xlu0 %5637
        %5639 = vrot.lane.b32.xlu0 %v4891, 32
        %v5640 = vpop.permute.xlu0 %5639
        %5641 = vrot.lane.b32.xlu0 %v4892, 32
        %v5642 = vpop.permute.xlu0 %5641
        %5643 = vrot.lane.b32.xlu0 %v4893, 32
        %v5644 = vpop.permute.xlu0 %5643
        %5645 = vrot.lane.b32.xlu0 %v4894, 32
        %v5646 = vpop.permute.xlu0 %5645
        %5647 = vrot.lane.b32.xlu0 %v4895, 32
        %v5648 = vpop.permute.xlu0 %5647
        %5649 = vrot.lane.b32.xlu0 %v4896, 32
        %v5650 = vpop.permute.xlu0 %5649
        %5651 = vrot.lane.b32.xlu0 %v4897, 32
        %v5652 = vpop.permute.xlu0 %5651
        %5653 = vrot.lane.b32.xlu0 %v4898, 32
        %v5654 = vpop.permute.xlu0 %5653
        %5655 = vrot.lane.b32.xlu0 %v4899, 32
        %v5656 = vpop.permute.xlu0 %5655
        %5657 = vrot.lane.b32.xlu0 %v4900, 32
        %v5658 = vpop.permute.xlu0 %5657
        %5659 = vrot.lane.b32.xlu0 %v4901, 32
        %v5660 = vpop.permute.xlu0 %5659
        %5661 = vrot.lane.b32.xlu0 %v4902, 32
        %v5662 = vpop.permute.xlu0 %5661
        %5663 = vrot.lane.b32.xlu0 %v4903, 32
        %v5664 = vpop.permute.xlu0 %5663
        %5665 = vrot.lane.b32.xlu0 %v4904, 32
        %v5666 = vpop.permute.xlu0 %5665
        %5667 = vrot.lane.b32.xlu0 %v4905, 32
        %v5668 = vpop.permute.xlu0 %5667
        %5669 = vrot.lane.b32.xlu0 %v4906, 32
        %v5670 = vpop.permute.xlu0 %5669
        %5671 = vrot.lane.b32.xlu0 %v4907, 32
        %v5672 = vpop.permute.xlu0 %5671
        %5673 = vrot.lane.b32.xlu0 %v4908, 32
        %v5674 = vpop.permute.xlu0 %5673
        %5675 = vrot.lane.b32.xlu0 %v4909, 32
        %v5676 = vpop.permute.xlu0 %5675
        %5677 = vrot.lane.b32.xlu0 %v4910, 32
        %v5678 = vpop.permute.xlu0 %5677
        %5743 = vrot.lane.b32.xlu0 %v4911, 40
        %v5744 = vpop.permute.xlu0 %5743
        %5745 = vrot.lane.b32.xlu0 %v4912, 40
        %v5746 = vpop.permute.xlu0 %5745
        %5747 = vrot.lane.b32.xlu0 %v4913, 40
        %v5748 = vpop.permute.xlu0 %5747
        %5749 = vrot.lane.b32.xlu0 %v4914, 40
        %v5750 = vpop.permute.xlu0 %5749
        %5751 = vrot.lane.b32.xlu0 %v4915, 40
        %v5752 = vpop.permute.xlu0 %5751
        %5753 = vrot.lane.b32.xlu0 %v4916, 40
        %v5754 = vpop.permute.xlu0 %5753
        %5755 = vrot.lane.b32.xlu0 %v4917, 40
        %v5756 = vpop.permute.xlu0 %5755
        %5757 = vrot.lane.b32.xlu0 %v4918, 40
        %v5758 = vpop.permute.xlu0 %5757
        %5759 = vrot.lane.b32.xlu0 %v4919, 40
        %v5760 = vpop.permute.xlu0 %5759
        %5761 = vrot.lane.b32.xlu0 %v4920, 40
        %v5762 = vpop.permute.xlu0 %5761
        %5763 = vrot.lane.b32.xlu0 %v4921, 40
        %v5764 = vpop.permute.xlu0 %5763
        %5765 = vrot.lane.b32.xlu0 %v4922, 40
        %v5766 = vpop.permute.xlu0 %5765
        %5767 = vrot.lane.b32.xlu0 %v4923, 40
        %v5768 = vpop.permute.xlu0 %5767
        %5769 = vrot.lane.b32.xlu0 %v4924, 40
        %v5770 = vpop.permute.xlu0 %5769
        %5771 = vrot.lane.b32.xlu0 %v4925, 40
        %v5772 = vpop.permute.xlu0 %5771
        %5773 = vrot.lane.b32.xlu0 %v4926, 40
        %v5774 = vpop.permute.xlu0 %5773
        %5775 = vrot.lane.b32.xlu0 %v4927, 40
        %v5776 = vpop.permute.xlu0 %5775
        %5777 = vrot.lane.b32.xlu0 %v4928, 40
        %v5778 = vpop.permute.xlu0 %5777
        %5779 = vrot.lane.b32.xlu0 %v4929, 40
        %v5780 = vpop.permute.xlu0 %5779
        %5781 = vrot.lane.b32.xlu0 %v4930, 40
        %v5782 = vpop.permute.xlu0 %5781
        %5783 = vrot.lane.b32.xlu0 %v4931, 40
        %v5784 = vpop.permute.xlu0 %5783
        %5785 = vrot.lane.b32.xlu0 %v4932, 40
        %v5786 = vpop.permute.xlu0 %5785
        %5787 = vrot.lane.b32.xlu0 %v4933, 40
        %v5788 = vpop.permute.xlu0 %5787
        %5789 = vrot.lane.b32.xlu0 %v4934, 40
        %v5790 = vpop.permute.xlu0 %5789
        %5791 = vrot.lane.b32.xlu0 %v4935, 40
        %v5792 = vpop.permute.xlu0 %5791
        %5793 = vrot.lane.b32.xlu0 %v4936, 40
        %v5794 = vpop.permute.xlu0 %5793
        %5795 = vrot.lane.b32.xlu0 %v4937, 40
        %v5796 = vpop.permute.xlu0 %5795
        %5797 = vrot.lane.b32.xlu0 %v4938, 40
        %v5798 = vpop.permute.xlu0 %5797
        %5799 = vrot.lane.b32.xlu0 %v4939, 40
        %v5800 = vpop.permute.xlu0 %5799
        %5801 = vrot.lane.b32.xlu0 %v4940, 40
        %v5802 = vpop.permute.xlu0 %5801
        %5803 = vrot.lane.b32.xlu0 %v4941, 40
        %v5804 = vpop.permute.xlu0 %5803
        %5805 = vrot.lane.b32.xlu0 %v4942, 40
        %v5806 = vpop.permute.xlu0 %5805
        %5871 = vrot.lane.b32.xlu0 %v4943, 48
        %v5872 = vpop.permute.xlu0 %5871
        %5873 = vrot.lane.b32.xlu0 %v4944, 48
        %v5874 = vpop.permute.xlu0 %5873
        %5875 = vrot.lane.b32.xlu0 %v4945, 48
        %v5876 = vpop.permute.xlu0 %5875
        %5877 = vrot.lane.b32.xlu0 %v4946, 48
        %v5878 = vpop.permute.xlu0 %5877
        %5879 = vrot.lane.b32.xlu0 %v4947, 48
        %v5880 = vpop.permute.xlu0 %5879
        %5881 = vrot.lane.b32.xlu0 %v4948, 48
        %v5882 = vpop.permute.xlu0 %5881
        %5883 = vrot.lane.b32.xlu0 %v4949, 48
        %v5884 = vpop.permute.xlu0 %5883
        %5885 = vrot.lane.b32.xlu0 %v4950, 48
        %v5886 = vpop.permute.xlu0 %5885
        %5887 = vrot.lane.b32.xlu0 %v4951, 48
        %v5888 = vpop.permute.xlu0 %5887
        %5889 = vrot.lane.b32.xlu0 %v4952, 48
        %v5890 = vpop.permute.xlu0 %5889
        %5891 = vrot.lane.b32.xlu0 %v4953, 48
        %v5892 = vpop.permute.xlu0 %5891
        %5893 = vrot.lane.b32.xlu0 %v4954, 48
        %v5894 = vpop.permute.xlu0 %5893
        %5895 = vrot.lane.b32.xlu0 %v4955, 48
        %v5896 = vpop.permute.xlu0 %5895
        %5897 = vrot.lane.b32.xlu0 %v4956, 48
        %v5898 = vpop.permute.xlu0 %5897
        %5899 = vrot.lane.b32.xlu0 %v4957, 48
        %v5900 = vpop.permute.xlu0 %5899
        %5901 = vrot.lane.b32.xlu0 %v4958, 48
        %v5902 = vpop.permute.xlu0 %5901
        %5903 = vrot.lane.b32.xlu0 %v4959, 48
        %v5904 = vpop.permute.xlu0 %5903
        %5905 = vrot.lane.b32.xlu0 %v4960, 48
        %v5906 = vpop.permute.xlu0 %5905
        %5907 = vrot.lane.b32.xlu0 %v4961, 48
        %v5908 = vpop.permute.xlu0 %5907
        %5909 = vrot.lane.b32.xlu0 %v4962, 48
        %v5910 = vpop.permute.xlu0 %5909
        %5911 = vrot.lane.b32.xlu0 %v4963, 48
        %v5912 = vpop.permute.xlu0 %5911
        %5913 = vrot.lane.b32.xlu0 %v4964, 48
        %v5914 = vpop.permute.xlu0 %5913
        %5915 = vrot.lane.b32.xlu0 %v4965, 48
        %v5916 = vpop.permute.xlu0 %5915
        %5917 = vrot.lane.b32.xlu0 %v4966, 48
        %v5918 = vpop.permute.xlu0 %5917
        %5919 = vrot.lane.b32.xlu0 %v4967, 48
        %v5920 = vpop.permute.xlu0 %5919
        %5921 = vrot.lane.b32.xlu0 %v4968, 48
        %v5922 = vpop.permute.xlu0 %5921
        %5923 = vrot.lane.b32.xlu0 %v4969, 48
        %v5924 = vpop.permute.xlu0 %5923
        %5925 = vrot.lane.b32.xlu0 %v4970, 48
        %v5926 = vpop.permute.xlu0 %5925
        %5927 = vrot.lane.b32.xlu0 %v4971, 48
        %v5928 = vpop.permute.xlu0 %5927
        %5929 = vrot.lane.b32.xlu0 %v4972, 48
        %v5930 = vpop.permute.xlu0 %5929
        %5931 = vrot.lane.b32.xlu0 %v4973, 48
        %v5932 = vpop.permute.xlu0 %5931
        %5933 = vrot.lane.b32.xlu0 %v4974, 48
        %v5934 = vpop.permute.xlu0 %5933
        %v5967 = vsel %vm2198, %v5008, %v5136
        %v5968 = vsel %vm2198, %v5010, %v5138
        %v5969 = vsel %vm2198, %v5012, %v5140
        %v5970 = vsel %vm2198, %v5014, %v5142
        %v5971 = vsel %vm2198, %v5016, %v5144
        %v5972 = vsel %vm2198, %v5018, %v5146
        %v5973 = vsel %vm2198, %v5020, %v5148
        %v5974 = vsel %vm2198, %v5022, %v5150
        %v5975 = vsel %vm2198, %v5024, %v5152
        %v5976 = vsel %vm2198, %v5026, %v5154
        %v5977 = vsel %vm2198, %v5028, %v5156
        %v5978 = vsel %vm2198, %v5030, %v5158
        %v5979 = vsel %vm2198, %v5032, %v5160
        %v5980 = vsel %vm2198, %v5034, %v5162
        %v5981 = vsel %vm2198, %v5036, %v5164
        %v5982 = vsel %vm2198, %v5038, %v5166
        %v5983 = vsel %vm2198, %v5040, %v5168
        %v5984 = vsel %vm2198, %v5042, %v5170
        %v5985 = vsel %vm2198, %v5044, %v5172
        %v5986 = vsel %vm2198, %v5046, %v5174
        %v5987 = vsel %vm2198, %v5048, %v5176
        %v5988 = vsel %vm2198, %v5050, %v5178
        %v5989 = vsel %vm2198, %v5052, %v5180
        %v5990 = vsel %vm2198, %v5054, %v5182
        %v5991 = vsel %vm2198, %v5056, %v5184
        %v5992 = vsel %vm2198, %v5058, %v5186
        %v5993 = vsel %vm2198, %v5060, %v5188
        %v5994 = vsel %vm2198, %v5062, %v5190
        %v5995 = vsel %vm2198, %v5064, %v5192
        %v5996 = vsel %vm2198, %v5066, %v5194
        %v5997 = vsel %vm2198, %v5068, %v5196
        %v5998 = vsel %vm2198, %v5070, %v5198
        %v5999 = vsel %vm2231, %v5967, %v4780
        %v6000 = vsel %vm2231, %v5968, %v4781
        %v6001 = vsel %vm2231, %v5969, %v4782
        %v6002 = vsel %vm2231, %v5970, %v4783
        %v6003 = vsel %vm2231, %v5971, %v4784
        %v6004 = vsel %vm2231, %v5972, %v4785
        %v6005 = vsel %vm2231, %v5973, %v4786
        %v6006 = vsel %vm2231, %v5974, %v4787
        %v6007 = vsel %vm2231, %v5975, %v4788
        %v6008 = vsel %vm2231, %v5976, %v4789
        %v6009 = vsel %vm2231, %v5977, %v4790
        %v6010 = vsel %vm2231, %v5978, %v4791
        %v6011 = vsel %vm2231, %v5979, %v4792
        %v6012 = vsel %vm2231, %v5980, %v4793
        %v6013 = vsel %vm2231, %v5981, %v4794
        %v6014 = vsel %vm2231, %v5982, %v4795
        %v6015 = vsel %vm2231, %v5983, %v4796
        %v6016 = vsel %vm2231, %v5984, %v4797
        %v6017 = vsel %vm2231, %v5985, %v4798
        %v6018 = vsel %vm2231, %v5986, %v4799
        %v6019 = vsel %vm2231, %v5987, %v4800
        %v6020 = vsel %vm2231, %v5988, %v4801
        %v6021 = vsel %vm2231, %v5989, %v4802
        %v6022 = vsel %vm2231, %v5990, %v4803
        %v6023 = vsel %vm2231, %v5991, %v4804
        %v6024 = vsel %vm2231, %v5992, %v4805
        %v6025 = vsel %vm2231, %v5993, %v4806
        %v6026 = vsel %vm2231, %v5994, %v4807
        %v6027 = vsel %vm2231, %v5995, %v4808
        %v6028 = vsel %vm2231, %v5996, %v4809
        %v6029 = vsel %vm2231, %v5997, %v4810
        %v6030 = vsel %vm2231, %v5998, %v4811
        %v6031 = vsel %vm2264, %v5999, %v5264
        %v6032 = vsel %vm2264, %v6000, %v5266
        %v6033 = vsel %vm2264, %v6001, %v5268
        %v6034 = vsel %vm2264, %v6002, %v5270
        %v6035 = vsel %vm2264, %v6003, %v5272
        %v6036 = vsel %vm2264, %v6004, %v5274
        %v6037 = vsel %vm2264, %v6005, %v5276
        %v6038 = vsel %vm2264, %v6006, %v5278
        %v6039 = vsel %vm2264, %v6007, %v5280
        %v6040 = vsel %vm2264, %v6008, %v5282
        %v6041 = vsel %vm2264, %v6009, %v5284
        %v6042 = vsel %vm2264, %v6010, %v5286
        %v6043 = vsel %vm2264, %v6011, %v5288
        %v6044 = vsel %vm2264, %v6012, %v5290
        %v6045 = vsel %vm2264, %v6013, %v5292
        %v6046 = vsel %vm2264, %v6014, %v5294
        %v6047 = vsel %vm2264, %v6015, %v5296
        %v6048 = vsel %vm2264, %v6016, %v5298
        %v6049 = vsel %vm2264, %v6017, %v5300
        %v6050 = vsel %vm2264, %v6018, %v5302
        %v6051 = vsel %vm2264, %v6019, %v5304
        %v6052 = vsel %vm2264, %v6020, %v5306
        %v6053 = vsel %vm2264, %v6021, %v5308
        %v6054 = vsel %vm2264, %v6022, %v5310
        %v6055 = vsel %vm2264, %v6023, %v5312
        %v6056 = vsel %vm2264, %v6024, %v5314
        %v6057 = vsel %vm2264, %v6025, %v5316
        %v6058 = vsel %vm2264, %v6026, %v5318
        %v6059 = vsel %vm2264, %v6027, %v5320
        %v6060 = vsel %vm2264, %v6028, %v5322
        %v6061 = vsel %vm2264, %v6029, %v5324
        %v6062 = vsel %vm2264, %v6030, %v5326
        %v6063 = vsel %vm2297, %v6031, %v5360
        %v6064 = vsel %vm2297, %v6032, %v5362
        %v6065 = vsel %vm2297, %v6033, %v5364
        %v6066 = vsel %vm2297, %v6034, %v5366
        %v6067 = vsel %vm2297, %v6035, %v5368
        %v6068 = vsel %vm2297, %v6036, %v5370
        %v6069 = vsel %vm2297, %v6037, %v5372
        %v6070 = vsel %vm2297, %v6038, %v5374
        %v6071 = vsel %vm2297, %v6039, %v5376
        %v6072 = vsel %vm2297, %v6040, %v5378
        %v6073 = vsel %vm2297, %v6041, %v5380
        %v6074 = vsel %vm2297, %v6042, %v5382
        %v6075 = vsel %vm2297, %v6043, %v5384
        %v6076 = vsel %vm2297, %v6044, %v5386
        %v6077 = vsel %vm2297, %v6045, %v5388
        %v6078 = vsel %vm2297, %v6046, %v5390
        %v6079 = vsel %vm2297, %v6047, %v5392
        %v6080 = vsel %vm2297, %v6048, %v5394
        %v6081 = vsel %vm2297, %v6049, %v5396
        %v6082 = vsel %vm2297, %v6050, %v5398
        %v6083 = vsel %vm2297, %v6051, %v5400
        %v6084 = vsel %vm2297, %v6052, %v5402
        %v6085 = vsel %vm2297, %v6053, %v5404
        %v6086 = vsel %vm2297, %v6054, %v5406
        %v6087 = vsel %vm2297, %v6055, %v5408
        %v6088 = vsel %vm2297, %v6056, %v5410
        %v6089 = vsel %vm2297, %v6057, %v5412
        %v6090 = vsel %vm2297, %v6058, %v5414
        %v6091 = vsel %vm2297, %v6059, %v5416
        %v6092 = vsel %vm2297, %v6060, %v5418
        %v6093 = vsel %vm2297, %v6061, %v5420
        %v6094 = vsel %vm2297, %v6062, %v5422
        %v6095 = vsel %vm2330, %v6063, %v5488
        %v6096 = vsel %vm2330, %v6064, %v5490
        %v6097 = vsel %vm2330, %v6065, %v5492
        %v6098 = vsel %vm2330, %v6066, %v5494
        %v6099 = vsel %vm2330, %v6067, %v5496
        %v6100 = vsel %vm2330, %v6068, %v5498
        %v6101 = vsel %vm2330, %v6069, %v5500
        %v6102 = vsel %vm2330, %v6070, %v5502
        %v6103 = vsel %vm2330, %v6071, %v5504
        %v6104 = vsel %vm2330, %v6072, %v5506
        %v6105 = vsel %vm2330, %v6073, %v5508
        %v6106 = vsel %vm2330, %v6074, %v5510
        %v6107 = vsel %vm2330, %v6075, %v5512
        %v6108 = vsel %vm2330, %v6076, %v5514
        %v6109 = vsel %vm2330, %v6077, %v5516
        %v6110 = vsel %vm2330, %v6078, %v5518
        %v6111 = vsel %vm2330, %v6079, %v5520
        %v6112 = vsel %vm2330, %v6080, %v5522
        %v6113 = vsel %vm2330, %v6081, %v5524
        %v6114 = vsel %vm2330, %v6082, %v5526
        %v6115 = vsel %vm2330, %v6083, %v5528
        %v6116 = vsel %vm2330, %v6084, %v5530
        %v6117 = vsel %vm2330, %v6085, %v5532
        %v6118 = vsel %vm2330, %v6086, %v5534
        %v6119 = vsel %vm2330, %v6087, %v5536
        %v6120 = vsel %vm2330, %v6088, %v5538
        %v6121 = vsel %vm2330, %v6089, %v5540
        %v6122 = vsel %vm2330, %v6090, %v5542
        %v6123 = vsel %vm2330, %v6091, %v5544
        %v6124 = vsel %vm2330, %v6092, %v5546
        %v6125 = vsel %vm2330, %v6093, %v5548
        %v6126 = vsel %vm2330, %v6094, %v5550
        %v6127 = vsel %vm2363, %v6095, %v5616
        %v6128 = vsel %vm2363, %v6096, %v5618
        %v6129 = vsel %vm2363, %v6097, %v5620
        %v6130 = vsel %vm2363, %v6098, %v5622
        %v6131 = vsel %vm2363, %v6099, %v5624
        %v6132 = vsel %vm2363, %v6100, %v5626
        %v6133 = vsel %vm2363, %v6101, %v5628
        %v6134 = vsel %vm2363, %v6102, %v5630
        %v6135 = vsel %vm2363, %v6103, %v5632
        %v6136 = vsel %vm2363, %v6104, %v5634
        %v6137 = vsel %vm2363, %v6105, %v5636
        %v6138 = vsel %vm2363, %v6106, %v5638
        %v6139 = vsel %vm2363, %v6107, %v5640
        %v6140 = vsel %vm2363, %v6108, %v5642
        %v6141 = vsel %vm2363, %v6109, %v5644
        %v6142 = vsel %vm2363, %v6110, %v5646
        %v6143 = vsel %vm2363, %v6111, %v5648
        %v6144 = vsel %vm2363, %v6112, %v5650
        %v6145 = vsel %vm2363, %v6113, %v5652
        %v6146 = vsel %vm2363, %v6114, %v5654
        %v6147 = vsel %vm2363, %v6115, %v5656
        %v6148 = vsel %vm2363, %v6116, %v5658
        %v6149 = vsel %vm2363, %v6117, %v5660
        %v6150 = vsel %vm2363, %v6118, %v5662
        %v6151 = vsel %vm2363, %v6119, %v5664
        %v6152 = vsel %vm2363, %v6120, %v5666
        %v6153 = vsel %vm2363, %v6121, %v5668
        %v6154 = vsel %vm2363, %v6122, %v5670
        %v6155 = vsel %vm2363, %v6123, %v5672
        %v6156 = vsel %vm2363, %v6124, %v5674
        %v6157 = vsel %vm2363, %v6125, %v5676
        %v6158 = vsel %vm2363, %v6126, %v5678
        %v6159 = vsel %vm2396, %v6127, %v5744
        %v6160 = vsel %vm2396, %v6128, %v5746
        %v6161 = vsel %vm2396, %v6129, %v5748
        %v6162 = vsel %vm2396, %v6130, %v5750
        %v6163 = vsel %vm2396, %v6131, %v5752
        %v6164 = vsel %vm2396, %v6132, %v5754
        %v6165 = vsel %vm2396, %v6133, %v5756
        %v6166 = vsel %vm2396, %v6134, %v5758
        %v6167 = vsel %vm2396, %v6135, %v5760
        %v6168 = vsel %vm2396, %v6136, %v5762
        %v6169 = vsel %vm2396, %v6137, %v5764
        %v6170 = vsel %vm2396, %v6138, %v5766
        %v6171 = vsel %vm2396, %v6139, %v5768
        %v6172 = vsel %vm2396, %v6140, %v5770
        %v6173 = vsel %vm2396, %v6141, %v5772
        %v6174 = vsel %vm2396, %v6142, %v5774
        %v6175 = vsel %vm2396, %v6143, %v5776
        %v6176 = vsel %vm2396, %v6144, %v5778
        %v6177 = vsel %vm2396, %v6145, %v5780
        %v6178 = vsel %vm2396, %v6146, %v5782
        %v6179 = vsel %vm2396, %v6147, %v5784
        %v6180 = vsel %vm2396, %v6148, %v5786
        %v6181 = vsel %vm2396, %v6149, %v5788
        %v6182 = vsel %vm2396, %v6150, %v5790
        %v6183 = vsel %vm2396, %v6151, %v5792
        %v6184 = vsel %vm2396, %v6152, %v5794
        %v6185 = vsel %vm2396, %v6153, %v5796
        %v6186 = vsel %vm2396, %v6154, %v5798
        %v6187 = vsel %vm2396, %v6155, %v5800
        %v6188 = vsel %vm2396, %v6156, %v5802
        %v6189 = vsel %vm2396, %v6157, %v5804
        %v6190 = vsel %vm2396, %v6158, %v5806
        %v6191 = vsel %vm2429, %v6159, %v5872
        %v6192 = vsel %vm2429, %v6160, %v5874
        %v6193 = vsel %vm2429, %v6161, %v5876
        %v6194 = vsel %vm2429, %v6162, %v5878
        %v6195 = vsel %vm2429, %v6163, %v5880
        %v6196 = vsel %vm2429, %v6164, %v5882
        %v6197 = vsel %vm2429, %v6165, %v5884
        %v6198 = vsel %vm2429, %v6166, %v5886
        %v6199 = vsel %vm2429, %v6167, %v5888
        %v6200 = vsel %vm2429, %v6168, %v5890
        %v6201 = vsel %vm2429, %v6169, %v5892
        %v6202 = vsel %vm2429, %v6170, %v5894
        %v6203 = vsel %vm2429, %v6171, %v5896
        %v6204 = vsel %vm2429, %v6172, %v5898
        %v6205 = vsel %vm2429, %v6173, %v5900
        %v6206 = vsel %vm2429, %v6174, %v5902
        %v6207 = vsel %vm2429, %v6175, %v5904
        %v6208 = vsel %vm2429, %v6176, %v5906
        %v6209 = vsel %vm2429, %v6177, %v5908
        %v6210 = vsel %vm2429, %v6178, %v5910
        %v6211 = vsel %vm2429, %v6179, %v5912
        %v6212 = vsel %vm2429, %v6180, %v5914
        %v6213 = vsel %vm2429, %v6181, %v5916
        %v6214 = vsel %vm2429, %v6182, %v5918
        %v6215 = vsel %vm2429, %v6183, %v5920
        %v6216 = vsel %vm2429, %v6184, %v5922
        %v6217 = vsel %vm2429, %v6185, %v5924
        %v6218 = vsel %vm2429, %v6186, %v5926
        %v6219 = vsel %vm2429, %v6187, %v5928
        %v6220 = vsel %vm2429, %v6188, %v5930
        %v6221 = vsel %vm2429, %v6189, %v5932
        %v6222 = vsel %vm2429, %v6190, %v5934
        %s6223 = scalar_lea.vmem %s1, 144
        %v6224 = vld [vmem:[%s6223] sm:$0xff]
        %v6225 = vld [vmem:[%s6223 + $0x8] sm:$0xff]
        %v6226 = vld [vmem:[%s6223 + $0x10] sm:$0xff]
        %v6227 = vld [vmem:[%s6223 + $0x18] sm:$0xff]
        %v6228 = vld [vmem:[%s6223 + $0x20] sm:$0xff]
        %v6229 = vld [vmem:[%s6223 + $0x28] sm:$0xff]
        %v6230 = vld [vmem:[%s6223 + $0x30] sm:$0xff]
        %v6231 = vld [vmem:[%s6223 + $0x38] sm:$0xff]
        %v6232 = vld [vmem:[%s6223 + $0x40] sm:$0xff]
        %s6233 = scalar_lea.vmem %s2, 2
        %v6234 = vld [vmem:[%s6233] sm:$0x1]
        %v6236 = vlaneseq
        %v6237 = vshrl.u32 %v6236, 7
        %v6238 = vsub.s32 0, %v6237
        %v6239 = vrot.slane %v6234, %v6238
        %v6242 = vsel %vm2478, %v6191, 0
        %v6245 = vsel %vm2478, %v6192, 0
        %v6248 = vsel %vm2478, %v6193, 0
        %v6251 = vsel %vm2478, %v6194, 0
        %v6254 = vsel %vm2478, %v6195, 0
        %v6257 = vsel %vm2478, %v6196, 0
        %v6260 = vsel %vm2478, %v6197, 0
        %v6263 = vsel %vm2478, %v6198, 0
        %v6266 = vsel %vm2478, %v6199, 0
        %v6269 = vsel %vm2478, %v6200, 0
        %v6272 = vsel %vm2478, %v6201, 0
        %v6275 = vsel %vm2478, %v6202, 0
        %v6278 = vsel %vm2478, %v6203, 0
        %v6281 = vsel %vm2478, %v6204, 0
        %v6284 = vsel %vm2478, %v6205, 0
        %v6287 = vsel %vm2478, %v6206, 0
        %v6290 = vsel %vm2478, %v6207, 0
        %v6293 = vsel %vm2478, %v6208, 0
        %v6296 = vsel %vm2478, %v6209, 0
        %v6299 = vsel %vm2478, %v6210, 0
        %v6302 = vsel %vm2478, %v6211, 0
        %v6305 = vsel %vm2478, %v6212, 0
        %v6308 = vsel %vm2478, %v6213, 0
        %v6311 = vsel %vm2478, %v6214, 0
        %v6314 = vsel %vm2478, %v6215, 0
        %v6317 = vsel %vm2478, %v6216, 0
        %v6320 = vsel %vm2478, %v6217, 0
        %v6323 = vsel %vm2478, %v6218, 0
        %v6326 = vsel %vm2478, %v6219, 0
        %v6329 = vsel %vm2478, %v6220, 0
        %v6332 = vsel %vm2478, %v6221, 0
        %v6335 = vsel %vm2478, %v6222, 0
        %6337 = vmatprep.subr.mxu0 0.0
        %6338 = vmatpush1.msra.mxu0 0.0
        %6339 = vmatprep.subr.mxu0 0.0
        %6340 = vmatpush1.msra.mxu0 0.0
        %6341 = vmatprep.subr.mxu0 0.0
        %6342 = vmatpush1.msra.mxu0 0.0
        %6343 = vmatprep.subr.mxu0 0.0
        %6344 = vmatpush1.msra.mxu0 0.0
        %6345 = vmatprep.subr.mxu0 0.0
        %6346 = vmatpush1.msra.mxu0 0.0
        %6347 = vmatprep.subr.mxu0 0.0
        %6348 = vmatpush1.msra.mxu0 0.0
        %6349 = vmatprep.subr.mxu0 0.0
        %6350 = vmatpush1.msra.mxu0 0.0
        %6351 = vmatprep.subr.mxu0 0.0
        %6352 = vmatpush1.msra.mxu0 %v6232
        %6353 = vmatprep.subr.mxu0 0.0
        %6354 = vmatpush1.msra.mxu0 %v6231
        %6355 = vmatprep.subr.mxu0 0.0
        %6356 = vmatpush1.msra.mxu0 %v6230
        %6357 = vmatprep.subr.mxu0 0.0
        %6358 = vmatpush1.msra.mxu0 %v6229
        %6359 = vmatprep.subr.mxu0 0.0
        %6360 = vmatpush1.msra.mxu0 %v6228
        %6361 = vmatprep.subr.mxu0 0.0
        %6362 = vmatpush1.msra.mxu0 %v6227
        %6363 = vmatprep.subr.mxu0 0.0
        %6364 = vmatpush1.msra.mxu0 %v6226
        %6365 = vmatprep.subr.mxu0 0.0
        %6366 = vmatpush1.msra.mxu0 %v6225
        %6367 = vmatprep.subr.mxu0 0.0
        %6368 = vmatpush1.msra.mxu0 %v6224
        %6369 = vmatprep.subr.mxu0 0.0
        %6370 = vmatpush2.msra.mxu0 0.0
        %6371 = vmatprep.subr.mxu0 0.0
        %6372 = vmatpush2.msra.mxu0 0.0
        %6373 = vmatprep.subr.mxu0 0.0
        %6374 = vmatpush2.msra.mxu0 0.0
        %6375 = vmatprep.subr.mxu0 0.0
        %6376 = vmatpush2.msra.mxu0 0.0
        %6377 = vmatprep.subr.mxu0 0.0
        %6378 = vmatpush2.msra.mxu0 0.0
        %6379 = vmatprep.subr.mxu0 0.0
        %6380 = vmatpush2.msra.mxu0 0.0
        %6381 = vmatprep.subr.mxu0 0.0
        %6382 = vmatpush2.msra.mxu0 0.0
        %6383 = vmatprep.subr.mxu0 0.0
        %6384 = vmatpush2.msra.mxu0 0.0
        %6385 = vmatprep.subr.mxu0 0.0
        %6386 = vmatpush2.msra.mxu0 0.0
        %6387 = vmatprep.subr.mxu0 0.0
        %6388 = vmatpush2.msra.mxu0 0.0
        %6389 = vmatprep.subr.mxu0 0.0
        %6390 = vmatpush2.msra.mxu0 0.0
        %6391 = vmatprep.subr.mxu0 0.0
        %6392 = vmatpush2.msra.mxu0 0.0
        %6393 = vmatprep.subr.mxu0 0.0
        %6394 = vmatpush2.msra.mxu0 0.0
        %6395 = vmatprep.subr.mxu0 0.0
        %6396 = vmatpush2.msra.mxu0 0.0
        %6397 = vmatprep.subr.mxu0 0.0
        %6398 = vmatpush2.msra.mxu0 0.0
        %6399 = vmatprep.subr.mxu0 0.0
        %6400 = vmatpush2.msra.mxu0 0.0
        %6401 = vmatprep.mubr.f32.mxu0 0.0
        %6402 = vmatmul.mubr.f32.gmra.mxu0 %v6242
        %v6403 = vpop.f32.mrf.mxu0
        %v6404 = vadd.f32 %v6239, %v6403
        %v6405 = vpop.f32.mrf.mxu0
        %6406 = vmatprep.mubr.f32.mxu0 0.0
        %6407 = vmatmul.mubr.f32.gmra.mxu0 %v6245
        %v6408 = vpop.f32.mrf.mxu0
        %v6409 = vadd.f32 %v6239, %v6408
        %v6410 = vpop.f32.mrf.mxu0
        %6411 = vmatprep.mubr.f32.mxu0 0.0
        %6412 = vmatmul.mubr.f32.gmra.mxu0 %v6248
        %v6413 = vpop.f32.mrf.mxu0
        %v6414 = vadd.f32 %v6239, %v6413
        %v6415 = vpop.f32.mrf.mxu0
        %6416 = vmatprep.mubr.f32.mxu0 0.0
        %6417 = vmatmul.mubr.f32.gmra.mxu0 %v6251
        %v6418 = vpop.f32.mrf.mxu0
        %v6419 = vadd.f32 %v6239, %v6418
        %v6420 = vpop.f32.mrf.mxu0
        %6421 = vmatprep.mubr.f32.mxu0 0.0
        %6422 = vmatmul.mubr.f32.gmra.mxu0 %v6254
        %v6423 = vpop.f32.mrf.mxu0
        %v6424 = vadd.f32 %v6239, %v6423
        %v6425 = vpop.f32.mrf.mxu0
        %6426 = vmatprep.mubr.f32.mxu0 0.0
        %6427 = vmatmul.mubr.f32.gmra.mxu0 %v6257
        %v6428 = vpop.f32.mrf.mxu0
        %v6429 = vadd.f32 %v6239, %v6428
        %v6430 = vpop.f32.mrf.mxu0
        %6431 = vmatprep.mubr.f32.mxu0 0.0
        %6432 = vmatmul.mubr.f32.gmra.mxu0 %v6260
        %v6433 = vpop.f32.mrf.mxu0
        %v6434 = vadd.f32 %v6239, %v6433
        %v6435 = vpop.f32.mrf.mxu0
        %6436 = vmatprep.mubr.f32.mxu0 0.0
        %6437 = vmatmul.mubr.f32.gmra.mxu0 %v6263
        %v6438 = vpop.f32.mrf.mxu0
        %v6439 = vadd.f32 %v6239, %v6438
        %v6440 = vpop.f32.mrf.mxu0
        %6441 = vmatprep.mubr.f32.mxu0 0.0
        %6442 = vmatmul.mubr.f32.gmra.mxu0 %v6266
        %v6443 = vpop.f32.mrf.mxu0
        %v6444 = vadd.f32 %v6239, %v6443
        %v6445 = vpop.f32.mrf.mxu0
        %6446 = vmatprep.mubr.f32.mxu0 0.0
        %6447 = vmatmul.mubr.f32.gmra.mxu0 %v6269
        %v6448 = vpop.f32.mrf.mxu0
        %v6449 = vadd.f32 %v6239, %v6448
        %v6450 = vpop.f32.mrf.mxu0
        %6451 = vmatprep.mubr.f32.mxu0 0.0
        %6452 = vmatmul.mubr.f32.gmra.mxu0 %v6272
        %v6453 = vpop.f32.mrf.mxu0
        %v6454 = vadd.f32 %v6239, %v6453
        %v6455 = vpop.f32.mrf.mxu0
        %6456 = vmatprep.mubr.f32.mxu0 0.0
        %6457 = vmatmul.mubr.f32.gmra.mxu0 %v6275
        %v6458 = vpop.f32.mrf.mxu0
        %v6459 = vadd.f32 %v6239, %v6458
        %v6460 = vpop.f32.mrf.mxu0
        %6461 = vmatprep.mubr.f32.mxu0 0.0
        %6462 = vmatmul.mubr.f32.gmra.mxu0 %v6278
        %v6463 = vpop.f32.mrf.mxu0
        %v6464 = vadd.f32 %v6239, %v6463
        %v6465 = vpop.f32.mrf.mxu0
        %6466 = vmatprep.mubr.f32.mxu0 0.0
        %6467 = vmatmul.mubr.f32.gmra.mxu0 %v6281
        %v6468 = vpop.f32.mrf.mxu0
        %v6469 = vadd.f32 %v6239, %v6468
        %v6470 = vpop.f32.mrf.mxu0
        %6471 = vmatprep.mubr.f32.mxu0 0.0
        %6472 = vmatmul.mubr.f32.gmra.mxu0 %v6284
        %v6473 = vpop.f32.mrf.mxu0
        %v6474 = vadd.f32 %v6239, %v6473
        %v6475 = vpop.f32.mrf.mxu0
        %6476 = vmatprep.mubr.f32.mxu0 0.0
        %6477 = vmatmul.mubr.f32.gmra.mxu0 %v6287
        %v6478 = vpop.f32.mrf.mxu0
        %v6479 = vadd.f32 %v6239, %v6478
        %v6480 = vpop.f32.mrf.mxu0
        %6481 = vmatprep.mubr.f32.mxu0 0.0
        %6482 = vmatmul.mubr.f32.gmra.mxu0 %v6290
        %v6483 = vpop.f32.mrf.mxu0
        %v6484 = vadd.f32 %v6239, %v6483
        %v6485 = vpop.f32.mrf.mxu0
        %6486 = vmatprep.mubr.f32.mxu0 0.0
        %6487 = vmatmul.mubr.f32.gmra.mxu0 %v6293
        %v6488 = vpop.f32.mrf.mxu0
        %v6489 = vadd.f32 %v6239, %v6488
        %v6490 = vpop.f32.mrf.mxu0
        %6491 = vmatprep.mubr.f32.mxu0 0.0
        %6492 = vmatmul.mubr.f32.gmra.mxu0 %v6296
        %v6493 = vpop.f32.mrf.mxu0
        %v6494 = vadd.f32 %v6239, %v6493
        %v6495 = vpop.f32.mrf.mxu0
        %6496 = vmatprep.mubr.f32.mxu0 0.0
        %6497 = vmatmul.mubr.f32.gmra.mxu0 %v6299
        %v6498 = vpop.f32.mrf.mxu0
        %v6499 = vadd.f32 %v6239, %v6498
        %v6500 = vpop.f32.mrf.mxu0
        %6501 = vmatprep.mubr.f32.mxu0 0.0
        %6502 = vmatmul.mubr.f32.gmra.mxu0 %v6302
        %v6503 = vpop.f32.mrf.mxu0
        %v6504 = vadd.f32 %v6239, %v6503
        %v6505 = vpop.f32.mrf.mxu0
        %6506 = vmatprep.mubr.f32.mxu0 0.0
        %6507 = vmatmul.mubr.f32.gmra.mxu0 %v6305
        %v6508 = vpop.f32.mrf.mxu0
        %v6509 = vadd.f32 %v6239, %v6508
        %v6510 = vpop.f32.mrf.mxu0
        %6511 = vmatprep.mubr.f32.mxu0 0.0
        %6512 = vmatmul.mubr.f32.gmra.mxu0 %v6308
        %v6513 = vpop.f32.mrf.mxu0
        %v6514 = vadd.f32 %v6239, %v6513
        %v6515 = vpop.f32.mrf.mxu0
        %6516 = vmatprep.mubr.f32.mxu0 0.0
        %6517 = vmatmul.mubr.f32.gmra.mxu0 %v6311
        %v6518 = vpop.f32.mrf.mxu0
        %v6519 = vadd.f32 %v6239, %v6518
        %v6520 = vpop.f32.mrf.mxu0
        %6521 = vmatprep.mubr.f32.mxu0 0.0
        %6522 = vmatmul.mubr.f32.gmra.mxu0 %v6314
        %v6523 = vpop.f32.mrf.mxu0
        %v6524 = vadd.f32 %v6239, %v6523
        %v6525 = vpop.f32.mrf.mxu0
        %6526 = vmatprep.mubr.f32.mxu0 0.0
        %6527 = vmatmul.mubr.f32.gmra.mxu0 %v6317
        %v6528 = vpop.f32.mrf.mxu0
        %v6529 = vadd.f32 %v6239, %v6528
        %v6530 = vpop.f32.mrf.mxu0
        %6531 = vmatprep.mubr.f32.mxu0 0.0
        %6532 = vmatmul.mubr.f32.gmra.mxu0 %v6320
        %v6533 = vpop.f32.mrf.mxu0
        %v6534 = vadd.f32 %v6239, %v6533
        %v6535 = vpop.f32.mrf.mxu0
        %6536 = vmatprep.mubr.f32.mxu0 0.0
        %6537 = vmatmul.mubr.f32.gmra.mxu0 %v6323
        %v6538 = vpop.f32.mrf.mxu0
        %v6539 = vadd.f32 %v6239, %v6538
        %v6540 = vpop.f32.mrf.mxu0
        %6541 = vmatprep.mubr.f32.mxu0 0.0
        %6542 = vmatmul.mubr.f32.gmra.mxu0 %v6326
        %v6543 = vpop.f32.mrf.mxu0
        %v6544 = vadd.f32 %v6239, %v6543
        %v6545 = vpop.f32.mrf.mxu0
        %6546 = vmatprep.mubr.f32.mxu0 0.0
        %6547 = vmatmul.mubr.f32.gmra.mxu0 %v6329
        %v6548 = vpop.f32.mrf.mxu0
        %v6549 = vadd.f32 %v6239, %v6548
        %v6550 = vpop.f32.mrf.mxu0
        %6551 = vmatprep.mubr.f32.mxu0 0.0
        %6552 = vmatmul.mubr.f32.gmra.mxu0 %v6332
        %v6553 = vpop.f32.mrf.mxu0
        %v6554 = vadd.f32 %v6239, %v6553
        %v6555 = vpop.f32.mrf.mxu0
        %6556 = vmatprep.mubr.f32.mxu0 0.0
        %6557 = vmatmul.mubr.f32.gmra.mxu0 %v6335
        %v6558 = vpop.f32.mrf.mxu0
        %v6559 = vadd.f32 %v6239, %v6558
        %v6560 = vpop.f32.mrf.mxu0
        %6561 = vdwg.mxu0
        %6594 = vrot.lane.b32.xlu0 %v912, 112
        %v6595 = vpop.permute.xlu0 %6594
        %6596 = vrot.lane.b32.xlu0 %v913, 112
        %v6597 = vpop.permute.xlu0 %6596
        %6598 = vrot.lane.b32.xlu0 %v914, 112
        %v6599 = vpop.permute.xlu0 %6598
        %6600 = vrot.lane.b32.xlu0 %v915, 112
        %v6601 = vpop.permute.xlu0 %6600
        %6602 = vrot.lane.b32.xlu0 %v916, 112
        %v6603 = vpop.permute.xlu0 %6602
        %6604 = vrot.lane.b32.xlu0 %v917, 112
        %v6605 = vpop.permute.xlu0 %6604
        %6606 = vrot.lane.b32.xlu0 %v918, 112
        %v6607 = vpop.permute.xlu0 %6606
        %6608 = vrot.lane.b32.xlu0 %v919, 112
        %v6609 = vpop.permute.xlu0 %6608
        %6610 = vrot.lane.b32.xlu0 %v920, 112
        %v6611 = vpop.permute.xlu0 %6610
        %6612 = vrot.lane.b32.xlu0 %v921, 112
        %v6613 = vpop.permute.xlu0 %6612
        %6614 = vrot.lane.b32.xlu0 %v922, 112
        %v6615 = vpop.permute.xlu0 %6614
        %6616 = vrot.lane.b32.xlu0 %v923, 112
        %v6617 = vpop.permute.xlu0 %6616
        %6618 = vrot.lane.b32.xlu0 %v924, 112
        %v6619 = vpop.permute.xlu0 %6618
        %6620 = vrot.lane.b32.xlu0 %v925, 112
        %v6621 = vpop.permute.xlu0 %6620
        %6622 = vrot.lane.b32.xlu0 %v926, 112
        %v6623 = vpop.permute.xlu0 %6622
        %6624 = vrot.lane.b32.xlu0 %v927, 112
        %v6625 = vpop.permute.xlu0 %6624
        %6626 = vrot.lane.b32.xlu0 %v928, 112
        %v6627 = vpop.permute.xlu0 %6626
        %6628 = vrot.lane.b32.xlu0 %v929, 112
        %v6629 = vpop.permute.xlu0 %6628
        %6630 = vrot.lane.b32.xlu0 %v930, 112
        %v6631 = vpop.permute.xlu0 %6630
        %6632 = vrot.lane.b32.xlu0 %v931, 112
        %v6633 = vpop.permute.xlu0 %6632
        %6634 = vrot.lane.b32.xlu0 %v932, 112
        %v6635 = vpop.permute.xlu0 %6634
        %6636 = vrot.lane.b32.xlu0 %v933, 112
        %v6637 = vpop.permute.xlu0 %6636
        %6638 = vrot.lane.b32.xlu0 %v934, 112
        %v6639 = vpop.permute.xlu0 %6638
        %6640 = vrot.lane.b32.xlu0 %v935, 112
        %v6641 = vpop.permute.xlu0 %6640
        %6642 = vrot.lane.b32.xlu0 %v936, 112
        %v6643 = vpop.permute.xlu0 %6642
        %6644 = vrot.lane.b32.xlu0 %v937, 112
        %v6645 = vpop.permute.xlu0 %6644
        %6646 = vrot.lane.b32.xlu0 %v938, 112
        %v6647 = vpop.permute.xlu0 %6646
        %6648 = vrot.lane.b32.xlu0 %v939, 112
        %v6649 = vpop.permute.xlu0 %6648
        %6650 = vrot.lane.b32.xlu0 %v940, 112
        %v6651 = vpop.permute.xlu0 %6650
        %6652 = vrot.lane.b32.xlu0 %v941, 112
        %v6653 = vpop.permute.xlu0 %6652
        %6654 = vrot.lane.b32.xlu0 %v942, 112
        %v6655 = vpop.permute.xlu0 %6654
        %6656 = vrot.lane.b32.xlu0 %v943, 112
        %v6657 = vpop.permute.xlu0 %6656
        %v6690 = vadd.f32 %v6404, %v6595
        %v6691 = vadd.f32 %v6409, %v6597
        %v6692 = vadd.f32 %v6414, %v6599
        %v6693 = vadd.f32 %v6419, %v6601
        %v6694 = vadd.f32 %v6424, %v6603
        %v6695 = vadd.f32 %v6429, %v6605
        %v6696 = vadd.f32 %v6434, %v6607
        %v6697 = vadd.f32 %v6439, %v6609
        %v6698 = vadd.f32 %v6444, %v6611
        %v6699 = vadd.f32 %v6449, %v6613
        %v6700 = vadd.f32 %v6454, %v6615
        %v6701 = vadd.f32 %v6459, %v6617
        %v6702 = vadd.f32 %v6464, %v6619
        %v6703 = vadd.f32 %v6469, %v6621
        %v6704 = vadd.f32 %v6474, %v6623
        %v6705 = vadd.f32 %v6479, %v6625
        %v6706 = vadd.f32 %v6484, %v6627
        %v6707 = vadd.f32 %v6489, %v6629
        %v6708 = vadd.f32 %v6494, %v6631
        %v6709 = vadd.f32 %v6499, %v6633
        %v6710 = vadd.f32 %v6504, %v6635
        %v6711 = vadd.f32 %v6509, %v6637
        %v6712 = vadd.f32 %v6514, %v6639
        %v6713 = vadd.f32 %v6519, %v6641
        %v6714 = vadd.f32 %v6524, %v6643
        %v6715 = vadd.f32 %v6529, %v6645
        %v6716 = vadd.f32 %v6534, %v6647
        %v6717 = vadd.f32 %v6539, %v6649
        %v6718 = vadd.f32 %v6544, %v6651
        %v6719 = vadd.f32 %v6549, %v6653
        %v6720 = vadd.f32 %v6554, %v6655
        %v6721 = vadd.f32 %v6559, %v6657
        %s6722 = smul.u32 %s748, 64
        %s6723 = scalar_lea.vmem [#allocation2], %s6722
        %v6724 = vld [vmem:[%s6723 + $0x6] sm:$0xff]
        %v6725 = vld [vmem:[%s6723 + $0xe] sm:$0xff]
        %v6726 = vld [vmem:[%s6723 + $0x46] sm:$0xff]
        %v6727 = vld [vmem:[%s6723 + $0x4e] sm:$0xff]
        %v6728 = vld [vmem:[%s6723 + $0x86] sm:$0xff]
        %v6729 = vld [vmem:[%s6723 + $0x8e] sm:$0xff]
        %v6730 = vld [vmem:[%s6723 + $0xc6] sm:$0xff]
        %v6731 = vld [vmem:[%s6723 + $0xce] sm:$0xff]
        %v6732 = vld [vmem:[%s6723 + $0x106] sm:$0xff]
        %v6733 = vld [vmem:[%s6723 + $0x10e] sm:$0xff]
        %v6734 = vld [vmem:[%s6723 + $0x146] sm:$0xff]
        %v6735 = vld [vmem:[%s6723 + $0x14e] sm:$0xff]
        %v6736 = vld [vmem:[%s6723 + $0x186] sm:$0xff]
        %v6737 = vld [vmem:[%s6723 + $0x18e] sm:$0xff]
        %v6738 = vld [vmem:[%s6723 + $0x1c6] sm:$0xff]
        %v6739 = vld [vmem:[%s6723 + $0x1ce] sm:$0xff]
        %v6740 = vld [vmem:[%s6723 + $0x206] sm:$0xff]
        %v6741 = vld [vmem:[%s6723 + $0x20e] sm:$0xff]
        %v6742 = vld [vmem:[%s6723 + $0x246] sm:$0xff]
        %v6743 = vld [vmem:[%s6723 + $0x24e] sm:$0xff]
        %v6744 = vld [vmem:[%s6723 + $0x286] sm:$0xff]
        %v6745 = vld [vmem:[%s6723 + $0x28e] sm:$0xff]
        %v6746 = vld [vmem:[%s6723 + $0x2c6] sm:$0xff]
        %v6747 = vld [vmem:[%s6723 + $0x2ce] sm:$0xff]
        %v6748 = vld [vmem:[%s6723 + $0x306] sm:$0xff]
        %v6749 = vld [vmem:[%s6723 + $0x30e] sm:$0xff]
        %v6750 = vld [vmem:[%s6723 + $0x346] sm:$0xff]
        %v6751 = vld [vmem:[%s6723 + $0x34e] sm:$0xff]
        %v6752 = vld [vmem:[%s6723 + $0x386] sm:$0xff]
        %v6753 = vld [vmem:[%s6723 + $0x38e] sm:$0xff]
        %v6754 = vld [vmem:[%s6723 + $0x3c6] sm:$0xff]
        %v6755 = vld [vmem:[%s6723 + $0x3ce] sm:$0xff]
        %v6756 = vld [vmem:[%s6723 + $0x18] sm:$0xff]
        %v6757 = vld [vmem:[%s6723 + $0x20] sm:$0xff]
        %v6758 = vld [vmem:[%s6723 + $0x58] sm:$0xff]
        %v6759 = vld [vmem:[%s6723 + $0x60] sm:$0xff]
        %v6760 = vld [vmem:[%s6723 + $0x98] sm:$0xff]
        %v6761 = vld [vmem:[%s6723 + $0xa0] sm:$0xff]
        %v6762 = vld [vmem:[%s6723 + $0xd8] sm:$0xff]
        %v6763 = vld [vmem:[%s6723 + $0xe0] sm:$0xff]
        %v6764 = vld [vmem:[%s6723 + $0x118] sm:$0xff]
        %v6765 = vld [vmem:[%s6723 + $0x120] sm:$0xff]
        %v6766 = vld [vmem:[%s6723 + $0x158] sm:$0xff]
        %v6767 = vld [vmem:[%s6723 + $0x160] sm:$0xff]
        %v6768 = vld [vmem:[%s6723 + $0x198] sm:$0xff]
        %v6769 = vld [vmem:[%s6723 + $0x1a0] sm:$0xff]
        %v6770 = vld [vmem:[%s6723 + $0x1d8] sm:$0xff]
        %v6771 = vld [vmem:[%s6723 + $0x1e0] sm:$0xff]
        %v6772 = vld [vmem:[%s6723 + $0x218] sm:$0xff]
        %v6773 = vld [vmem:[%s6723 + $0x220] sm:$0xff]
        %v6774 = vld [vmem:[%s6723 + $0x258] sm:$0xff]
        %v6775 = vld [vmem:[%s6723 + $0x260] sm:$0xff]
        %v6776 = vld [vmem:[%s6723 + $0x298] sm:$0xff]
        %v6777 = vld [vmem:[%s6723 + $0x2a0] sm:$0xff]
        %v6778 = vld [vmem:[%s6723 + $0x2d8] sm:$0xff]
        %v6779 = vld [vmem:[%s6723 + $0x2e0] sm:$0xff]
        %v6780 = vld [vmem:[%s6723 + $0x318] sm:$0xff]
        %v6781 = vld [vmem:[%s6723 + $0x320] sm:$0xff]
        %v6782 = vld [vmem:[%s6723 + $0x358] sm:$0xff]
        %v6783 = vld [vmem:[%s6723 + $0x360] sm:$0xff]
        %v6784 = vld [vmem:[%s6723 + $0x398] sm:$0xff]
        %v6785 = vld [vmem:[%s6723 + $0x3a0] sm:$0xff]
        %v6786 = vld [vmem:[%s6723 + $0x3d8] sm:$0xff]
        %v6787 = vld [vmem:[%s6723 + $0x3e0] sm:$0xff]
        %v6788 = vld [vmem:[%s6723 + $0x2a] sm:$0xff]
        %v6789 = vld [vmem:[%s6723 + $0x32] sm:$0xff]
        %v6790 = vld [vmem:[%s6723 + $0x6a] sm:$0xff]
        %v6791 = vld [vmem:[%s6723 + $0x72] sm:$0xff]
        %v6792 = vld [vmem:[%s6723 + $0xaa] sm:$0xff]
        %v6793 = vld [vmem:[%s6723 + $0xb2] sm:$0xff]
        %v6794 = vld [vmem:[%s6723 + $0xea] sm:$0xff]
        %v6795 = vld [vmem:[%s6723 + $0xf2] sm:$0xff]
        %v6796 = vld [vmem:[%s6723 + $0x12a] sm:$0xff]
        %v6797 = vld [vmem:[%s6723 + $0x132] sm:$0xff]
        %v6798 = vld [vmem:[%s6723 + $0x16a] sm:$0xff]
        %v6799 = vld [vmem:[%s6723 + $0x172] sm:$0xff]
        %v6800 = vld [vmem:[%s6723 + $0x1aa] sm:$0xff]
        %v6801 = vld [vmem:[%s6723 + $0x1b2] sm:$0xff]
        %v6802 = vld [vmem:[%s6723 + $0x1ea] sm:$0xff]
        %v6803 = vld [vmem:[%s6723 + $0x1f2] sm:$0xff]
        %v6804 = vld [vmem:[%s6723 + $0x22a] sm:$0xff]
        %v6805 = vld [vmem:[%s6723 + $0x232] sm:$0xff]
        %v6806 = vld [vmem:[%s6723 + $0x26a] sm:$0xff]
        %v6807 = vld [vmem:[%s6723 + $0x272] sm:$0xff]
        %v6808 = vld [vmem:[%s6723 + $0x2aa] sm:$0xff]
        %v6809 = vld [vmem:[%s6723 + $0x2b2] sm:$0xff]
        %v6810 = vld [vmem:[%s6723 + $0x2ea] sm:$0xff]
        %v6811 = vld [vmem:[%s6723 + $0x2f2] sm:$0xff]
        %v6812 = vld [vmem:[%s6723 + $0x32a] sm:$0xff]
        %v6813 = vld [vmem:[%s6723 + $0x332] sm:$0xff]
        %v6814 = vld [vmem:[%s6723 + $0x36a] sm:$0xff]
        %v6815 = vld [vmem:[%s6723 + $0x372] sm:$0xff]
        %v6816 = vld [vmem:[%s6723 + $0x3aa] sm:$0xff]
        %v6817 = vld [vmem:[%s6723 + $0x3b2] sm:$0xff]
        %v6818 = vld [vmem:[%s6723 + $0x3ea] sm:$0xff]
        %v6819 = vld [vmem:[%s6723 + $0x3f2] sm:$0xff]
        %v6820 = vld [vmem:[%s751 + $0x6] sm:$0xff]
        %v6821 = vld [vmem:[%s751 + $0xe] sm:$0xff]
        %v6822 = vld [vmem:[%s751 + $0x46] sm:$0xff]
        %v6823 = vld [vmem:[%s751 + $0x4e] sm:$0xff]
        %v6824 = vld [vmem:[%s751 + $0x86] sm:$0xff]
        %v6825 = vld [vmem:[%s751 + $0x8e] sm:$0xff]
        %v6826 = vld [vmem:[%s751 + $0xc6] sm:$0xff]
        %v6827 = vld [vmem:[%s751 + $0xce] sm:$0xff]
        %v6828 = vld [vmem:[%s751 + $0x106] sm:$0xff]
        %v6829 = vld [vmem:[%s751 + $0x10e] sm:$0xff]
        %v6830 = vld [vmem:[%s751 + $0x146] sm:$0xff]
        %v6831 = vld [vmem:[%s751 + $0x14e] sm:$0xff]
        %v6832 = vld [vmem:[%s751 + $0x186] sm:$0xff]
        %v6833 = vld [vmem:[%s751 + $0x18e] sm:$0xff]
        %v6834 = vld [vmem:[%s751 + $0x1c6] sm:$0xff]
        %v6835 = vld [vmem:[%s751 + $0x1ce] sm:$0xff]
        %v6836 = vld [vmem:[%s751 + $0x206] sm:$0xff]
        %v6837 = vld [vmem:[%s751 + $0x20e] sm:$0xff]
        %v6838 = vld [vmem:[%s751 + $0x246] sm:$0xff]
        %v6839 = vld [vmem:[%s751 + $0x24e] sm:$0xff]
        %v6840 = vld [vmem:[%s751 + $0x286] sm:$0xff]
        %v6841 = vld [vmem:[%s751 + $0x28e] sm:$0xff]
        %v6842 = vld [vmem:[%s751 + $0x2c6] sm:$0xff]
        %v6843 = vld [vmem:[%s751 + $0x2ce] sm:$0xff]
        %v6844 = vld [vmem:[%s751 + $0x306] sm:$0xff]
        %v6845 = vld [vmem:[%s751 + $0x30e] sm:$0xff]
        %v6846 = vld [vmem:[%s751 + $0x346] sm:$0xff]
        %v6847 = vld [vmem:[%s751 + $0x34e] sm:$0xff]
        %v6848 = vld [vmem:[%s751 + $0x386] sm:$0xff]
        %v6849 = vld [vmem:[%s751 + $0x38e] sm:$0xff]
        %v6850 = vld [vmem:[%s751 + $0x3c6] sm:$0xff]
        %v6851 = vld [vmem:[%s751 + $0x3ce] sm:$0xff]
        %v6852 = vld [vmem:[%s751 + $0x2a] sm:$0xff]
        %v6853 = vld [vmem:[%s751 + $0x32] sm:$0xff]
        %v6854 = vld [vmem:[%s751 + $0x6a] sm:$0xff]
        %v6855 = vld [vmem:[%s751 + $0x72] sm:$0xff]
        %v6856 = vld [vmem:[%s751 + $0xaa] sm:$0xff]
        %v6857 = vld [vmem:[%s751 + $0xb2] sm:$0xff]
        %v6858 = vld [vmem:[%s751 + $0xea] sm:$0xff]
        %v6859 = vld [vmem:[%s751 + $0xf2] sm:$0xff]
        %v6860 = vld [vmem:[%s751 + $0x12a] sm:$0xff]
        %v6861 = vld [vmem:[%s751 + $0x132] sm:$0xff]
        %v6862 = vld [vmem:[%s751 + $0x16a] sm:$0xff]
        %v6863 = vld [vmem:[%s751 + $0x172] sm:$0xff]
        %v6864 = vld [vmem:[%s751 + $0x1aa] sm:$0xff]
        %v6865 = vld [vmem:[%s751 + $0x1b2] sm:$0xff]
        %v6866 = vld [vmem:[%s751 + $0x1ea] sm:$0xff]
        %v6867 = vld [vmem:[%s751 + $0x1f2] sm:$0xff]
        %v6868 = vld [vmem:[%s751 + $0x22a] sm:$0xff]
        %v6869 = vld [vmem:[%s751 + $0x232] sm:$0xff]
        %v6870 = vld [vmem:[%s751 + $0x26a] sm:$0xff]
        %v6871 = vld [vmem:[%s751 + $0x272] sm:$0xff]
        %v6872 = vld [vmem:[%s751 + $0x2aa] sm:$0xff]
        %v6873 = vld [vmem:[%s751 + $0x2b2] sm:$0xff]
        %v6874 = vld [vmem:[%s751 + $0x2ea] sm:$0xff]
        %v6875 = vld [vmem:[%s751 + $0x2f2] sm:$0xff]
        %v6876 = vld [vmem:[%s751 + $0x32a] sm:$0xff]
        %v6877 = vld [vmem:[%s751 + $0x332] sm:$0xff]
        %v6878 = vld [vmem:[%s751 + $0x36a] sm:$0xff]
        %v6879 = vld [vmem:[%s751 + $0x372] sm:$0xff]
        %v6880 = vld [vmem:[%s751 + $0x3aa] sm:$0xff]
        %v6881 = vld [vmem:[%s751 + $0x3b2] sm:$0xff]
        %v6882 = vld [vmem:[%s751 + $0x3ea] sm:$0xff]
        %v6883 = vld [vmem:[%s751 + $0x3f2] sm:$0xff]
        %s6884 = sadd.s32 %s748, 36
        %s6885 = smul.u32 %s6884, 64
        %s6886 = scalar_lea.vmem [#allocation2], %s6885
        %v6887 = vld [vmem:[%s6886 + $0x6] sm:$0xff]
        %v6888 = vld [vmem:[%s6886 + $0xe] sm:$0xff]
        %v6889 = vld [vmem:[%s6886 + $0x46] sm:$0xff]
        %v6890 = vld [vmem:[%s6886 + $0x4e] sm:$0xff]
        %v6891 = vld [vmem:[%s6886 + $0x86] sm:$0xff]
        %v6892 = vld [vmem:[%s6886 + $0x8e] sm:$0xff]
        %v6893 = vld [vmem:[%s6886 + $0xc6] sm:$0xff]
        %v6894 = vld [vmem:[%s6886 + $0xce] sm:$0xff]
        %v6895 = vld [vmem:[%s6886 + $0x106] sm:$0xff]
        %v6896 = vld [vmem:[%s6886 + $0x10e] sm:$0xff]
        %v6897 = vld [vmem:[%s6886 + $0x146] sm:$0xff]
        %v6898 = vld [vmem:[%s6886 + $0x14e] sm:$0xff]
        %v6899 = vld [vmem:[%s6886 + $0x186] sm:$0xff]
        %v6900 = vld [vmem:[%s6886 + $0x18e] sm:$0xff]
        %v6901 = vld [vmem:[%s6886 + $0x1c6] sm:$0xff]
        %v6902 = vld [vmem:[%s6886 + $0x1ce] sm:$0xff]
        %v6903 = vld [vmem:[%s6886 + $0x206] sm:$0xff]
        %v6904 = vld [vmem:[%s6886 + $0x20e] sm:$0xff]
        %v6905 = vld [vmem:[%s6886 + $0x246] sm:$0xff]
        %v6906 = vld [vmem:[%s6886 + $0x24e] sm:$0xff]
        %v6907 = vld [vmem:[%s6886 + $0x286] sm:$0xff]
        %v6908 = vld [vmem:[%s6886 + $0x28e] sm:$0xff]
        %v6909 = vld [vmem:[%s6886 + $0x2c6] sm:$0xff]
        %v6910 = vld [vmem:[%s6886 + $0x2ce] sm:$0xff]
        %v6911 = vld [vmem:[%s6886 + $0x306] sm:$0xff]
        %v6912 = vld [vmem:[%s6886 + $0x30e] sm:$0xff]
        %v6913 = vld [vmem:[%s6886 + $0x346] sm:$0xff]
        %v6914 = vld [vmem:[%s6886 + $0x34e] sm:$0xff]
        %v6915 = vld [vmem:[%s6886 + $0x386] sm:$0xff]
        %v6916 = vld [vmem:[%s6886 + $0x38e] sm:$0xff]
        %v6917 = vld [vmem:[%s6886 + $0x3c6] sm:$0xff]
        %v6918 = vld [vmem:[%s6886 + $0x3ce] sm:$0xff]
        %v6919 = vld [vmem:[%s6886 + $0x18] sm:$0xff]
        %v6920 = vld [vmem:[%s6886 + $0x20] sm:$0xff]
        %v6921 = vld [vmem:[%s6886 + $0x58] sm:$0xff]
        %v6922 = vld [vmem:[%s6886 + $0x60] sm:$0xff]
        %v6923 = vld [vmem:[%s6886 + $0x98] sm:$0xff]
        %v6924 = vld [vmem:[%s6886 + $0xa0] sm:$0xff]
        %v6925 = vld [vmem:[%s6886 + $0xd8] sm:$0xff]
        %v6926 = vld [vmem:[%s6886 + $0xe0] sm:$0xff]
        %v6927 = vld [vmem:[%s6886 + $0x118] sm:$0xff]
        %v6928 = vld [vmem:[%s6886 + $0x120] sm:$0xff]
        %v6929 = vld [vmem:[%s6886 + $0x158] sm:$0xff]
        %v6930 = vld [vmem:[%s6886 + $0x160] sm:$0xff]
        %v6931 = vld [vmem:[%s6886 + $0x198] sm:$0xff]
        %v6932 = vld [vmem:[%s6886 + $0x1a0] sm:$0xff]
        %v6933 = vld [vmem:[%s6886 + $0x1d8] sm:$0xff]
        %v6934 = vld [vmem:[%s6886 + $0x1e0] sm:$0xff]
        %v6935 = vld [vmem:[%s6886 + $0x218] sm:$0xff]
        %v6936 = vld [vmem:[%s6886 + $0x220] sm:$0xff]
        %v6937 = vld [vmem:[%s6886 + $0x258] sm:$0xff]
        %v6938 = vld [vmem:[%s6886 + $0x260] sm:$0xff]
        %v6939 = vld [vmem:[%s6886 + $0x298] sm:$0xff]
        %v6940 = vld [vmem:[%s6886 + $0x2a0] sm:$0xff]
        %v6941 = vld [vmem:[%s6886 + $0x2d8] sm:$0xff]
        %v6942 = vld [vmem:[%s6886 + $0x2e0] sm:$0xff]
        %v6943 = vld [vmem:[%s6886 + $0x318] sm:$0xff]
        %v6944 = vld [vmem:[%s6886 + $0x320] sm:$0xff]
        %v6945 = vld [vmem:[%s6886 + $0x358] sm:$0xff]
        %v6946 = vld [vmem:[%s6886 + $0x360] sm:$0xff]
        %v6947 = vld [vmem:[%s6886 + $0x398] sm:$0xff]
        %v6948 = vld [vmem:[%s6886 + $0x3a0] sm:$0xff]
        %v6949 = vld [vmem:[%s6886 + $0x3d8] sm:$0xff]
        %v6950 = vld [vmem:[%s6886 + $0x3e0] sm:$0xff]
        %v6951 = vld [vmem:[%s6886 + $0x2a] sm:$0xff]
        %v6952 = vld [vmem:[%s6886 + $0x32] sm:$0xff]
        %v6953 = vld [vmem:[%s6886 + $0x6a] sm:$0xff]
        %v6954 = vld [vmem:[%s6886 + $0x72] sm:$0xff]
        %v6955 = vld [vmem:[%s6886 + $0xaa] sm:$0xff]
        %v6956 = vld [vmem:[%s6886 + $0xb2] sm:$0xff]
        %v6957 = vld [vmem:[%s6886 + $0xea] sm:$0xff]
        %v6958 = vld [vmem:[%s6886 + $0xf2] sm:$0xff]
        %v6959 = vld [vmem:[%s6886 + $0x12a] sm:$0xff]
        %v6960 = vld [vmem:[%s6886 + $0x132] sm:$0xff]
        %v6961 = vld [vmem:[%s6886 + $0x16a] sm:$0xff]
        %v6962 = vld [vmem:[%s6886 + $0x172] sm:$0xff]
        %v6963 = vld [vmem:[%s6886 + $0x1aa] sm:$0xff]
        %v6964 = vld [vmem:[%s6886 + $0x1b2] sm:$0xff]
        %v6965 = vld [vmem:[%s6886 + $0x1ea] sm:$0xff]
        %v6966 = vld [vmem:[%s6886 + $0x1f2] sm:$0xff]
        %v6967 = vld [vmem:[%s6886 + $0x22a] sm:$0xff]
        %v6968 = vld [vmem:[%s6886 + $0x232] sm:$0xff]
        %v6969 = vld [vmem:[%s6886 + $0x26a] sm:$0xff]
        %v6970 = vld [vmem:[%s6886 + $0x272] sm:$0xff]
        %v6971 = vld [vmem:[%s6886 + $0x2aa] sm:$0xff]
        %v6972 = vld [vmem:[%s6886 + $0x2b2] sm:$0xff]
        %v6973 = vld [vmem:[%s6886 + $0x2ea] sm:$0xff]
        %v6974 = vld [vmem:[%s6886 + $0x2f2] sm:$0xff]
        %v6975 = vld [vmem:[%s6886 + $0x32a] sm:$0xff]
        %v6976 = vld [vmem:[%s6886 + $0x332] sm:$0xff]
        %v6977 = vld [vmem:[%s6886 + $0x36a] sm:$0xff]
        %v6978 = vld [vmem:[%s6886 + $0x372] sm:$0xff]
        %v6979 = vld [vmem:[%s6886 + $0x3aa] sm:$0xff]
        %v6980 = vld [vmem:[%s6886 + $0x3b2] sm:$0xff]
        %v6981 = vld [vmem:[%s6886 + $0x3ea] sm:$0xff]
        %v6982 = vld [vmem:[%s6886 + $0x3f2] sm:$0xff]
        %7015 = vrot.lane.b32.xlu0 %v6724, 104
        %v7016 = vpop.permute.xlu0 %7015
        %7017 = vrot.lane.b32.xlu0 %v6725, 104
        %v7018 = vpop.permute.xlu0 %7017
        %7019 = vrot.lane.b32.xlu0 %v6726, 104
        %v7020 = vpop.permute.xlu0 %7019
        %7021 = vrot.lane.b32.xlu0 %v6727, 104
        %v7022 = vpop.permute.xlu0 %7021
        %7023 = vrot.lane.b32.xlu0 %v6728, 104
        %v7024 = vpop.permute.xlu0 %7023
        %7025 = vrot.lane.b32.xlu0 %v6729, 104
        %v7026 = vpop.permute.xlu0 %7025
        %7027 = vrot.lane.b32.xlu0 %v6730, 104
        %v7028 = vpop.permute.xlu0 %7027
        %7029 = vrot.lane.b32.xlu0 %v6731, 104
        %v7030 = vpop.permute.xlu0 %7029
        %7031 = vrot.lane.b32.xlu0 %v6732, 104
        %v7032 = vpop.permute.xlu0 %7031
        %7033 = vrot.lane.b32.xlu0 %v6733, 104
        %v7034 = vpop.permute.xlu0 %7033
        %7035 = vrot.lane.b32.xlu0 %v6734, 104
        %v7036 = vpop.permute.xlu0 %7035
        %7037 = vrot.lane.b32.xlu0 %v6735, 104
        %v7038 = vpop.permute.xlu0 %7037
        %7039 = vrot.lane.b32.xlu0 %v6736, 104
        %v7040 = vpop.permute.xlu0 %7039
        %7041 = vrot.lane.b32.xlu0 %v6737, 104
        %v7042 = vpop.permute.xlu0 %7041
        %7043 = vrot.lane.b32.xlu0 %v6738, 104
        %v7044 = vpop.permute.xlu0 %7043
        %7045 = vrot.lane.b32.xlu0 %v6739, 104
        %v7046 = vpop.permute.xlu0 %7045
        %7047 = vrot.lane.b32.xlu0 %v6740, 104
        %v7048 = vpop.permute.xlu0 %7047
        %7049 = vrot.lane.b32.xlu0 %v6741, 104
        %v7050 = vpop.permute.xlu0 %7049
        %7051 = vrot.lane.b32.xlu0 %v6742, 104
        %v7052 = vpop.permute.xlu0 %7051
        %7053 = vrot.lane.b32.xlu0 %v6743, 104
        %v7054 = vpop.permute.xlu0 %7053
        %7055 = vrot.lane.b32.xlu0 %v6744, 104
        %v7056 = vpop.permute.xlu0 %7055
        %7057 = vrot.lane.b32.xlu0 %v6745, 104
        %v7058 = vpop.permute.xlu0 %7057
        %7059 = vrot.lane.b32.xlu0 %v6746, 104
        %v7060 = vpop.permute.xlu0 %7059
        %7061 = vrot.lane.b32.xlu0 %v6747, 104
        %v7062 = vpop.permute.xlu0 %7061
        %7063 = vrot.lane.b32.xlu0 %v6748, 104
        %v7064 = vpop.permute.xlu0 %7063
        %7065 = vrot.lane.b32.xlu0 %v6749, 104
        %v7066 = vpop.permute.xlu0 %7065
        %7067 = vrot.lane.b32.xlu0 %v6750, 104
        %v7068 = vpop.permute.xlu0 %7067
        %7069 = vrot.lane.b32.xlu0 %v6751, 104
        %v7070 = vpop.permute.xlu0 %7069
        %7071 = vrot.lane.b32.xlu0 %v6752, 104
        %v7072 = vpop.permute.xlu0 %7071
        %7073 = vrot.lane.b32.xlu0 %v6753, 104
        %v7074 = vpop.permute.xlu0 %7073
        %7075 = vrot.lane.b32.xlu0 %v6754, 104
        %v7076 = vpop.permute.xlu0 %7075
        %7077 = vrot.lane.b32.xlu0 %v6755, 104
        %v7078 = vpop.permute.xlu0 %7077
        %7143 = vrot.lane.b32.xlu0 %v6756, 112
        %v7144 = vpop.permute.xlu0 %7143
        %7145 = vrot.lane.b32.xlu0 %v6757, 112
        %v7146 = vpop.permute.xlu0 %7145
        %7147 = vrot.lane.b32.xlu0 %v6758, 112
        %v7148 = vpop.permute.xlu0 %7147
        %7149 = vrot.lane.b32.xlu0 %v6759, 112
        %v7150 = vpop.permute.xlu0 %7149
        %7151 = vrot.lane.b32.xlu0 %v6760, 112
        %v7152 = vpop.permute.xlu0 %7151
        %7153 = vrot.lane.b32.xlu0 %v6761, 112
        %v7154 = vpop.permute.xlu0 %7153
        %7155 = vrot.lane.b32.xlu0 %v6762, 112
        %v7156 = vpop.permute.xlu0 %7155
        %7157 = vrot.lane.b32.xlu0 %v6763, 112
        %v7158 = vpop.permute.xlu0 %7157
        %7159 = vrot.lane.b32.xlu0 %v6764, 112
        %v7160 = vpop.permute.xlu0 %7159
        %7161 = vrot.lane.b32.xlu0 %v6765, 112
        %v7162 = vpop.permute.xlu0 %7161
        %7163 = vrot.lane.b32.xlu0 %v6766, 112
        %v7164 = vpop.permute.xlu0 %7163
        %7165 = vrot.lane.b32.xlu0 %v6767, 112
        %v7166 = vpop.permute.xlu0 %7165
        %7167 = vrot.lane.b32.xlu0 %v6768, 112
        %v7168 = vpop.permute.xlu0 %7167
        %7169 = vrot.lane.b32.xlu0 %v6769, 112
        %v7170 = vpop.permute.xlu0 %7169
        %7171 = vrot.lane.b32.xlu0 %v6770, 112
        %v7172 = vpop.permute.xlu0 %7171
        %7173 = vrot.lane.b32.xlu0 %v6771, 112
        %v7174 = vpop.permute.xlu0 %7173
        %7175 = vrot.lane.b32.xlu0 %v6772, 112
        %v7176 = vpop.permute.xlu0 %7175
        %7177 = vrot.lane.b32.xlu0 %v6773, 112
        %v7178 = vpop.permute.xlu0 %7177
        %7179 = vrot.lane.b32.xlu0 %v6774, 112
        %v7180 = vpop.permute.xlu0 %7179
        %7181 = vrot.lane.b32.xlu0 %v6775, 112
        %v7182 = vpop.permute.xlu0 %7181
        %7183 = vrot.lane.b32.xlu0 %v6776, 112
        %v7184 = vpop.permute.xlu0 %7183
        %7185 = vrot.lane.b32.xlu0 %v6777, 112
        %v7186 = vpop.permute.xlu0 %7185
        %7187 = vrot.lane.b32.xlu0 %v6778, 112
        %v7188 = vpop.permute.xlu0 %7187
        %7189 = vrot.lane.b32.xlu0 %v6779, 112
        %v7190 = vpop.permute.xlu0 %7189
        %7191 = vrot.lane.b32.xlu0 %v6780, 112
        %v7192 = vpop.permute.xlu0 %7191
        %7193 = vrot.lane.b32.xlu0 %v6781, 112
        %v7194 = vpop.permute.xlu0 %7193
        %7195 = vrot.lane.b32.xlu0 %v6782, 112
        %v7196 = vpop.permute.xlu0 %7195
        %7197 = vrot.lane.b32.xlu0 %v6783, 112
        %v7198 = vpop.permute.xlu0 %7197
        %7199 = vrot.lane.b32.xlu0 %v6784, 112
        %v7200 = vpop.permute.xlu0 %7199
        %7201 = vrot.lane.b32.xlu0 %v6785, 112
        %v7202 = vpop.permute.xlu0 %7201
        %7203 = vrot.lane.b32.xlu0 %v6786, 112
        %v7204 = vpop.permute.xlu0 %7203
        %7205 = vrot.lane.b32.xlu0 %v6787, 112
        %v7206 = vpop.permute.xlu0 %7205
        %7271 = vrot.lane.b32.xlu0 %v6788, 120
        %v7272 = vpop.permute.xlu0 %7271
        %7273 = vrot.lane.b32.xlu0 %v6789, 120
        %v7274 = vpop.permute.xlu0 %7273
        %7275 = vrot.lane.b32.xlu0 %v6790, 120
        %v7276 = vpop.permute.xlu0 %7275
        %7277 = vrot.lane.b32.xlu0 %v6791, 120
        %v7278 = vpop.permute.xlu0 %7277
        %7279 = vrot.lane.b32.xlu0 %v6792, 120
        %v7280 = vpop.permute.xlu0 %7279
        %7281 = vrot.lane.b32.xlu0 %v6793, 120
        %v7282 = vpop.permute.xlu0 %7281
        %7283 = vrot.lane.b32.xlu0 %v6794, 120
        %v7284 = vpop.permute.xlu0 %7283
        %7285 = vrot.lane.b32.xlu0 %v6795, 120
        %v7286 = vpop.permute.xlu0 %7285
        %7287 = vrot.lane.b32.xlu0 %v6796, 120
        %v7288 = vpop.permute.xlu0 %7287
        %7289 = vrot.lane.b32.xlu0 %v6797, 120
        %v7290 = vpop.permute.xlu0 %7289
        %7291 = vrot.lane.b32.xlu0 %v6798, 120
        %v7292 = vpop.permute.xlu0 %7291
        %7293 = vrot.lane.b32.xlu0 %v6799, 120
        %v7294 = vpop.permute.xlu0 %7293
        %7295 = vrot.lane.b32.xlu0 %v6800, 120
        %v7296 = vpop.permute.xlu0 %7295
        %7297 = vrot.lane.b32.xlu0 %v6801, 120
        %v7298 = vpop.permute.xlu0 %7297
        %7299 = vrot.lane.b32.xlu0 %v6802, 120
        %v7300 = vpop.permute.xlu0 %7299
        %7301 = vrot.lane.b32.xlu0 %v6803, 120
        %v7302 = vpop.permute.xlu0 %7301
        %7303 = vrot.lane.b32.xlu0 %v6804, 120
        %v7304 = vpop.permute.xlu0 %7303
        %7305 = vrot.lane.b32.xlu0 %v6805, 120
        %v7306 = vpop.permute.xlu0 %7305
        %7307 = vrot.lane.b32.xlu0 %v6806, 120
        %v7308 = vpop.permute.xlu0 %7307
        %7309 = vrot.lane.b32.xlu0 %v6807, 120
        %v7310 = vpop.permute.xlu0 %7309
        %7311 = vrot.lane.b32.xlu0 %v6808, 120
        %v7312 = vpop.permute.xlu0 %7311
        %7313 = vrot.lane.b32.xlu0 %v6809, 120
        %v7314 = vpop.permute.xlu0 %7313
        %7315 = vrot.lane.b32.xlu0 %v6810, 120
        %v7316 = vpop.permute.xlu0 %7315
        %7317 = vrot.lane.b32.xlu0 %v6811, 120
        %v7318 = vpop.permute.xlu0 %7317
        %7319 = vrot.lane.b32.xlu0 %v6812, 120
        %v7320 = vpop.permute.xlu0 %7319
        %7321 = vrot.lane.b32.xlu0 %v6813, 120
        %v7322 = vpop.permute.xlu0 %7321
        %7323 = vrot.lane.b32.xlu0 %v6814, 120
        %v7324 = vpop.permute.xlu0 %7323
        %7325 = vrot.lane.b32.xlu0 %v6815, 120
        %v7326 = vpop.permute.xlu0 %7325
        %7327 = vrot.lane.b32.xlu0 %v6816, 120
        %v7328 = vpop.permute.xlu0 %7327
        %7329 = vrot.lane.b32.xlu0 %v6817, 120
        %v7330 = vpop.permute.xlu0 %7329
        %7331 = vrot.lane.b32.xlu0 %v6818, 120
        %v7332 = vpop.permute.xlu0 %7331
        %7333 = vrot.lane.b32.xlu0 %v6819, 120
        %v7334 = vpop.permute.xlu0 %7333
        %7367 = vrot.lane.b32.xlu0 %v752, 8
        %v7368 = vpop.permute.xlu0 %7367
        %7369 = vrot.lane.b32.xlu0 %v753, 8
        %v7370 = vpop.permute.xlu0 %7369
        %7371 = vrot.lane.b32.xlu0 %v754, 8
        %v7372 = vpop.permute.xlu0 %7371
        %7373 = vrot.lane.b32.xlu0 %v755, 8
        %v7374 = vpop.permute.xlu0 %7373
        %7375 = vrot.lane.b32.xlu0 %v756, 8
        %v7376 = vpop.permute.xlu0 %7375
        %7377 = vrot.lane.b32.xlu0 %v757, 8
        %v7378 = vpop.permute.xlu0 %7377
        %7379 = vrot.lane.b32.xlu0 %v758, 8
        %v7380 = vpop.permute.xlu0 %7379
        %7381 = vrot.lane.b32.xlu0 %v759, 8
        %v7382 = vpop.permute.xlu0 %7381
        %7383 = vrot.lane.b32.xlu0 %v760, 8
        %v7384 = vpop.permute.xlu0 %7383
        %7385 = vrot.lane.b32.xlu0 %v761, 8
        %v7386 = vpop.permute.xlu0 %7385
        %7387 = vrot.lane.b32.xlu0 %v762, 8
        %v7388 = vpop.permute.xlu0 %7387
        %7389 = vrot.lane.b32.xlu0 %v763, 8
        %v7390 = vpop.permute.xlu0 %7389
        %7391 = vrot.lane.b32.xlu0 %v764, 8
        %v7392 = vpop.permute.xlu0 %7391
        %7393 = vrot.lane.b32.xlu0 %v765, 8
        %v7394 = vpop.permute.xlu0 %7393
        %7395 = vrot.lane.b32.xlu0 %v766, 8
        %v7396 = vpop.permute.xlu0 %7395
        %7397 = vrot.lane.b32.xlu0 %v767, 8
        %v7398 = vpop.permute.xlu0 %7397
        %7399 = vrot.lane.b32.xlu0 %v768, 8
        %v7400 = vpop.permute.xlu0 %7399
        %7401 = vrot.lane.b32.xlu0 %v769, 8
        %v7402 = vpop.permute.xlu0 %7401
        %7403 = vrot.lane.b32.xlu0 %v770, 8
        %v7404 = vpop.permute.xlu0 %7403
        %7405 = vrot.lane.b32.xlu0 %v771, 8
        %v7406 = vpop.permute.xlu0 %7405
        %7407 = vrot.lane.b32.xlu0 %v772, 8
        %v7408 = vpop.permute.xlu0 %7407
        %7409 = vrot.lane.b32.xlu0 %v773, 8
        %v7410 = vpop.permute.xlu0 %7409
        %7411 = vrot.lane.b32.xlu0 %v774, 8
        %v7412 = vpop.permute.xlu0 %7411
        %7413 = vrot.lane.b32.xlu0 %v775, 8
        %v7414 = vpop.permute.xlu0 %7413
        %7415 = vrot.lane.b32.xlu0 %v776, 8
        %v7416 = vpop.permute.xlu0 %7415
        %7417 = vrot.lane.b32.xlu0 %v777, 8
        %v7418 = vpop.permute.xlu0 %7417
        %7419 = vrot.lane.b32.xlu0 %v778, 8
        %v7420 = vpop.permute.xlu0 %7419
        %7421 = vrot.lane.b32.xlu0 %v779, 8
        %v7422 = vpop.permute.xlu0 %7421
        %7423 = vrot.lane.b32.xlu0 %v780, 8
        %v7424 = vpop.permute.xlu0 %7423
        %7425 = vrot.lane.b32.xlu0 %v781, 8
        %v7426 = vpop.permute.xlu0 %7425
        %7427 = vrot.lane.b32.xlu0 %v782, 8
        %v7428 = vpop.permute.xlu0 %7427
        %7429 = vrot.lane.b32.xlu0 %v783, 8
        %v7430 = vpop.permute.xlu0 %7429
        %7495 = vrot.lane.b32.xlu0 %v6852, 16
        %v7496 = vpop.permute.xlu0 %7495
        %7497 = vrot.lane.b32.xlu0 %v6853, 16
        %v7498 = vpop.permute.xlu0 %7497
        %7499 = vrot.lane.b32.xlu0 %v6854, 16
        %v7500 = vpop.permute.xlu0 %7499
        %7501 = vrot.lane.b32.xlu0 %v6855, 16
        %v7502 = vpop.permute.xlu0 %7501
        %7503 = vrot.lane.b32.xlu0 %v6856, 16
        %v7504 = vpop.permute.xlu0 %7503
        %7505 = vrot.lane.b32.xlu0 %v6857, 16
        %v7506 = vpop.permute.xlu0 %7505
        %7507 = vrot.lane.b32.xlu0 %v6858, 16
        %v7508 = vpop.permute.xlu0 %7507
        %7509 = vrot.lane.b32.xlu0 %v6859, 16
        %v7510 = vpop.permute.xlu0 %7509
        %7511 = vrot.lane.b32.xlu0 %v6860, 16
        %v7512 = vpop.permute.xlu0 %7511
        %7513 = vrot.lane.b32.xlu0 %v6861, 16
        %v7514 = vpop.permute.xlu0 %7513
        %7515 = vrot.lane.b32.xlu0 %v6862, 16
        %v7516 = vpop.permute.xlu0 %7515
        %7517 = vrot.lane.b32.xlu0 %v6863, 16
        %v7518 = vpop.permute.xlu0 %7517
        %7519 = vrot.lane.b32.xlu0 %v6864, 16
        %v7520 = vpop.permute.xlu0 %7519
        %7521 = vrot.lane.b32.xlu0 %v6865, 16
        %v7522 = vpop.permute.xlu0 %7521
        %7523 = vrot.lane.b32.xlu0 %v6866, 16
        %v7524 = vpop.permute.xlu0 %7523
        %7525 = vrot.lane.b32.xlu0 %v6867, 16
        %v7526 = vpop.permute.xlu0 %7525
        %7527 = vrot.lane.b32.xlu0 %v6868, 16
        %v7528 = vpop.permute.xlu0 %7527
        %7529 = vrot.lane.b32.xlu0 %v6869, 16
        %v7530 = vpop.permute.xlu0 %7529
        %7531 = vrot.lane.b32.xlu0 %v6870, 16
        %v7532 = vpop.permute.xlu0 %7531
        %7533 = vrot.lane.b32.xlu0 %v6871, 16
        %v7534 = vpop.permute.xlu0 %7533
        %7535 = vrot.lane.b32.xlu0 %v6872, 16
        %v7536 = vpop.permute.xlu0 %7535
        %7537 = vrot.lane.b32.xlu0 %v6873, 16
        %v7538 = vpop.permute.xlu0 %7537
        %7539 = vrot.lane.b32.xlu0 %v6874, 16
        %v7540 = vpop.permute.xlu0 %7539
        %7541 = vrot.lane.b32.xlu0 %v6875, 16
        %v7542 = vpop.permute.xlu0 %7541
        %7543 = vrot.lane.b32.xlu0 %v6876, 16
        %v7544 = vpop.permute.xlu0 %7543
        %7545 = vrot.lane.b32.xlu0 %v6877, 16
        %v7546 = vpop.permute.xlu0 %7545
        %7547 = vrot.lane.b32.xlu0 %v6878, 16
        %v7548 = vpop.permute.xlu0 %7547
        %7549 = vrot.lane.b32.xlu0 %v6879, 16
        %v7550 = vpop.permute.xlu0 %7549
        %7551 = vrot.lane.b32.xlu0 %v6880, 16
        %v7552 = vpop.permute.xlu0 %7551
        %7553 = vrot.lane.b32.xlu0 %v6881, 16
        %v7554 = vpop.permute.xlu0 %7553
        %7555 = vrot.lane.b32.xlu0 %v6882, 16
        %v7556 = vpop.permute.xlu0 %7555
        %7557 = vrot.lane.b32.xlu0 %v6883, 16
        %v7558 = vpop.permute.xlu0 %7557
        %7623 = vrot.lane.b32.xlu0 %v6887, 24
        %v7624 = vpop.permute.xlu0 %7623
        %7625 = vrot.lane.b32.xlu0 %v6888, 24
        %v7626 = vpop.permute.xlu0 %7625
        %7627 = vrot.lane.b32.xlu0 %v6889, 24
        %v7628 = vpop.permute.xlu0 %7627
        %7629 = vrot.lane.b32.xlu0 %v6890, 24
        %v7630 = vpop.permute.xlu0 %7629
        %7631 = vrot.lane.b32.xlu0 %v6891, 24
        %v7632 = vpop.permute.xlu0 %7631
        %7633 = vrot.lane.b32.xlu0 %v6892, 24
        %v7634 = vpop.permute.xlu0 %7633
        %7635 = vrot.lane.b32.xlu0 %v6893, 24
        %v7636 = vpop.permute.xlu0 %7635
        %7637 = vrot.lane.b32.xlu0 %v6894, 24
        %v7638 = vpop.permute.xlu0 %7637
        %7639 = vrot.lane.b32.xlu0 %v6895, 24
        %v7640 = vpop.permute.xlu0 %7639
        %7641 = vrot.lane.b32.xlu0 %v6896, 24
        %v7642 = vpop.permute.xlu0 %7641
        %7643 = vrot.lane.b32.xlu0 %v6897, 24
        %v7644 = vpop.permute.xlu0 %7643
        %7645 = vrot.lane.b32.xlu0 %v6898, 24
        %v7646 = vpop.permute.xlu0 %7645
        %7647 = vrot.lane.b32.xlu0 %v6899, 24
        %v7648 = vpop.permute.xlu0 %7647
        %7649 = vrot.lane.b32.xlu0 %v6900, 24
        %v7650 = vpop.permute.xlu0 %7649
        %7651 = vrot.lane.b32.xlu0 %v6901, 24
        %v7652 = vpop.permute.xlu0 %7651
        %7653 = vrot.lane.b32.xlu0 %v6902, 24
        %v7654 = vpop.permute.xlu0 %7653
        %7655 = vrot.lane.b32.xlu0 %v6903, 24
        %v7656 = vpop.permute.xlu0 %7655
        %7657 = vrot.lane.b32.xlu0 %v6904, 24
        %v7658 = vpop.permute.xlu0 %7657
        %7659 = vrot.lane.b32.xlu0 %v6905, 24
        %v7660 = vpop.permute.xlu0 %7659
        %7661 = vrot.lane.b32.xlu0 %v6906, 24
        %v7662 = vpop.permute.xlu0 %7661
        %7663 = vrot.lane.b32.xlu0 %v6907, 24
        %v7664 = vpop.permute.xlu0 %7663
        %7665 = vrot.lane.b32.xlu0 %v6908, 24
        %v7666 = vpop.permute.xlu0 %7665
        %7667 = vrot.lane.b32.xlu0 %v6909, 24
        %v7668 = vpop.permute.xlu0 %7667
        %7669 = vrot.lane.b32.xlu0 %v6910, 24
        %v7670 = vpop.permute.xlu0 %7669
        %7671 = vrot.lane.b32.xlu0 %v6911, 24
        %v7672 = vpop.permute.xlu0 %7671
        %7673 = vrot.lane.b32.xlu0 %v6912, 24
        %v7674 = vpop.permute.xlu0 %7673
        %7675 = vrot.lane.b32.xlu0 %v6913, 24
        %v7676 = vpop.permute.xlu0 %7675
        %7677 = vrot.lane.b32.xlu0 %v6914, 24
        %v7678 = vpop.permute.xlu0 %7677
        %7679 = vrot.lane.b32.xlu0 %v6915, 24
        %v7680 = vpop.permute.xlu0 %7679
        %7681 = vrot.lane.b32.xlu0 %v6916, 24
        %v7682 = vpop.permute.xlu0 %7681
        %7683 = vrot.lane.b32.xlu0 %v6917, 24
        %v7684 = vpop.permute.xlu0 %7683
        %7685 = vrot.lane.b32.xlu0 %v6918, 24
        %v7686 = vpop.permute.xlu0 %7685
        %7751 = vrot.lane.b32.xlu0 %v6919, 32
        %v7752 = vpop.permute.xlu0 %7751
        %7753 = vrot.lane.b32.xlu0 %v6920, 32
        %v7754 = vpop.permute.xlu0 %7753
        %7755 = vrot.lane.b32.xlu0 %v6921, 32
        %v7756 = vpop.permute.xlu0 %7755
        %7757 = vrot.lane.b32.xlu0 %v6922, 32
        %v7758 = vpop.permute.xlu0 %7757
        %7759 = vrot.lane.b32.xlu0 %v6923, 32
        %v7760 = vpop.permute.xlu0 %7759
        %7761 = vrot.lane.b32.xlu0 %v6924, 32
        %v7762 = vpop.permute.xlu0 %7761
        %7763 = vrot.lane.b32.xlu0 %v6925, 32
        %v7764 = vpop.permute.xlu0 %7763
        %7765 = vrot.lane.b32.xlu0 %v6926, 32
        %v7766 = vpop.permute.xlu0 %7765
        %7767 = vrot.lane.b32.xlu0 %v6927, 32
        %v7768 = vpop.permute.xlu0 %7767
        %7769 = vrot.lane.b32.xlu0 %v6928, 32
        %v7770 = vpop.permute.xlu0 %7769
        %7771 = vrot.lane.b32.xlu0 %v6929, 32
        %v7772 = vpop.permute.xlu0 %7771
        %7773 = vrot.lane.b32.xlu0 %v6930, 32
        %v7774 = vpop.permute.xlu0 %7773
        %7775 = vrot.lane.b32.xlu0 %v6931, 32
        %v7776 = vpop.permute.xlu0 %7775
        %7777 = vrot.lane.b32.xlu0 %v6932, 32
        %v7778 = vpop.permute.xlu0 %7777
        %7779 = vrot.lane.b32.xlu0 %v6933, 32
        %v7780 = vpop.permute.xlu0 %7779
        %7781 = vrot.lane.b32.xlu0 %v6934, 32
        %v7782 = vpop.permute.xlu0 %7781
        %7783 = vrot.lane.b32.xlu0 %v6935, 32
        %v7784 = vpop.permute.xlu0 %7783
        %7785 = vrot.lane.b32.xlu0 %v6936, 32
        %v7786 = vpop.permute.xlu0 %7785
        %7787 = vrot.lane.b32.xlu0 %v6937, 32
        %v7788 = vpop.permute.xlu0 %7787
        %7789 = vrot.lane.b32.xlu0 %v6938, 32
        %v7790 = vpop.permute.xlu0 %7789
        %7791 = vrot.lane.b32.xlu0 %v6939, 32
        %v7792 = vpop.permute.xlu0 %7791
        %7793 = vrot.lane.b32.xlu0 %v6940, 32
        %v7794 = vpop.permute.xlu0 %7793
        %7795 = vrot.lane.b32.xlu0 %v6941, 32
        %v7796 = vpop.permute.xlu0 %7795
        %7797 = vrot.lane.b32.xlu0 %v6942, 32
        %v7798 = vpop.permute.xlu0 %7797
        %7799 = vrot.lane.b32.xlu0 %v6943, 32
        %v7800 = vpop.permute.xlu0 %7799
        %7801 = vrot.lane.b32.xlu0 %v6944, 32
        %v7802 = vpop.permute.xlu0 %7801
        %7803 = vrot.lane.b32.xlu0 %v6945, 32
        %v7804 = vpop.permute.xlu0 %7803
        %7805 = vrot.lane.b32.xlu0 %v6946, 32
        %v7806 = vpop.permute.xlu0 %7805
        %7807 = vrot.lane.b32.xlu0 %v6947, 32
        %v7808 = vpop.permute.xlu0 %7807
        %7809 = vrot.lane.b32.xlu0 %v6948, 32
        %v7810 = vpop.permute.xlu0 %7809
        %7811 = vrot.lane.b32.xlu0 %v6949, 32
        %v7812 = vpop.permute.xlu0 %7811
        %7813 = vrot.lane.b32.xlu0 %v6950, 32
        %v7814 = vpop.permute.xlu0 %7813
        %7879 = vrot.lane.b32.xlu0 %v6951, 40
        %v7880 = vpop.permute.xlu0 %7879
        %7881 = vrot.lane.b32.xlu0 %v6952, 40
        %v7882 = vpop.permute.xlu0 %7881
        %7883 = vrot.lane.b32.xlu0 %v6953, 40
        %v7884 = vpop.permute.xlu0 %7883
        %7885 = vrot.lane.b32.xlu0 %v6954, 40
        %v7886 = vpop.permute.xlu0 %7885
        %7887 = vrot.lane.b32.xlu0 %v6955, 40
        %v7888 = vpop.permute.xlu0 %7887
        %7889 = vrot.lane.b32.xlu0 %v6956, 40
        %v7890 = vpop.permute.xlu0 %7889
        %7891 = vrot.lane.b32.xlu0 %v6957, 40
        %v7892 = vpop.permute.xlu0 %7891
        %7893 = vrot.lane.b32.xlu0 %v6958, 40
        %v7894 = vpop.permute.xlu0 %7893
        %7895 = vrot.lane.b32.xlu0 %v6959, 40
        %v7896 = vpop.permute.xlu0 %7895
        %7897 = vrot.lane.b32.xlu0 %v6960, 40
        %v7898 = vpop.permute.xlu0 %7897
        %7899 = vrot.lane.b32.xlu0 %v6961, 40
        %v7900 = vpop.permute.xlu0 %7899
        %7901 = vrot.lane.b32.xlu0 %v6962, 40
        %v7902 = vpop.permute.xlu0 %7901
        %7903 = vrot.lane.b32.xlu0 %v6963, 40
        %v7904 = vpop.permute.xlu0 %7903
        %7905 = vrot.lane.b32.xlu0 %v6964, 40
        %v7906 = vpop.permute.xlu0 %7905
        %7907 = vrot.lane.b32.xlu0 %v6965, 40
        %v7908 = vpop.permute.xlu0 %7907
        %7909 = vrot.lane.b32.xlu0 %v6966, 40
        %v7910 = vpop.permute.xlu0 %7909
        %7911 = vrot.lane.b32.xlu0 %v6967, 40
        %v7912 = vpop.permute.xlu0 %7911
        %7913 = vrot.lane.b32.xlu0 %v6968, 40
        %v7914 = vpop.permute.xlu0 %7913
        %7915 = vrot.lane.b32.xlu0 %v6969, 40
        %v7916 = vpop.permute.xlu0 %7915
        %7917 = vrot.lane.b32.xlu0 %v6970, 40
        %v7918 = vpop.permute.xlu0 %7917
        %7919 = vrot.lane.b32.xlu0 %v6971, 40
        %v7920 = vpop.permute.xlu0 %7919
        %7921 = vrot.lane.b32.xlu0 %v6972, 40
        %v7922 = vpop.permute.xlu0 %7921
        %7923 = vrot.lane.b32.xlu0 %v6973, 40
        %v7924 = vpop.permute.xlu0 %7923
        %7925 = vrot.lane.b32.xlu0 %v6974, 40
        %v7926 = vpop.permute.xlu0 %7925
        %7927 = vrot.lane.b32.xlu0 %v6975, 40
        %v7928 = vpop.permute.xlu0 %7927
        %7929 = vrot.lane.b32.xlu0 %v6976, 40
        %v7930 = vpop.permute.xlu0 %7929
        %7931 = vrot.lane.b32.xlu0 %v6977, 40
        %v7932 = vpop.permute.xlu0 %7931
        %7933 = vrot.lane.b32.xlu0 %v6978, 40
        %v7934 = vpop.permute.xlu0 %7933
        %7935 = vrot.lane.b32.xlu0 %v6979, 40
        %v7936 = vpop.permute.xlu0 %7935
        %7937 = vrot.lane.b32.xlu0 %v6980, 40
        %v7938 = vpop.permute.xlu0 %7937
        %7939 = vrot.lane.b32.xlu0 %v6981, 40
        %v7940 = vpop.permute.xlu0 %7939
        %7941 = vrot.lane.b32.xlu0 %v6982, 40
        %v7942 = vpop.permute.xlu0 %7941
        %v7975 = vsel %vm2198, %v7016, %v7144
        %v7976 = vsel %vm2198, %v7018, %v7146
        %v7977 = vsel %vm2198, %v7020, %v7148
        %v7978 = vsel %vm2198, %v7022, %v7150
        %v7979 = vsel %vm2198, %v7024, %v7152
        %v7980 = vsel %vm2198, %v7026, %v7154
        %v7981 = vsel %vm2198, %v7028, %v7156
        %v7982 = vsel %vm2198, %v7030, %v7158
        %v7983 = vsel %vm2198, %v7032, %v7160
        %v7984 = vsel %vm2198, %v7034, %v7162
        %v7985 = vsel %vm2198, %v7036, %v7164
        %v7986 = vsel %vm2198, %v7038, %v7166
        %v7987 = vsel %vm2198, %v7040, %v7168
        %v7988 = vsel %vm2198, %v7042, %v7170
        %v7989 = vsel %vm2198, %v7044, %v7172
        %v7990 = vsel %vm2198, %v7046, %v7174
        %v7991 = vsel %vm2198, %v7048, %v7176
        %v7992 = vsel %vm2198, %v7050, %v7178
        %v7993 = vsel %vm2198, %v7052, %v7180
        %v7994 = vsel %vm2198, %v7054, %v7182
        %v7995 = vsel %vm2198, %v7056, %v7184
        %v7996 = vsel %vm2198, %v7058, %v7186
        %v7997 = vsel %vm2198, %v7060, %v7188
        %v7998 = vsel %vm2198, %v7062, %v7190
        %v7999 = vsel %vm2198, %v7064, %v7192
        %v8000 = vsel %vm2198, %v7066, %v7194
        %v8001 = vsel %vm2198, %v7068, %v7196
        %v8002 = vsel %vm2198, %v7070, %v7198
        %v8003 = vsel %vm2198, %v7072, %v7200
        %v8004 = vsel %vm2198, %v7074, %v7202
        %v8005 = vsel %vm2198, %v7076, %v7204
        %v8006 = vsel %vm2198, %v7078, %v7206
        %v8007 = vsel %vm2231, %v7975, %v7272
        %v8008 = vsel %vm2231, %v7976, %v7274
        %v8009 = vsel %vm2231, %v7977, %v7276
        %v8010 = vsel %vm2231, %v7978, %v7278
        %v8011 = vsel %vm2231, %v7979, %v7280
        %v8012 = vsel %vm2231, %v7980, %v7282
        %v8013 = vsel %vm2231, %v7981, %v7284
        %v8014 = vsel %vm2231, %v7982, %v7286
        %v8015 = vsel %vm2231, %v7983, %v7288
        %v8016 = vsel %vm2231, %v7984, %v7290
        %v8017 = vsel %vm2231, %v7985, %v7292
        %v8018 = vsel %vm2231, %v7986, %v7294
        %v8019 = vsel %vm2231, %v7987, %v7296
        %v8020 = vsel %vm2231, %v7988, %v7298
        %v8021 = vsel %vm2231, %v7989, %v7300
        %v8022 = vsel %vm2231, %v7990, %v7302
        %v8023 = vsel %vm2231, %v7991, %v7304
        %v8024 = vsel %vm2231, %v7992, %v7306
        %v8025 = vsel %vm2231, %v7993, %v7308
        %v8026 = vsel %vm2231, %v7994, %v7310
        %v8027 = vsel %vm2231, %v7995, %v7312
        %v8028 = vsel %vm2231, %v7996, %v7314
        %v8029 = vsel %vm2231, %v7997, %v7316
        %v8030 = vsel %vm2231, %v7998, %v7318
        %v8031 = vsel %vm2231, %v7999, %v7320
        %v8032 = vsel %vm2231, %v8000, %v7322
        %v8033 = vsel %vm2231, %v8001, %v7324
        %v8034 = vsel %vm2231, %v8002, %v7326
        %v8035 = vsel %vm2231, %v8003, %v7328
        %v8036 = vsel %vm2231, %v8004, %v7330
        %v8037 = vsel %vm2231, %v8005, %v7332
        %v8038 = vsel %vm2231, %v8006, %v7334
        %v8039 = vsel %vm2264, %v8007, %v6820
        %v8040 = vsel %vm2264, %v8008, %v6821
        %v8041 = vsel %vm2264, %v8009, %v6822
        %v8042 = vsel %vm2264, %v8010, %v6823
        %v8043 = vsel %vm2264, %v8011, %v6824
        %v8044 = vsel %vm2264, %v8012, %v6825
        %v8045 = vsel %vm2264, %v8013, %v6826
        %v8046 = vsel %vm2264, %v8014, %v6827
        %v8047 = vsel %vm2264, %v8015, %v6828
        %v8048 = vsel %vm2264, %v8016, %v6829
        %v8049 = vsel %vm2264, %v8017, %v6830
        %v8050 = vsel %vm2264, %v8018, %v6831
        %v8051 = vsel %vm2264, %v8019, %v6832
        %v8052 = vsel %vm2264, %v8020, %v6833
        %v8053 = vsel %vm2264, %v8021, %v6834
        %v8054 = vsel %vm2264, %v8022, %v6835
        %v8055 = vsel %vm2264, %v8023, %v6836
        %v8056 = vsel %vm2264, %v8024, %v6837
        %v8057 = vsel %vm2264, %v8025, %v6838
        %v8058 = vsel %vm2264, %v8026, %v6839
        %v8059 = vsel %vm2264, %v8027, %v6840
        %v8060 = vsel %vm2264, %v8028, %v6841
        %v8061 = vsel %vm2264, %v8029, %v6842
        %v8062 = vsel %vm2264, %v8030, %v6843
        %v8063 = vsel %vm2264, %v8031, %v6844
        %v8064 = vsel %vm2264, %v8032, %v6845
        %v8065 = vsel %vm2264, %v8033, %v6846
        %v8066 = vsel %vm2264, %v8034, %v6847
        %v8067 = vsel %vm2264, %v8035, %v6848
        %v8068 = vsel %vm2264, %v8036, %v6849
        %v8069 = vsel %vm2264, %v8037, %v6850
        %v8070 = vsel %vm2264, %v8038, %v6851
        %v8071 = vsel %vm2297, %v8039, %v7368
        %v8072 = vsel %vm2297, %v8040, %v7370
        %v8073 = vsel %vm2297, %v8041, %v7372
        %v8074 = vsel %vm2297, %v8042, %v7374
        %v8075 = vsel %vm2297, %v8043, %v7376
        %v8076 = vsel %vm2297, %v8044, %v7378
        %v8077 = vsel %vm2297, %v8045, %v7380
        %v8078 = vsel %vm2297, %v8046, %v7382
        %v8079 = vsel %vm2297, %v8047, %v7384
        %v8080 = vsel %vm2297, %v8048, %v7386
        %v8081 = vsel %vm2297, %v8049, %v7388
        %v8082 = vsel %vm2297, %v8050, %v7390
        %v8083 = vsel %vm2297, %v8051, %v7392
        %v8084 = vsel %vm2297, %v8052, %v7394
        %v8085 = vsel %vm2297, %v8053, %v7396
        %v8086 = vsel %vm2297, %v8054, %v7398
        %v8087 = vsel %vm2297, %v8055, %v7400
        %v8088 = vsel %vm2297, %v8056, %v7402
        %v8089 = vsel %vm2297, %v8057, %v7404
        %v8090 = vsel %vm2297, %v8058, %v7406
        %v8091 = vsel %vm2297, %v8059, %v7408
        %v8092 = vsel %vm2297, %v8060, %v7410
        %v8093 = vsel %vm2297, %v8061, %v7412
        %v8094 = vsel %vm2297, %v8062, %v7414
        %v8095 = vsel %vm2297, %v8063, %v7416
        %v8096 = vsel %vm2297, %v8064, %v7418
        %v8097 = vsel %vm2297, %v8065, %v7420
        %v8098 = vsel %vm2297, %v8066, %v7422
        %v8099 = vsel %vm2297, %v8067, %v7424
        %v8100 = vsel %vm2297, %v8068, %v7426
        %v8101 = vsel %vm2297, %v8069, %v7428
        %v8102 = vsel %vm2297, %v8070, %v7430
        %v8103 = vsel %vm2330, %v8071, %v7496
        %v8104 = vsel %vm2330, %v8072, %v7498
        %v8105 = vsel %vm2330, %v8073, %v7500
        %v8106 = vsel %vm2330, %v8074, %v7502
        %v8107 = vsel %vm2330, %v8075, %v7504
        %v8108 = vsel %vm2330, %v8076, %v7506
        %v8109 = vsel %vm2330, %v8077, %v7508
        %v8110 = vsel %vm2330, %v8078, %v7510
        %v8111 = vsel %vm2330, %v8079, %v7512
        %v8112 = vsel %vm2330, %v8080, %v7514
        %v8113 = vsel %vm2330, %v8081, %v7516
        %v8114 = vsel %vm2330, %v8082, %v7518
        %v8115 = vsel %vm2330, %v8083, %v7520
        %v8116 = vsel %vm2330, %v8084, %v7522
        %v8117 = vsel %vm2330, %v8085, %v7524
        %v8118 = vsel %vm2330, %v8086, %v7526
        %v8119 = vsel %vm2330, %v8087, %v7528
        %v8120 = vsel %vm2330, %v8088, %v7530
        %v8121 = vsel %vm2330, %v8089, %v7532
        %v8122 = vsel %vm2330, %v8090, %v7534
        %v8123 = vsel %vm2330, %v8091, %v7536
        %v8124 = vsel %vm2330, %v8092, %v7538
        %v8125 = vsel %vm2330, %v8093, %v7540
        %v8126 = vsel %vm2330, %v8094, %v7542
        %v8127 = vsel %vm2330, %v8095, %v7544
        %v8128 = vsel %vm2330, %v8096, %v7546
        %v8129 = vsel %vm2330, %v8097, %v7548
        %v8130 = vsel %vm2330, %v8098, %v7550
        %v8131 = vsel %vm2330, %v8099, %v7552
        %v8132 = vsel %vm2330, %v8100, %v7554
        %v8133 = vsel %vm2330, %v8101, %v7556
        %v8134 = vsel %vm2330, %v8102, %v7558
        %v8135 = vsel %vm2363, %v8103, %v7624
        %v8136 = vsel %vm2363, %v8104, %v7626
        %v8137 = vsel %vm2363, %v8105, %v7628
        %v8138 = vsel %vm2363, %v8106, %v7630
        %v8139 = vsel %vm2363, %v8107, %v7632
        %v8140 = vsel %vm2363, %v8108, %v7634
        %v8141 = vsel %vm2363, %v8109, %v7636
        %v8142 = vsel %vm2363, %v8110, %v7638
        %v8143 = vsel %vm2363, %v8111, %v7640
        %v8144 = vsel %vm2363, %v8112, %v7642
        %v8145 = vsel %vm2363, %v8113, %v7644
        %v8146 = vsel %vm2363, %v8114, %v7646
        %v8147 = vsel %vm2363, %v8115, %v7648
        %v8148 = vsel %vm2363, %v8116, %v7650
        %v8149 = vsel %vm2363, %v8117, %v7652
        %v8150 = vsel %vm2363, %v8118, %v7654
        %v8151 = vsel %vm2363, %v8119, %v7656
        %v8152 = vsel %vm2363, %v8120, %v7658
        %v8153 = vsel %vm2363, %v8121, %v7660
        %v8154 = vsel %vm2363, %v8122, %v7662
        %v8155 = vsel %vm2363, %v8123, %v7664
        %v8156 = vsel %vm2363, %v8124, %v7666
        %v8157 = vsel %vm2363, %v8125, %v7668
        %v8158 = vsel %vm2363, %v8126, %v7670
        %v8159 = vsel %vm2363, %v8127, %v7672
        %v8160 = vsel %vm2363, %v8128, %v7674
        %v8161 = vsel %vm2363, %v8129, %v7676
        %v8162 = vsel %vm2363, %v8130, %v7678
        %v8163 = vsel %vm2363, %v8131, %v7680
        %v8164 = vsel %vm2363, %v8132, %v7682
        %v8165 = vsel %vm2363, %v8133, %v7684
        %v8166 = vsel %vm2363, %v8134, %v7686
        %v8167 = vsel %vm2396, %v8135, %v7752
        %v8168 = vsel %vm2396, %v8136, %v7754
        %v8169 = vsel %vm2396, %v8137, %v7756
        %v8170 = vsel %vm2396, %v8138, %v7758
        %v8171 = vsel %vm2396, %v8139, %v7760
        %v8172 = vsel %vm2396, %v8140, %v7762
        %v8173 = vsel %vm2396, %v8141, %v7764
        %v8174 = vsel %vm2396, %v8142, %v7766
        %v8175 = vsel %vm2396, %v8143, %v7768
        %v8176 = vsel %vm2396, %v8144, %v7770
        %v8177 = vsel %vm2396, %v8145, %v7772
        %v8178 = vsel %vm2396, %v8146, %v7774
        %v8179 = vsel %vm2396, %v8147, %v7776
        %v8180 = vsel %vm2396, %v8148, %v7778
        %v8181 = vsel %vm2396, %v8149, %v7780
        %v8182 = vsel %vm2396, %v8150, %v7782
        %v8183 = vsel %vm2396, %v8151, %v7784
        %v8184 = vsel %vm2396, %v8152, %v7786
        %v8185 = vsel %vm2396, %v8153, %v7788
        %v8186 = vsel %vm2396, %v8154, %v7790
        %v8187 = vsel %vm2396, %v8155, %v7792
        %v8188 = vsel %vm2396, %v8156, %v7794
        %v8189 = vsel %vm2396, %v8157, %v7796
        %v8190 = vsel %vm2396, %v8158, %v7798
        %v8191 = vsel %vm2396, %v8159, %v7800
        %v8192 = vsel %vm2396, %v8160, %v7802
        %v8193 = vsel %vm2396, %v8161, %v7804
        %v8194 = vsel %vm2396, %v8162, %v7806
        %v8195 = vsel %vm2396, %v8163, %v7808
        %v8196 = vsel %vm2396, %v8164, %v7810
        %v8197 = vsel %vm2396, %v8165, %v7812
        %v8198 = vsel %vm2396, %v8166, %v7814
        %v8199 = vsel %vm2429, %v8167, %v7880
        %v8200 = vsel %vm2429, %v8168, %v7882
        %v8201 = vsel %vm2429, %v8169, %v7884
        %v8202 = vsel %vm2429, %v8170, %v7886
        %v8203 = vsel %vm2429, %v8171, %v7888
        %v8204 = vsel %vm2429, %v8172, %v7890
        %v8205 = vsel %vm2429, %v8173, %v7892
        %v8206 = vsel %vm2429, %v8174, %v7894
        %v8207 = vsel %vm2429, %v8175, %v7896
        %v8208 = vsel %vm2429, %v8176, %v7898
        %v8209 = vsel %vm2429, %v8177, %v7900
        %v8210 = vsel %vm2429, %v8178, %v7902
        %v8211 = vsel %vm2429, %v8179, %v7904
        %v8212 = vsel %vm2429, %v8180, %v7906
        %v8213 = vsel %vm2429, %v8181, %v7908
        %v8214 = vsel %vm2429, %v8182, %v7910
        %v8215 = vsel %vm2429, %v8183, %v7912
        %v8216 = vsel %vm2429, %v8184, %v7914
        %v8217 = vsel %vm2429, %v8185, %v7916
        %v8218 = vsel %vm2429, %v8186, %v7918
        %v8219 = vsel %vm2429, %v8187, %v7920
        %v8220 = vsel %vm2429, %v8188, %v7922
        %v8221 = vsel %vm2429, %v8189, %v7924
        %v8222 = vsel %vm2429, %v8190, %v7926
        %v8223 = vsel %vm2429, %v8191, %v7928
        %v8224 = vsel %vm2429, %v8192, %v7930
        %v8225 = vsel %vm2429, %v8193, %v7932
        %v8226 = vsel %vm2429, %v8194, %v7934
        %v8227 = vsel %vm2429, %v8195, %v7936
        %v8228 = vsel %vm2429, %v8196, %v7938
        %v8229 = vsel %vm2429, %v8197, %v7940
        %v8230 = vsel %vm2429, %v8198, %v7942
        %s8231 = scalar_lea.vmem %s1, 216
        %v8232 = vld [vmem:[%s8231] sm:$0xff]
        %v8233 = vld [vmem:[%s8231 + $0x8] sm:$0xff]
        %v8234 = vld [vmem:[%s8231 + $0x10] sm:$0xff]
        %v8235 = vld [vmem:[%s8231 + $0x18] sm:$0xff]
        %v8236 = vld [vmem:[%s8231 + $0x20] sm:$0xff]
        %v8237 = vld [vmem:[%s8231 + $0x28] sm:$0xff]
        %v8238 = vld [vmem:[%s8231 + $0x30] sm:$0xff]
        %v8239 = vld [vmem:[%s8231 + $0x38] sm:$0xff]
        %v8240 = vld [vmem:[%s8231 + $0x40] sm:$0xff]
        %s8241 = scalar_lea.vmem %s2, 3
        %v8242 = vld [vmem:[%s8241] sm:$0x1]
        %v8244 = vlaneseq
        %v8245 = vshrl.u32 %v8244, 7
        %v8246 = vsub.s32 0, %v8245
        %v8247 = vrot.slane %v8242, %v8246
        %v8250 = vsel %vm2478, %v8199, 0
        %v8253 = vsel %vm2478, %v8200, 0
        %v8256 = vsel %vm2478, %v8201, 0
        %v8259 = vsel %vm2478, %v8202, 0
        %v8262 = vsel %vm2478, %v8203, 0
        %v8265 = vsel %vm2478, %v8204, 0
        %v8268 = vsel %vm2478, %v8205, 0
        %v8271 = vsel %vm2478, %v8206, 0
        %v8274 = vsel %vm2478, %v8207, 0
        %v8277 = vsel %vm2478, %v8208, 0
        %v8280 = vsel %vm2478, %v8209, 0
        %v8283 = vsel %vm2478, %v8210, 0
        %v8286 = vsel %vm2478, %v8211, 0
        %v8289 = vsel %vm2478, %v8212, 0
        %v8292 = vsel %vm2478, %v8213, 0
        %v8295 = vsel %vm2478, %v8214, 0
        %v8298 = vsel %vm2478, %v8215, 0
        %v8301 = vsel %vm2478, %v8216, 0
        %v8304 = vsel %vm2478, %v8217, 0
        %v8307 = vsel %vm2478, %v8218, 0
        %v8310 = vsel %vm2478, %v8219, 0
        %v8313 = vsel %vm2478, %v8220, 0
        %v8316 = vsel %vm2478, %v8221, 0
        %v8319 = vsel %vm2478, %v8222, 0
        %v8322 = vsel %vm2478, %v8223, 0
        %v8325 = vsel %vm2478, %v8224, 0
        %v8328 = vsel %vm2478, %v8225, 0
        %v8331 = vsel %vm2478, %v8226, 0
        %v8334 = vsel %vm2478, %v8227, 0
        %v8337 = vsel %vm2478, %v8228, 0
        %v8340 = vsel %vm2478, %v8229, 0
        %v8343 = vsel %vm2478, %v8230, 0
        %8345 = vmatprep.subr.mxu0 0.0
        %8346 = vmatpush1.msra.mxu0 0.0
        %8347 = vmatprep.subr.mxu0 0.0
        %8348 = vmatpush1.msra.mxu0 0.0
        %8349 = vmatprep.subr.mxu0 0.0
        %8350 = vmatpush1.msra.mxu0 0.0
        %8351 = vmatprep.subr.mxu0 0.0
        %8352 = vmatpush1.msra.mxu0 0.0
        %8353 = vmatprep.subr.mxu0 0.0
        %8354 = vmatpush1.msra.mxu0 0.0
        %8355 = vmatprep.subr.mxu0 0.0
        %8356 = vmatpush1.msra.mxu0 0.0
        %8357 = vmatprep.subr.mxu0 0.0
        %8358 = vmatpush1.msra.mxu0 0.0
        %8359 = vmatprep.subr.mxu0 0.0
        %8360 = vmatpush1.msra.mxu0 %v8240
        %8361 = vmatprep.subr.mxu0 0.0
        %8362 = vmatpush1.msra.mxu0 %v8239
        %8363 = vmatprep.subr.mxu0 0.0
        %8364 = vmatpush1.msra.mxu0 %v8238
        %8365 = vmatprep.subr.mxu0 0.0
        %8366 = vmatpush1.msra.mxu0 %v8237
        %8367 = vmatprep.subr.mxu0 0.0
        %8368 = vmatpush1.msra.mxu0 %v8236
        %8369 = vmatprep.subr.mxu0 0.0
        %8370 = vmatpush1.msra.mxu0 %v8235
        %8371 = vmatprep.subr.mxu0 0.0
        %8372 = vmatpush1.msra.mxu0 %v8234
        %8373 = vmatprep.subr.mxu0 0.0
        %8374 = vmatpush1.msra.mxu0 %v8233
        %8375 = vmatprep.subr.mxu0 0.0
        %8376 = vmatpush1.msra.mxu0 %v8232
        %8377 = vmatprep.subr.mxu0 0.0
        %8378 = vmatpush2.msra.mxu0 0.0
        %8379 = vmatprep.subr.mxu0 0.0
        %8380 = vmatpush2.msra.mxu0 0.0
        %8381 = vmatprep.subr.mxu0 0.0
        %8382 = vmatpush2.msra.mxu0 0.0
        %8383 = vmatprep.subr.mxu0 0.0
        %8384 = vmatpush2.msra.mxu0 0.0
        %8385 = vmatprep.subr.mxu0 0.0
        %8386 = vmatpush2.msra.mxu0 0.0
        %8387 = vmatprep.subr.mxu0 0.0
        %8388 = vmatpush2.msra.mxu0 0.0
        %8389 = vmatprep.subr.mxu0 0.0
        %8390 = vmatpush2.msra.mxu0 0.0
        %8391 = vmatprep.subr.mxu0 0.0
        %8392 = vmatpush2.msra.mxu0 0.0
        %8393 = vmatprep.subr.mxu0 0.0
        %8394 = vmatpush2.msra.mxu0 0.0
        %8395 = vmatprep.subr.mxu0 0.0
        %8396 = vmatpush2.msra.mxu0 0.0
        %8397 = vmatprep.subr.mxu0 0.0
        %8398 = vmatpush2.msra.mxu0 0.0
        %8399 = vmatprep.subr.mxu0 0.0
        %8400 = vmatpush2.msra.mxu0 0.0
        %8401 = vmatprep.subr.mxu0 0.0
        %8402 = vmatpush2.msra.mxu0 0.0
        %8403 = vmatprep.subr.mxu0 0.0
        %8404 = vmatpush2.msra.mxu0 0.0
        %8405 = vmatprep.subr.mxu0 0.0
        %8406 = vmatpush2.msra.mxu0 0.0
        %8407 = vmatprep.subr.mxu0 0.0
        %8408 = vmatpush2.msra.mxu0 0.0
        %8409 = vmatprep.mubr.f32.mxu0 0.0
        %8410 = vmatmul.mubr.f32.gmra.mxu0 %v8250
        %v8411 = vpop.f32.mrf.mxu0
        %v8412 = vadd.f32 %v8247, %v8411
        %v8413 = vpop.f32.mrf.mxu0
        %8414 = vmatprep.mubr.f32.mxu0 0.0
        %8415 = vmatmul.mubr.f32.gmra.mxu0 %v8253
        %v8416 = vpop.f32.mrf.mxu0
        %v8417 = vadd.f32 %v8247, %v8416
        %v8418 = vpop.f32.mrf.mxu0
        %8419 = vmatprep.mubr.f32.mxu0 0.0
        %8420 = vmatmul.mubr.f32.gmra.mxu0 %v8256
        %v8421 = vpop.f32.mrf.mxu0
        %v8422 = vadd.f32 %v8247, %v8421
        %v8423 = vpop.f32.mrf.mxu0
        %8424 = vmatprep.mubr.f32.mxu0 0.0
        %8425 = vmatmul.mubr.f32.gmra.mxu0 %v8259
        %v8426 = vpop.f32.mrf.mxu0
        %v8427 = vadd.f32 %v8247, %v8426
        %v8428 = vpop.f32.mrf.mxu0
        %8429 = vmatprep.mubr.f32.mxu0 0.0
        %8430 = vmatmul.mubr.f32.gmra.mxu0 %v8262
        %v8431 = vpop.f32.mrf.mxu0
        %v8432 = vadd.f32 %v8247, %v8431
        %v8433 = vpop.f32.mrf.mxu0
        %8434 = vmatprep.mubr.f32.mxu0 0.0
        %8435 = vmatmul.mubr.f32.gmra.mxu0 %v8265
        %v8436 = vpop.f32.mrf.mxu0
        %v8437 = vadd.f32 %v8247, %v8436
        %v8438 = vpop.f32.mrf.mxu0
        %8439 = vmatprep.mubr.f32.mxu0 0.0
        %8440 = vmatmul.mubr.f32.gmra.mxu0 %v8268
        %v8441 = vpop.f32.mrf.mxu0
        %v8442 = vadd.f32 %v8247, %v8441
        %v8443 = vpop.f32.mrf.mxu0
        %8444 = vmatprep.mubr.f32.mxu0 0.0
        %8445 = vmatmul.mubr.f32.gmra.mxu0 %v8271
        %v8446 = vpop.f32.mrf.mxu0
        %v8447 = vadd.f32 %v8247, %v8446
        %v8448 = vpop.f32.mrf.mxu0
        %8449 = vmatprep.mubr.f32.mxu0 0.0
        %8450 = vmatmul.mubr.f32.gmra.mxu0 %v8274
        %v8451 = vpop.f32.mrf.mxu0
        %v8452 = vadd.f32 %v8247, %v8451
        %v8453 = vpop.f32.mrf.mxu0
        %8454 = vmatprep.mubr.f32.mxu0 0.0
        %8455 = vmatmul.mubr.f32.gmra.mxu0 %v8277
        %v8456 = vpop.f32.mrf.mxu0
        %v8457 = vadd.f32 %v8247, %v8456
        %v8458 = vpop.f32.mrf.mxu0
        %8459 = vmatprep.mubr.f32.mxu0 0.0
        %8460 = vmatmul.mubr.f32.gmra.mxu0 %v8280
        %v8461 = vpop.f32.mrf.mxu0
        %v8462 = vadd.f32 %v8247, %v8461
        %v8463 = vpop.f32.mrf.mxu0
        %8464 = vmatprep.mubr.f32.mxu0 0.0
        %8465 = vmatmul.mubr.f32.gmra.mxu0 %v8283
        %v8466 = vpop.f32.mrf.mxu0
        %v8467 = vadd.f32 %v8247, %v8466
        %v8468 = vpop.f32.mrf.mxu0
        %8469 = vmatprep.mubr.f32.mxu0 0.0
        %8470 = vmatmul.mubr.f32.gmra.mxu0 %v8286
        %v8471 = vpop.f32.mrf.mxu0
        %v8472 = vadd.f32 %v8247, %v8471
        %v8473 = vpop.f32.mrf.mxu0
        %8474 = vmatprep.mubr.f32.mxu0 0.0
        %8475 = vmatmul.mubr.f32.gmra.mxu0 %v8289
        %v8476 = vpop.f32.mrf.mxu0
        %v8477 = vadd.f32 %v8247, %v8476
        %v8478 = vpop.f32.mrf.mxu0
        %8479 = vmatprep.mubr.f32.mxu0 0.0
        %8480 = vmatmul.mubr.f32.gmra.mxu0 %v8292
        %v8481 = vpop.f32.mrf.mxu0
        %v8482 = vadd.f32 %v8247, %v8481
        %v8483 = vpop.f32.mrf.mxu0
        %8484 = vmatprep.mubr.f32.mxu0 0.0
        %8485 = vmatmul.mubr.f32.gmra.mxu0 %v8295
        %v8486 = vpop.f32.mrf.mxu0
        %v8487 = vadd.f32 %v8247, %v8486
        %v8488 = vpop.f32.mrf.mxu0
        %8489 = vmatprep.mubr.f32.mxu0 0.0
        %8490 = vmatmul.mubr.f32.gmra.mxu0 %v8298
        %v8491 = vpop.f32.mrf.mxu0
        %v8492 = vadd.f32 %v8247, %v8491
        %v8493 = vpop.f32.mrf.mxu0
        %8494 = vmatprep.mubr.f32.mxu0 0.0
        %8495 = vmatmul.mubr.f32.gmra.mxu0 %v8301
        %v8496 = vpop.f32.mrf.mxu0
        %v8497 = vadd.f32 %v8247, %v8496
        %v8498 = vpop.f32.mrf.mxu0
        %8499 = vmatprep.mubr.f32.mxu0 0.0
        %8500 = vmatmul.mubr.f32.gmra.mxu0 %v8304
        %v8501 = vpop.f32.mrf.mxu0
        %v8502 = vadd.f32 %v8247, %v8501
        %v8503 = vpop.f32.mrf.mxu0
        %8504 = vmatprep.mubr.f32.mxu0 0.0
        %8505 = vmatmul.mubr.f32.gmra.mxu0 %v8307
        %v8506 = vpop.f32.mrf.mxu0
        %v8507 = vadd.f32 %v8247, %v8506
        %v8508 = vpop.f32.mrf.mxu0
        %8509 = vmatprep.mubr.f32.mxu0 0.0
        %8510 = vmatmul.mubr.f32.gmra.mxu0 %v8310
        %v8511 = vpop.f32.mrf.mxu0
        %v8512 = vadd.f32 %v8247, %v8511
        %v8513 = vpop.f32.mrf.mxu0
        %8514 = vmatprep.mubr.f32.mxu0 0.0
        %8515 = vmatmul.mubr.f32.gmra.mxu0 %v8313
        %v8516 = vpop.f32.mrf.mxu0
        %v8517 = vadd.f32 %v8247, %v8516
        %v8518 = vpop.f32.mrf.mxu0
        %8519 = vmatprep.mubr.f32.mxu0 0.0
        %8520 = vmatmul.mubr.f32.gmra.mxu0 %v8316
        %v8521 = vpop.f32.mrf.mxu0
        %v8522 = vadd.f32 %v8247, %v8521
        %v8523 = vpop.f32.mrf.mxu0
        %8524 = vmatprep.mubr.f32.mxu0 0.0
        %8525 = vmatmul.mubr.f32.gmra.mxu0 %v8319
        %v8526 = vpop.f32.mrf.mxu0
        %v8527 = vadd.f32 %v8247, %v8526
        %v8528 = vpop.f32.mrf.mxu0
        %8529 = vmatprep.mubr.f32.mxu0 0.0
        %8530 = vmatmul.mubr.f32.gmra.mxu0 %v8322
        %v8531 = vpop.f32.mrf.mxu0
        %v8532 = vadd.f32 %v8247, %v8531
        %v8533 = vpop.f32.mrf.mxu0
        %8534 = vmatprep.mubr.f32.mxu0 0.0
        %8535 = vmatmul.mubr.f32.gmra.mxu0 %v8325
        %v8536 = vpop.f32.mrf.mxu0
        %v8537 = vadd.f32 %v8247, %v8536
        %v8538 = vpop.f32.mrf.mxu0
        %8539 = vmatprep.mubr.f32.mxu0 0.0
        %8540 = vmatmul.mubr.f32.gmra.mxu0 %v8328
        %v8541 = vpop.f32.mrf.mxu0
        %v8542 = vadd.f32 %v8247, %v8541
        %v8543 = vpop.f32.mrf.mxu0
        %8544 = vmatprep.mubr.f32.mxu0 0.0
        %8545 = vmatmul.mubr.f32.gmra.mxu0 %v8331
        %v8546 = vpop.f32.mrf.mxu0
        %v8547 = vadd.f32 %v8247, %v8546
        %v8548 = vpop.f32.mrf.mxu0
        %8549 = vmatprep.mubr.f32.mxu0 0.0
        %8550 = vmatmul.mubr.f32.gmra.mxu0 %v8334
        %v8551 = vpop.f32.mrf.mxu0
        %v8552 = vadd.f32 %v8247, %v8551
        %v8553 = vpop.f32.mrf.mxu0
        %8554 = vmatprep.mubr.f32.mxu0 0.0
        %8555 = vmatmul.mubr.f32.gmra.mxu0 %v8337
        %v8556 = vpop.f32.mrf.mxu0
        %v8557 = vadd.f32 %v8247, %v8556
        %v8558 = vpop.f32.mrf.mxu0
        %8559 = vmatprep.mubr.f32.mxu0 0.0
        %8560 = vmatmul.mubr.f32.gmra.mxu0 %v8340
        %v8561 = vpop.f32.mrf.mxu0
        %v8562 = vadd.f32 %v8247, %v8561
        %v8563 = vpop.f32.mrf.mxu0
        %8564 = vmatprep.mubr.f32.mxu0 0.0
        %8565 = vmatmul.mubr.f32.gmra.mxu0 %v8343
        %v8566 = vpop.f32.mrf.mxu0
        %v8567 = vadd.f32 %v8247, %v8566
        %v8568 = vpop.f32.mrf.mxu0
        %8569 = vdwg.mxu0
        %v8570 = vadd.f32 %v8412, %v6595
        %v8571 = vadd.f32 %v8417, %v6597
        %v8572 = vadd.f32 %v8422, %v6599
        %v8573 = vadd.f32 %v8427, %v6601
        %v8574 = vadd.f32 %v8432, %v6603
        %v8575 = vadd.f32 %v8437, %v6605
        %v8576 = vadd.f32 %v8442, %v6607
        %v8577 = vadd.f32 %v8447, %v6609
        %v8578 = vadd.f32 %v8452, %v6611
        %v8579 = vadd.f32 %v8457, %v6613
        %v8580 = vadd.f32 %v8462, %v6615
        %v8581 = vadd.f32 %v8467, %v6617
        %v8582 = vadd.f32 %v8472, %v6619
        %v8583 = vadd.f32 %v8477, %v6621
        %v8584 = vadd.f32 %v8482, %v6623
        %v8585 = vadd.f32 %v8487, %v6625
        %v8586 = vadd.f32 %v8492, %v6627
        %v8587 = vadd.f32 %v8497, %v6629
        %v8588 = vadd.f32 %v8502, %v6631
        %v8589 = vadd.f32 %v8507, %v6633
        %v8590 = vadd.f32 %v8512, %v6635
        %v8591 = vadd.f32 %v8517, %v6637
        %v8592 = vadd.f32 %v8522, %v6639
        %v8593 = vadd.f32 %v8527, %v6641
        %v8594 = vadd.f32 %v8532, %v6643
        %v8595 = vadd.f32 %v8537, %v6645
        %v8596 = vadd.f32 %v8542, %v6647
        %v8597 = vadd.f32 %v8547, %v6649
        %v8598 = vadd.f32 %v8552, %v6651
        %v8599 = vadd.f32 %v8557, %v6653
        %v8600 = vadd.f32 %v8562, %v6655
        %v8601 = vadd.f32 %v8567, %v6657
        %v8602 = vld [vmem:[%s3] sm:$0xff]
        %v8603 = vld [vmem:[%s3 + $0x8] sm:$0xff]
        %v8605 = vsel %vm2198, %v4681, 0
        %v8608 = vsel %vm2198, %v4682, 0
        %v8611 = vsel %vm2198, %v4683, 0
        %v8614 = vsel %vm2198, %v4684, 0
        %v8617 = vsel %vm2198, %v4685, 0
        %v8620 = vsel %vm2198, %v4686, 0
        %v8623 = vsel %vm2198, %v4687, 0
        %v8626 = vsel %vm2198, %v4688, 0
        %v8629 = vsel %vm2198, %v4689, 0
        %v8632 = vsel %vm2198, %v4690, 0
        %v8635 = vsel %vm2198, %v4691, 0
        %v8638 = vsel %vm2198, %v4692, 0
        %v8641 = vsel %vm2198, %v4693, 0
        %v8644 = vsel %vm2198, %v4694, 0
        %v8647 = vsel %vm2198, %v4695, 0
        %v8650 = vsel %vm2198, %v4696, 0
        %v8653 = vsel %vm2198, %v4697, 0
        %v8656 = vsel %vm2198, %v4698, 0
        %v8659 = vsel %vm2198, %v4699, 0
        %v8662 = vsel %vm2198, %v4700, 0
        %v8665 = vsel %vm2198, %v4701, 0
        %v8668 = vsel %vm2198, %v4702, 0
        %v8671 = vsel %vm2198, %v4703, 0
        %v8674 = vsel %vm2198, %v4704, 0
        %v8677 = vsel %vm2198, %v4705, 0
        %v8680 = vsel %vm2198, %v4706, 0
        %v8683 = vsel %vm2198, %v4707, 0
        %v8686 = vsel %vm2198, %v4708, 0
        %v8689 = vsel %vm2198, %v4709, 0
        %v8692 = vsel %vm2198, %v4710, 0
        %v8695 = vsel %vm2198, %v4711, 0
        %v8698 = vsel %vm2198, %v4712, 0
        %8700 = vmatprep.subr.mxu0 0.0
        %8701 = vmatpush1.msra.mxu0 0.0
        %8702 = vmatprep.subr.mxu0 0.0
        %8703 = vmatpush1.msra.mxu0 0.0
        %8704 = vmatprep.subr.mxu0 0.0
        %8705 = vmatpush1.msra.mxu0 0.0
        %8706 = vmatprep.subr.mxu0 0.0
        %8707 = vmatpush1.msra.mxu0 0.0
        %8708 = vmatprep.subr.mxu0 0.0
        %8709 = vmatpush1.msra.mxu0 0.0
        %8710 = vmatprep.subr.mxu0 0.0
        %8711 = vmatpush1.msra.mxu0 0.0
        %8712 = vmatprep.subr.mxu0 0.0
        %8713 = vmatpush1.msra.mxu0 0.0
        %8714 = vmatprep.subr.mxu0 0.0
        %8715 = vmatpush1.msra.mxu0 0.0
        %8716 = vmatprep.subr.mxu0 0.0
        %8717 = vmatpush1.msra.mxu0 0.0
        %8718 = vmatprep.subr.mxu0 0.0
        %8719 = vmatpush1.msra.mxu0 0.0
        %8720 = vmatprep.subr.mxu0 0.0
        %8721 = vmatpush1.msra.mxu0 0.0
        %8722 = vmatprep.subr.mxu0 0.0
        %8723 = vmatpush1.msra.mxu0 0.0
        %8724 = vmatprep.subr.mxu0 0.0
        %8725 = vmatpush1.msra.mxu0 0.0
        %8726 = vmatprep.subr.mxu0 0.0
        %8727 = vmatpush1.msra.mxu0 0.0
        %8728 = vmatprep.subr.mxu0 0.0
        %8729 = vmatpush1.msra.mxu0 0.0
        %8730 = vmatprep.subr.mxu0 0.0
        %8731 = vmatpush1.msra.mxu0 %v8603
        %8732 = vmatprep.subr.mxu0 0.0
        %8733 = vmatpush2.msra.mxu0 0.0
        %8734 = vmatprep.subr.mxu0 0.0
        %8735 = vmatpush2.msra.mxu0 0.0
        %8736 = vmatprep.subr.mxu0 0.0
        %8737 = vmatpush2.msra.mxu0 0.0
        %8738 = vmatprep.subr.mxu0 0.0
        %8739 = vmatpush2.msra.mxu0 0.0
        %8740 = vmatprep.subr.mxu0 0.0
        %8741 = vmatpush2.msra.mxu0 0.0
        %8742 = vmatprep.subr.mxu0 0.0
        %8743 = vmatpush2.msra.mxu0 0.0
        %8744 = vmatprep.subr.mxu0 0.0
        %8745 = vmatpush2.msra.mxu0 0.0
        %8746 = vmatprep.subr.mxu0 0.0
        %8747 = vmatpush2.msra.mxu0 0.0
        %8748 = vmatprep.subr.mxu0 0.0
        %8749 = vmatpush2.msra.mxu0 0.0
        %8750 = vmatprep.subr.mxu0 0.0
        %8751 = vmatpush2.msra.mxu0 0.0
        %8752 = vmatprep.subr.mxu0 0.0
        %8753 = vmatpush2.msra.mxu0 0.0
        %8754 = vmatprep.subr.mxu0 0.0
        %8755 = vmatpush2.msra.mxu0 0.0
        %8756 = vmatprep.subr.mxu0 0.0
        %8757 = vmatpush2.msra.mxu0 0.0
        %8758 = vmatprep.subr.mxu0 0.0
        %8759 = vmatpush2.msra.mxu0 0.0
        %8760 = vmatprep.subr.mxu0 0.0
        %8761 = vmatpush2.msra.mxu0 0.0
        %8762 = vmatprep.subr.mxu0 0.0
        %8763 = vmatpush2.msra.mxu0 0.0
        %8764 = vmatprep.mubr.f32.mxu0 0.0
        %8765 = vmatmul.mubr.f32.gmra.mxu0 %v8605
        %v8766 = vpop.f32.mrf.mxu0
        %v8767 = vadd.f32 0.0, %v8766
        %v8768 = vpop.f32.mrf.mxu0
        %8769 = vmatprep.mubr.f32.mxu0 0.0
        %8770 = vmatmul.mubr.f32.gmra.mxu0 %v8608
        %v8771 = vpop.f32.mrf.mxu0
        %v8772 = vadd.f32 0.0, %v8771
        %v8773 = vpop.f32.mrf.mxu0
        %8774 = vmatprep.mubr.f32.mxu0 0.0
        %8775 = vmatmul.mubr.f32.gmra.mxu0 %v8611
        %v8776 = vpop.f32.mrf.mxu0
        %v8777 = vadd.f32 0.0, %v8776
        %v8778 = vpop.f32.mrf.mxu0
        %8779 = vmatprep.mubr.f32.mxu0 0.0
        %8780 = vmatmul.mubr.f32.gmra.mxu0 %v8614
        %v8781 = vpop.f32.mrf.mxu0
        %v8782 = vadd.f32 0.0, %v8781
        %v8783 = vpop.f32.mrf.mxu0
        %8784 = vmatprep.mubr.f32.mxu0 0.0
        %8785 = vmatmul.mubr.f32.gmra.mxu0 %v8617
        %v8786 = vpop.f32.mrf.mxu0
        %v8787 = vadd.f32 0.0, %v8786
        %v8788 = vpop.f32.mrf.mxu0
        %8789 = vmatprep.mubr.f32.mxu0 0.0
        %8790 = vmatmul.mubr.f32.gmra.mxu0 %v8620
        %v8791 = vpop.f32.mrf.mxu0
        %v8792 = vadd.f32 0.0, %v8791
        %v8793 = vpop.f32.mrf.mxu0
        %8794 = vmatprep.mubr.f32.mxu0 0.0
        %8795 = vmatmul.mubr.f32.gmra.mxu0 %v8623
        %v8796 = vpop.f32.mrf.mxu0
        %v8797 = vadd.f32 0.0, %v8796
        %v8798 = vpop.f32.mrf.mxu0
        %8799 = vmatprep.mubr.f32.mxu0 0.0
        %8800 = vmatmul.mubr.f32.gmra.mxu0 %v8626
        %v8801 = vpop.f32.mrf.mxu0
        %v8802 = vadd.f32 0.0, %v8801
        %v8803 = vpop.f32.mrf.mxu0
        %8804 = vmatprep.mubr.f32.mxu0 0.0
        %8805 = vmatmul.mubr.f32.gmra.mxu0 %v8629
        %v8806 = vpop.f32.mrf.mxu0
        %v8807 = vadd.f32 0.0, %v8806
        %v8808 = vpop.f32.mrf.mxu0
        %8809 = vmatprep.mubr.f32.mxu0 0.0
        %8810 = vmatmul.mubr.f32.gmra.mxu0 %v8632
        %v8811 = vpop.f32.mrf.mxu0
        %v8812 = vadd.f32 0.0, %v8811
        %v8813 = vpop.f32.mrf.mxu0
        %8814 = vmatprep.mubr.f32.mxu0 0.0
        %8815 = vmatmul.mubr.f32.gmra.mxu0 %v8635
        %v8816 = vpop.f32.mrf.mxu0
        %v8817 = vadd.f32 0.0, %v8816
        %v8818 = vpop.f32.mrf.mxu0
        %8819 = vmatprep.mubr.f32.mxu0 0.0
        %8820 = vmatmul.mubr.f32.gmra.mxu0 %v8638
        %v8821 = vpop.f32.mrf.mxu0
        %v8822 = vadd.f32 0.0, %v8821
        %v8823 = vpop.f32.mrf.mxu0
        %8824 = vmatprep.mubr.f32.mxu0 0.0
        %8825 = vmatmul.mubr.f32.gmra.mxu0 %v8641
        %v8826 = vpop.f32.mrf.mxu0
        %v8827 = vadd.f32 0.0, %v8826
        %v8828 = vpop.f32.mrf.mxu0
        %8829 = vmatprep.mubr.f32.mxu0 0.0
        %8830 = vmatmul.mubr.f32.gmra.mxu0 %v8644
        %v8831 = vpop.f32.mrf.mxu0
        %v8832 = vadd.f32 0.0, %v8831
        %v8833 = vpop.f32.mrf.mxu0
        %8834 = vmatprep.mubr.f32.mxu0 0.0
        %8835 = vmatmul.mubr.f32.gmra.mxu0 %v8647
        %v8836 = vpop.f32.mrf.mxu0
        %v8837 = vadd.f32 0.0, %v8836
        %v8838 = vpop.f32.mrf.mxu0
        %8839 = vmatprep.mubr.f32.mxu0 0.0
        %8840 = vmatmul.mubr.f32.gmra.mxu0 %v8650
        %v8841 = vpop.f32.mrf.mxu0
        %v8842 = vadd.f32 0.0, %v8841
        %v8843 = vpop.f32.mrf.mxu0
        %8844 = vmatprep.mubr.f32.mxu0 0.0
        %8845 = vmatmul.mubr.f32.gmra.mxu0 %v8653
        %v8846 = vpop.f32.mrf.mxu0
        %v8847 = vadd.f32 0.0, %v8846
        %v8848 = vpop.f32.mrf.mxu0
        %8849 = vmatprep.mubr.f32.mxu0 0.0
        %8850 = vmatmul.mubr.f32.gmra.mxu0 %v8656
        %v8851 = vpop.f32.mrf.mxu0
        %v8852 = vadd.f32 0.0, %v8851
        %v8853 = vpop.f32.mrf.mxu0
        %8854 = vmatprep.mubr.f32.mxu0 0.0
        %8855 = vmatmul.mubr.f32.gmra.mxu0 %v8659
        %v8856 = vpop.f32.mrf.mxu0
        %v8857 = vadd.f32 0.0, %v8856
        %v8858 = vpop.f32.mrf.mxu0
        %8859 = vmatprep.mubr.f32.mxu0 0.0
        %8860 = vmatmul.mubr.f32.gmra.mxu0 %v8662
        %v8861 = vpop.f32.mrf.mxu0
        %v8862 = vadd.f32 0.0, %v8861
        %v8863 = vpop.f32.mrf.mxu0
        %8864 = vmatprep.mubr.f32.mxu0 0.0
        %8865 = vmatmul.mubr.f32.gmra.mxu0 %v8665
        %v8866 = vpop.f32.mrf.mxu0
        %v8867 = vadd.f32 0.0, %v8866
        %v8868 = vpop.f32.mrf.mxu0
        %8869 = vmatprep.mubr.f32.mxu0 0.0
        %8870 = vmatmul.mubr.f32.gmra.mxu0 %v8668
        %v8871 = vpop.f32.mrf.mxu0
        %v8872 = vadd.f32 0.0, %v8871
        %v8873 = vpop.f32.mrf.mxu0
        %8874 = vmatprep.mubr.f32.mxu0 0.0
        %8875 = vmatmul.mubr.f32.gmra.mxu0 %v8671
        %v8876 = vpop.f32.mrf.mxu0
        %v8877 = vadd.f32 0.0, %v8876
        %v8878 = vpop.f32.mrf.mxu0
        %8879 = vmatprep.mubr.f32.mxu0 0.0
        %8880 = vmatmul.mubr.f32.gmra.mxu0 %v8674
        %v8881 = vpop.f32.mrf.mxu0
        %v8882 = vadd.f32 0.0, %v8881
        %v8883 = vpop.f32.mrf.mxu0
        %8884 = vmatprep.mubr.f32.mxu0 0.0
        %8885 = vmatmul.mubr.f32.gmra.mxu0 %v8677
        %v8886 = vpop.f32.mrf.mxu0
        %v8887 = vadd.f32 0.0, %v8886
        %v8888 = vpop.f32.mrf.mxu0
        %8889 = vmatprep.mubr.f32.mxu0 0.0
        %8890 = vmatmul.mubr.f32.gmra.mxu0 %v8680
        %v8891 = vpop.f32.mrf.mxu0
        %v8892 = vadd.f32 0.0, %v8891
        %v8893 = vpop.f32.mrf.mxu0
        %8894 = vmatprep.mubr.f32.mxu0 0.0
        %8895 = vmatmul.mubr.f32.gmra.mxu0 %v8683
        %v8896 = vpop.f32.mrf.mxu0
        %v8897 = vadd.f32 0.0, %v8896
        %v8898 = vpop.f32.mrf.mxu0
        %8899 = vmatprep.mubr.f32.mxu0 0.0
        %8900 = vmatmul.mubr.f32.gmra.mxu0 %v8686
        %v8901 = vpop.f32.mrf.mxu0
        %v8902 = vadd.f32 0.0, %v8901
        %v8903 = vpop.f32.mrf.mxu0
        %8904 = vmatprep.mubr.f32.mxu0 0.0
        %8905 = vmatmul.mubr.f32.gmra.mxu0 %v8689
        %v8906 = vpop.f32.mrf.mxu0
        %v8907 = vadd.f32 0.0, %v8906
        %v8908 = vpop.f32.mrf.mxu0
        %8909 = vmatprep.mubr.f32.mxu0 0.0
        %8910 = vmatmul.mubr.f32.gmra.mxu0 %v8692
        %v8911 = vpop.f32.mrf.mxu0
        %v8912 = vadd.f32 0.0, %v8911
        %v8913 = vpop.f32.mrf.mxu0
        %8914 = vmatprep.mubr.f32.mxu0 0.0
        %8915 = vmatmul.mubr.f32.gmra.mxu0 %v8695
        %v8916 = vpop.f32.mrf.mxu0
        %v8917 = vadd.f32 0.0, %v8916
        %v8918 = vpop.f32.mrf.mxu0
        %8919 = vmatprep.mubr.f32.mxu0 0.0
        %8920 = vmatmul.mubr.f32.gmra.mxu0 %v8698
        %v8921 = vpop.f32.mrf.mxu0
        %v8922 = vadd.f32 0.0, %v8921
        %v8923 = vpop.f32.mrf.mxu0
        %8924 = vdwg.mxu0
        %v8926 = vsel %vm2198, %v2800, 0
        %v8929 = vsel %vm2198, %v2801, 0
        %v8932 = vsel %vm2198, %v2802, 0
        %v8935 = vsel %vm2198, %v2803, 0
        %v8938 = vsel %vm2198, %v2804, 0
        %v8941 = vsel %vm2198, %v2805, 0
        %v8944 = vsel %vm2198, %v2806, 0
        %v8947 = vsel %vm2198, %v2807, 0
        %v8950 = vsel %vm2198, %v2808, 0
        %v8953 = vsel %vm2198, %v2809, 0
        %v8956 = vsel %vm2198, %v2810, 0
        %v8959 = vsel %vm2198, %v2811, 0
        %v8962 = vsel %vm2198, %v2812, 0
        %v8965 = vsel %vm2198, %v2813, 0
        %v8968 = vsel %vm2198, %v2814, 0
        %v8971 = vsel %vm2198, %v2815, 0
        %v8974 = vsel %vm2198, %v2816, 0
        %v8977 = vsel %vm2198, %v2817, 0
        %v8980 = vsel %vm2198, %v2818, 0
        %v8983 = vsel %vm2198, %v2819, 0
        %v8986 = vsel %vm2198, %v2820, 0
        %v8989 = vsel %vm2198, %v2821, 0
        %v8992 = vsel %vm2198, %v2822, 0
        %v8995 = vsel %vm2198, %v2823, 0
        %v8998 = vsel %vm2198, %v2824, 0
        %v9001 = vsel %vm2198, %v2825, 0
        %v9004 = vsel %vm2198, %v2826, 0
        %v9007 = vsel %vm2198, %v2827, 0
        %v9010 = vsel %vm2198, %v2828, 0
        %v9013 = vsel %vm2198, %v2829, 0
        %v9016 = vsel %vm2198, %v2830, 0
        %v9019 = vsel %vm2198, %v2831, 0
        %9021 = vmatprep.subr.mxu0 0.0
        %9022 = vmatpush1.msra.mxu0 0.0
        %9023 = vmatprep.subr.mxu0 0.0
        %9024 = vmatpush1.msra.mxu0 0.0
        %9025 = vmatprep.subr.mxu0 0.0
        %9026 = vmatpush1.msra.mxu0 0.0
        %9027 = vmatprep.subr.mxu0 0.0
        %9028 = vmatpush1.msra.mxu0 0.0
        %9029 = vmatprep.subr.mxu0 0.0
        %9030 = vmatpush1.msra.mxu0 0.0
        %9031 = vmatprep.subr.mxu0 0.0
        %9032 = vmatpush1.msra.mxu0 0.0
        %9033 = vmatprep.subr.mxu0 0.0
        %9034 = vmatpush1.msra.mxu0 0.0
        %9035 = vmatprep.subr.mxu0 0.0
        %9036 = vmatpush1.msra.mxu0 0.0
        %9037 = vmatprep.subr.mxu0 0.0
        %9038 = vmatpush1.msra.mxu0 0.0
        %9039 = vmatprep.subr.mxu0 0.0
        %9040 = vmatpush1.msra.mxu0 0.0
        %9041 = vmatprep.subr.mxu0 0.0
        %9042 = vmatpush1.msra.mxu0 0.0
        %9043 = vmatprep.subr.mxu0 0.0
        %9044 = vmatpush1.msra.mxu0 0.0
        %9045 = vmatprep.subr.mxu0 0.0
        %9046 = vmatpush1.msra.mxu0 0.0
        %9047 = vmatprep.subr.mxu0 0.0
        %9048 = vmatpush1.msra.mxu0 0.0
        %9049 = vmatprep.subr.mxu0 0.0
        %9050 = vmatpush1.msra.mxu0 0.0
        %9051 = vmatprep.subr.mxu0 0.0
        %9052 = vmatpush1.msra.mxu0 %v8602
        %9053 = vmatprep.subr.mxu0 0.0
        %9054 = vmatpush2.msra.mxu0 0.0
        %9055 = vmatprep.subr.mxu0 0.0
        %9056 = vmatpush2.msra.mxu0 0.0
        %9057 = vmatprep.subr.mxu0 0.0
        %9058 = vmatpush2.msra.mxu0 0.0
        %9059 = vmatprep.subr.mxu0 0.0
        %9060 = vmatpush2.msra.mxu0 0.0
        %9061 = vmatprep.subr.mxu0 0.0
        %9062 = vmatpush2.msra.mxu0 0.0
        %9063 = vmatprep.subr.mxu0 0.0
        %9064 = vmatpush2.msra.mxu0 0.0
        %9065 = vmatprep.subr.mxu0 0.0
        %9066 = vmatpush2.msra.mxu0 0.0
        %9067 = vmatprep.subr.mxu0 0.0
        %9068 = vmatpush2.msra.mxu0 0.0
        %9069 = vmatprep.subr.mxu0 0.0
        %9070 = vmatpush2.msra.mxu0 0.0
        %9071 = vmatprep.subr.mxu0 0.0
        %9072 = vmatpush2.msra.mxu0 0.0
        %9073 = vmatprep.subr.mxu0 0.0
        %9074 = vmatpush2.msra.mxu0 0.0
        %9075 = vmatprep.subr.mxu0 0.0
        %9076 = vmatpush2.msra.mxu0 0.0
        %9077 = vmatprep.subr.mxu0 0.0
        %9078 = vmatpush2.msra.mxu0 0.0
        %9079 = vmatprep.subr.mxu0 0.0
        %9080 = vmatpush2.msra.mxu0 0.0
        %9081 = vmatprep.subr.mxu0 0.0
        %9082 = vmatpush2.msra.mxu0 0.0
        %9083 = vmatprep.subr.mxu0 0.0
        %9084 = vmatpush2.msra.mxu0 0.0
        %9085 = vmatprep.mubr.f32.mxu0 0.0
        %9086 = vmatmul.mubr.f32.gmra.mxu0 %v8926
        %v9087 = vpop.f32.mrf.mxu0
        %v9088 = vadd.f32 %v8767, %v9087
        %v9089 = vpop.f32.mrf.mxu0
        %9090 = vmatprep.mubr.f32.mxu0 0.0
        %9091 = vmatmul.mubr.f32.gmra.mxu0 %v8929
        %v9092 = vpop.f32.mrf.mxu0
        %v9093 = vadd.f32 %v8772, %v9092
        %v9094 = vpop.f32.mrf.mxu0
        %9095 = vmatprep.mubr.f32.mxu0 0.0
        %9096 = vmatmul.mubr.f32.gmra.mxu0 %v8932
        %v9097 = vpop.f32.mrf.mxu0
        %v9098 = vadd.f32 %v8777, %v9097
        %v9099 = vpop.f32.mrf.mxu0
        %9100 = vmatprep.mubr.f32.mxu0 0.0
        %9101 = vmatmul.mubr.f32.gmra.mxu0 %v8935
        %v9102 = vpop.f32.mrf.mxu0
        %v9103 = vadd.f32 %v8782, %v9102
        %v9104 = vpop.f32.mrf.mxu0
        %9105 = vmatprep.mubr.f32.mxu0 0.0
        %9106 = vmatmul.mubr.f32.gmra.mxu0 %v8938
        %v9107 = vpop.f32.mrf.mxu0
        %v9108 = vadd.f32 %v8787, %v9107
        %v9109 = vpop.f32.mrf.mxu0
        %9110 = vmatprep.mubr.f32.mxu0 0.0
        %9111 = vmatmul.mubr.f32.gmra.mxu0 %v8941
        %v9112 = vpop.f32.mrf.mxu0
        %v9113 = vadd.f32 %v8792, %v9112
        %v9114 = vpop.f32.mrf.mxu0
        %9115 = vmatprep.mubr.f32.mxu0 0.0
        %9116 = vmatmul.mubr.f32.gmra.mxu0 %v8944
        %v9117 = vpop.f32.mrf.mxu0
        %v9118 = vadd.f32 %v8797, %v9117
        %v9119 = vpop.f32.mrf.mxu0
        %9120 = vmatprep.mubr.f32.mxu0 0.0
        %9121 = vmatmul.mubr.f32.gmra.mxu0 %v8947
        %v9122 = vpop.f32.mrf.mxu0
        %v9123 = vadd.f32 %v8802, %v9122
        %v9124 = vpop.f32.mrf.mxu0
        %9125 = vmatprep.mubr.f32.mxu0 0.0
        %9126 = vmatmul.mubr.f32.gmra.mxu0 %v8950
        %v9127 = vpop.f32.mrf.mxu0
        %v9128 = vadd.f32 %v8807, %v9127
        %v9129 = vpop.f32.mrf.mxu0
        %9130 = vmatprep.mubr.f32.mxu0 0.0
        %9131 = vmatmul.mubr.f32.gmra.mxu0 %v8953
        %v9132 = vpop.f32.mrf.mxu0
        %v9133 = vadd.f32 %v8812, %v9132
        %v9134 = vpop.f32.mrf.mxu0
        %9135 = vmatprep.mubr.f32.mxu0 0.0
        %9136 = vmatmul.mubr.f32.gmra.mxu0 %v8956
        %v9137 = vpop.f32.mrf.mxu0
        %v9138 = vadd.f32 %v8817, %v9137
        %v9139 = vpop.f32.mrf.mxu0
        %9140 = vmatprep.mubr.f32.mxu0 0.0
        %9141 = vmatmul.mubr.f32.gmra.mxu0 %v8959
        %v9142 = vpop.f32.mrf.mxu0
        %v9143 = vadd.f32 %v8822, %v9142
        %v9144 = vpop.f32.mrf.mxu0
        %9145 = vmatprep.mubr.f32.mxu0 0.0
        %9146 = vmatmul.mubr.f32.gmra.mxu0 %v8962
        %v9147 = vpop.f32.mrf.mxu0
        %v9148 = vadd.f32 %v8827, %v9147
        %v9149 = vpop.f32.mrf.mxu0
        %9150 = vmatprep.mubr.f32.mxu0 0.0
        %9151 = vmatmul.mubr.f32.gmra.mxu0 %v8965
        %v9152 = vpop.f32.mrf.mxu0
        %v9153 = vadd.f32 %v8832, %v9152
        %v9154 = vpop.f32.mrf.mxu0
        %9155 = vmatprep.mubr.f32.mxu0 0.0
        %9156 = vmatmul.mubr.f32.gmra.mxu0 %v8968
        %v9157 = vpop.f32.mrf.mxu0
        %v9158 = vadd.f32 %v8837, %v9157
        %v9159 = vpop.f32.mrf.mxu0
        %9160 = vmatprep.mubr.f32.mxu0 0.0
        %9161 = vmatmul.mubr.f32.gmra.mxu0 %v8971
        %v9162 = vpop.f32.mrf.mxu0
        %v9163 = vadd.f32 %v8842, %v9162
        %v9164 = vpop.f32.mrf.mxu0
        %9165 = vmatprep.mubr.f32.mxu0 0.0
        %9166 = vmatmul.mubr.f32.gmra.mxu0 %v8974
        %v9167 = vpop.f32.mrf.mxu0
        %v9168 = vadd.f32 %v8847, %v9167
        %v9169 = vpop.f32.mrf.mxu0
        %9170 = vmatprep.mubr.f32.mxu0 0.0
        %9171 = vmatmul.mubr.f32.gmra.mxu0 %v8977
        %v9172 = vpop.f32.mrf.mxu0
        %v9173 = vadd.f32 %v8852, %v9172
        %v9174 = vpop.f32.mrf.mxu0
        %9175 = vmatprep.mubr.f32.mxu0 0.0
        %9176 = vmatmul.mubr.f32.gmra.mxu0 %v8980
        %v9177 = vpop.f32.mrf.mxu0
        %v9178 = vadd.f32 %v8857, %v9177
        %v9179 = vpop.f32.mrf.mxu0
        %9180 = vmatprep.mubr.f32.mxu0 0.0
        %9181 = vmatmul.mubr.f32.gmra.mxu0 %v8983
        %v9182 = vpop.f32.mrf.mxu0
        %v9183 = vadd.f32 %v8862, %v9182
        %v9184 = vpop.f32.mrf.mxu0
        %9185 = vmatprep.mubr.f32.mxu0 0.0
        %9186 = vmatmul.mubr.f32.gmra.mxu0 %v8986
        %v9187 = vpop.f32.mrf.mxu0
        %v9188 = vadd.f32 %v8867, %v9187
        %v9189 = vpop.f32.mrf.mxu0
        %9190 = vmatprep.mubr.f32.mxu0 0.0
        %9191 = vmatmul.mubr.f32.gmra.mxu0 %v8989
        %v9192 = vpop.f32.mrf.mxu0
        %v9193 = vadd.f32 %v8872, %v9192
        %v9194 = vpop.f32.mrf.mxu0
        %9195 = vmatprep.mubr.f32.mxu0 0.0
        %9196 = vmatmul.mubr.f32.gmra.mxu0 %v8992
        %v9197 = vpop.f32.mrf.mxu0
        %v9198 = vadd.f32 %v8877, %v9197
        %v9199 = vpop.f32.mrf.mxu0
        %9200 = vmatprep.mubr.f32.mxu0 0.0
        %9201 = vmatmul.mubr.f32.gmra.mxu0 %v8995
        %v9202 = vpop.f32.mrf.mxu0
        %v9203 = vadd.f32 %v8882, %v9202
        %v9204 = vpop.f32.mrf.mxu0
        %9205 = vmatprep.mubr.f32.mxu0 0.0
        %9206 = vmatmul.mubr.f32.gmra.mxu0 %v8998
        %v9207 = vpop.f32.mrf.mxu0
        %v9208 = vadd.f32 %v8887, %v9207
        %v9209 = vpop.f32.mrf.mxu0
        %9210 = vmatprep.mubr.f32.mxu0 0.0
        %9211 = vmatmul.mubr.f32.gmra.mxu0 %v9001
        %v9212 = vpop.f32.mrf.mxu0
        %v9213 = vadd.f32 %v8892, %v9212
        %v9214 = vpop.f32.mrf.mxu0
        %9215 = vmatprep.mubr.f32.mxu0 0.0
        %9216 = vmatmul.mubr.f32.gmra.mxu0 %v9004
        %v9217 = vpop.f32.mrf.mxu0
        %v9218 = vadd.f32 %v8897, %v9217
        %v9219 = vpop.f32.mrf.mxu0
        %9220 = vmatprep.mubr.f32.mxu0 0.0
        %9221 = vmatmul.mubr.f32.gmra.mxu0 %v9007
        %v9222 = vpop.f32.mrf.mxu0
        %v9223 = vadd.f32 %v8902, %v9222
        %v9224 = vpop.f32.mrf.mxu0
        %9225 = vmatprep.mubr.f32.mxu0 0.0
        %9226 = vmatmul.mubr.f32.gmra.mxu0 %v9010
        %v9227 = vpop.f32.mrf.mxu0
        %v9228 = vadd.f32 %v8907, %v9227
        %v9229 = vpop.f32.mrf.mxu0
        %9230 = vmatprep.mubr.f32.mxu0 0.0
        %9231 = vmatmul.mubr.f32.gmra.mxu0 %v9013
        %v9232 = vpop.f32.mrf.mxu0
        %v9233 = vadd.f32 %v8912, %v9232
        %v9234 = vpop.f32.mrf.mxu0
        %9235 = vmatprep.mubr.f32.mxu0 0.0
        %9236 = vmatmul.mubr.f32.gmra.mxu0 %v9016
        %v9237 = vpop.f32.mrf.mxu0
        %v9238 = vadd.f32 %v8917, %v9237
        %v9239 = vpop.f32.mrf.mxu0
        %9240 = vmatprep.mubr.f32.mxu0 0.0
        %9241 = vmatmul.mubr.f32.gmra.mxu0 %v9019
        %v9242 = vpop.f32.mrf.mxu0
        %v9243 = vadd.f32 %v8922, %v9242
        %v9244 = vpop.f32.mrf.mxu0
        %9245 = vdwg.mxu0
        %v9246 = vld [vmem:[%s4] sm:$0x1]
        %v9248 = vlaneseq
        %v9249 = vshrl.u32 %v9248, 7
        %v9250 = vsub.s32 0, %v9249
        %v9251 = vrot.slane %v9246, %v9250
        %v9253 = vadd.f32 %v9088, %v9251
        %v9254 = vadd.f32 %v9093, %v9251
        %v9255 = vadd.f32 %v9098, %v9251
        %v9256 = vadd.f32 %v9103, %v9251
        %v9257 = vadd.f32 %v9108, %v9251
        %v9258 = vadd.f32 %v9113, %v9251
        %v9259 = vadd.f32 %v9118, %v9251
        %v9260 = vadd.f32 %v9123, %v9251
        %v9261 = vadd.f32 %v9128, %v9251
        %v9262 = vadd.f32 %v9133, %v9251
        %v9263 = vadd.f32 %v9138, %v9251
        %v9264 = vadd.f32 %v9143, %v9251
        %v9265 = vadd.f32 %v9148, %v9251
        %v9266 = vadd.f32 %v9153, %v9251
        %v9267 = vadd.f32 %v9158, %v9251
        %v9268 = vadd.f32 %v9163, %v9251
        %v9269 = vadd.f32 %v9168, %v9251
        %v9270 = vadd.f32 %v9173, %v9251
        %v9271 = vadd.f32 %v9178, %v9251
        %v9272 = vadd.f32 %v9183, %v9251
        %v9273 = vadd.f32 %v9188, %v9251
        %v9274 = vadd.f32 %v9193, %v9251
        %v9275 = vadd.f32 %v9198, %v9251
        %v9276 = vadd.f32 %v9203, %v9251
        %v9277 = vadd.f32 %v9208, %v9251
        %v9278 = vadd.f32 %v9213, %v9251
        %v9279 = vadd.f32 %v9218, %v9251
        %v9280 = vadd.f32 %v9223, %v9251
        %v9281 = vadd.f32 %v9228, %v9251
        %v9282 = vadd.f32 %v9233, %v9251
        %v9283 = vadd.f32 %v9238, %v9251
        %v9284 = vadd.f32 %v9243, %v9251
        %v9285 = vsub.f32 0.0, %v9253
        %v9286 = vsub.f32 0.0, %v9254
        %v9287 = vsub.f32 0.0, %v9255
        %v9288 = vsub.f32 0.0, %v9256
        %v9289 = vsub.f32 0.0, %v9257
        %v9290 = vsub.f32 0.0, %v9258
        %v9291 = vsub.f32 0.0, %v9259
        %v9292 = vsub.f32 0.0, %v9260
        %v9293 = vsub.f32 0.0, %v9261
        %v9294 = vsub.f32 0.0, %v9262
        %v9295 = vsub.f32 0.0, %v9263
        %v9296 = vsub.f32 0.0, %v9264
        %v9297 = vsub.f32 0.0, %v9265
        %v9298 = vsub.f32 0.0, %v9266
        %v9299 = vsub.f32 0.0, %v9267
        %v9300 = vsub.f32 0.0, %v9268
        %v9301 = vsub.f32 0.0, %v9269
        %v9302 = vsub.f32 0.0, %v9270
        %v9303 = vsub.f32 0.0, %v9271
        %v9304 = vsub.f32 0.0, %v9272
        %v9305 = vsub.f32 0.0, %v9273
        %v9306 = vsub.f32 0.0, %v9274
        %v9307 = vsub.f32 0.0, %v9275
        %v9308 = vsub.f32 0.0, %v9276
        %v9309 = vsub.f32 0.0, %v9277
        %v9310 = vsub.f32 0.0, %v9278
        %v9311 = vsub.f32 0.0, %v9279
        %v9312 = vsub.f32 0.0, %v9280
        %v9313 = vsub.f32 0.0, %v9281
        %v9314 = vsub.f32 0.0, %v9282
        %v9315 = vsub.f32 0.0, %v9283
        %v9316 = vsub.f32 0.0, %v9284
        %v9317 = vmul.f32 %v9285, 1.442695
        %v9318 = vpow.pop %v9317
        %v9319 = vmul.f32 %v9286, 1.442695
        %v9320 = vpow.pop %v9319
        %v9321 = vmul.f32 %v9287, 1.442695
        %v9322 = vpow.pop %v9321
        %v9323 = vmul.f32 %v9288, 1.442695
        %v9324 = vpow.pop %v9323
        %v9325 = vmul.f32 %v9289, 1.442695
        %v9326 = vpow.pop %v9325
        %v9327 = vmul.f32 %v9290, 1.442695
        %v9328 = vpow.pop %v9327
        %v9329 = vmul.f32 %v9291, 1.442695
        %v9330 = vpow.pop %v9329
        %v9331 = vmul.f32 %v9292, 1.442695
        %v9332 = vpow.pop %v9331
        %v9333 = vmul.f32 %v9293, 1.442695
        %v9334 = vpow.pop %v9333
        %v9335 = vmul.f32 %v9294, 1.442695
        %v9336 = vpow.pop %v9335
        %v9337 = vmul.f32 %v9295, 1.442695
        %v9338 = vpow.pop %v9337
        %v9339 = vmul.f32 %v9296, 1.442695
        %v9340 = vpow.pop %v9339
        %v9341 = vmul.f32 %v9297, 1.442695
        %v9342 = vpow.pop %v9341
        %v9343 = vmul.f32 %v9298, 1.442695
        %v9344 = vpow.pop %v9343
        %v9345 = vmul.f32 %v9299, 1.442695
        %v9346 = vpow.pop %v9345
        %v9347 = vmul.f32 %v9300, 1.442695
        %v9348 = vpow.pop %v9347
        %v9349 = vmul.f32 %v9301, 1.442695
        %v9350 = vpow.pop %v9349
        %v9351 = vmul.f32 %v9302, 1.442695
        %v9352 = vpow.pop %v9351
        %v9353 = vmul.f32 %v9303, 1.442695
        %v9354 = vpow.pop %v9353
        %v9355 = vmul.f32 %v9304, 1.442695
        %v9356 = vpow.pop %v9355
        %v9357 = vmul.f32 %v9305, 1.442695
        %v9358 = vpow.pop %v9357
        %v9359 = vmul.f32 %v9306, 1.442695
        %v9360 = vpow.pop %v9359
        %v9361 = vmul.f32 %v9307, 1.442695
        %v9362 = vpow.pop %v9361
        %v9363 = vmul.f32 %v9308, 1.442695
        %v9364 = vpow.pop %v9363
        %v9365 = vmul.f32 %v9309, 1.442695
        %v9366 = vpow.pop %v9365
        %v9367 = vmul.f32 %v9310, 1.442695
        %v9368 = vpow.pop %v9367
        %v9369 = vmul.f32 %v9311, 1.442695
        %v9370 = vpow.pop %v9369
        %v9371 = vmul.f32 %v9312, 1.442695
        %v9372 = vpow.pop %v9371
        %v9373 = vmul.f32 %v9313, 1.442695
        %v9374 = vpow.pop %v9373
        %v9375 = vmul.f32 %v9314, 1.442695
        %v9376 = vpow.pop %v9375
        %v9377 = vmul.f32 %v9315, 1.442695
        %v9378 = vpow.pop %v9377
        %v9379 = vmul.f32 %v9316, 1.442695
        %v9380 = vpow.pop %v9379
        %v9381 = vadd.f32 %v9318, 1.0
        %v9382 = vadd.f32 %v9320, 1.0
        %v9383 = vadd.f32 %v9322, 1.0
        %v9384 = vadd.f32 %v9324, 1.0
        %v9385 = vadd.f32 %v9326, 1.0
        %v9386 = vadd.f32 %v9328, 1.0
        %v9387 = vadd.f32 %v9330, 1.0
        %v9388 = vadd.f32 %v9332, 1.0
        %v9389 = vadd.f32 %v9334, 1.0
        %v9390 = vadd.f32 %v9336, 1.0
        %v9391 = vadd.f32 %v9338, 1.0
        %v9392 = vadd.f32 %v9340, 1.0
        %v9393 = vadd.f32 %v9342, 1.0
        %v9394 = vadd.f32 %v9344, 1.0
        %v9395 = vadd.f32 %v9346, 1.0
        %v9396 = vadd.f32 %v9348, 1.0
        %v9397 = vadd.f32 %v9350, 1.0
        %v9398 = vadd.f32 %v9352, 1.0
        %v9399 = vadd.f32 %v9354, 1.0
        %v9400 = vadd.f32 %v9356, 1.0
        %v9401 = vadd.f32 %v9358, 1.0
        %v9402 = vadd.f32 %v9360, 1.0
        %v9403 = vadd.f32 %v9362, 1.0
        %v9404 = vadd.f32 %v9364, 1.0
        %v9405 = vadd.f32 %v9366, 1.0
        %v9406 = vadd.f32 %v9368, 1.0
        %v9407 = vadd.f32 %v9370, 1.0
        %v9408 = vadd.f32 %v9372, 1.0
        %v9409 = vadd.f32 %v9374, 1.0
        %v9410 = vadd.f32 %v9376, 1.0
        %v9411 = vadd.f32 %v9378, 1.0
        %v9412 = vadd.f32 %v9380, 1.0
        %v9413 = vrcp.pop %v9381
        %v9414 = vrcp.pop %v9382
        %v9415 = vrcp.pop %v9383
        %v9416 = vrcp.pop %v9384
        %v9417 = vrcp.pop %v9385
        %v9418 = vrcp.pop %v9386
        %v9419 = vrcp.pop %v9387
        %v9420 = vrcp.pop %v9388
        %v9421 = vrcp.pop %v9389
        %v9422 = vrcp.pop %v9390
        %v9423 = vrcp.pop %v9391
        %v9424 = vrcp.pop %v9392
        %v9425 = vrcp.pop %v9393
        %v9426 = vrcp.pop %v9394
        %v9427 = vrcp.pop %v9395
        %v9428 = vrcp.pop %v9396
        %v9429 = vrcp.pop %v9397
        %v9430 = vrcp.pop %v9398
        %v9431 = vrcp.pop %v9399
        %v9432 = vrcp.pop %v9400
        %v9433 = vrcp.pop %v9401
        %v9434 = vrcp.pop %v9402
        %v9435 = vrcp.pop %v9403
        %v9436 = vrcp.pop %v9404
        %v9437 = vrcp.pop %v9405
        %v9438 = vrcp.pop %v9406
        %v9439 = vrcp.pop %v9407
        %v9440 = vrcp.pop %v9408
        %v9441 = vrcp.pop %v9409
        %v9442 = vrcp.pop %v9410
        %v9443 = vrcp.pop %v9411
        %v9444 = vrcp.pop %v9412
        %v9445 = vmul.f32 %v9253, %v9413
        %v9446 = vmul.f32 %v9254, %v9414
        %v9447 = vmul.f32 %v9255, %v9415
        %v9448 = vmul.f32 %v9256, %v9416
        %v9449 = vmul.f32 %v9257, %v9417
        %v9450 = vmul.f32 %v9258, %v9418
        %v9451 = vmul.f32 %v9259, %v9419
        %v9452 = vmul.f32 %v9260, %v9420
        %v9453 = vmul.f32 %v9261, %v9421
        %v9454 = vmul.f32 %v9262, %v9422
        %v9455 = vmul.f32 %v9263, %v9423
        %v9456 = vmul.f32 %v9264, %v9424
        %v9457 = vmul.f32 %v9265, %v9425
        %v9458 = vmul.f32 %v9266, %v9426
        %v9459 = vmul.f32 %v9267, %v9427
        %v9460 = vmul.f32 %v9268, %v9428
        %v9461 = vmul.f32 %v9269, %v9429
        %v9462 = vmul.f32 %v9270, %v9430
        %v9463 = vmul.f32 %v9271, %v9431
        %v9464 = vmul.f32 %v9272, %v9432
        %v9465 = vmul.f32 %v9273, %v9433
        %v9466 = vmul.f32 %v9274, %v9434
        %v9467 = vmul.f32 %v9275, %v9435
        %v9468 = vmul.f32 %v9276, %v9436
        %v9469 = vmul.f32 %v9277, %v9437
        %v9470 = vmul.f32 %v9278, %v9438
        %v9471 = vmul.f32 %v9279, %v9439
        %v9472 = vmul.f32 %v9280, %v9440
        %v9473 = vmul.f32 %v9281, %v9441
        %v9474 = vmul.f32 %v9282, %v9442
        %v9475 = vmul.f32 %v9283, %v9443
        %v9476 = vmul.f32 %v9284, %v9444
        %v9478 = vsel %vm2198, %v8570, 0
        %v9481 = vsel %vm2198, %v8571, 0
        %v9484 = vsel %vm2198, %v8572, 0
        %v9487 = vsel %vm2198, %v8573, 0
        %v9490 = vsel %vm2198, %v8574, 0
        %v9493 = vsel %vm2198, %v8575, 0
        %v9496 = vsel %vm2198, %v8576, 0
        %v9499 = vsel %vm2198, %v8577, 0
        %v9502 = vsel %vm2198, %v8578, 0
        %v9505 = vsel %vm2198, %v8579, 0
        %v9508 = vsel %vm2198, %v8580, 0
        %v9511 = vsel %vm2198, %v8581, 0
        %v9514 = vsel %vm2198, %v8582, 0
        %v9517 = vsel %vm2198, %v8583, 0
        %v9520 = vsel %vm2198, %v8584, 0
        %v9523 = vsel %vm2198, %v8585, 0
        %v9526 = vsel %vm2198, %v8586, 0
        %v9529 = vsel %vm2198, %v8587, 0
        %v9532 = vsel %vm2198, %v8588, 0
        %v9535 = vsel %vm2198, %v8589, 0
        %v9538 = vsel %vm2198, %v8590, 0
        %v9541 = vsel %vm2198, %v8591, 0
        %v9544 = vsel %vm2198, %v8592, 0
        %v9547 = vsel %vm2198, %v8593, 0
        %v9550 = vsel %vm2198, %v8594, 0
        %v9553 = vsel %vm2198, %v8595, 0
        %v9556 = vsel %vm2198, %v8596, 0
        %v9559 = vsel %vm2198, %v8597, 0
        %v9562 = vsel %vm2198, %v8598, 0
        %v9565 = vsel %vm2198, %v8599, 0
        %v9568 = vsel %vm2198, %v8600, 0
        %v9571 = vsel %vm2198, %v8601, 0
        %9573 = vmatprep.subr.mxu0 0.0
        %9574 = vmatpush1.msra.mxu0 0.0
        %9575 = vmatprep.subr.mxu0 0.0
        %9576 = vmatpush1.msra.mxu0 0.0
        %9577 = vmatprep.subr.mxu0 0.0
        %9578 = vmatpush1.msra.mxu0 0.0
        %9579 = vmatprep.subr.mxu0 0.0
        %9580 = vmatpush1.msra.mxu0 0.0
        %9581 = vmatprep.subr.mxu0 0.0
        %9582 = vmatpush1.msra.mxu0 0.0
        %9583 = vmatprep.subr.mxu0 0.0
        %9584 = vmatpush1.msra.mxu0 0.0
        %9585 = vmatprep.subr.mxu0 0.0
        %9586 = vmatpush1.msra.mxu0 0.0
        %9587 = vmatprep.subr.mxu0 0.0
        %9588 = vmatpush1.msra.mxu0 0.0
        %9589 = vmatprep.subr.mxu0 0.0
        %9590 = vmatpush1.msra.mxu0 0.0
        %9591 = vmatprep.subr.mxu0 0.0
        %9592 = vmatpush1.msra.mxu0 0.0
        %9593 = vmatprep.subr.mxu0 0.0
        %9594 = vmatpush1.msra.mxu0 0.0
        %9595 = vmatprep.subr.mxu0 0.0
        %9596 = vmatpush1.msra.mxu0 0.0
        %9597 = vmatprep.subr.mxu0 0.0
        %9598 = vmatpush1.msra.mxu0 0.0
        %9599 = vmatprep.subr.mxu0 0.0
        %9600 = vmatpush1.msra.mxu0 0.0
        %9601 = vmatprep.subr.mxu0 0.0
        %9602 = vmatpush1.msra.mxu0 0.0
        %9603 = vmatprep.subr.mxu0 0.0
        %9604 = vmatpush1.msra.mxu0 %v8603
        %9605 = vmatprep.subr.mxu0 0.0
        %9606 = vmatpush2.msra.mxu0 0.0
        %9607 = vmatprep.subr.mxu0 0.0
        %9608 = vmatpush2.msra.mxu0 0.0
        %9609 = vmatprep.subr.mxu0 0.0
        %9610 = vmatpush2.msra.mxu0 0.0
        %9611 = vmatprep.subr.mxu0 0.0
        %9612 = vmatpush2.msra.mxu0 0.0
        %9613 = vmatprep.subr.mxu0 0.0
        %9614 = vmatpush2.msra.mxu0 0.0
        %9615 = vmatprep.subr.mxu0 0.0
        %9616 = vmatpush2.msra.mxu0 0.0
        %9617 = vmatprep.subr.mxu0 0.0
        %9618 = vmatpush2.msra.mxu0 0.0
        %9619 = vmatprep.subr.mxu0 0.0
        %9620 = vmatpush2.msra.mxu0 0.0
        %9621 = vmatprep.subr.mxu0 0.0
        %9622 = vmatpush2.msra.mxu0 0.0
        %9623 = vmatprep.subr.mxu0 0.0
        %9624 = vmatpush2.msra.mxu0 0.0
        %9625 = vmatprep.subr.mxu0 0.0
        %9626 = vmatpush2.msra.mxu0 0.0
        %9627 = vmatprep.subr.mxu0 0.0
        %9628 = vmatpush2.msra.mxu0 0.0
        %9629 = vmatprep.subr.mxu0 0.0
        %9630 = vmatpush2.msra.mxu0 0.0
        %9631 = vmatprep.subr.mxu0 0.0
        %9632 = vmatpush2.msra.mxu0 0.0
        %9633 = vmatprep.subr.mxu0 0.0
        %9634 = vmatpush2.msra.mxu0 0.0
        %9635 = vmatprep.subr.mxu0 0.0
        %9636 = vmatpush2.msra.mxu0 0.0
        %9637 = vmatprep.mubr.f32.mxu0 0.0
        %9638 = vmatmul.mubr.f32.gmra.mxu0 %v9478
        %v9639 = vpop.f32.mrf.mxu0
        %v9640 = vadd.f32 0.0, %v9639
        %v9641 = vpop.f32.mrf.mxu0
        %9642 = vmatprep.mubr.f32.mxu0 0.0
        %9643 = vmatmul.mubr.f32.gmra.mxu0 %v9481
        %v9644 = vpop.f32.mrf.mxu0
        %v9645 = vadd.f32 0.0, %v9644
        %v9646 = vpop.f32.mrf.mxu0
        %9647 = vmatprep.mubr.f32.mxu0 0.0
        %9648 = vmatmul.mubr.f32.gmra.mxu0 %v9484
        %v9649 = vpop.f32.mrf.mxu0
        %v9650 = vadd.f32 0.0, %v9649
        %v9651 = vpop.f32.mrf.mxu0
        %9652 = vmatprep.mubr.f32.mxu0 0.0
        %9653 = vmatmul.mubr.f32.gmra.mxu0 %v9487
        %v9654 = vpop.f32.mrf.mxu0
        %v9655 = vadd.f32 0.0, %v9654
        %v9656 = vpop.f32.mrf.mxu0
        %9657 = vmatprep.mubr.f32.mxu0 0.0
        %9658 = vmatmul.mubr.f32.gmra.mxu0 %v9490
        %v9659 = vpop.f32.mrf.mxu0
        %v9660 = vadd.f32 0.0, %v9659
        %v9661 = vpop.f32.mrf.mxu0
        %9662 = vmatprep.mubr.f32.mxu0 0.0
        %9663 = vmatmul.mubr.f32.gmra.mxu0 %v9493
        %v9664 = vpop.f32.mrf.mxu0
        %v9665 = vadd.f32 0.0, %v9664
        %v9666 = vpop.f32.mrf.mxu0
        %9667 = vmatprep.mubr.f32.mxu0 0.0
        %9668 = vmatmul.mubr.f32.gmra.mxu0 %v9496
        %v9669 = vpop.f32.mrf.mxu0
        %v9670 = vadd.f32 0.0, %v9669
        %v9671 = vpop.f32.mrf.mxu0
        %9672 = vmatprep.mubr.f32.mxu0 0.0
        %9673 = vmatmul.mubr.f32.gmra.mxu0 %v9499
        %v9674 = vpop.f32.mrf.mxu0
        %v9675 = vadd.f32 0.0, %v9674
        %v9676 = vpop.f32.mrf.mxu0
        %9677 = vmatprep.mubr.f32.mxu0 0.0
        %9678 = vmatmul.mubr.f32.gmra.mxu0 %v9502
        %v9679 = vpop.f32.mrf.mxu0
        %v9680 = vadd.f32 0.0, %v9679
        %v9681 = vpop.f32.mrf.mxu0
        %9682 = vmatprep.mubr.f32.mxu0 0.0
        %9683 = vmatmul.mubr.f32.gmra.mxu0 %v9505
        %v9684 = vpop.f32.mrf.mxu0
        %v9685 = vadd.f32 0.0, %v9684
        %v9686 = vpop.f32.mrf.mxu0
        %9687 = vmatprep.mubr.f32.mxu0 0.0
        %9688 = vmatmul.mubr.f32.gmra.mxu0 %v9508
        %v9689 = vpop.f32.mrf.mxu0
        %v9690 = vadd.f32 0.0, %v9689
        %v9691 = vpop.f32.mrf.mxu0
        %9692 = vmatprep.mubr.f32.mxu0 0.0
        %9693 = vmatmul.mubr.f32.gmra.mxu0 %v9511
        %v9694 = vpop.f32.mrf.mxu0
        %v9695 = vadd.f32 0.0, %v9694
        %v9696 = vpop.f32.mrf.mxu0
        %9697 = vmatprep.mubr.f32.mxu0 0.0
        %9698 = vmatmul.mubr.f32.gmra.mxu0 %v9514
        %v9699 = vpop.f32.mrf.mxu0
        %v9700 = vadd.f32 0.0, %v9699
        %v9701 = vpop.f32.mrf.mxu0
        %9702 = vmatprep.mubr.f32.mxu0 0.0
        %9703 = vmatmul.mubr.f32.gmra.mxu0 %v9517
        %v9704 = vpop.f32.mrf.mxu0
        %v9705 = vadd.f32 0.0, %v9704
        %v9706 = vpop.f32.mrf.mxu0
        %9707 = vmatprep.mubr.f32.mxu0 0.0
        %9708 = vmatmul.mubr.f32.gmra.mxu0 %v9520
        %v9709 = vpop.f32.mrf.mxu0
        %v9710 = vadd.f32 0.0, %v9709
        %v9711 = vpop.f32.mrf.mxu0
        %9712 = vmatprep.mubr.f32.mxu0 0.0
        %9713 = vmatmul.mubr.f32.gmra.mxu0 %v9523
        %v9714 = vpop.f32.mrf.mxu0
        %v9715 = vadd.f32 0.0, %v9714
        %v9716 = vpop.f32.mrf.mxu0
        %9717 = vmatprep.mubr.f32.mxu0 0.0
        %9718 = vmatmul.mubr.f32.gmra.mxu0 %v9526
        %v9719 = vpop.f32.mrf.mxu0
        %v9720 = vadd.f32 0.0, %v9719
        %v9721 = vpop.f32.mrf.mxu0
        %9722 = vmatprep.mubr.f32.mxu0 0.0
        %9723 = vmatmul.mubr.f32.gmra.mxu0 %v9529
        %v9724 = vpop.f32.mrf.mxu0
        %v9725 = vadd.f32 0.0, %v9724
        %v9726 = vpop.f32.mrf.mxu0
        %9727 = vmatprep.mubr.f32.mxu0 0.0
        %9728 = vmatmul.mubr.f32.gmra.mxu0 %v9532
        %v9729 = vpop.f32.mrf.mxu0
        %v9730 = vadd.f32 0.0, %v9729
        %v9731 = vpop.f32.mrf.mxu0
        %9732 = vmatprep.mubr.f32.mxu0 0.0
        %9733 = vmatmul.mubr.f32.gmra.mxu0 %v9535
        %v9734 = vpop.f32.mrf.mxu0
        %v9735 = vadd.f32 0.0, %v9734
        %v9736 = vpop.f32.mrf.mxu0
        %9737 = vmatprep.mubr.f32.mxu0 0.0
        %9738 = vmatmul.mubr.f32.gmra.mxu0 %v9538
        %v9739 = vpop.f32.mrf.mxu0
        %v9740 = vadd.f32 0.0, %v9739
        %v9741 = vpop.f32.mrf.mxu0
        %9742 = vmatprep.mubr.f32.mxu0 0.0
        %9743 = vmatmul.mubr.f32.gmra.mxu0 %v9541
        %v9744 = vpop.f32.mrf.mxu0
        %v9745 = vadd.f32 0.0, %v9744
        %v9746 = vpop.f32.mrf.mxu0
        %9747 = vmatprep.mubr.f32.mxu0 0.0
        %9748 = vmatmul.mubr.f32.gmra.mxu0 %v9544
        %v9749 = vpop.f32.mrf.mxu0
        %v9750 = vadd.f32 0.0, %v9749
        %v9751 = vpop.f32.mrf.mxu0
        %9752 = vmatprep.mubr.f32.mxu0 0.0
        %9753 = vmatmul.mubr.f32.gmra.mxu0 %v9547
        %v9754 = vpop.f32.mrf.mxu0
        %v9755 = vadd.f32 0.0, %v9754
        %v9756 = vpop.f32.mrf.mxu0
        %9757 = vmatprep.mubr.f32.mxu0 0.0
        %9758 = vmatmul.mubr.f32.gmra.mxu0 %v9550
        %v9759 = vpop.f32.mrf.mxu0
        %v9760 = vadd.f32 0.0, %v9759
        %v9761 = vpop.f32.mrf.mxu0
        %9762 = vmatprep.mubr.f32.mxu0 0.0
        %9763 = vmatmul.mubr.f32.gmra.mxu0 %v9553
        %v9764 = vpop.f32.mrf.mxu0
        %v9765 = vadd.f32 0.0, %v9764
        %v9766 = vpop.f32.mrf.mxu0
        %9767 = vmatprep.mubr.f32.mxu0 0.0
        %9768 = vmatmul.mubr.f32.gmra.mxu0 %v9556
        %v9769 = vpop.f32.mrf.mxu0
        %v9770 = vadd.f32 0.0, %v9769
        %v9771 = vpop.f32.mrf.mxu0
        %9772 = vmatprep.mubr.f32.mxu0 0.0
        %9773 = vmatmul.mubr.f32.gmra.mxu0 %v9559
        %v9774 = vpop.f32.mrf.mxu0
        %v9775 = vadd.f32 0.0, %v9774
        %v9776 = vpop.f32.mrf.mxu0
        %9777 = vmatprep.mubr.f32.mxu0 0.0
        %9778 = vmatmul.mubr.f32.gmra.mxu0 %v9562
        %v9779 = vpop.f32.mrf.mxu0
        %v9780 = vadd.f32 0.0, %v9779
        %v9781 = vpop.f32.mrf.mxu0
        %9782 = vmatprep.mubr.f32.mxu0 0.0
        %9783 = vmatmul.mubr.f32.gmra.mxu0 %v9565
        %v9784 = vpop.f32.mrf.mxu0
        %v9785 = vadd.f32 0.0, %v9784
        %v9786 = vpop.f32.mrf.mxu0
        %9787 = vmatprep.mubr.f32.mxu0 0.0
        %9788 = vmatmul.mubr.f32.gmra.mxu0 %v9568
        %v9789 = vpop.f32.mrf.mxu0
        %v9790 = vadd.f32 0.0, %v9789
        %v9791 = vpop.f32.mrf.mxu0
        %9792 = vmatprep.mubr.f32.mxu0 0.0
        %9793 = vmatmul.mubr.f32.gmra.mxu0 %v9571
        %v9794 = vpop.f32.mrf.mxu0
        %v9795 = vadd.f32 0.0, %v9794
        %v9796 = vpop.f32.mrf.mxu0
        %9797 = vdwg.mxu0
        %v9799 = vsel %vm2198, %v6690, 0
        %v9802 = vsel %vm2198, %v6691, 0
        %v9805 = vsel %vm2198, %v6692, 0
        %v9808 = vsel %vm2198, %v6693, 0
        %v9811 = vsel %vm2198, %v6694, 0
        %v9814 = vsel %vm2198, %v6695, 0
        %v9817 = vsel %vm2198, %v6696, 0
        %v9820 = vsel %vm2198, %v6697, 0
        %v9823 = vsel %vm2198, %v6698, 0
        %v9826 = vsel %vm2198, %v6699, 0
        %v9829 = vsel %vm2198, %v6700, 0
        %v9832 = vsel %vm2198, %v6701, 0
        %v9835 = vsel %vm2198, %v6702, 0
        %v9838 = vsel %vm2198, %v6703, 0
        %v9841 = vsel %vm2198, %v6704, 0
        %v9844 = vsel %vm2198, %v6705, 0
        %v9847 = vsel %vm2198, %v6706, 0
        %v9850 = vsel %vm2198, %v6707, 0
        %v9853 = vsel %vm2198, %v6708, 0
        %v9856 = vsel %vm2198, %v6709, 0
        %v9859 = vsel %vm2198, %v6710, 0
        %v9862 = vsel %vm2198, %v6711, 0
        %v9865 = vsel %vm2198, %v6712, 0
        %v9868 = vsel %vm2198, %v6713, 0
        %v9871 = vsel %vm2198, %v6714, 0
        %v9874 = vsel %vm2198, %v6715, 0
        %v9877 = vsel %vm2198, %v6716, 0
        %v9880 = vsel %vm2198, %v6717, 0
        %v9883 = vsel %vm2198, %v6718, 0
        %v9886 = vsel %vm2198, %v6719, 0
        %v9889 = vsel %vm2198, %v6720, 0
        %v9892 = vsel %vm2198, %v6721, 0
        %9894 = vmatprep.subr.mxu0 0.0
        %9895 = vmatpush1.msra.mxu0 0.0
        %9896 = vmatprep.subr.mxu0 0.0
        %9897 = vmatpush1.msra.mxu0 0.0
        %9898 = vmatprep.subr.mxu0 0.0
        %9899 = vmatpush1.msra.mxu0 0.0
        %9900 = vmatprep.subr.mxu0 0.0
        %9901 = vmatpush1.msra.mxu0 0.0
        %9902 = vmatprep.subr.mxu0 0.0
        %9903 = vmatpush1.msra.mxu0 0.0
        %9904 = vmatprep.subr.mxu0 0.0
        %9905 = vmatpush1.msra.mxu0 0.0
        %9906 = vmatprep.subr.mxu0 0.0
        %9907 = vmatpush1.msra.mxu0 0.0
        %9908 = vmatprep.subr.mxu0 0.0
        %9909 = vmatpush1.msra.mxu0 0.0
        %9910 = vmatprep.subr.mxu0 0.0
        %9911 = vmatpush1.msra.mxu0 0.0
        %9912 = vmatprep.subr.mxu0 0.0
        %9913 = vmatpush1.msra.mxu0 0.0
        %9914 = vmatprep.subr.mxu0 0.0
        %9915 = vmatpush1.msra.mxu0 0.0
        %9916 = vmatprep.subr.mxu0 0.0
        %9917 = vmatpush1.msra.mxu0 0.0
        %9918 = vmatprep.subr.mxu0 0.0
        %9919 = vmatpush1.msra.mxu0 0.0
        %9920 = vmatprep.subr.mxu0 0.0
        %9921 = vmatpush1.msra.mxu0 0.0
        %9922 = vmatprep.subr.mxu0 0.0
        %9923 = vmatpush1.msra.mxu0 0.0
        %9924 = vmatprep.subr.mxu0 0.0
        %9925 = vmatpush1.msra.mxu0 %v8602
        %9926 = vmatprep.subr.mxu0 0.0
        %9927 = vmatpush2.msra.mxu0 0.0
        %9928 = vmatprep.subr.mxu0 0.0
        %9929 = vmatpush2.msra.mxu0 0.0
        %9930 = vmatprep.subr.mxu0 0.0
        %9931 = vmatpush2.msra.mxu0 0.0
        %9932 = vmatprep.subr.mxu0 0.0
        %9933 = vmatpush2.msra.mxu0 0.0
        %9934 = vmatprep.subr.mxu0 0.0
        %9935 = vmatpush2.msra.mxu0 0.0
        %9936 = vmatprep.subr.mxu0 0.0
        %9937 = vmatpush2.msra.mxu0 0.0
        %9938 = vmatprep.subr.mxu0 0.0
        %9939 = vmatpush2.msra.mxu0 0.0
        %9940 = vmatprep.subr.mxu0 0.0
        %9941 = vmatpush2.msra.mxu0 0.0
        %9942 = vmatprep.subr.mxu0 0.0
        %9943 = vmatpush2.msra.mxu0 0.0
        %9944 = vmatprep.subr.mxu0 0.0
        %9945 = vmatpush2.msra.mxu0 0.0
        %9946 = vmatprep.subr.mxu0 0.0
        %9947 = vmatpush2.msra.mxu0 0.0
        %9948 = vmatprep.subr.mxu0 0.0
        %9949 = vmatpush2.msra.mxu0 0.0
        %9950 = vmatprep.subr.mxu0 0.0
        %9951 = vmatpush2.msra.mxu0 0.0
        %9952 = vmatprep.subr.mxu0 0.0
        %9953 = vmatpush2.msra.mxu0 0.0
        %9954 = vmatprep.subr.mxu0 0.0
        %9955 = vmatpush2.msra.mxu0 0.0
        %9956 = vmatprep.subr.mxu0 0.0
        %9957 = vmatpush2.msra.mxu0 0.0
        %9958 = vmatprep.mubr.f32.mxu0 0.0
        %9959 = vmatmul.mubr.f32.gmra.mxu0 %v9799
        %v9960 = vpop.f32.mrf.mxu0
        %v9961 = vadd.f32 %v9640, %v9960
        %v9962 = vpop.f32.mrf.mxu0
        %9963 = vmatprep.mubr.f32.mxu0 0.0
        %9964 = vmatmul.mubr.f32.gmra.mxu0 %v9802
        %v9965 = vpop.f32.mrf.mxu0
        %v9966 = vadd.f32 %v9645, %v9965
        %v9967 = vpop.f32.mrf.mxu0
        %9968 = vmatprep.mubr.f32.mxu0 0.0
        %9969 = vmatmul.mubr.f32.gmra.mxu0 %v9805
        %v9970 = vpop.f32.mrf.mxu0
        %v9971 = vadd.f32 %v9650, %v9970
        %v9972 = vpop.f32.mrf.mxu0
        %9973 = vmatprep.mubr.f32.mxu0 0.0
        %9974 = vmatmul.mubr.f32.gmra.mxu0 %v9808
        %v9975 = vpop.f32.mrf.mxu0
        %v9976 = vadd.f32 %v9655, %v9975
        %v9977 = vpop.f32.mrf.mxu0
        %9978 = vmatprep.mubr.f32.mxu0 0.0
        %9979 = vmatmul.mubr.f32.gmra.mxu0 %v9811
        %v9980 = vpop.f32.mrf.mxu0
        %v9981 = vadd.f32 %v9660, %v9980
        %v9982 = vpop.f32.mrf.mxu0
        %9983 = vmatprep.mubr.f32.mxu0 0.0
        %9984 = vmatmul.mubr.f32.gmra.mxu0 %v9814
        %v9985 = vpop.f32.mrf.mxu0
        %v9986 = vadd.f32 %v9665, %v9985
        %v9987 = vpop.f32.mrf.mxu0
        %9988 = vmatprep.mubr.f32.mxu0 0.0
        %9989 = vmatmul.mubr.f32.gmra.mxu0 %v9817
        %v9990 = vpop.f32.mrf.mxu0
        %v9991 = vadd.f32 %v9670, %v9990
        %v9992 = vpop.f32.mrf.mxu0
        %9993 = vmatprep.mubr.f32.mxu0 0.0
        %9994 = vmatmul.mubr.f32.gmra.mxu0 %v9820
        %v9995 = vpop.f32.mrf.mxu0
        %v9996 = vadd.f32 %v9675, %v9995
        %v9997 = vpop.f32.mrf.mxu0
        %9998 = vmatprep.mubr.f32.mxu0 0.0
        %9999 = vmatmul.mubr.f32.gmra.mxu0 %v9823
        %v10000 = vpop.f32.mrf.mxu0
        %v10001 = vadd.f32 %v9680, %v10000
        %v10002 = vpop.f32.mrf.mxu0
        %10003 = vmatprep.mubr.f32.mxu0 0.0
        %10004 = vmatmul.mubr.f32.gmra.mxu0 %v9826
        %v10005 = vpop.f32.mrf.mxu0
        %v10006 = vadd.f32 %v9685, %v10005
        %v10007 = vpop.f32.mrf.mxu0
        %10008 = vmatprep.mubr.f32.mxu0 0.0
        %10009 = vmatmul.mubr.f32.gmra.mxu0 %v9829
        %v10010 = vpop.f32.mrf.mxu0
        %v10011 = vadd.f32 %v9690, %v10010
        %v10012 = vpop.f32.mrf.mxu0
        %10013 = vmatprep.mubr.f32.mxu0 0.0
        %10014 = vmatmul.mubr.f32.gmra.mxu0 %v9832
        %v10015 = vpop.f32.mrf.mxu0
        %v10016 = vadd.f32 %v9695, %v10015
        %v10017 = vpop.f32.mrf.mxu0
        %10018 = vmatprep.mubr.f32.mxu0 0.0
        %10019 = vmatmul.mubr.f32.gmra.mxu0 %v9835
        %v10020 = vpop.f32.mrf.mxu0
        %v10021 = vadd.f32 %v9700, %v10020
        %v10022 = vpop.f32.mrf.mxu0
        %10023 = vmatprep.mubr.f32.mxu0 0.0
        %10024 = vmatmul.mubr.f32.gmra.mxu0 %v9838
        %v10025 = vpop.f32.mrf.mxu0
        %v10026 = vadd.f32 %v9705, %v10025
        %v10027 = vpop.f32.mrf.mxu0
        %10028 = vmatprep.mubr.f32.mxu0 0.0
        %10029 = vmatmul.mubr.f32.gmra.mxu0 %v9841
        %v10030 = vpop.f32.mrf.mxu0
        %v10031 = vadd.f32 %v9710, %v10030
        %v10032 = vpop.f32.mrf.mxu0
        %10033 = vmatprep.mubr.f32.mxu0 0.0
        %10034 = vmatmul.mubr.f32.gmra.mxu0 %v9844
        %v10035 = vpop.f32.mrf.mxu0
        %v10036 = vadd.f32 %v9715, %v10035
        %v10037 = vpop.f32.mrf.mxu0
        %10038 = vmatprep.mubr.f32.mxu0 0.0
        %10039 = vmatmul.mubr.f32.gmra.mxu0 %v9847
        %v10040 = vpop.f32.mrf.mxu0
        %v10041 = vadd.f32 %v9720, %v10040
        %v10042 = vpop.f32.mrf.mxu0
        %10043 = vmatprep.mubr.f32.mxu0 0.0
        %10044 = vmatmul.mubr.f32.gmra.mxu0 %v9850
        %v10045 = vpop.f32.mrf.mxu0
        %v10046 = vadd.f32 %v9725, %v10045
        %v10047 = vpop.f32.mrf.mxu0
        %10048 = vmatprep.mubr.f32.mxu0 0.0
        %10049 = vmatmul.mubr.f32.gmra.mxu0 %v9853
        %v10050 = vpop.f32.mrf.mxu0
        %v10051 = vadd.f32 %v9730, %v10050
        %v10052 = vpop.f32.mrf.mxu0
        %10053 = vmatprep.mubr.f32.mxu0 0.0
        %10054 = vmatmul.mubr.f32.gmra.mxu0 %v9856
        %v10055 = vpop.f32.mrf.mxu0
        %v10056 = vadd.f32 %v9735, %v10055
        %v10057 = vpop.f32.mrf.mxu0
        %10058 = vmatprep.mubr.f32.mxu0 0.0
        %10059 = vmatmul.mubr.f32.gmra.mxu0 %v9859
        %v10060 = vpop.f32.mrf.mxu0
        %v10061 = vadd.f32 %v9740, %v10060
        %v10062 = vpop.f32.mrf.mxu0
        %10063 = vmatprep.mubr.f32.mxu0 0.0
        %10064 = vmatmul.mubr.f32.gmra.mxu0 %v9862
        %v10065 = vpop.f32.mrf.mxu0
        %v10066 = vadd.f32 %v9745, %v10065
        %v10067 = vpop.f32.mrf.mxu0
        %10068 = vmatprep.mubr.f32.mxu0 0.0
        %10069 = vmatmul.mubr.f32.gmra.mxu0 %v9865
        %v10070 = vpop.f32.mrf.mxu0
        %v10071 = vadd.f32 %v9750, %v10070
        %v10072 = vpop.f32.mrf.mxu0
        %10073 = vmatprep.mubr.f32.mxu0 0.0
        %10074 = vmatmul.mubr.f32.gmra.mxu0 %v9868
        %v10075 = vpop.f32.mrf.mxu0
        %v10076 = vadd.f32 %v9755, %v10075
        %v10077 = vpop.f32.mrf.mxu0
        %10078 = vmatprep.mubr.f32.mxu0 0.0
        %10079 = vmatmul.mubr.f32.gmra.mxu0 %v9871
        %v10080 = vpop.f32.mrf.mxu0
        %v10081 = vadd.f32 %v9760, %v10080
        %v10082 = vpop.f32.mrf.mxu0
        %10083 = vmatprep.mubr.f32.mxu0 0.0
        %10084 = vmatmul.mubr.f32.gmra.mxu0 %v9874
        %v10085 = vpop.f32.mrf.mxu0
        %v10086 = vadd.f32 %v9765, %v10085
        %v10087 = vpop.f32.mrf.mxu0
        %10088 = vmatprep.mubr.f32.mxu0 0.0
        %10089 = vmatmul.mubr.f32.gmra.mxu0 %v9877
        %v10090 = vpop.f32.mrf.mxu0
        %v10091 = vadd.f32 %v9770, %v10090
        %v10092 = vpop.f32.mrf.mxu0
        %10093 = vmatprep.mubr.f32.mxu0 0.0
        %10094 = vmatmul.mubr.f32.gmra.mxu0 %v9880
        %v10095 = vpop.f32.mrf.mxu0
        %v10096 = vadd.f32 %v9775, %v10095
        %v10097 = vpop.f32.mrf.mxu0
        %10098 = vmatprep.mubr.f32.mxu0 0.0
        %10099 = vmatmul.mubr.f32.gmra.mxu0 %v9883
        %v10100 = vpop.f32.mrf.mxu0
        %v10101 = vadd.f32 %v9780, %v10100
        %v10102 = vpop.f32.mrf.mxu0
        %10103 = vmatprep.mubr.f32.mxu0 0.0
        %10104 = vmatmul.mubr.f32.gmra.mxu0 %v9886
        %v10105 = vpop.f32.mrf.mxu0
        %v10106 = vadd.f32 %v9785, %v10105
        %v10107 = vpop.f32.mrf.mxu0
        %10108 = vmatprep.mubr.f32.mxu0 0.0
        %10109 = vmatmul.mubr.f32.gmra.mxu0 %v9889
        %v10110 = vpop.f32.mrf.mxu0
        %v10111 = vadd.f32 %v9790, %v10110
        %v10112 = vpop.f32.mrf.mxu0
        %10113 = vmatprep.mubr.f32.mxu0 0.0
        %10114 = vmatmul.mubr.f32.gmra.mxu0 %v9892
        %v10115 = vpop.f32.mrf.mxu0
        %v10116 = vadd.f32 %v9795, %v10115
        %v10117 = vpop.f32.mrf.mxu0
        %10118 = vdwg.mxu0
        %v10119 = vadd.f32 %v9961, %v9251
        %v10120 = vadd.f32 %v9966, %v9251
        %v10121 = vadd.f32 %v9971, %v9251
        %v10122 = vadd.f32 %v9976, %v9251
        %v10123 = vadd.f32 %v9981, %v9251
        %v10124 = vadd.f32 %v9986, %v9251
        %v10125 = vadd.f32 %v9991, %v9251
        %v10126 = vadd.f32 %v9996, %v9251
        %v10127 = vadd.f32 %v10001, %v9251
        %v10128 = vadd.f32 %v10006, %v9251
        %v10129 = vadd.f32 %v10011, %v9251
        %v10130 = vadd.f32 %v10016, %v9251
        %v10131 = vadd.f32 %v10021, %v9251
        %v10132 = vadd.f32 %v10026, %v9251
        %v10133 = vadd.f32 %v10031, %v9251
        %v10134 = vadd.f32 %v10036, %v9251
        %v10135 = vadd.f32 %v10041, %v9251
        %v10136 = vadd.f32 %v10046, %v9251
        %v10137 = vadd.f32 %v10051, %v9251
        %v10138 = vadd.f32 %v10056, %v9251
        %v10139 = vadd.f32 %v10061, %v9251
        %v10140 = vadd.f32 %v10066, %v9251
        %v10141 = vadd.f32 %v10071, %v9251
        %v10142 = vadd.f32 %v10076, %v9251
        %v10143 = vadd.f32 %v10081, %v9251
        %v10144 = vadd.f32 %v10086, %v9251
        %v10145 = vadd.f32 %v10091, %v9251
        %v10146 = vadd.f32 %v10096, %v9251
        %v10147 = vadd.f32 %v10101, %v9251
        %v10148 = vadd.f32 %v10106, %v9251
        %v10149 = vadd.f32 %v10111, %v9251
        %v10150 = vadd.f32 %v10116, %v9251
        %v10151 = vsub.f32 0.0, %v10119
        %v10152 = vsub.f32 0.0, %v10120
        %v10153 = vsub.f32 0.0, %v10121
        %v10154 = vsub.f32 0.0, %v10122
        %v10155 = vsub.f32 0.0, %v10123
        %v10156 = vsub.f32 0.0, %v10124
        %v10157 = vsub.f32 0.0, %v10125
        %v10158 = vsub.f32 0.0, %v10126
        %v10159 = vsub.f32 0.0, %v10127
        %v10160 = vsub.f32 0.0, %v10128
        %v10161 = vsub.f32 0.0, %v10129
        %v10162 = vsub.f32 0.0, %v10130
        %v10163 = vsub.f32 0.0, %v10131
        %v10164 = vsub.f32 0.0, %v10132
        %v10165 = vsub.f32 0.0, %v10133
        %v10166 = vsub.f32 0.0, %v10134
        %v10167 = vsub.f32 0.0, %v10135
        %v10168 = vsub.f32 0.0, %v10136
        %v10169 = vsub.f32 0.0, %v10137
        %v10170 = vsub.f32 0.0, %v10138
        %v10171 = vsub.f32 0.0, %v10139
        %v10172 = vsub.f32 0.0, %v10140
        %v10173 = vsub.f32 0.0, %v10141
        %v10174 = vsub.f32 0.0, %v10142
        %v10175 = vsub.f32 0.0, %v10143
        %v10176 = vsub.f32 0.0, %v10144
        %v10177 = vsub.f32 0.0, %v10145
        %v10178 = vsub.f32 0.0, %v10146
        %v10179 = vsub.f32 0.0, %v10147
        %v10180 = vsub.f32 0.0, %v10148
        %v10181 = vsub.f32 0.0, %v10149
        %v10182 = vsub.f32 0.0, %v10150
        %v10183 = vmul.f32 %v10151, 1.442695
        %v10184 = vpow.pop %v10183
        %v10185 = vmul.f32 %v10152, 1.442695
        %v10186 = vpow.pop %v10185
        %v10187 = vmul.f32 %v10153, 1.442695
        %v10188 = vpow.pop %v10187
        %v10189 = vmul.f32 %v10154, 1.442695
        %v10190 = vpow.pop %v10189
        %v10191 = vmul.f32 %v10155, 1.442695
        %v10192 = vpow.pop %v10191
        %v10193 = vmul.f32 %v10156, 1.442695
        %v10194 = vpow.pop %v10193
        %v10195 = vmul.f32 %v10157, 1.442695
        %v10196 = vpow.pop %v10195
        %v10197 = vmul.f32 %v10158, 1.442695
        %v10198 = vpow.pop %v10197
        %v10199 = vmul.f32 %v10159, 1.442695
        %v10200 = vpow.pop %v10199
        %v10201 = vmul.f32 %v10160, 1.442695
        %v10202 = vpow.pop %v10201
        %v10203 = vmul.f32 %v10161, 1.442695
        %v10204 = vpow.pop %v10203
        %v10205 = vmul.f32 %v10162, 1.442695
        %v10206 = vpow.pop %v10205
        %v10207 = vmul.f32 %v10163, 1.442695
        %v10208 = vpow.pop %v10207
        %v10209 = vmul.f32 %v10164, 1.442695
        %v10210 = vpow.pop %v10209
        %v10211 = vmul.f32 %v10165, 1.442695
        %v10212 = vpow.pop %v10211
        %v10213 = vmul.f32 %v10166, 1.442695
        %v10214 = vpow.pop %v10213
        %v10215 = vmul.f32 %v10167, 1.442695
        %v10216 = vpow.pop %v10215
        %v10217 = vmul.f32 %v10168, 1.442695
        %v10218 = vpow.pop %v10217
        %v10219 = vmul.f32 %v10169, 1.442695
        %v10220 = vpow.pop %v10219
        %v10221 = vmul.f32 %v10170, 1.442695
        %v10222 = vpow.pop %v10221
        %v10223 = vmul.f32 %v10171, 1.442695
        %v10224 = vpow.pop %v10223
        %v10225 = vmul.f32 %v10172, 1.442695
        %v10226 = vpow.pop %v10225
        %v10227 = vmul.f32 %v10173, 1.442695
        %v10228 = vpow.pop %v10227
        %v10229 = vmul.f32 %v10174, 1.442695
        %v10230 = vpow.pop %v10229
        %v10231 = vmul.f32 %v10175, 1.442695
        %v10232 = vpow.pop %v10231
        %v10233 = vmul.f32 %v10176, 1.442695
        %v10234 = vpow.pop %v10233
        %v10235 = vmul.f32 %v10177, 1.442695
        %v10236 = vpow.pop %v10235
        %v10237 = vmul.f32 %v10178, 1.442695
        %v10238 = vpow.pop %v10237
        %v10239 = vmul.f32 %v10179, 1.442695
        %v10240 = vpow.pop %v10239
        %v10241 = vmul.f32 %v10180, 1.442695
        %v10242 = vpow.pop %v10241
        %v10243 = vmul.f32 %v10181, 1.442695
        %v10244 = vpow.pop %v10243
        %v10245 = vmul.f32 %v10182, 1.442695
        %v10246 = vpow.pop %v10245
        %v10247 = vadd.f32 %v10184, 1.0
        %v10248 = vadd.f32 %v10186, 1.0
        %v10249 = vadd.f32 %v10188, 1.0
        %v10250 = vadd.f32 %v10190, 1.0
        %v10251 = vadd.f32 %v10192, 1.0
        %v10252 = vadd.f32 %v10194, 1.0
        %v10253 = vadd.f32 %v10196, 1.0
        %v10254 = vadd.f32 %v10198, 1.0
        %v10255 = vadd.f32 %v10200, 1.0
        %v10256 = vadd.f32 %v10202, 1.0
        %v10257 = vadd.f32 %v10204, 1.0
        %v10258 = vadd.f32 %v10206, 1.0
        %v10259 = vadd.f32 %v10208, 1.0
        %v10260 = vadd.f32 %v10210, 1.0
        %v10261 = vadd.f32 %v10212, 1.0
        %v10262 = vadd.f32 %v10214, 1.0
        %v10263 = vadd.f32 %v10216, 1.0
        %v10264 = vadd.f32 %v10218, 1.0
        %v10265 = vadd.f32 %v10220, 1.0
        %v10266 = vadd.f32 %v10222, 1.0
        %v10267 = vadd.f32 %v10224, 1.0
        %v10268 = vadd.f32 %v10226, 1.0
        %v10269 = vadd.f32 %v10228, 1.0
        %v10270 = vadd.f32 %v10230, 1.0
        %v10271 = vadd.f32 %v10232, 1.0
        %v10272 = vadd.f32 %v10234, 1.0
        %v10273 = vadd.f32 %v10236, 1.0
        %v10274 = vadd.f32 %v10238, 1.0
        %v10275 = vadd.f32 %v10240, 1.0
        %v10276 = vadd.f32 %v10242, 1.0
        %v10277 = vadd.f32 %v10244, 1.0
        %v10278 = vadd.f32 %v10246, 1.0
        %v10279 = vrcp.pop %v10247
        %v10280 = vrcp.pop %v10248
        %v10281 = vrcp.pop %v10249
        %v10282 = vrcp.pop %v10250
        %v10283 = vrcp.pop %v10251
        %v10284 = vrcp.pop %v10252
        %v10285 = vrcp.pop %v10253
        %v10286 = vrcp.pop %v10254
        %v10287 = vrcp.pop %v10255
        %v10288 = vrcp.pop %v10256
        %v10289 = vrcp.pop %v10257
        %v10290 = vrcp.pop %v10258
        %v10291 = vrcp.pop %v10259
        %v10292 = vrcp.pop %v10260
        %v10293 = vrcp.pop %v10261
        %v10294 = vrcp.pop %v10262
        %v10295 = vrcp.pop %v10263
        %v10296 = vrcp.pop %v10264
        %v10297 = vrcp.pop %v10265
        %v10298 = vrcp.pop %v10266
        %v10299 = vrcp.pop %v10267
        %v10300 = vrcp.pop %v10268
        %v10301 = vrcp.pop %v10269
        %v10302 = vrcp.pop %v10270
        %v10303 = vrcp.pop %v10271
        %v10304 = vrcp.pop %v10272
        %v10305 = vrcp.pop %v10273
        %v10306 = vrcp.pop %v10274
        %v10307 = vrcp.pop %v10275
        %v10308 = vrcp.pop %v10276
        %v10309 = vrcp.pop %v10277
        %v10310 = vrcp.pop %v10278
        %v10311 = vmul.f32 %v10119, %v10279
        %v10312 = vmul.f32 %v10120, %v10280
        %v10313 = vmul.f32 %v10121, %v10281
        %v10314 = vmul.f32 %v10122, %v10282
        %v10315 = vmul.f32 %v10123, %v10283
        %v10316 = vmul.f32 %v10124, %v10284
        %v10317 = vmul.f32 %v10125, %v10285
        %v10318 = vmul.f32 %v10126, %v10286
        %v10319 = vmul.f32 %v10127, %v10287
        %v10320 = vmul.f32 %v10128, %v10288
        %v10321 = vmul.f32 %v10129, %v10289
        %v10322 = vmul.f32 %v10130, %v10290
        %v10323 = vmul.f32 %v10131, %v10291
        %v10324 = vmul.f32 %v10132, %v10292
        %v10325 = vmul.f32 %v10133, %v10293
        %v10326 = vmul.f32 %v10134, %v10294
        %v10327 = vmul.f32 %v10135, %v10295
        %v10328 = vmul.f32 %v10136, %v10296
        %v10329 = vmul.f32 %v10137, %v10297
        %v10330 = vmul.f32 %v10138, %v10298
        %v10331 = vmul.f32 %v10139, %v10299
        %v10332 = vmul.f32 %v10140, %v10300
        %v10333 = vmul.f32 %v10141, %v10301
        %v10334 = vmul.f32 %v10142, %v10302
        %v10335 = vmul.f32 %v10143, %v10303
        %v10336 = vmul.f32 %v10144, %v10304
        %v10337 = vmul.f32 %v10145, %v10305
        %v10338 = vmul.f32 %v10146, %v10306
        %v10339 = vmul.f32 %v10147, %v10307
        %v10340 = vmul.f32 %v10148, %v10308
        %v10341 = vmul.f32 %v10149, %v10309
        %v10342 = vmul.f32 %v10150, %v10310
        %v10343 = vld [vmem:[%s5] sm:$0xff]
        %v10344 = vld [vmem:[%s5 + $0x8] sm:$0xff]
        %v10345 = vld [vmem:[%s5 + $0x10] sm:$0xff]
        %v10346 = vld [vmem:[%s5 + $0x18] sm:$0xff]
        %v10348 = vsel %vm2231, %v10311, 0
        %v10351 = vsel %vm2231, %v10312, 0
        %v10354 = vsel %vm2231, %v10313, 0
        %v10357 = vsel %vm2231, %v10314, 0
        %v10360 = vsel %vm2231, %v10315, 0
        %v10363 = vsel %vm2231, %v10316, 0
        %v10366 = vsel %vm2231, %v10317, 0
        %v10369 = vsel %vm2231, %v10318, 0
        %v10372 = vsel %vm2231, %v10319, 0
        %v10375 = vsel %vm2231, %v10320, 0
        %v10378 = vsel %vm2231, %v10321, 0
        %v10381 = vsel %vm2231, %v10322, 0
        %v10384 = vsel %vm2231, %v10323, 0
        %v10387 = vsel %vm2231, %v10324, 0
        %v10390 = vsel %vm2231, %v10325, 0
        %v10393 = vsel %vm2231, %v10326, 0
        %v10396 = vsel %vm2231, %v10327, 0
        %v10399 = vsel %vm2231, %v10328, 0
        %v10402 = vsel %vm2231, %v10329, 0
        %v10405 = vsel %vm2231, %v10330, 0
        %v10408 = vsel %vm2231, %v10331, 0
        %v10411 = vsel %vm2231, %v10332, 0
        %v10414 = vsel %vm2231, %v10333, 0
        %v10417 = vsel %vm2231, %v10334, 0
        %v10420 = vsel %vm2231, %v10335, 0
        %v10423 = vsel %vm2231, %v10336, 0
        %v10426 = vsel %vm2231, %v10337, 0
        %v10429 = vsel %vm2231, %v10338, 0
        %v10432 = vsel %vm2231, %v10339, 0
        %v10435 = vsel %vm2231, %v10340, 0
        %v10438 = vsel %vm2231, %v10341, 0
        %v10441 = vsel %vm2231, %v10342, 0
        %10443 = vmatprep.subr.mxu0 0.0
        %10444 = vmatpush1.msra.mxu0 0.0
        %10445 = vmatprep.subr.mxu0 0.0
        %10446 = vmatpush1.msra.mxu0 0.0
        %10447 = vmatprep.subr.mxu0 0.0
        %10448 = vmatpush1.msra.mxu0 0.0
        %10449 = vmatprep.subr.mxu0 0.0
        %10450 = vmatpush1.msra.mxu0 0.0
        %10451 = vmatprep.subr.mxu0 0.0
        %10452 = vmatpush1.msra.mxu0 0.0
        %10453 = vmatprep.subr.mxu0 0.0
        %10454 = vmatpush1.msra.mxu0 0.0
        %10455 = vmatprep.subr.mxu0 0.0
        %10456 = vmatpush1.msra.mxu0 0.0
        %10457 = vmatprep.subr.mxu0 0.0
        %10458 = vmatpush1.msra.mxu0 0.0
        %10459 = vmatprep.subr.mxu0 0.0
        %10460 = vmatpush1.msra.mxu0 0.0
        %10461 = vmatprep.subr.mxu0 0.0
        %10462 = vmatpush1.msra.mxu0 0.0
        %10463 = vmatprep.subr.mxu0 0.0
        %10464 = vmatpush1.msra.mxu0 0.0
        %10465 = vmatprep.subr.mxu0 0.0
        %10466 = vmatpush1.msra.mxu0 0.0
        %10467 = vmatprep.subr.mxu0 0.0
        %10468 = vmatpush1.msra.mxu0 0.0
        %10469 = vmatprep.subr.mxu0 0.0
        %10470 = vmatpush1.msra.mxu0 0.0
        %10471 = vmatprep.subr.mxu0 0.0
        %10472 = vmatpush1.msra.mxu0 %v10346
        %10473 = vmatprep.subr.mxu0 0.0
        %10474 = vmatpush1.msra.mxu0 %v10345
        %10475 = vmatprep.subr.mxu0 0.0
        %10476 = vmatpush2.msra.mxu0 0.0
        %10477 = vmatprep.subr.mxu0 0.0
        %10478 = vmatpush2.msra.mxu0 0.0
        %10479 = vmatprep.subr.mxu0 0.0
        %10480 = vmatpush2.msra.mxu0 0.0
        %10481 = vmatprep.subr.mxu0 0.0
        %10482 = vmatpush2.msra.mxu0 0.0
        %10483 = vmatprep.subr.mxu0 0.0
        %10484 = vmatpush2.msra.mxu0 0.0
        %10485 = vmatprep.subr.mxu0 0.0
        %10486 = vmatpush2.msra.mxu0 0.0
        %10487 = vmatprep.subr.mxu0 0.0
        %10488 = vmatpush2.msra.mxu0 0.0
        %10489 = vmatprep.subr.mxu0 0.0
        %10490 = vmatpush2.msra.mxu0 0.0
        %10491 = vmatprep.subr.mxu0 0.0
        %10492 = vmatpush2.msra.mxu0 0.0
        %10493 = vmatprep.subr.mxu0 0.0
        %10494 = vmatpush2.msra.mxu0 0.0
        %10495 = vmatprep.subr.mxu0 0.0
        %10496 = vmatpush2.msra.mxu0 0.0
        %10497 = vmatprep.subr.mxu0 0.0
        %10498 = vmatpush2.msra.mxu0 0.0
        %10499 = vmatprep.subr.mxu0 0.0
        %10500 = vmatpush2.msra.mxu0 0.0
        %10501 = vmatprep.subr.mxu0 0.0
        %10502 = vmatpush2.msra.mxu0 0.0
        %10503 = vmatprep.subr.mxu0 0.0
        %10504 = vmatpush2.msra.mxu0 0.0
        %10505 = vmatprep.subr.mxu0 0.0
        %10506 = vmatpush2.msra.mxu0 0.0
        %10507 = vmatprep.mubr.f32.mxu0 0.0
        %10508 = vmatmul.mubr.f32.gmra.mxu0 %v10348
        %v10509 = vpop.f32.mrf.mxu0
        %v10510 = vadd.f32 0.0, %v10509
        %v10511 = vpop.f32.mrf.mxu0
        %10512 = vmatprep.mubr.f32.mxu0 0.0
        %10513 = vmatmul.mubr.f32.gmra.mxu0 %v10351
        %v10514 = vpop.f32.mrf.mxu0
        %v10515 = vadd.f32 0.0, %v10514
        %v10516 = vpop.f32.mrf.mxu0
        %10517 = vmatprep.mubr.f32.mxu0 0.0
        %10518 = vmatmul.mubr.f32.gmra.mxu0 %v10354
        %v10519 = vpop.f32.mrf.mxu0
        %v10520 = vadd.f32 0.0, %v10519
        %v10521 = vpop.f32.mrf.mxu0
        %10522 = vmatprep.mubr.f32.mxu0 0.0
        %10523 = vmatmul.mubr.f32.gmra.mxu0 %v10357
        %v10524 = vpop.f32.mrf.mxu0
        %v10525 = vadd.f32 0.0, %v10524
        %v10526 = vpop.f32.mrf.mxu0
        %10527 = vmatprep.mubr.f32.mxu0 0.0
        %10528 = vmatmul.mubr.f32.gmra.mxu0 %v10360
        %v10529 = vpop.f32.mrf.mxu0
        %v10530 = vadd.f32 0.0, %v10529
        %v10531 = vpop.f32.mrf.mxu0
        %10532 = vmatprep.mubr.f32.mxu0 0.0
        %10533 = vmatmul.mubr.f32.gmra.mxu0 %v10363
        %v10534 = vpop.f32.mrf.mxu0
        %v10535 = vadd.f32 0.0, %v10534
        %v10536 = vpop.f32.mrf.mxu0
        %10537 = vmatprep.mubr.f32.mxu0 0.0
        %10538 = vmatmul.mubr.f32.gmra.mxu0 %v10366
        %v10539 = vpop.f32.mrf.mxu0
        %v10540 = vadd.f32 0.0, %v10539
        %v10541 = vpop.f32.mrf.mxu0
        %10542 = vmatprep.mubr.f32.mxu0 0.0
        %10543 = vmatmul.mubr.f32.gmra.mxu0 %v10369
        %v10544 = vpop.f32.mrf.mxu0
        %v10545 = vadd.f32 0.0, %v10544
        %v10546 = vpop.f32.mrf.mxu0
        %10547 = vmatprep.mubr.f32.mxu0 0.0
        %10548 = vmatmul.mubr.f32.gmra.mxu0 %v10372
        %v10549 = vpop.f32.mrf.mxu0
        %v10550 = vadd.f32 0.0, %v10549
        %v10551 = vpop.f32.mrf.mxu0
        %10552 = vmatprep.mubr.f32.mxu0 0.0
        %10553 = vmatmul.mubr.f32.gmra.mxu0 %v10375
        %v10554 = vpop.f32.mrf.mxu0
        %v10555 = vadd.f32 0.0, %v10554
        %v10556 = vpop.f32.mrf.mxu0
        %10557 = vmatprep.mubr.f32.mxu0 0.0
        %10558 = vmatmul.mubr.f32.gmra.mxu0 %v10378
        %v10559 = vpop.f32.mrf.mxu0
        %v10560 = vadd.f32 0.0, %v10559
        %v10561 = vpop.f32.mrf.mxu0
        %10562 = vmatprep.mubr.f32.mxu0 0.0
        %10563 = vmatmul.mubr.f32.gmra.mxu0 %v10381
        %v10564 = vpop.f32.mrf.mxu0
        %v10565 = vadd.f32 0.0, %v10564
        %v10566 = vpop.f32.mrf.mxu0
        %10567 = vmatprep.mubr.f32.mxu0 0.0
        %10568 = vmatmul.mubr.f32.gmra.mxu0 %v10384
        %v10569 = vpop.f32.mrf.mxu0
        %v10570 = vadd.f32 0.0, %v10569
        %v10571 = vpop.f32.mrf.mxu0
        %10572 = vmatprep.mubr.f32.mxu0 0.0
        %10573 = vmatmul.mubr.f32.gmra.mxu0 %v10387
        %v10574 = vpop.f32.mrf.mxu0
        %v10575 = vadd.f32 0.0, %v10574
        %v10576 = vpop.f32.mrf.mxu0
        %10577 = vmatprep.mubr.f32.mxu0 0.0
        %10578 = vmatmul.mubr.f32.gmra.mxu0 %v10390
        %v10579 = vpop.f32.mrf.mxu0
        %v10580 = vadd.f32 0.0, %v10579
        %v10581 = vpop.f32.mrf.mxu0
        %10582 = vmatprep.mubr.f32.mxu0 0.0
        %10583 = vmatmul.mubr.f32.gmra.mxu0 %v10393
        %v10584 = vpop.f32.mrf.mxu0
        %v10585 = vadd.f32 0.0, %v10584
        %v10586 = vpop.f32.mrf.mxu0
        %10587 = vmatprep.mubr.f32.mxu0 0.0
        %10588 = vmatmul.mubr.f32.gmra.mxu0 %v10396
        %v10589 = vpop.f32.mrf.mxu0
        %v10590 = vadd.f32 0.0, %v10589
        %v10591 = vpop.f32.mrf.mxu0
        %10592 = vmatprep.mubr.f32.mxu0 0.0
        %10593 = vmatmul.mubr.f32.gmra.mxu0 %v10399
        %v10594 = vpop.f32.mrf.mxu0
        %v10595 = vadd.f32 0.0, %v10594
        %v10596 = vpop.f32.mrf.mxu0
        %10597 = vmatprep.mubr.f32.mxu0 0.0
        %10598 = vmatmul.mubr.f32.gmra.mxu0 %v10402
        %v10599 = vpop.f32.mrf.mxu0
        %v10600 = vadd.f32 0.0, %v10599
        %v10601 = vpop.f32.mrf.mxu0
        %10602 = vmatprep.mubr.f32.mxu0 0.0
        %10603 = vmatmul.mubr.f32.gmra.mxu0 %v10405
        %v10604 = vpop.f32.mrf.mxu0
        %v10605 = vadd.f32 0.0, %v10604
        %v10606 = vpop.f32.mrf.mxu0
        %10607 = vmatprep.mubr.f32.mxu0 0.0
        %10608 = vmatmul.mubr.f32.gmra.mxu0 %v10408
        %v10609 = vpop.f32.mrf.mxu0
        %v10610 = vadd.f32 0.0, %v10609
        %v10611 = vpop.f32.mrf.mxu0
        %10612 = vmatprep.mubr.f32.mxu0 0.0
        %10613 = vmatmul.mubr.f32.gmra.mxu0 %v10411
        %v10614 = vpop.f32.mrf.mxu0
        %v10615 = vadd.f32 0.0, %v10614
        %v10616 = vpop.f32.mrf.mxu0
        %10617 = vmatprep.mubr.f32.mxu0 0.0
        %10618 = vmatmul.mubr.f32.gmra.mxu0 %v10414
        %v10619 = vpop.f32.mrf.mxu0
        %v10620 = vadd.f32 0.0, %v10619
        %v10621 = vpop.f32.mrf.mxu0
        %10622 = vmatprep.mubr.f32.mxu0 0.0
        %10623 = vmatmul.mubr.f32.gmra.mxu0 %v10417
        %v10624 = vpop.f32.mrf.mxu0
        %v10625 = vadd.f32 0.0, %v10624
        %v10626 = vpop.f32.mrf.mxu0
        %10627 = vmatprep.mubr.f32.mxu0 0.0
        %10628 = vmatmul.mubr.f32.gmra.mxu0 %v10420
        %v10629 = vpop.f32.mrf.mxu0
        %v10630 = vadd.f32 0.0, %v10629
        %v10631 = vpop.f32.mrf.mxu0
        %10632 = vmatprep.mubr.f32.mxu0 0.0
        %10633 = vmatmul.mubr.f32.gmra.mxu0 %v10423
        %v10634 = vpop.f32.mrf.mxu0
        %v10635 = vadd.f32 0.0, %v10634
        %v10636 = vpop.f32.mrf.mxu0
        %10637 = vmatprep.mubr.f32.mxu0 0.0
        %10638 = vmatmul.mubr.f32.gmra.mxu0 %v10426
        %v10639 = vpop.f32.mrf.mxu0
        %v10640 = vadd.f32 0.0, %v10639
        %v10641 = vpop.f32.mrf.mxu0
        %10642 = vmatprep.mubr.f32.mxu0 0.0
        %10643 = vmatmul.mubr.f32.gmra.mxu0 %v10429
        %v10644 = vpop.f32.mrf.mxu0
        %v10645 = vadd.f32 0.0, %v10644
        %v10646 = vpop.f32.mrf.mxu0
        %10647 = vmatprep.mubr.f32.mxu0 0.0
        %10648 = vmatmul.mubr.f32.gmra.mxu0 %v10432
        %v10649 = vpop.f32.mrf.mxu0
        %v10650 = vadd.f32 0.0, %v10649
        %v10651 = vpop.f32.mrf.mxu0
        %10652 = vmatprep.mubr.f32.mxu0 0.0
        %10653 = vmatmul.mubr.f32.gmra.mxu0 %v10435
        %v10654 = vpop.f32.mrf.mxu0
        %v10655 = vadd.f32 0.0, %v10654
        %v10656 = vpop.f32.mrf.mxu0
        %10657 = vmatprep.mubr.f32.mxu0 0.0
        %10658 = vmatmul.mubr.f32.gmra.mxu0 %v10438
        %v10659 = vpop.f32.mrf.mxu0
        %v10660 = vadd.f32 0.0, %v10659
        %v10661 = vpop.f32.mrf.mxu0
        %10662 = vmatprep.mubr.f32.mxu0 0.0
        %10663 = vmatmul.mubr.f32.gmra.mxu0 %v10441
        %v10664 = vpop.f32.mrf.mxu0
        %v10665 = vadd.f32 0.0, %v10664
        %v10666 = vpop.f32.mrf.mxu0
        %10667 = vdwg.mxu0
        %v10669 = vsel %vm2231, %v9445, 0
        %v10672 = vsel %vm2231, %v9446, 0
        %v10675 = vsel %vm2231, %v9447, 0
        %v10678 = vsel %vm2231, %v9448, 0
        %v10681 = vsel %vm2231, %v9449, 0
        %v10684 = vsel %vm2231, %v9450, 0
        %v10687 = vsel %vm2231, %v9451, 0
        %v10690 = vsel %vm2231, %v9452, 0
        %v10693 = vsel %vm2231, %v9453, 0
        %v10696 = vsel %vm2231, %v9454, 0
        %v10699 = vsel %vm2231, %v9455, 0
        %v10702 = vsel %vm2231, %v9456, 0
        %v10705 = vsel %vm2231, %v9457, 0
        %v10708 = vsel %vm2231, %v9458, 0
        %v10711 = vsel %vm2231, %v9459, 0
        %v10714 = vsel %vm2231, %v9460, 0
        %v10717 = vsel %vm2231, %v9461, 0
        %v10720 = vsel %vm2231, %v9462, 0
        %v10723 = vsel %vm2231, %v9463, 0
        %v10726 = vsel %vm2231, %v9464, 0
        %v10729 = vsel %vm2231, %v9465, 0
        %v10732 = vsel %vm2231, %v9466, 0
        %v10735 = vsel %vm2231, %v9467, 0
        %v10738 = vsel %vm2231, %v9468, 0
        %v10741 = vsel %vm2231, %v9469, 0
        %v10744 = vsel %vm2231, %v9470, 0
        %v10747 = vsel %vm2231, %v9471, 0
        %v10750 = vsel %vm2231, %v9472, 0
        %v10753 = vsel %vm2231, %v9473, 0
        %v10756 = vsel %vm2231, %v9474, 0
        %v10759 = vsel %vm2231, %v9475, 0
        %v10762 = vsel %vm2231, %v9476, 0
        %10764 = vmatprep.subr.mxu0 0.0
        %10765 = vmatpush1.msra.mxu0 0.0
        %10766 = vmatprep.subr.mxu0 0.0
        %10767 = vmatpush1.msra.mxu0 0.0
        %10768 = vmatprep.subr.mxu0 0.0
        %10769 = vmatpush1.msra.mxu0 0.0
        %10770 = vmatprep.subr.mxu0 0.0
        %10771 = vmatpush1.msra.mxu0 0.0
        %10772 = vmatprep.subr.mxu0 0.0
        %10773 = vmatpush1.msra.mxu0 0.0
        %10774 = vmatprep.subr.mxu0 0.0
        %10775 = vmatpush1.msra.mxu0 0.0
        %10776 = vmatprep.subr.mxu0 0.0
        %10777 = vmatpush1.msra.mxu0 0.0
        %10778 = vmatprep.subr.mxu0 0.0
        %10779 = vmatpush1.msra.mxu0 0.0
        %10780 = vmatprep.subr.mxu0 0.0
        %10781 = vmatpush1.msra.mxu0 0.0
        %10782 = vmatprep.subr.mxu0 0.0
        %10783 = vmatpush1.msra.mxu0 0.0
        %10784 = vmatprep.subr.mxu0 0.0
        %10785 = vmatpush1.msra.mxu0 0.0
        %10786 = vmatprep.subr.mxu0 0.0
        %10787 = vmatpush1.msra.mxu0 0.0
        %10788 = vmatprep.subr.mxu0 0.0
        %10789 = vmatpush1.msra.mxu0 0.0
        %10790 = vmatprep.subr.mxu0 0.0
        %10791 = vmatpush1.msra.mxu0 0.0
        %10792 = vmatprep.subr.mxu0 0.0
        %10793 = vmatpush1.msra.mxu0 %v10344
        %10794 = vmatprep.subr.mxu0 0.0
        %10795 = vmatpush1.msra.mxu0 %v10343
        %10796 = vmatprep.subr.mxu0 0.0
        %10797 = vmatpush2.msra.mxu0 0.0
        %10798 = vmatprep.subr.mxu0 0.0
        %10799 = vmatpush2.msra.mxu0 0.0
        %10800 = vmatprep.subr.mxu0 0.0
        %10801 = vmatpush2.msra.mxu0 0.0
        %10802 = vmatprep.subr.mxu0 0.0
        %10803 = vmatpush2.msra.mxu0 0.0
        %10804 = vmatprep.subr.mxu0 0.0
        %10805 = vmatpush2.msra.mxu0 0.0
        %10806 = vmatprep.subr.mxu0 0.0
        %10807 = vmatpush2.msra.mxu0 0.0
        %10808 = vmatprep.subr.mxu0 0.0
        %10809 = vmatpush2.msra.mxu0 0.0
        %10810 = vmatprep.subr.mxu0 0.0
        %10811 = vmatpush2.msra.mxu0 0.0
        %10812 = vmatprep.subr.mxu0 0.0
        %10813 = vmatpush2.msra.mxu0 0.0
        %10814 = vmatprep.subr.mxu0 0.0
        %10815 = vmatpush2.msra.mxu0 0.0
        %10816 = vmatprep.subr.mxu0 0.0
        %10817 = vmatpush2.msra.mxu0 0.0
        %10818 = vmatprep.subr.mxu0 0.0
        %10819 = vmatpush2.msra.mxu0 0.0
        %10820 = vmatprep.subr.mxu0 0.0
        %10821 = vmatpush2.msra.mxu0 0.0
        %10822 = vmatprep.subr.mxu0 0.0
        %10823 = vmatpush2.msra.mxu0 0.0
        %10824 = vmatprep.subr.mxu0 0.0
        %10825 = vmatpush2.msra.mxu0 0.0
        %10826 = vmatprep.subr.mxu0 0.0
        %10827 = vmatpush2.msra.mxu0 0.0
        %10828 = vmatprep.mubr.f32.mxu0 0.0
        %10829 = vmatmul.mubr.f32.gmra.mxu0 %v10669
        %v10830 = vpop.f32.mrf.mxu0
        %v10831 = vadd.f32 %v10510, %v10830
        %v10832 = vpop.f32.mrf.mxu0
        %10833 = vmatprep.mubr.f32.mxu0 0.0
        %10834 = vmatmul.mubr.f32.gmra.mxu0 %v10672
        %v10835 = vpop.f32.mrf.mxu0
        %v10836 = vadd.f32 %v10515, %v10835
        %v10837 = vpop.f32.mrf.mxu0
        %10838 = vmatprep.mubr.f32.mxu0 0.0
        %10839 = vmatmul.mubr.f32.gmra.mxu0 %v10675
        %v10840 = vpop.f32.mrf.mxu0
        %v10841 = vadd.f32 %v10520, %v10840
        %v10842 = vpop.f32.mrf.mxu0
        %10843 = vmatprep.mubr.f32.mxu0 0.0
        %10844 = vmatmul.mubr.f32.gmra.mxu0 %v10678
        %v10845 = vpop.f32.mrf.mxu0
        %v10846 = vadd.f32 %v10525, %v10845
        %v10847 = vpop.f32.mrf.mxu0
        %10848 = vmatprep.mubr.f32.mxu0 0.0
        %10849 = vmatmul.mubr.f32.gmra.mxu0 %v10681
        %v10850 = vpop.f32.mrf.mxu0
        %v10851 = vadd.f32 %v10530, %v10850
        %v10852 = vpop.f32.mrf.mxu0
        %10853 = vmatprep.mubr.f32.mxu0 0.0
        %10854 = vmatmul.mubr.f32.gmra.mxu0 %v10684
        %v10855 = vpop.f32.mrf.mxu0
        %v10856 = vadd.f32 %v10535, %v10855
        %v10857 = vpop.f32.mrf.mxu0
        %10858 = vmatprep.mubr.f32.mxu0 0.0
        %10859 = vmatmul.mubr.f32.gmra.mxu0 %v10687
        %v10860 = vpop.f32.mrf.mxu0
        %v10861 = vadd.f32 %v10540, %v10860
        %v10862 = vpop.f32.mrf.mxu0
        %10863 = vmatprep.mubr.f32.mxu0 0.0
        %10864 = vmatmul.mubr.f32.gmra.mxu0 %v10690
        %v10865 = vpop.f32.mrf.mxu0
        %v10866 = vadd.f32 %v10545, %v10865
        %v10867 = vpop.f32.mrf.mxu0
        %10868 = vmatprep.mubr.f32.mxu0 0.0
        %10869 = vmatmul.mubr.f32.gmra.mxu0 %v10693
        %v10870 = vpop.f32.mrf.mxu0
        %v10871 = vadd.f32 %v10550, %v10870
        %v10872 = vpop.f32.mrf.mxu0
        %10873 = vmatprep.mubr.f32.mxu0 0.0
        %10874 = vmatmul.mubr.f32.gmra.mxu0 %v10696
        %v10875 = vpop.f32.mrf.mxu0
        %v10876 = vadd.f32 %v10555, %v10875
        %v10877 = vpop.f32.mrf.mxu0
        %10878 = vmatprep.mubr.f32.mxu0 0.0
        %10879 = vmatmul.mubr.f32.gmra.mxu0 %v10699
        %v10880 = vpop.f32.mrf.mxu0
        %v10881 = vadd.f32 %v10560, %v10880
        %v10882 = vpop.f32.mrf.mxu0
        %10883 = vmatprep.mubr.f32.mxu0 0.0
        %10884 = vmatmul.mubr.f32.gmra.mxu0 %v10702
        %v10885 = vpop.f32.mrf.mxu0
        %v10886 = vadd.f32 %v10565, %v10885
        %v10887 = vpop.f32.mrf.mxu0
        %10888 = vmatprep.mubr.f32.mxu0 0.0
        %10889 = vmatmul.mubr.f32.gmra.mxu0 %v10705
        %v10890 = vpop.f32.mrf.mxu0
        %v10891 = vadd.f32 %v10570, %v10890
        %v10892 = vpop.f32.mrf.mxu0
        %10893 = vmatprep.mubr.f32.mxu0 0.0
        %10894 = vmatmul.mubr.f32.gmra.mxu0 %v10708
        %v10895 = vpop.f32.mrf.mxu0
        %v10896 = vadd.f32 %v10575, %v10895
        %v10897 = vpop.f32.mrf.mxu0
        %10898 = vmatprep.mubr.f32.mxu0 0.0
        %10899 = vmatmul.mubr.f32.gmra.mxu0 %v10711
        %v10900 = vpop.f32.mrf.mxu0
        %v10901 = vadd.f32 %v10580, %v10900
        %v10902 = vpop.f32.mrf.mxu0
        %10903 = vmatprep.mubr.f32.mxu0 0.0
        %10904 = vmatmul.mubr.f32.gmra.mxu0 %v10714
        %v10905 = vpop.f32.mrf.mxu0
        %v10906 = vadd.f32 %v10585, %v10905
        %v10907 = vpop.f32.mrf.mxu0
        %10908 = vmatprep.mubr.f32.mxu0 0.0
        %10909 = vmatmul.mubr.f32.gmra.mxu0 %v10717
        %v10910 = vpop.f32.mrf.mxu0
        %v10911 = vadd.f32 %v10590, %v10910
        %v10912 = vpop.f32.mrf.mxu0
        %10913 = vmatprep.mubr.f32.mxu0 0.0
        %10914 = vmatmul.mubr.f32.gmra.mxu0 %v10720
        %v10915 = vpop.f32.mrf.mxu0
        %v10916 = vadd.f32 %v10595, %v10915
        %v10917 = vpop.f32.mrf.mxu0
        %10918 = vmatprep.mubr.f32.mxu0 0.0
        %10919 = vmatmul.mubr.f32.gmra.mxu0 %v10723
        %v10920 = vpop.f32.mrf.mxu0
        %v10921 = vadd.f32 %v10600, %v10920
        %v10922 = vpop.f32.mrf.mxu0
        %10923 = vmatprep.mubr.f32.mxu0 0.0
        %10924 = vmatmul.mubr.f32.gmra.mxu0 %v10726
        %v10925 = vpop.f32.mrf.mxu0
        %v10926 = vadd.f32 %v10605, %v10925
        %v10927 = vpop.f32.mrf.mxu0
        %10928 = vmatprep.mubr.f32.mxu0 0.0
        %10929 = vmatmul.mubr.f32.gmra.mxu0 %v10729
        %v10930 = vpop.f32.mrf.mxu0
        %v10931 = vadd.f32 %v10610, %v10930
        %v10932 = vpop.f32.mrf.mxu0
        %10933 = vmatprep.mubr.f32.mxu0 0.0
        %10934 = vmatmul.mubr.f32.gmra.mxu0 %v10732
        %v10935 = vpop.f32.mrf.mxu0
        %v10936 = vadd.f32 %v10615, %v10935
        %v10937 = vpop.f32.mrf.mxu0
        %10938 = vmatprep.mubr.f32.mxu0 0.0
        %10939 = vmatmul.mubr.f32.gmra.mxu0 %v10735
        %v10940 = vpop.f32.mrf.mxu0
        %v10941 = vadd.f32 %v10620, %v10940
        %v10942 = vpop.f32.mrf.mxu0
        %10943 = vmatprep.mubr.f32.mxu0 0.0
        %10944 = vmatmul.mubr.f32.gmra.mxu0 %v10738
        %v10945 = vpop.f32.mrf.mxu0
        %v10946 = vadd.f32 %v10625, %v10945
        %v10947 = vpop.f32.mrf.mxu0
        %10948 = vmatprep.mubr.f32.mxu0 0.0
        %10949 = vmatmul.mubr.f32.gmra.mxu0 %v10741
        %v10950 = vpop.f32.mrf.mxu0
        %v10951 = vadd.f32 %v10630, %v10950
        %v10952 = vpop.f32.mrf.mxu0
        %10953 = vmatprep.mubr.f32.mxu0 0.0
        %10954 = vmatmul.mubr.f32.gmra.mxu0 %v10744
        %v10955 = vpop.f32.mrf.mxu0
        %v10956 = vadd.f32 %v10635, %v10955
        %v10957 = vpop.f32.mrf.mxu0
        %10958 = vmatprep.mubr.f32.mxu0 0.0
        %10959 = vmatmul.mubr.f32.gmra.mxu0 %v10747
        %v10960 = vpop.f32.mrf.mxu0
        %v10961 = vadd.f32 %v10640, %v10960
        %v10962 = vpop.f32.mrf.mxu0
        %10963 = vmatprep.mubr.f32.mxu0 0.0
        %10964 = vmatmul.mubr.f32.gmra.mxu0 %v10750
        %v10965 = vpop.f32.mrf.mxu0
        %v10966 = vadd.f32 %v10645, %v10965
        %v10967 = vpop.f32.mrf.mxu0
        %10968 = vmatprep.mubr.f32.mxu0 0.0
        %10969 = vmatmul.mubr.f32.gmra.mxu0 %v10753
        %v10970 = vpop.f32.mrf.mxu0
        %v10971 = vadd.f32 %v10650, %v10970
        %v10972 = vpop.f32.mrf.mxu0
        %10973 = vmatprep.mubr.f32.mxu0 0.0
        %10974 = vmatmul.mubr.f32.gmra.mxu0 %v10756
        %v10975 = vpop.f32.mrf.mxu0
        %v10976 = vadd.f32 %v10655, %v10975
        %v10977 = vpop.f32.mrf.mxu0
        %10978 = vmatprep.mubr.f32.mxu0 0.0
        %10979 = vmatmul.mubr.f32.gmra.mxu0 %v10759
        %v10980 = vpop.f32.mrf.mxu0
        %v10981 = vadd.f32 %v10660, %v10980
        %v10982 = vpop.f32.mrf.mxu0
        %10983 = vmatprep.mubr.f32.mxu0 0.0
        %10984 = vmatmul.mubr.f32.gmra.mxu0 %v10762
        %v10985 = vpop.f32.mrf.mxu0
        %v10986 = vadd.f32 %v10665, %v10985
        %v10987 = vpop.f32.mrf.mxu0
        %10988 = vdwg.mxu0
        %v10989 = vld [vmem:[%s6] sm:$0x1]
        %v10991 = vlaneseq
        %v10992 = vshrl.u32 %v10991, 7
        %v10993 = vsub.s32 0, %v10992
        %v10994 = vrot.slane %v10989, %v10993
        %v10996 = vadd.f32 %v10831, %v10994
        %v10997 = vadd.f32 %v10836, %v10994
        %v10998 = vadd.f32 %v10841, %v10994
        %v10999 = vadd.f32 %v10846, %v10994
        %v11000 = vadd.f32 %v10851, %v10994
        %v11001 = vadd.f32 %v10856, %v10994
        %v11002 = vadd.f32 %v10861, %v10994
        %v11003 = vadd.f32 %v10866, %v10994
        %v11004 = vadd.f32 %v10871, %v10994
        %v11005 = vadd.f32 %v10876, %v10994
        %v11006 = vadd.f32 %v10881, %v10994
        %v11007 = vadd.f32 %v10886, %v10994
        %v11008 = vadd.f32 %v10891, %v10994
        %v11009 = vadd.f32 %v10896, %v10994
        %v11010 = vadd.f32 %v10901, %v10994
        %v11011 = vadd.f32 %v10906, %v10994
        %v11012 = vadd.f32 %v10911, %v10994
        %v11013 = vadd.f32 %v10916, %v10994
        %v11014 = vadd.f32 %v10921, %v10994
        %v11015 = vadd.f32 %v10926, %v10994
        %v11016 = vadd.f32 %v10931, %v10994
        %v11017 = vadd.f32 %v10936, %v10994
        %v11018 = vadd.f32 %v10941, %v10994
        %v11019 = vadd.f32 %v10946, %v10994
        %v11020 = vadd.f32 %v10951, %v10994
        %v11021 = vadd.f32 %v10956, %v10994
        %v11022 = vadd.f32 %v10961, %v10994
        %v11023 = vadd.f32 %v10966, %v10994
        %v11024 = vadd.f32 %v10971, %v10994
        %v11025 = vadd.f32 %v10976, %v10994
        %v11026 = vadd.f32 %v10981, %v10994
        %v11027 = vadd.f32 %v10986, %v10994
        %v11028 = vsub.f32 0.0, %v10996
        %v11029 = vsub.f32 0.0, %v10997
        %v11030 = vsub.f32 0.0, %v10998
        %v11031 = vsub.f32 0.0, %v10999
        %v11032 = vsub.f32 0.0, %v11000
        %v11033 = vsub.f32 0.0, %v11001
        %v11034 = vsub.f32 0.0, %v11002
        %v11035 = vsub.f32 0.0, %v11003
        %v11036 = vsub.f32 0.0, %v11004
        %v11037 = vsub.f32 0.0, %v11005
        %v11038 = vsub.f32 0.0, %v11006
        %v11039 = vsub.f32 0.0, %v11007
        %v11040 = vsub.f32 0.0, %v11008
        %v11041 = vsub.f32 0.0, %v11009
        %v11042 = vsub.f32 0.0, %v11010
        %v11043 = vsub.f32 0.0, %v11011
        %v11044 = vsub.f32 0.0, %v11012
        %v11045 = vsub.f32 0.0, %v11013
        %v11046 = vsub.f32 0.0, %v11014
        %v11047 = vsub.f32 0.0, %v11015
        %v11048 = vsub.f32 0.0, %v11016
        %v11049 = vsub.f32 0.0, %v11017
        %v11050 = vsub.f32 0.0, %v11018
        %v11051 = vsub.f32 0.0, %v11019
        %v11052 = vsub.f32 0.0, %v11020
        %v11053 = vsub.f32 0.0, %v11021
        %v11054 = vsub.f32 0.0, %v11022
        %v11055 = vsub.f32 0.0, %v11023
        %v11056 = vsub.f32 0.0, %v11024
        %v11057 = vsub.f32 0.0, %v11025
        %v11058 = vsub.f32 0.0, %v11026
        %v11059 = vsub.f32 0.0, %v11027
        %v11060 = vmul.f32 %v11028, 1.442695
        %v11061 = vpow.pop %v11060
        %v11062 = vmul.f32 %v11029, 1.442695
        %v11063 = vpow.pop %v11062
        %v11064 = vmul.f32 %v11030, 1.442695
        %v11065 = vpow.pop %v11064
        %v11066 = vmul.f32 %v11031, 1.442695
        %v11067 = vpow.pop %v11066
        %v11068 = vmul.f32 %v11032, 1.442695
        %v11069 = vpow.pop %v11068
        %v11070 = vmul.f32 %v11033, 1.442695
        %v11071 = vpow.pop %v11070
        %v11072 = vmul.f32 %v11034, 1.442695
        %v11073 = vpow.pop %v11072
        %v11074 = vmul.f32 %v11035, 1.442695
        %v11075 = vpow.pop %v11074
        %v11076 = vmul.f32 %v11036, 1.442695
        %v11077 = vpow.pop %v11076
        %v11078 = vmul.f32 %v11037, 1.442695
        %v11079 = vpow.pop %v11078
        %v11080 = vmul.f32 %v11038, 1.442695
        %v11081 = vpow.pop %v11080
        %v11082 = vmul.f32 %v11039, 1.442695
        %v11083 = vpow.pop %v11082
        %v11084 = vmul.f32 %v11040, 1.442695
        %v11085 = vpow.pop %v11084
        %v11086 = vmul.f32 %v11041, 1.442695
        %v11087 = vpow.pop %v11086
        %v11088 = vmul.f32 %v11042, 1.442695
        %v11089 = vpow.pop %v11088
        %v11090 = vmul.f32 %v11043, 1.442695
        %v11091 = vpow.pop %v11090
        %v11092 = vmul.f32 %v11044, 1.442695
        %v11093 = vpow.pop %v11092
        %v11094 = vmul.f32 %v11045, 1.442695
        %v11095 = vpow.pop %v11094
        %v11096 = vmul.f32 %v11046, 1.442695
        %v11097 = vpow.pop %v11096
        %v11098 = vmul.f32 %v11047, 1.442695
        %v11099 = vpow.pop %v11098
        %v11100 = vmul.f32 %v11048, 1.442695
        %v11101 = vpow.pop %v11100
        %v11102 = vmul.f32 %v11049, 1.442695
        %v11103 = vpow.pop %v11102
        %v11104 = vmul.f32 %v11050, 1.442695
        %v11105 = vpow.pop %v11104
        %v11106 = vmul.f32 %v11051, 1.442695
        %v11107 = vpow.pop %v11106
        %v11108 = vmul.f32 %v11052, 1.442695
        %v11109 = vpow.pop %v11108
        %v11110 = vmul.f32 %v11053, 1.442695
        %v11111 = vpow.pop %v11110
        %v11112 = vmul.f32 %v11054, 1.442695
        %v11113 = vpow.pop %v11112
        %v11114 = vmul.f32 %v11055, 1.442695
        %v11115 = vpow.pop %v11114
        %v11116 = vmul.f32 %v11056, 1.442695
        %v11117 = vpow.pop %v11116
        %v11118 = vmul.f32 %v11057, 1.442695
        %v11119 = vpow.pop %v11118
        %v11120 = vmul.f32 %v11058, 1.442695
        %v11121 = vpow.pop %v11120
        %v11122 = vmul.f32 %v11059, 1.442695
        %v11123 = vpow.pop %v11122
        %v11124 = vadd.f32 %v11061, 1.0
        %v11125 = vadd.f32 %v11063, 1.0
        %v11126 = vadd.f32 %v11065, 1.0
        %v11127 = vadd.f32 %v11067, 1.0
        %v11128 = vadd.f32 %v11069, 1.0
        %v11129 = vadd.f32 %v11071, 1.0
        %v11130 = vadd.f32 %v11073, 1.0
        %v11131 = vadd.f32 %v11075, 1.0
        %v11132 = vadd.f32 %v11077, 1.0
        %v11133 = vadd.f32 %v11079, 1.0
        %v11134 = vadd.f32 %v11081, 1.0
        %v11135 = vadd.f32 %v11083, 1.0
        %v11136 = vadd.f32 %v11085, 1.0
        %v11137 = vadd.f32 %v11087, 1.0
        %v11138 = vadd.f32 %v11089, 1.0
        %v11139 = vadd.f32 %v11091, 1.0
        %v11140 = vadd.f32 %v11093, 1.0
        %v11141 = vadd.f32 %v11095, 1.0
        %v11142 = vadd.f32 %v11097, 1.0
        %v11143 = vadd.f32 %v11099, 1.0
        %v11144 = vadd.f32 %v11101, 1.0
        %v11145 = vadd.f32 %v11103, 1.0
        %v11146 = vadd.f32 %v11105, 1.0
        %v11147 = vadd.f32 %v11107, 1.0
        %v11148 = vadd.f32 %v11109, 1.0
        %v11149 = vadd.f32 %v11111, 1.0
        %v11150 = vadd.f32 %v11113, 1.0
        %v11151 = vadd.f32 %v11115, 1.0
        %v11152 = vadd.f32 %v11117, 1.0
        %v11153 = vadd.f32 %v11119, 1.0
        %v11154 = vadd.f32 %v11121, 1.0
        %v11155 = vadd.f32 %v11123, 1.0
        %v11156 = vrcp.pop %v11124
        %v11157 = vrcp.pop %v11125
        %v11158 = vrcp.pop %v11126
        %v11159 = vrcp.pop %v11127
        %v11160 = vrcp.pop %v11128
        %v11161 = vrcp.pop %v11129
        %v11162 = vrcp.pop %v11130
        %v11163 = vrcp.pop %v11131
        %v11164 = vrcp.pop %v11132
        %v11165 = vrcp.pop %v11133
        %v11166 = vrcp.pop %v11134
        %v11167 = vrcp.pop %v11135
        %v11168 = vrcp.pop %v11136
        %v11169 = vrcp.pop %v11137
        %v11170 = vrcp.pop %v11138
        %v11171 = vrcp.pop %v11139
        %v11172 = vrcp.pop %v11140
        %v11173 = vrcp.pop %v11141
        %v11174 = vrcp.pop %v11142
        %v11175 = vrcp.pop %v11143
        %v11176 = vrcp.pop %v11144
        %v11177 = vrcp.pop %v11145
        %v11178 = vrcp.pop %v11146
        %v11179 = vrcp.pop %v11147
        %v11180 = vrcp.pop %v11148
        %v11181 = vrcp.pop %v11149
        %v11182 = vrcp.pop %v11150
        %v11183 = vrcp.pop %v11151
        %v11184 = vrcp.pop %v11152
        %v11185 = vrcp.pop %v11153
        %v11186 = vrcp.pop %v11154
        %v11187 = vrcp.pop %v11155
        %v11188 = vmul.f32 %v10996, %v11156
        %v11189 = vmul.f32 %v10997, %v11157
        %v11190 = vmul.f32 %v10998, %v11158
        %v11191 = vmul.f32 %v10999, %v11159
        %v11192 = vmul.f32 %v11000, %v11160
        %v11193 = vmul.f32 %v11001, %v11161
        %v11194 = vmul.f32 %v11002, %v11162
        %v11195 = vmul.f32 %v11003, %v11163
        %v11196 = vmul.f32 %v11004, %v11164
        %v11197 = vmul.f32 %v11005, %v11165
        %v11198 = vmul.f32 %v11006, %v11166
        %v11199 = vmul.f32 %v11007, %v11167
        %v11200 = vmul.f32 %v11008, %v11168
        %v11201 = vmul.f32 %v11009, %v11169
        %v11202 = vmul.f32 %v11010, %v11170
        %v11203 = vmul.f32 %v11011, %v11171
        %v11204 = vmul.f32 %v11012, %v11172
        %v11205 = vmul.f32 %v11013, %v11173
        %v11206 = vmul.f32 %v11014, %v11174
        %v11207 = vmul.f32 %v11015, %v11175
        %v11208 = vmul.f32 %v11016, %v11176
        %v11209 = vmul.f32 %v11017, %v11177
        %v11210 = vmul.f32 %v11018, %v11178
        %v11211 = vmul.f32 %v11019, %v11179
        %v11212 = vmul.f32 %v11020, %v11180
        %v11213 = vmul.f32 %v11021, %v11181
        %v11214 = vmul.f32 %v11022, %v11182
        %v11215 = vmul.f32 %v11023, %v11183
        %v11216 = vmul.f32 %v11024, %v11184
        %v11217 = vmul.f32 %v11025, %v11185
        %v11218 = vmul.f32 %v11026, %v11186
        %v11219 = vmul.f32 %v11027, %v11187
        %11220 = vst.msk [vmem:[%s285] sm:$0xff] %vm2297, %v11188
        %11221 = vst.msk [vmem:[%s285 + $0x8] sm:$0xff] %vm2297, %v11189
        %11222 = vst.msk [vmem:[%s285 + $0x10] sm:$0xff] %vm2297, %v11190
        %11223 = vst.msk [vmem:[%s285 + $0x18] sm:$0xff] %vm2297, %v11191
        %11224 = vst.msk [vmem:[%s285 + $0x20] sm:$0xff] %vm2297, %v11192
        %11225 = vst.msk [vmem:[%s285 + $0x28] sm:$0xff] %vm2297, %v11193
        %11226 = vst.msk [vmem:[%s285 + $0x30] sm:$0xff] %vm2297, %v11194
        %11227 = vst.msk [vmem:[%s285 + $0x38] sm:$0xff] %vm2297, %v11195
        %11228 = vst.msk [vmem:[%s285 + $0x40] sm:$0xff] %vm2297, %v11196
        %11229 = vst.msk [vmem:[%s285 + $0x48] sm:$0xff] %vm2297, %v11197
        %11230 = vst.msk [vmem:[%s285 + $0x50] sm:$0xff] %vm2297, %v11198
        %11231 = vst.msk [vmem:[%s285 + $0x58] sm:$0xff] %vm2297, %v11199
        %11232 = vst.msk [vmem:[%s285 + $0x60] sm:$0xff] %vm2297, %v11200
        %11233 = vst.msk [vmem:[%s285 + $0x68] sm:$0xff] %vm2297, %v11201
        %11234 = vst.msk [vmem:[%s285 + $0x70] sm:$0xff] %vm2297, %v11202
        %11235 = vst.msk [vmem:[%s285 + $0x78] sm:$0xff] %vm2297, %v11203
        %11236 = vst.msk [vmem:[%s285 + $0x80] sm:$0xff] %vm2297, %v11204
        %11237 = vst.msk [vmem:[%s285 + $0x88] sm:$0xff] %vm2297, %v11205
        %11238 = vst.msk [vmem:[%s285 + $0x90] sm:$0xff] %vm2297, %v11206
        %11239 = vst.msk [vmem:[%s285 + $0x98] sm:$0xff] %vm2297, %v11207
        %11240 = vst.msk [vmem:[%s285 + $0xa0] sm:$0xff] %vm2297, %v11208
        %11241 = vst.msk [vmem:[%s285 + $0xa8] sm:$0xff] %vm2297, %v11209
        %11242 = vst.msk [vmem:[%s285 + $0xb0] sm:$0xff] %vm2297, %v11210
        %11243 = vst.msk [vmem:[%s285 + $0xb8] sm:$0xff] %vm2297, %v11211
        %11244 = vst.msk [vmem:[%s285 + $0xc0] sm:$0xff] %vm2297, %v11212
        %11245 = vst.msk [vmem:[%s285 + $0xc8] sm:$0xff] %vm2297, %v11213
        %11246 = vst.msk [vmem:[%s285 + $0xd0] sm:$0xff] %vm2297, %v11214
        %11247 = vst.msk [vmem:[%s285 + $0xd8] sm:$0xff] %vm2297, %v11215
        %11248 = vst.msk [vmem:[%s285 + $0xe0] sm:$0xff] %vm2297, %v11216
        %11249 = vst.msk [vmem:[%s285 + $0xe8] sm:$0xff] %vm2297, %v11217
        %11250 = vst.msk [vmem:[%s285 + $0xf0] sm:$0xff] %vm2297, %v11218
        %11251 = vst.msk [vmem:[%s285 + $0xf8] sm:$0xff] %vm2297, %v11219
        %s11252 = sand.u32 %s195, 1
        %s11253 = scalar_lea.sflag [#allocation4], %s11252
        %s11254 = sand.u32 %s195, 1
        %s11255 = smul.addr %s11254, 256
        %s11256 = scalar_lea.vmem [#allocation3], %s11255
        // Predicated region
        $region53: #{_lambda_.3} parent=47 // pred_check
          %p11257 = pneg %p205
        $region54: #{_lambda_.3} parent=47 // pred_check_branch
          %11259 = sbr.rel (%p11257) target = $region56
        $region55: #{_lambda_.3} parent=47 // pred_region
          %s11260 = smul.u32 32, %s26
          %s11262 = ssub.s32 4096, 4096
          %11263 = vsyncadd %s11253, %s11262
          %s11264 = smul.addr %s25, 32
          %s11265 = sadd.s32 %s11260, %s11264
          %s11266 = smul.addr %s11265, 128
          %s11267 = scalar_lea.hbm %s7, %s11266
          %s11268 = sshll.u32 %s11256, 4
          %s11269 = int_to_ptr.vmem [resolvable:$true] %s11268
          %11274 = dma.vmem_to_hbm [thread:$0]  %s11269, 4096, %s11267, %s11253, 128, 128, 8
        $region56: #{_lambda_.3} parent=47 // pred_fallthru
          _
      $region48: #{_lambda_.3} parent=5 // pred_fallthru
        _
      %p11275 = scmp.le.s32.totalorder 2, %s16
      // Predicated region
      $region57: #{_lambda_.3} parent=5 // pred_check
        %p11276 = pneg %p11275
      $region58: #{_lambda_.3} parent=5 // pred_check_branch
        %11278 = sbr.rel (%p11276) target = $region60
      $region59: #{_lambda_.3} parent=5 // pred_region
        %s11279 = ssub.s32 %s16, 2
        // Predicated region
        $region61: #{_lambda_.3} parent=59 // pred_check
          %p11280 = pneg %p211
        $region62: #{_lambda_.3} parent=59 // pred_check_branch
          %11282 = sbr.rel (%p11280) target = $region64
        $region63: #{_lambda_.3} parent=59 // pred_region
          %s11283 = sand.u32 %s196, 1
          %s11284 = scalar_lea.sflag [#allocation4], %s11283
          %s11285 = sand.u32 %s196, 1
          %s11286 = smul.addr %s11285, 256
          %s11287 = scalar_lea.vmem [#allocation3], %s11286
          %11288 = dma.done %s11284, 4096
        $region64: #{_lambda_.3} parent=59 // pred_fallthru
          _
      $region60: #{_lambda_.3} parent=5 // pred_fallthru
        _
    $region6: #{_lambda_.3} parent=1 // loop_footer
      %s20 = sadd.s32 1, %s16
    $region7: #{_lambda_.3} parent=1 // loop_footer_branch
      %15 = sbr.rel target = $region3
    $region8: #{_lambda_.3} parent=1 // loop_exit
      _
    %11289 = vsyncpa [#allocation4], 1
    %s11290 = scalar_lea.sflag [#allocation4], 1
    %11291 = vsyncpa %s11290, 1

</llo_original>
